<compile_context>
chip_gen: v5e
topology: v5e:2x2
jax: 0.10.0
libtpu: 0.0.40
codegen_flags: <defaults>
</compile_context>

<pallas_src>
import functools

import numpy as np
import jax
import jax.numpy as jnp
from jax import lax
from jax.experimental import pallas as pl
from jax.experimental.pallas import tpu as pltpu


def _attn_rel_scl_kernel(xq_ref, xkv_ref, wq_ref, wk_ref, wv_ref, bias_ref,
                         gamma_ref, beta_ref, o_ref,
                         q_scr, m_scr, l_scr, acc_scr, bacc_scr, out_scr,
                         *, num_heads, approx_recip):
    """Fused Attention_Rel_Scl forward, flash-style over KV tiles.

    Grid = (batch, q_tiles, kv_tiles); kv is innermost ("arbitrary"), so only
    an (Tq, Tkv) score slab per head is live at any time.  Because the module
    adds the relative bias AFTER softmax, its contribution is accumulated as a
    separate bias_tile @ V_tile term (must not be rescaled by the online
    softmax correction factor):  (softmax(S) + B) @ V == softmax(S)@V + B@V.

    xq_ref    : (1, Tq, C)    query-side tokens (compute dtype)
    xkv_ref   : (1, Tkv, C)   key/value-side tokens (compute dtype)
    wq_ref    : (C, C)        query weight, pre-transposed, scale folded in
    wk_ref    : (C, C)        key weight, pre-transposed
    wv_ref    : (C, C)        value weight, pre-transposed
    bias_ref  : (H, Tq, Tkv)  post-softmax relative bias tile (compute dtype)
    gamma_ref : (1, C) f32    LayerNorm weight
    beta_ref  : (1, C) f32    LayerNorm bias
    o_ref     : (1, Tq, C)    output
    scratch   : q_scr (Tq,C) cdt; m/l (H,Tq,1) f32; acc/bacc (H,Tq,hd) f32;
                out_scr (Tq,C) f32
    """
    kv = pl.program_id(2)
    n_kv = pl.num_programs(2)
    c = xq_ref.shape[-1]
    hd = c // num_heads
    cdt = xq_ref.dtype

    @pl.when(kv == 0)
    def _init():
        # Lane-dense (Tq, C) x (C, C) projection on the MXU; the attention
        # scale is pre-folded into Wq.  Cached in VMEM across the KV loop.
        q_scr[...] = jnp.dot(xq_ref[0], wq_ref[...], preferred_element_type=cdt)
        m_scr[...] = jnp.full_like(m_scr, -jnp.inf)
        l_scr[...] = jnp.zeros_like(l_scr)
        acc_scr[...] = jnp.zeros_like(acc_scr)
        bacc_scr[...] = jnp.zeros_like(bacc_scr)

    # Lane-dense K/V projections for this KV tile (one (Tkv,C)x(C,C) each).
    xkv = xkv_ref[0]
    kf = jnp.dot(xkv, wk_ref[...], preferred_element_type=cdt)    # (Tkv, C)
    vf = jnp.dot(xkv, wv_ref[...], preferred_element_type=cdt)    # (Tkv, C)

    # Per-head online-softmax update.  Heads are addressed with static lane
    # slices of the full-width projections (layout only; no head-broadcast of
    # x and no identity-scatter matmul).
    for h in range(num_heads):
        lo, hi = h * hd, (h + 1) * hd
        q_h = q_scr[:, lo:hi]                  # (Tq, hd)
        k_h = kf[:, lo:hi]                     # (Tkv, hd)
        v_h = vf[:, lo:hi]                     # (Tkv, hd)

        s = lax.dot_general(q_h, k_h, (((1,), (1,)), ((), ())),
                            preferred_element_type=jnp.float32)   # (Tq, Tkv)

        m_prev = m_scr[h]
        m_new = jnp.maximum(m_prev, jnp.max(s, axis=-1, keepdims=True))
        alpha = jnp.exp(m_prev - m_new)
        p = jnp.exp(s - m_new)                                    # f32

        l_scr[h] = alpha * l_scr[h] + jnp.sum(p, axis=-1, keepdims=True)
        acc_scr[h] = alpha * acc_scr[h] + jnp.dot(
            p.astype(cdt), v_h, preferred_element_type=jnp.float32)
        # Post-softmax bias term: accumulated separately, never rescaled.
        bacc_scr[h] = bacc_scr[h] + jnp.dot(
            bias_ref[h].astype(cdt), v_h, preferred_element_type=jnp.float32)
        m_scr[h] = m_new

    @pl.when(kv == n_kv - 1)
    def _finalize():
        # Merge heads with lane-slice writes into a (Tq, C) f32 scratch (pure
        # layout; no matmul), then LayerNorm in f32 and write the output.
        for h in range(num_heads):
            lo, hi = h * hd, (h + 1) * hd
            if approx_recip:
                inv_l = pl.reciprocal(l_scr[h], approx=True)
            else:
                inv_l = 1.0 / l_scr[h]
            out_scr[:, lo:hi] = acc_scr[h] * inv_l + bacc_scr[h]
        out = out_scr[...]                                        # (Tq, C) f32
        mu = jnp.mean(out, axis=-1, keepdims=True)
        var = jnp.mean(jnp.square(out - mu), axis=-1, keepdims=True)
        out = (out - mu) * lax.rsqrt(var + 1e-5)
        out = out * gamma_ref[...] + beta_ref[...]
        o_ref[0] = out.astype(o_ref.dtype)


def prepare_params(w_q, w_k, w_v, rel_bias_table, ln_gamma, ln_beta,
                   num_heads, seq_len, compute_dtype=jnp.bfloat16):
    """One-time parameter prep (hoisted out of the per-forward path)."""
    emb = w_q.shape[0]
    scale = float(emb) ** -0.5                 # module uses emb_size ** -0.5
    # nn.Linear stores (out_features, in_features); pre-transpose once so the
    # kernel does lane-dense x @ W matmuls, and fold the scale into Wq.
    wq_t = (jnp.asarray(w_q, jnp.float32) * scale).T.astype(compute_dtype)
    wk_t = jnp.asarray(w_k, jnp.float32).T.astype(compute_dtype)
    wv_t = jnp.asarray(w_v, jnp.float32).T.astype(compute_dtype)

    # Relative positional bias, gathered once: bias[h, i, j] = table[i-j+N-1, h].
    # NOTE: the module's 5-D permute/unsqueeze of the gathered bias cannot
    # broadcast against (B, H, N, N) for seq_len > 1; we implement the evidently
    # intended per-head (N, N) post-softmax bias.  `.repeat(1, 8)` hard-codes
    # 8 head columns, so num_heads == 8.  Stored in the compute dtype so HBM
    # footprint/traffic halves on the bf16 path; tiled (Tq, Tkv) in the kernel.
    # TODO(synk): for very long sequences pass the compact (2N-1, H) table and
    # build the (Tq, Tkv) bias slice in-kernel to make bias traffic O(N*H).
    idx = jnp.arange(seq_len)
    rel_index = idx[:, None] - idx[None, :] + (seq_len - 1)
    rel_bias = jnp.transpose(jnp.asarray(rel_bias_table, jnp.float32)[rel_index],
                             (2, 0, 1)).astype(compute_dtype)     # (H, N, N)

    gamma2d = jnp.asarray(ln_gamma, jnp.float32).reshape(1, emb)
    beta2d = jnp.asarray(ln_beta, jnp.float32).reshape(1, emb)
    return wq_t, wk_t, wv_t, rel_bias, gamma2d, beta2d


def _pick_tile(n, cap):
    """Full axis if it fits, otherwise the largest 128-multiple divisor <= cap."""
    if n <= cap:
        return n
    t = (cap // 128) * 128
    while t >= 128:
        if n % t == 0:
            return t
        t -= 128
    return n


def _vmem_limit_bytes():
    """Generation-aware VMEM limit with ~20% headroom (v7x has only 64 MiB)."""
    try:
        cap = getattr(pltpu.get_tpu_info(), "vmem_capacity_bytes", None)
    except Exception:
        cap = None
    if not cap:
        return None                      # keep Mosaic's default scoped limit
    return int(cap) * 4 // 5


def attention_rel_scl(x, params, num_heads, *, compute_dtype=jnp.bfloat16,
                      tq=None, tkv=None):
    """x: (B, N, C). params: output of prepare_params (same compute_dtype).

    Production shapes should keep C a multiple of 128 and N a multiple of the
    chosen tiles so loads/stores stay lane-dense; the demo below uses tiny
    shapes for correctness only.
    """
    B, N, C = x.shape
    assert C % num_heads == 0
    hd = C // num_heads
    wq_t, wk_t, wv_t, rel_bias, gamma2d, beta2d = params
    out_dtype = x.dtype
    approx_recip = bool(np.dtype(compute_dtype) != np.dtype(jnp.float32))

    tq = _pick_tile(N, 256) if tq is None else tq
    tkv = _pick_tile(N, 512) if tkv is None else tkv
    assert N % tq == 0 and N % tkv == 0
    grid = (B, N // tq, N // tkv)          # kv innermost (reduction axis)

    kernel = functools.partial(_attn_rel_scl_kernel, num_heads=num_heads,
                               approx_recip=approx_recip)

    def build(use_buffered):
        def const_spec(shape):
            zeros = (0,) * len(shape)
            imap = lambda b, qi, ki, _z=zeros: _z
            if use_buffered:
                # Grid-invariant blocks do not need double buffers.
                return pl.BlockSpec(shape, imap, pipeline_mode=pl.Buffered(1))
            return pl.BlockSpec(shape, imap)

        return pl.pallas_call(
            kernel,
            out_shape=jax.ShapeDtypeStruct((B, N, C), out_dtype),
            grid_spec=pltpu.PrefetchScalarGridSpec(
                num_scalar_prefetch=0,
                grid=grid,
                in_specs=[
                    pl.BlockSpec((1, tq, C), lambda b, qi, ki: (b, qi, 0)),
                    pl.BlockSpec((1, tkv, C), lambda b, qi, ki: (b, ki, 0)),
                    const_spec((C, C)),                       # Wq (scale folded)
                    const_spec((C, C)),                       # Wk
                    const_spec((C, C)),                       # Wv
                    pl.BlockSpec((num_heads, tq, tkv),
                                 lambda b, qi, ki: (0, qi, ki)),  # bias tile
                    const_spec((1, C)),                       # LN gamma
                    const_spec((1, C)),                       # LN beta
                ],
                out_specs=pl.BlockSpec((1, tq, C), lambda b, qi, ki: (b, qi, 0)),
                scratch_shapes=[
                    pltpu.VMEM((tq, C), compute_dtype),            # cached Q
                    pltpu.VMEM((num_heads, tq, 1), jnp.float32),   # running max
                    pltpu.VMEM((num_heads, tq, 1), jnp.float32),   # running sum
                    pltpu.VMEM((num_heads, tq, hd), jnp.float32),  # softmax@V acc
                    pltpu.VMEM((num_heads, tq, hd), jnp.float32),  # bias@V acc
                    pltpu.VMEM((tq, C), jnp.float32),              # merged heads
                ]),
            compiler_params=pltpu.CompilerParams(
                dimension_semantics=("parallel", "parallel", "arbitrary"),
                vmem_limit_bytes=_vmem_limit_bytes()),
        )

    x_c = x.astype(compute_dtype)
    args = (x_c, x_c, wq_t, wk_t, wv_t, rel_bias, gamma2d, beta2d)
    try:
        out = build(True)(*args)
        jax.block_until_ready(out)
        return out
    except Exception:
        # Fallback if this JAX build rejects pipeline_mode=pl.Buffered(1).
        return build(False)(*args)


def attention_rel_scl_ref(x, w_q, w_k, w_v, rel_bias_table, ln_gamma, ln_beta,
                          num_heads):
    """Pure-JAX f32 reference mirroring the PyTorch forward."""
    B, N, C = x.shape
    hd = C // num_heads
    scale = float(C) ** -0.5

    def proj(w):
        y = (x @ jnp.asarray(w).T).reshape(B, N, num_heads, hd)
        return jnp.transpose(y, (0, 2, 1, 3))                       # (B, H, N, hd)

    q, k, v = proj(w_q), proj(w_k), proj(w_v)
    attn = jnp.einsum('bhnd,bhmd->bhnm', q, k) * scale
    attn = jax.nn.softmax(attn, axis=-1)

    idx = jnp.arange(N)
    rel_index = idx[:, None] - idx[None, :] + (N - 1)
    rel_bias = jnp.transpose(rel_bias_table[rel_index], (2, 0, 1))   # (H, N, N)
    attn = attn + rel_bias[None]

    out = jnp.einsum('bhnm,bhmd->bhnd', attn, v)
    out = jnp.transpose(out, (0, 2, 1, 3)).reshape(B, N, C)
    mu = out.mean(axis=-1, keepdims=True)
    var = ((out - mu) ** 2).mean(axis=-1, keepdims=True)
    return (out - mu) / jnp.sqrt(var + 1e-5) * ln_gamma + ln_beta


if __name__ == "__main__":
    H = 8   # `.repeat(1, 8)` in the module hard-codes 8 heads

    def make_inputs(key, B, N, C):
        kx, kq, kk, kv, kt, kg, kb = jax.random.split(key, 7)
        x = jax.random.normal(kx, (B, N, C), dtype=jnp.float32)
        # nn.Linear weights in torch layout (out_features, in_features), bias=False.
        w_q = jax.random.normal(kq, (C, C), dtype=jnp.float32) / np.sqrt(C)
        w_k = jax.random.normal(kk, (C, C), dtype=jnp.float32) / np.sqrt(C)
        w_v = jax.random.normal(kv, (C, C), dtype=jnp.float32) / np.sqrt(C)
        # relative_bias_table is zero-init in the module; use non-trivial values.
        tbl = 0.1 * jax.random.normal(kt, (2 * N - 1, H), dtype=jnp.float32)
        g = 1.0 + 0.1 * jax.random.normal(kg, (C,), dtype=jnp.float32)
        b = 0.1 * jax.random.normal(kb, (C,), dtype=jnp.float32)
        return x, w_q, w_k, w_v, tbl, g, b

    k1, k2 = jax.random.split(jax.random.PRNGKey(0))

    # --- Small shape: exact f32 verification path + bf16 performance path ---
    B, N, C = 2, 8, 32
    x, w_q, w_k, w_v, tbl, g, b = make_inputs(k1, B, N, C)
    ref = attention_rel_scl_ref(x, w_q, w_k, w_v, tbl, g, b, H)

    p_f32 = prepare_params(w_q, w_k, w_v, tbl, g, b, H, N,
                           compute_dtype=jnp.float32)
    out_f32 = jax.block_until_ready(
        attention_rel_scl(x, p_f32, H, compute_dtype=jnp.float32))
    np.testing.assert_allclose(np.asarray(out_f32), np.asarray(ref),
                               rtol=1e-3, atol=1e-4)

    p_bf16 = prepare_params(w_q, w_k, w_v, tbl, g, b, H, N,
                            compute_dtype=jnp.bfloat16)
    out_bf16 = jax.block_until_ready(attention_rel_scl(x, p_bf16, H))
    np.testing.assert_allclose(np.asarray(out_bf16), np.asarray(ref),
                               rtol=5e-2, atol=5e-2)

    # --- Larger shape: exercises the multi-tile flash/online-softmax KV loop ---
    B2, N2, C2 = 2, 256, 32
    x2, w_q2, w_k2, w_v2, tbl2, g2, b2 = make_inputs(k2, B2, N2, C2)
    ref2 = attention_rel_scl_ref(x2, w_q2, w_k2, w_v2, tbl2, g2, b2, H)
    p2 = prepare_params(w_q2, w_k2, w_v2, tbl2, g2, b2, H, N2,
                        compute_dtype=jnp.float32)
    out2 = jax.block_until_ready(
        attention_rel_scl(x2, p2, H, compute_dtype=jnp.float32, tq=128, tkv=128))
    np.testing.assert_allclose(np.asarray(out2), np.asarray(ref2),
                               rtol=1e-3, atol=1e-4)

    print("KERNEL_OK")
</pallas_src>

<mosaic_0001>
module attributes {stable_mosaic.version = 11 : i64} {
  func.func @_attn_rel_scl_kernel(%arg0: i32, %arg1: i32, %arg2: i32, %arg3: memref<1x8x32xf32, #tpu.memory_space<vmem>>, %arg4: memref<1x8x32xf32, #tpu.memory_space<vmem>>, %arg5: memref<32x32xf32, #tpu.memory_space<vmem>>, %arg6: memref<32x32xf32, #tpu.memory_space<vmem>>, %arg7: memref<32x32xf32, #tpu.memory_space<vmem>>, %arg8: memref<8x8x8xf32, #tpu.memory_space<vmem>>, %arg9: memref<1x32xf32, #tpu.memory_space<vmem>>, %arg10: memref<1x32xf32, #tpu.memory_space<vmem>>, %arg11: memref<1x8x32xf32, #tpu.memory_space<vmem>>, %arg12: memref<8x32xf32, #tpu.memory_space<vmem>>, %arg13: memref<8x8x1xf32, #tpu.memory_space<vmem>>, %arg14: memref<8x8x1xf32, #tpu.memory_space<vmem>>, %arg15: memref<8x8x4xf32, #tpu.memory_space<vmem>>, %arg16: memref<8x8x4xf32, #tpu.memory_space<vmem>>, %arg17: memref<8x32xf32, #tpu.memory_space<vmem>>) attributes {dimension_semantics = [#tpu.dimension_semantics<parallel>, #tpu.dimension_semantics<parallel>, #tpu.dimension_semantics<arbitrary>], iteration_bounds = array<i64: 2, 1, 1>, scalar_prefetch = 0 : i64, scratch_operands = 6 : i64, tpu.core_type = #tpu.core_type<tc>, window_params = [{transform_indices = @transform_0, window_bounds = array<i64: 1, 8, 32>}, {transform_indices = @transform_1, window_bounds = array<i64: 1, 8, 32>}, {pipeline_mode = #tpu.pipeline_mode<synchronous>, transform_indices = @transform_2, window_bounds = array<i64: 32, 32>}, {pipeline_mode = #tpu.pipeline_mode<synchronous>, transform_indices = @transform_3, window_bounds = array<i64: 32, 32>}, {pipeline_mode = #tpu.pipeline_mode<synchronous>, transform_indices = @transform_4, window_bounds = array<i64: 32, 32>}, {transform_indices = @transform_5, window_bounds = array<i64: 8, 8, 8>}, {pipeline_mode = #tpu.pipeline_mode<synchronous>, transform_indices = @transform_6, window_bounds = array<i64: 1, 32>}, {pipeline_mode = #tpu.pipeline_mode<synchronous>, transform_indices = @transform_7, window_bounds = array<i64: 1, 32>}, {transform_indices = @transform_8, window_bounds = array<i64: 1, 8, 32>}]} {
    %c0_i32 = arith.constant 0 : i32
    %0 = arith.cmpi eq, %arg2, %c0_i32 : i32
    %1 = arith.extui %0 : i1 to i32
    %c0_i32_0 = arith.constant 0 : i32
    %2 = arith.cmpi ne, %1, %c0_i32_0 : i32
    scf.if %2 {
      %c0_269 = arith.constant 0 : index
      %c0_270 = arith.constant 0 : index
      %c0_271 = arith.constant 0 : index
      %364 = vector.load %arg3[%c0_269, %c0_270, %c0_271] : memref<1x8x32xf32, #tpu.memory_space<vmem>>, vector<1x8x32xf32>
      %365 = vector.shape_cast %364 : vector<1x8x32xf32> to vector<8x32xf32>
      %c0_272 = arith.constant 0 : index
      %c0_273 = arith.constant 0 : index
      %366 = vector.load %arg5[%c0_272, %c0_273] : memref<32x32xf32, #tpu.memory_space<vmem>>, vector<32x32xf32>
      %cst_274 = arith.constant dense<0.000000e+00> : vector<8x32xf32>
      %367 = tpu.matmul %365, %366, %cst_274 {dimension_numbers = #tpu.dot_dimension_numbers<[1], [0], [0], [1], [0, 0, 1, 1], [], []>} : vector<8x32xf32>, vector<32x32xf32>, vector<8x32xf32> -> vector<8x32xf32>
      %c0_275 = arith.constant 0 : index
      %c0_276 = arith.constant 0 : index
      %368 = vector.load %arg12[%c0_275, %c0_276] : memref<8x32xf32, #tpu.memory_space<vmem>>, vector<8x32xf32>
      tpu.vector_store %arg12[%c0_275, %c0_276], %367 {strides = array<i32>} : memref<8x32xf32, #tpu.memory_space<vmem>>, vector<8x32xf32>,
      %cst_277 = arith.constant 0xFF800000 : f32
      %369 = vector.broadcast %cst_277 : f32 to vector<8x8x1xf32>
      %c0_278 = arith.constant 0 : index
      %c0_279 = arith.constant 0 : index
      %c0_280 = arith.constant 0 : index
      %370 = vector.load %arg13[%c0_278, %c0_279, %c0_280] : memref<8x8x1xf32, #tpu.memory_space<vmem>>, vector<8x8x1xf32>
      tpu.vector_store %arg13[%c0_278, %c0_279, %c0_280], %369 {strides = array<i32>} : memref<8x8x1xf32, #tpu.memory_space<vmem>>, vector<8x8x1xf32>,
      %cst_281 = arith.constant 0.000000e+00 : f32
      %371 = vector.broadcast %cst_281 : f32 to vector<8x8x1xf32>
      %c0_282 = arith.constant 0 : index
      %c0_283 = arith.constant 0 : index
      %c0_284 = arith.constant 0 : index
      %372 = vector.load %arg14[%c0_282, %c0_283, %c0_284] : memref<8x8x1xf32, #tpu.memory_space<vmem>>, vector<8x8x1xf32>
      tpu.vector_store %arg14[%c0_282, %c0_283, %c0_284], %371 {strides = array<i32>} : memref<8x8x1xf32, #tpu.memory_space<vmem>>, vector<8x8x1xf32>,
      %cst_285 = arith.constant 0.000000e+00 : f32
      %373 = vector.broadcast %cst_285 : f32 to vector<8x8x4xf32>
      %c0_286 = arith.constant 0 : index
      %c0_287 = arith.constant 0 : index
      %c0_288 = arith.constant 0 : index
      %374 = vector.load %arg15[%c0_286, %c0_287, %c0_288] : memref<8x8x4xf32, #tpu.memory_space<vmem>>, vector<8x8x4xf32>
      tpu.vector_store %arg15[%c0_286, %c0_287, %c0_288], %373 {strides = array<i32>} : memref<8x8x4xf32, #tpu.memory_space<vmem>>, vector<8x8x4xf32>,
      %cst_289 = arith.constant 0.000000e+00 : f32
      %375 = vector.broadcast %cst_289 : f32 to vector<8x8x4xf32>
      %c0_290 = arith.constant 0 : index
      %c0_291 = arith.constant 0 : index
      %c0_292 = arith.constant 0 : index
      %376 = vector.load %arg16[%c0_290, %c0_291, %c0_292] : memref<8x8x4xf32, #tpu.memory_space<vmem>>, vector<8x8x4xf32>
      tpu.vector_store %arg16[%c0_290, %c0_291, %c0_292], %375 {strides = array<i32>} : memref<8x8x4xf32, #tpu.memory_space<vmem>>, vector<8x8x4xf32>,
    } else {
    }
    %c0 = arith.constant 0 : index
    %c0_1 = arith.constant 0 : index
    %c0_2 = arith.constant 0 : index
    %3 = vector.load %arg4[%c0, %c0_1, %c0_2] : memref<1x8x32xf32, #tpu.memory_space<vmem>>, vector<1x8x32xf32>
    %4 = vector.shape_cast %3 : vector<1x8x32xf32> to vector<8x32xf32>
    %c0_3 = arith.constant 0 : index
    %c0_4 = arith.constant 0 : index
    %5 = vector.load %arg6[%c0_3, %c0_4] : memref<32x32xf32, #tpu.memory_space<vmem>>, vector<32x32xf32>
    %cst = arith.constant dense<0.000000e+00> : vector<8x32xf32>
    %6 = tpu.matmul %4, %5, %cst {dimension_numbers = #tpu.dot_dimension_numbers<[1], [0], [0], [1], [0, 0, 1, 1], [], []>} : vector<8x32xf32>, vector<32x32xf32>, vector<8x32xf32> -> vector<8x32xf32>
    %c0_5 = arith.constant 0 : index
    %c0_6 = arith.constant 0 : index
    %7 = vector.load %arg7[%c0_5, %c0_6] : memref<32x32xf32, #tpu.memory_space<vmem>>, vector<32x32xf32>
    %cst_7 = arith.constant dense<0.000000e+00> : vector<8x32xf32>
    %8 = tpu.matmul %4, %7, %cst_7 {dimension_numbers = #tpu.dot_dimension_numbers<[1], [0], [0], [1], [0, 0, 1, 1], [], []>} : vector<8x32xf32>, vector<32x32xf32>, vector<8x32xf32> -> vector<8x32xf32>
    %c0_8 = arith.constant 0 : index
    %c0_9 = arith.constant 0 : index
    %9 = vector.load %arg12[%c0_8, %c0_9] : memref<8x32xf32, #tpu.memory_space<vmem>>, vector<8x4xf32>
    %10 = vector.extract_strided_slice %6 {offsets = [0, 0], sizes = [8, 4], strides = [1, 1]} : vector<8x32xf32> to vector<8x4xf32>
    %11 = vector.extract_strided_slice %8 {offsets = [0, 0], sizes = [8, 4], strides = [1, 1]} : vector<8x32xf32> to vector<8x4xf32>
    %cst_10 = arith.constant dense<0.000000e+00> : vector<8x8xf32>
    %12 = tpu.matmul %9, %10, %cst_10 {dimension_numbers = #tpu.dot_dimension_numbers<[1], [1], [0], [0], [0, 0, 1, 0], [], []>} : vector<8x4xf32>, vector<8x4xf32>, vector<8x8xf32> -> vector<8x8xf32>
    %c0_11 = arith.constant 0 : index
    %c0_12 = arith.constant 0 : index
    %c0_13 = arith.constant 0 : index
    %13 = vector.load %arg13[%c0_11, %c0_12, %c0_13] : memref<8x8x1xf32, #tpu.memory_space<vmem>>, vector<1x8x1xf32>
    %14 = vector.shape_cast %13 : vector<1x8x1xf32> to vector<8x1xf32>
    %cst_14 = arith.constant dense<0xFF800000> : vector<8xf32>
    %15 = vector.multi_reduction <maximumf>, %12, %cst_14 [1] : vector<8x8xf32> to vector<8xf32>
    %16 = vector.shape_cast %15 : vector<8xf32> to vector<8x1xf32>
    %17 = arith.maximumf %14, %16 : vector<8x1xf32>
    %18 = arith.subf %14, %17 : vector<8x1xf32>
    %19 = math.exp %18 : vector<8x1xf32>
    %20 = vector.broadcast %17 : vector<8x1xf32> to vector<8x8xf32>
    %21 = arith.subf %12, %20 : vector<8x8xf32>
    %22 = math.exp %21 : vector<8x8xf32>
    %c0_15 = arith.constant 0 : index
    %c0_16 = arith.constant 0 : index
    %c0_17 = arith.constant 0 : index
    %23 = vector.load %arg14[%c0_15, %c0_16, %c0_17] : memref<8x8x1xf32, #tpu.memory_space<vmem>>, vector<1x8x1xf32>
    %24 = vector.shape_cast %23 : vector<1x8x1xf32> to vector<8x1xf32>
    %25 = arith.mulf %19, %24 : vector<8x1xf32>
    %cst_18 = arith.constant dense<0.000000e+00> : vector<8xf32>
    %26 = vector.multi_reduction <add>, %22, %cst_18 [1] : vector<8x8xf32> to vector<8xf32>
    %27 = vector.shape_cast %26 : vector<8xf32> to vector<8x1xf32>
    %28 = arith.addf %25, %27 : vector<8x1xf32>
    %c0_19 = arith.constant 0 : index
    %c0_20 = arith.constant 0 : index
    %c0_21 = arith.constant 0 : index
    %29 = vector.load %arg14[%c0_19, %c0_20, %c0_21] : memref<8x8x1xf32, #tpu.memory_space<vmem>>, vector<1x8x1xf32>
    %30 = vector.shape_cast %29 : vector<1x8x1xf32> to vector<8x1xf32>
    %31 = vector.shape_cast %28 : vector<8x1xf32> to vector<1x8x1xf32>
    tpu.vector_store %arg14[%c0_19, %c0_20, %c0_21], %31 {strides = array<i32>} : memref<8x8x1xf32, #tpu.memory_space<vmem>>, vector<1x8x1xf32>,
    %c0_22 = arith.constant 0 : index
    %c0_23 = arith.constant 0 : index
    %c0_24 = arith.constant 0 : index
    %32 = vector.load %arg15[%c0_22, %c0_23, %c0_24] : memref<8x8x4xf32, #tpu.memory_space<vmem>>, vector<1x8x4xf32>
    %33 = vector.shape_cast %32 : vector<1x8x4xf32> to vector<8x4xf32>
    %34 = vector.broadcast %19 : vector<8x1xf32> to vector<8x4xf32>
    %35 = arith.mulf %34, %33 : vector<8x4xf32>
    %cst_25 = arith.constant dense<0.000000e+00> : vector<8x4xf32>
    %36 = tpu.matmul %22, %11, %cst_25 {dimension_numbers = #tpu.dot_dimension_numbers<[1], [0], [0], [1], [0, 0, 1, 1], [], []>} : vector<8x8xf32>, vector<8x4xf32>, vector<8x4xf32> -> vector<8x4xf32>
    %37 = arith.addf %35, %36 : vector<8x4xf32>
    %c0_26 = arith.constant 0 : index
    %c0_27 = arith.constant 0 : index
    %c0_28 = arith.constant 0 : index
    %38 = vector.load %arg15[%c0_26, %c0_27, %c0_28] : memref<8x8x4xf32, #tpu.memory_space<vmem>>, vector<1x8x4xf32>
    %39 = vector.shape_cast %38 : vector<1x8x4xf32> to vector<8x4xf32>
    %40 = vector.shape_cast %37 : vector<8x4xf32> to vector<1x8x4xf32>
    tpu.vector_store %arg15[%c0_26, %c0_27, %c0_28], %40 {strides = array<i32>} : memref<8x8x4xf32, #tpu.memory_space<vmem>>, vector<1x8x4xf32>,
    %c0_29 = arith.constant 0 : index
    %c0_30 = arith.constant 0 : index
    %c0_31 = arith.constant 0 : index
    %41 = vector.load %arg16[%c0_29, %c0_30, %c0_31] : memref<8x8x4xf32, #tpu.memory_space<vmem>>, vector<1x8x4xf32>
    %42 = vector.shape_cast %41 : vector<1x8x4xf32> to vector<8x4xf32>
    %c0_32 = arith.constant 0 : index
    %c0_33 = arith.constant 0 : index
    %c0_34 = arith.constant 0 : index
    %43 = vector.load %arg8[%c0_32, %c0_33, %c0_34] : memref<8x8x8xf32, #tpu.memory_space<vmem>>, vector<1x8x8xf32>
    %44 = vector.shape_cast %43 : vector<1x8x8xf32> to vector<8x8xf32>
    %cst_35 = arith.constant dense<0.000000e+00> : vector<8x4xf32>
    %45 = tpu.matmul %44, %11, %cst_35 {dimension_numbers = #tpu.dot_dimension_numbers<[1], [0], [0], [1], [0, 0, 1, 1], [], []>} : vector<8x8xf32>, vector<8x4xf32>, vector<8x4xf32> -> vector<8x4xf32>
    %46 = arith.addf %42, %45 : vector<8x4xf32>
    %c0_36 = arith.constant 0 : index
    %c0_37 = arith.constant 0 : index
    %c0_38 = arith.constant 0 : index
    %47 = vector.load %arg16[%c0_36, %c0_37, %c0_38] : memref<8x8x4xf32, #tpu.memory_space<vmem>>, vector<1x8x4xf32>
    %48 = vector.shape_cast %47 : vector<1x8x4xf32> to vector<8x4xf32>
    %49 = vector.shape_cast %46 : vector<8x4xf32> to vector<1x8x4xf32>
    tpu.vector_store %arg16[%c0_36, %c0_37, %c0_38], %49 {strides = array<i32>} : memref<8x8x4xf32, #tpu.memory_space<vmem>>, vector<1x8x4xf32>,
    %c0_39 = arith.constant 0 : index
    %c0_40 = arith.constant 0 : index
    %c0_41 = arith.constant 0 : index
    %50 = vector.load %arg13[%c0_39, %c0_40, %c0_41] : memref<8x8x1xf32, #tpu.memory_space<vmem>>, vector<1x8x1xf32>
    %51 = vector.shape_cast %50 : vector<1x8x1xf32> to vector<8x1xf32>
    %52 = vector.shape_cast %17 : vector<8x1xf32> to vector<1x8x1xf32>
    tpu.vector_store %arg13[%c0_39, %c0_40, %c0_41], %52 {strides = array<i32>} : memref<8x8x1xf32, #tpu.memory_space<vmem>>, vector<1x8x1xf32>,
    %c0_42 = arith.constant 0 : index
    %c4 = arith.constant 4 : index
    %53 = vector.load %arg12[%c0_42, %c4] : memref<8x32xf32, #tpu.memory_space<vmem>>, vector<8x4xf32>
    %54 = vector.extract_strided_slice %6 {offsets = [0, 4], sizes = [8, 4], strides = [1, 1]} : vector<8x32xf32> to vector<8x4xf32>
    %55 = vector.extract_strided_slice %8 {offsets = [0, 4], sizes = [8, 4], strides = [1, 1]} : vector<8x32xf32> to vector<8x4xf32>
    %cst_43 = arith.constant dense<0.000000e+00> : vector<8x8xf32>
    %56 = tpu.matmul %53, %54, %cst_43 {dimension_numbers = #tpu.dot_dimension_numbers<[1], [1], [0], [0], [0, 0, 1, 0], [], []>} : vector<8x4xf32>, vector<8x4xf32>, vector<8x8xf32> -> vector<8x8xf32>
    %c1 = arith.constant 1 : index
    %c0_44 = arith.constant 0 : index
    %c0_45 = arith.constant 0 : index
    %57 = vector.load %arg13[%c1, %c0_44, %c0_45] : memref<8x8x1xf32, #tpu.memory_space<vmem>>, vector<1x8x1xf32>
    %58 = vector.shape_cast %57 : vector<1x8x1xf32> to vector<8x1xf32>
    %cst_46 = arith.constant dense<0xFF800000> : vector<8xf32>
    %59 = vector.multi_reduction <maximumf>, %56, %cst_46 [1] : vector<8x8xf32> to vector<8xf32>
    %60 = vector.shape_cast %59 : vector<8xf32> to vector<8x1xf32>
    %61 = arith.maximumf %58, %60 : vector<8x1xf32>
    %62 = arith.subf %58, %61 : vector<8x1xf32>
    %63 = math.exp %62 : vector<8x1xf32>
    %64 = vector.broadcast %61 : vector<8x1xf32> to vector<8x8xf32>
    %65 = arith.subf %56, %64 : vector<8x8xf32>
    %66 = math.exp %65 : vector<8x8xf32>
    %c1_47 = arith.constant 1 : index
    %c0_48 = arith.constant 0 : index
    %c0_49 = arith.constant 0 : index
    %67 = vector.load %arg14[%c1_47, %c0_48, %c0_49] : memref<8x8x1xf32, #tpu.memory_space<vmem>>, vector<1x8x1xf32>
    %68 = vector.shape_cast %67 : vector<1x8x1xf32> to vector<8x1xf32>
    %69 = arith.mulf %63, %68 : vector<8x1xf32>
    %cst_50 = arith.constant dense<0.000000e+00> : vector<8xf32>
    %70 = vector.multi_reduction <add>, %66, %cst_50 [1] : vector<8x8xf32> to vector<8xf32>
    %71 = vector.shape_cast %70 : vector<8xf32> to vector<8x1xf32>
    %72 = arith.addf %69, %71 : vector<8x1xf32>
    %c1_51 = arith.constant 1 : index
    %c0_52 = arith.constant 0 : index
    %c0_53 = arith.constant 0 : index
    %73 = vector.load %arg14[%c1_51, %c0_52, %c0_53] : memref<8x8x1xf32, #tpu.memory_space<vmem>>, vector<1x8x1xf32>
    %74 = vector.shape_cast %73 : vector<1x8x1xf32> to vector<8x1xf32>
    %75 = vector.shape_cast %72 : vector<8x1xf32> to vector<1x8x1xf32>
    tpu.vector_store %arg14[%c1_51, %c0_52, %c0_53], %75 {strides = array<i32>} : memref<8x8x1xf32, #tpu.memory_space<vmem>>, vector<1x8x1xf32>,
    %c1_54 = arith.constant 1 : index
    %c0_55 = arith.constant 0 : index
    %c0_56 = arith.constant 0 : index
    %76 = vector.load %arg15[%c1_54, %c0_55, %c0_56] : memref<8x8x4xf32, #tpu.memory_space<vmem>>, vector<1x8x4xf32>
    %77 = vector.shape_cast %76 : vector<1x8x4xf32> to vector<8x4xf32>
    %78 = vector.broadcast %63 : vector<8x1xf32> to vector<8x4xf32>
    %79 = arith.mulf %78, %77 : vector<8x4xf32>
    %cst_57 = arith.constant dense<0.000000e+00> : vector<8x4xf32>
    %80 = tpu.matmul %66, %55, %cst_57 {dimension_numbers = #tpu.dot_dimension_numbers<[1], [0], [0], [1], [0, 0, 1, 1], [], []>} : vector<8x8xf32>, vector<8x4xf32>, vector<8x4xf32> -> vector<8x4xf32>
    %81 = arith.addf %79, %80 : vector<8x4xf32>
    %c1_58 = arith.constant 1 : index
    %c0_59 = arith.constant 0 : index
    %c0_60 = arith.constant 0 : index
    %82 = vector.load %arg15[%c1_58, %c0_59, %c0_60] : memref<8x8x4xf32, #tpu.memory_space<vmem>>, vector<1x8x4xf32>
    %83 = vector.shape_cast %82 : vector<1x8x4xf32> to vector<8x4xf32>
    %84 = vector.shape_cast %81 : vector<8x4xf32> to vector<1x8x4xf32>
    tpu.vector_store %arg15[%c1_58, %c0_59, %c0_60], %84 {strides = array<i32>} : memref<8x8x4xf32, #tpu.memory_space<vmem>>, vector<1x8x4xf32>,
    %c1_61 = arith.constant 1 : index
    %c0_62 = arith.constant 0 : index
    %c0_63 = arith.constant 0 : index
    %85 = vector.load %arg16[%c1_61, %c0_62, %c0_63] : memref<8x8x4xf32, #tpu.memory_space<vmem>>, vector<1x8x4xf32>
    %86 = vector.shape_cast %85 : vector<1x8x4xf32> to vector<8x4xf32>
    %c1_64 = arith.constant 1 : index
    %c0_65 = arith.constant 0 : index
    %c0_66 = arith.constant 0 : index
    %87 = vector.load %arg8[%c1_64, %c0_65, %c0_66] : memref<8x8x8xf32, #tpu.memory_space<vmem>>, vector<1x8x8xf32>
    %88 = vector.shape_cast %87 : vector<1x8x8xf32> to vector<8x8xf32>
    %cst_67 = arith.constant dense<0.000000e+00> : vector<8x4xf32>
    %89 = tpu.matmul %88, %55, %cst_67 {dimension_numbers = #tpu.dot_dimension_numbers<[1], [0], [0], [1], [0, 0, 1, 1], [], []>} : vector<8x8xf32>, vector<8x4xf32>, vector<8x4xf32> -> vector<8x4xf32>
    %90 = arith.addf %86, %89 : vector<8x4xf32>
    %c1_68 = arith.constant 1 : index
    %c0_69 = arith.constant 0 : index
    %c0_70 = arith.constant 0 : index
    %91 = vector.load %arg16[%c1_68, %c0_69, %c0_70] : memref<8x8x4xf32, #tpu.memory_space<vmem>>, vector<1x8x4xf32>
    %92 = vector.shape_cast %91 : vector<1x8x4xf32> to vector<8x4xf32>
    %93 = vector.shape_cast %90 : vector<8x4xf32> to vector<1x8x4xf32>
    tpu.vector_store %arg16[%c1_68, %c0_69, %c0_70], %93 {strides = array<i32>} : memref<8x8x4xf32, #tpu.memory_space<vmem>>, vector<1x8x4xf32>,
    %c1_71 = arith.constant 1 : index
    %c0_72 = arith.constant 0 : index
    %c0_73 = arith.constant 0 : index
    %94 = vector.load %arg13[%c1_71, %c0_72, %c0_73] : memref<8x8x1xf32, #tpu.memory_space<vmem>>, vector<1x8x1xf32>
    %95 = vector.shape_cast %94 : vector<1x8x1xf32> to vector<8x1xf32>
    %96 = vector.shape_cast %61 : vector<8x1xf32> to vector<1x8x1xf32>
    tpu.vector_store %arg13[%c1_71, %c0_72, %c0_73], %96 {strides = array<i32>} : memref<8x8x1xf32, #tpu.memory_space<vmem>>, vector<1x8x1xf32>,
    %c0_74 = arith.constant 0 : index
    %c8 = arith.constant 8 : index
    %97 = vector.load %arg12[%c0_74, %c8] : memref<8x32xf32, #tpu.memory_space<vmem>>, vector<8x4xf32>
    %98 = vector.extract_strided_slice %6 {offsets = [0, 8], sizes = [8, 4], strides = [1, 1]} : vector<8x32xf32> to vector<8x4xf32>
    %99 = vector.extract_strided_slice %8 {offsets = [0, 8], sizes = [8, 4], strides = [1, 1]} : vector<8x32xf32> to vector<8x4xf32>
    %cst_75 = arith.constant dense<0.000000e+00> : vector<8x8xf32>
    %100 = tpu.matmul %97, %98, %cst_75 {dimension_numbers = #tpu.dot_dimension_numbers<[1], [1], [0], [0], [0, 0, 1, 0], [], []>} : vector<8x4xf32>, vector<8x4xf32>, vector<8x8xf32> -> vector<8x8xf32>
    %c2 = arith.constant 2 : index
    %c0_76 = arith.constant 0 : index
    %c0_77 = arith.constant 0 : index
    %101 = vector.load %arg13[%c2, %c0_76, %c0_77] : memref<8x8x1xf32, #tpu.memory_space<vmem>>, vector<1x8x1xf32>
    %102 = vector.shape_cast %101 : vector<1x8x1xf32> to vector<8x1xf32>
    %cst_78 = arith.constant dense<0xFF800000> : vector<8xf32>
    %103 = vector.multi_reduction <maximumf>, %100, %cst_78 [1] : vector<8x8xf32> to vector<8xf32>
    %104 = vector.shape_cast %103 : vector<8xf32> to vector<8x1xf32>
    %105 = arith.maximumf %102, %104 : vector<8x1xf32>
    %106 = arith.subf %102, %105 : vector<8x1xf32>
    %107 = math.exp %106 : vector<8x1xf32>
    %108 = vector.broadcast %105 : vector<8x1xf32> to vector<8x8xf32>
    %109 = arith.subf %100, %108 : vector<8x8xf32>
    %110 = math.exp %109 : vector<8x8xf32>
    %c2_79 = arith.constant 2 : index
    %c0_80 = arith.constant 0 : index
    %c0_81 = arith.constant 0 : index
    %111 = vector.load %arg14[%c2_79, %c0_80, %c0_81] : memref<8x8x1xf32, #tpu.memory_space<vmem>>, vector<1x8x1xf32>
    %112 = vector.shape_cast %111 : vector<1x8x1xf32> to vector<8x1xf32>
    %113 = arith.mulf %107, %112 : vector<8x1xf32>
    %cst_82 = arith.constant dense<0.000000e+00> : vector<8xf32>
    %114 = vector.multi_reduction <add>, %110, %cst_82 [1] : vector<8x8xf32> to vector<8xf32>
    %115 = vector.shape_cast %114 : vector<8xf32> to vector<8x1xf32>
    %116 = arith.addf %113, %115 : vector<8x1xf32>
    %c2_83 = arith.constant 2 : index
    %c0_84 = arith.constant 0 : index
    %c0_85 = arith.constant 0 : index
    %117 = vector.load %arg14[%c2_83, %c0_84, %c0_85] : memref<8x8x1xf32, #tpu.memory_space<vmem>>, vector<1x8x1xf32>
    %118 = vector.shape_cast %117 : vector<1x8x1xf32> to vector<8x1xf32>
    %119 = vector.shape_cast %116 : vector<8x1xf32> to vector<1x8x1xf32>
    tpu.vector_store %arg14[%c2_83, %c0_84, %c0_85], %119 {strides = array<i32>} : memref<8x8x1xf32, #tpu.memory_space<vmem>>, vector<1x8x1xf32>,
    %c2_86 = arith.constant 2 : index
    %c0_87 = arith.constant 0 : index
    %c0_88 = arith.constant 0 : index
    %120 = vector.load %arg15[%c2_86, %c0_87, %c0_88] : memref<8x8x4xf32, #tpu.memory_space<vmem>>, vector<1x8x4xf32>
    %121 = vector.shape_cast %120 : vector<1x8x4xf32> to vector<8x4xf32>
    %122 = vector.broadcast %107 : vector<8x1xf32> to vector<8x4xf32>
    %123 = arith.mulf %122, %121 : vector<8x4xf32>
    %cst_89 = arith.constant dense<0.000000e+00> : vector<8x4xf32>
    %124 = tpu.matmul %110, %99, %cst_89 {dimension_numbers = #tpu.dot_dimension_numbers<[1], [0], [0], [1], [0, 0, 1, 1], [], []>} : vector<8x8xf32>, vector<8x4xf32>, vector<8x4xf32> -> vector<8x4xf32>
    %125 = arith.addf %123, %124 : vector<8x4xf32>
    %c2_90 = arith.constant 2 : index
    %c0_91 = arith.constant 0 : index
    %c0_92 = arith.constant 0 : index
    %126 = vector.load %arg15[%c2_90, %c0_91, %c0_92] : memref<8x8x4xf32, #tpu.memory_space<vmem>>, vector<1x8x4xf32>
    %127 = vector.shape_cast %126 : vector<1x8x4xf32> to vector<8x4xf32>
    %128 = vector.shape_cast %125 : vector<8x4xf32> to vector<1x8x4xf32>
    tpu.vector_store %arg15[%c2_90, %c0_91, %c0_92], %128 {strides = array<i32>} : memref<8x8x4xf32, #tpu.memory_space<vmem>>, vector<1x8x4xf32>,
    %c2_93 = arith.constant 2 : index
    %c0_94 = arith.constant 0 : index
    %c0_95 = arith.constant 0 : index
    %129 = vector.load %arg16[%c2_93, %c0_94, %c0_95] : memref<8x8x4xf32, #tpu.memory_space<vmem>>, vector<1x8x4xf32>
    %130 = vector.shape_cast %129 : vector<1x8x4xf32> to vector<8x4xf32>
    %c2_96 = arith.constant 2 : index
    %c0_97 = arith.constant 0 : index
    %c0_98 = arith.constant 0 : index
    %131 = vector.load %arg8[%c2_96, %c0_97, %c0_98] : memref<8x8x8xf32, #tpu.memory_space<vmem>>, vector<1x8x8xf32>
    %132 = vector.shape_cast %131 : vector<1x8x8xf32> to vector<8x8xf32>
    %cst_99 = arith.constant dense<0.000000e+00> : vector<8x4xf32>
    %133 = tpu.matmul %132, %99, %cst_99 {dimension_numbers = #tpu.dot_dimension_numbers<[1], [0], [0], [1], [0, 0, 1, 1], [], []>} : vector<8x8xf32>, vector<8x4xf32>, vector<8x4xf32> -> vector<8x4xf32>
    %134 = arith.addf %130, %133 : vector<8x4xf32>
    %c2_100 = arith.constant 2 : index
    %c0_101 = arith.constant 0 : index
    %c0_102 = arith.constant 0 : index
    %135 = vector.load %arg16[%c2_100, %c0_101, %c0_102] : memref<8x8x4xf32, #tpu.memory_space<vmem>>, vector<1x8x4xf32>
    %136 = vector.shape_cast %135 : vector<1x8x4xf32> to vector<8x4xf32>
    %137 = vector.shape_cast %134 : vector<8x4xf32> to vector<1x8x4xf32>
    tpu.vector_store %arg16[%c2_100, %c0_101, %c0_102], %137 {strides = array<i32>} : memref<8x8x4xf32, #tpu.memory_space<vmem>>, vector<1x8x4xf32>,
    %c2_103 = arith.constant 2 : index
    %c0_104 = arith.constant 0 : index
    %c0_105 = arith.constant 0 : index
    %138 = vector.load %arg13[%c2_103, %c0_104, %c0_105] : memref<8x8x1xf32, #tpu.memory_space<vmem>>, vector<1x8x1xf32>
    %139 = vector.shape_cast %138 : vector<1x8x1xf32> to vector<8x1xf32>
    %140 = vector.shape_cast %105 : vector<8x1xf32> to vector<1x8x1xf32>
    tpu.vector_store %arg13[%c2_103, %c0_104, %c0_105], %140 {strides = array<i32>} : memref<8x8x1xf32, #tpu.memory_space<vmem>>, vector<1x8x1xf32>,
    %c0_106 = arith.constant 0 : index
    %c12 = arith.constant 12 : index
    %141 = vector.load %arg12[%c0_106, %c12] : memref<8x32xf32, #tpu.memory_space<vmem>>, vector<8x4xf32>
    %142 = vector.extract_strided_slice %6 {offsets = [0, 12], sizes = [8, 4], strides = [1, 1]} : vector<8x32xf32> to vector<8x4xf32>
    %143 = vector.extract_strided_slice %8 {offsets = [0, 12], sizes = [8, 4], strides = [1, 1]} : vector<8x32xf32> to vector<8x4xf32>
    %cst_107 = arith.constant dense<0.000000e+00> : vector<8x8xf32>
    %144 = tpu.matmul %141, %142, %cst_107 {dimension_numbers = #tpu.dot_dimension_numbers<[1], [1], [0], [0], [0, 0, 1, 0], [], []>} : vector<8x4xf32>, vector<8x4xf32>, vector<8x8xf32> -> vector<8x8xf32>
    %c3 = arith.constant 3 : index
    %c0_108 = arith.constant 0 : index
    %c0_109 = arith.constant 0 : index
    %145 = vector.load %arg13[%c3, %c0_108, %c0_109] : memref<8x8x1xf32, #tpu.memory_space<vmem>>, vector<1x8x1xf32>
    %146 = vector.shape_cast %145 : vector<1x8x1xf32> to vector<8x1xf32>
    %cst_110 = arith.constant dense<0xFF800000> : vector<8xf32>
    %147 = vector.multi_reduction <maximumf>, %144, %cst_110 [1] : vector<8x8xf32> to vector<8xf32>
    %148 = vector.shape_cast %147 : vector<8xf32> to vector<8x1xf32>
    %149 = arith.maximumf %146, %148 : vector<8x1xf32>
    %150 = arith.subf %146, %149 : vector<8x1xf32>
    %151 = math.exp %150 : vector<8x1xf32>
    %152 = vector.broadcast %149 : vector<8x1xf32> to vector<8x8xf32>
    %153 = arith.subf %144, %152 : vector<8x8xf32>
    %154 = math.exp %153 : vector<8x8xf32>
    %c3_111 = arith.constant 3 : index
    %c0_112 = arith.constant 0 : index
    %c0_113 = arith.constant 0 : index
    %155 = vector.load %arg14[%c3_111, %c0_112, %c0_113] : memref<8x8x1xf32, #tpu.memory_space<vmem>>, vector<1x8x1xf32>
    %156 = vector.shape_cast %155 : vector<1x8x1xf32> to vector<8x1xf32>
    %157 = arith.mulf %151, %156 : vector<8x1xf32>
    %cst_114 = arith.constant dense<0.000000e+00> : vector<8xf32>
    %158 = vector.multi_reduction <add>, %154, %cst_114 [1] : vector<8x8xf32> to vector<8xf32>
    %159 = vector.shape_cast %158 : vector<8xf32> to vector<8x1xf32>
    %160 = arith.addf %157, %159 : vector<8x1xf32>
    %c3_115 = arith.constant 3 : index
    %c0_116 = arith.constant 0 : index
    %c0_117 = arith.constant 0 : index
    %161 = vector.load %arg14[%c3_115, %c0_116, %c0_117] : memref<8x8x1xf32, #tpu.memory_space<vmem>>, vector<1x8x1xf32>
    %162 = vector.shape_cast %161 : vector<1x8x1xf32> to vector<8x1xf32>
    %163 = vector.shape_cast %160 : vector<8x1xf32> to vector<1x8x1xf32>
    tpu.vector_store %arg14[%c3_115, %c0_116, %c0_117], %163 {strides = array<i32>} : memref<8x8x1xf32, #tpu.memory_space<vmem>>, vector<1x8x1xf32>,
    %c3_118 = arith.constant 3 : index
    %c0_119 = arith.constant 0 : index
    %c0_120 = arith.constant 0 : index
    %164 = vector.load %arg15[%c3_118, %c0_119, %c0_120] : memref<8x8x4xf32, #tpu.memory_space<vmem>>, vector<1x8x4xf32>
    %165 = vector.shape_cast %164 : vector<1x8x4xf32> to vector<8x4xf32>
    %166 = vector.broadcast %151 : vector<8x1xf32> to vector<8x4xf32>
    %167 = arith.mulf %166, %165 : vector<8x4xf32>
    %cst_121 = arith.constant dense<0.000000e+00> : vector<8x4xf32>
    %168 = tpu.matmul %154, %143, %cst_121 {dimension_numbers = #tpu.dot_dimension_numbers<[1], [0], [0], [1], [0, 0, 1, 1], [], []>} : vector<8x8xf32>, vector<8x4xf32>, vector<8x4xf32> -> vector<8x4xf32>
    %169 = arith.addf %167, %168 : vector<8x4xf32>
    %c3_122 = arith.constant 3 : index
    %c0_123 = arith.constant 0 : index
    %c0_124 = arith.constant 0 : index
    %170 = vector.load %arg15[%c3_122, %c0_123, %c0_124] : memref<8x8x4xf32, #tpu.memory_space<vmem>>, vector<1x8x4xf32>
    %171 = vector.shape_cast %170 : vector<1x8x4xf32> to vector<8x4xf32>
    %172 = vector.shape_cast %169 : vector<8x4xf32> to vector<1x8x4xf32>
    tpu.vector_store %arg15[%c3_122, %c0_123, %c0_124], %172 {strides = array<i32>} : memref<8x8x4xf32, #tpu.memory_space<vmem>>, vector<1x8x4xf32>,
    %c3_125 = arith.constant 3 : index
    %c0_126 = arith.constant 0 : index
    %c0_127 = arith.constant 0 : index
    %173 = vector.load %arg16[%c3_125, %c0_126, %c0_127] : memref<8x8x4xf32, #tpu.memory_space<vmem>>, vector<1x8x4xf32>
    %174 = vector.shape_cast %173 : vector<1x8x4xf32> to vector<8x4xf32>
    %c3_128 = arith.constant 3 : index
    %c0_129 = arith.constant 0 : index
    %c0_130 = arith.constant 0 : index
    %175 = vector.load %arg8[%c3_128, %c0_129, %c0_130] : memref<8x8x8xf32, #tpu.memory_space<vmem>>, vector<1x8x8xf32>
    %176 = vector.shape_cast %175 : vector<1x8x8xf32> to vector<8x8xf32>
    %cst_131 = arith.constant dense<0.000000e+00> : vector<8x4xf32>
    %177 = tpu.matmul %176, %143, %cst_131 {dimension_numbers = #tpu.dot_dimension_numbers<[1], [0], [0], [1], [0, 0, 1, 1], [], []>} : vector<8x8xf32>, vector<8x4xf32>, vector<8x4xf32> -> vector<8x4xf32>
    %178 = arith.addf %174, %177 : vector<8x4xf32>
    %c3_132 = arith.constant 3 : index
    %c0_133 = arith.constant 0 : index
    %c0_134 = arith.constant 0 : index
    %179 = vector.load %arg16[%c3_132, %c0_133, %c0_134] : memref<8x8x4xf32, #tpu.memory_space<vmem>>, vector<1x8x4xf32>
    %180 = vector.shape_cast %179 : vector<1x8x4xf32> to vector<8x4xf32>
    %181 = vector.shape_cast %178 : vector<8x4xf32> to vector<1x8x4xf32>
    tpu.vector_store %arg16[%c3_132, %c0_133, %c0_134], %181 {strides = array<i32>} : memref<8x8x4xf32, #tpu.memory_space<vmem>>, vector<1x8x4xf32>,
    %c3_135 = arith.constant 3 : index
    %c0_136 = arith.constant 0 : index
    %c0_137 = arith.constant 0 : index
    %182 = vector.load %arg13[%c3_135, %c0_136, %c0_137] : memref<8x8x1xf32, #tpu.memory_space<vmem>>, vector<1x8x1xf32>
    %183 = vector.shape_cast %182 : vector<1x8x1xf32> to vector<8x1xf32>
    %184 = vector.shape_cast %149 : vector<8x1xf32> to vector<1x8x1xf32>
    tpu.vector_store %arg13[%c3_135, %c0_136, %c0_137], %184 {strides = array<i32>} : memref<8x8x1xf32, #tpu.memory_space<vmem>>, vector<1x8x1xf32>,
    %c0_138 = arith.constant 0 : index
    %c16 = arith.constant 16 : index
    %185 = vector.load %arg12[%c0_138, %c16] : memref<8x32xf32, #tpu.memory_space<vmem>>, vector<8x4xf32>
    %186 = vector.extract_strided_slice %6 {offsets = [0, 16], sizes = [8, 4], strides = [1, 1]} : vector<8x32xf32> to vector<8x4xf32>
    %187 = vector.extract_strided_slice %8 {offsets = [0, 16], sizes = [8, 4], strides = [1, 1]} : vector<8x32xf32> to vector<8x4xf32>
    %cst_139 = arith.constant dense<0.000000e+00> : vector<8x8xf32>
    %188 = tpu.matmul %185, %186, %cst_139 {dimension_numbers = #tpu.dot_dimension_numbers<[1], [1], [0], [0], [0, 0, 1, 0], [], []>} : vector<8x4xf32>, vector<8x4xf32>, vector<8x8xf32> -> vector<8x8xf32>
    %c4_140 = arith.constant 4 : index
    %c0_141 = arith.constant 0 : index
    %c0_142 = arith.constant 0 : index
    %189 = vector.load %arg13[%c4_140, %c0_141, %c0_142] : memref<8x8x1xf32, #tpu.memory_space<vmem>>, vector<1x8x1xf32>
    %190 = vector.shape_cast %189 : vector<1x8x1xf32> to vector<8x1xf32>
    %cst_143 = arith.constant dense<0xFF800000> : vector<8xf32>
    %191 = vector.multi_reduction <maximumf>, %188, %cst_143 [1] : vector<8x8xf32> to vector<8xf32>
    %192 = vector.shape_cast %191 : vector<8xf32> to vector<8x1xf32>
    %193 = arith.maximumf %190, %192 : vector<8x1xf32>
    %194 = arith.subf %190, %193 : vector<8x1xf32>
    %195 = math.exp %194 : vector<8x1xf32>
    %196 = vector.broadcast %193 : vector<8x1xf32> to vector<8x8xf32>
    %197 = arith.subf %188, %196 : vector<8x8xf32>
    %198 = math.exp %197 : vector<8x8xf32>
    %c4_144 = arith.constant 4 : index
    %c0_145 = arith.constant 0 : index
    %c0_146 = arith.constant 0 : index
    %199 = vector.load %arg14[%c4_144, %c0_145, %c0_146] : memref<8x8x1xf32, #tpu.memory_space<vmem>>, vector<1x8x1xf32>
    %200 = vector.shape_cast %199 : vector<1x8x1xf32> to vector<8x1xf32>
    %201 = arith.mulf %195, %200 : vector<8x1xf32>
    %cst_147 = arith.constant dense<0.000000e+00> : vector<8xf32>
    %202 = vector.multi_reduction <add>, %198, %cst_147 [1] : vector<8x8xf32> to vector<8xf32>
    %203 = vector.shape_cast %202 : vector<8xf32> to vector<8x1xf32>
    %204 = arith.addf %201, %203 : vector<8x1xf32>
    %c4_148 = arith.constant 4 : index
    %c0_149 = arith.constant 0 : index
    %c0_150 = arith.constant 0 : index
    %205 = vector.load %arg14[%c4_148, %c0_149, %c0_150] : memref<8x8x1xf32, #tpu.memory_space<vmem>>, vector<1x8x1xf32>
    %206 = vector.shape_cast %205 : vector<1x8x1xf32> to vector<8x1xf32>
    %207 = vector.shape_cast %204 : vector<8x1xf32> to vector<1x8x1xf32>
    tpu.vector_store %arg14[%c4_148, %c0_149, %c0_150], %207 {strides = array<i32>} : memref<8x8x1xf32, #tpu.memory_space<vmem>>, vector<1x8x1xf32>,
    %c4_151 = arith.constant 4 : index
    %c0_152 = arith.constant 0 : index
    %c0_153 = arith.constant 0 : index
    %208 = vector.load %arg15[%c4_151, %c0_152, %c0_153] : memref<8x8x4xf32, #tpu.memory_space<vmem>>, vector<1x8x4xf32>
    %209 = vector.shape_cast %208 : vector<1x8x4xf32> to vector<8x4xf32>
    %210 = vector.broadcast %195 : vector<8x1xf32> to vector<8x4xf32>
    %211 = arith.mulf %210, %209 : vector<8x4xf32>
    %cst_154 = arith.constant dense<0.000000e+00> : vector<8x4xf32>
    %212 = tpu.matmul %198, %187, %cst_154 {dimension_numbers = #tpu.dot_dimension_numbers<[1], [0], [0], [1], [0, 0, 1, 1], [], []>} : vector<8x8xf32>, vector<8x4xf32>, vector<8x4xf32> -> vector<8x4xf32>
    %213 = arith.addf %211, %212 : vector<8x4xf32>
    %c4_155 = arith.constant 4 : index
    %c0_156 = arith.constant 0 : index
    %c0_157 = arith.constant 0 : index
    %214 = vector.load %arg15[%c4_155, %c0_156, %c0_157] : memref<8x8x4xf32, #tpu.memory_space<vmem>>, vector<1x8x4xf32>
    %215 = vector.shape_cast %214 : vector<1x8x4xf32> to vector<8x4xf32>
    %216 = vector.shape_cast %213 : vector<8x4xf32> to vector<1x8x4xf32>
    tpu.vector_store %arg15[%c4_155, %c0_156, %c0_157], %216 {strides = array<i32>} : memref<8x8x4xf32, #tpu.memory_space<vmem>>, vector<1x8x4xf32>,
    %c4_158 = arith.constant 4 : index
    %c0_159 = arith.constant 0 : index
    %c0_160 = arith.constant 0 : index
    %217 = vector.load %arg16[%c4_158, %c0_159, %c0_160] : memref<8x8x4xf32, #tpu.memory_space<vmem>>, vector<1x8x4xf32>
    %218 = vector.shape_cast %217 : vector<1x8x4xf32> to vector<8x4xf32>
    %c4_161 = arith.constant 4 : index
    %c0_162 = arith.constant 0 : index
    %c0_163 = arith.constant 0 : index
    %219 = vector.load %arg8[%c4_161, %c0_162, %c0_163] : memref<8x8x8xf32, #tpu.memory_space<vmem>>, vector<1x8x8xf32>
    %220 = vector.shape_cast %219 : vector<1x8x8xf32> to vector<8x8xf32>
    %cst_164 = arith.constant dense<0.000000e+00> : vector<8x4xf32>
    %221 = tpu.matmul %220, %187, %cst_164 {dimension_numbers = #tpu.dot_dimension_numbers<[1], [0], [0], [1], [0, 0, 1, 1], [], []>} : vector<8x8xf32>, vector<8x4xf32>, vector<8x4xf32> -> vector<8x4xf32>
    %222 = arith.addf %218, %221 : vector<8x4xf32>
    %c4_165 = arith.constant 4 : index
    %c0_166 = arith.constant 0 : index
    %c0_167 = arith.constant 0 : index
    %223 = vector.load %arg16[%c4_165, %c0_166, %c0_167] : memref<8x8x4xf32, #tpu.memory_space<vmem>>, vector<1x8x4xf32>
    %224 = vector.shape_cast %223 : vector<1x8x4xf32> to vector<8x4xf32>
    %225 = vector.shape_cast %222 : vector<8x4xf32> to vector<1x8x4xf32>
    tpu.vector_store %arg16[%c4_165, %c0_166, %c0_167], %225 {strides = array<i32>} : memref<8x8x4xf32, #tpu.memory_space<vmem>>, vector<1x8x4xf32>,
    %c4_168 = arith.constant 4 : index
    %c0_169 = arith.constant 0 : index
    %c0_170 = arith.constant 0 : index
    %226 = vector.load %arg13[%c4_168, %c0_169, %c0_170] : memref<8x8x1xf32, #tpu.memory_space<vmem>>, vector<1x8x1xf32>
    %227 = vector.shape_cast %226 : vector<1x8x1xf32> to vector<8x1xf32>
    %228 = vector.shape_cast %193 : vector<8x1xf32> to vector<1x8x1xf32>
    tpu.vector_store %arg13[%c4_168, %c0_169, %c0_170], %228 {strides = array<i32>} : memref<8x8x1xf32, #tpu.memory_space<vmem>>, vector<1x8x1xf32>,
    %c0_171 = arith.constant 0 : index
    %c20 = arith.constant 20 : index
    %229 = vector.load %arg12[%c0_171, %c20] : memref<8x32xf32, #tpu.memory_space<vmem>>, vector<8x4xf32>
    %230 = vector.extract_strided_slice %6 {offsets = [0, 20], sizes = [8, 4], strides = [1, 1]} : vector<8x32xf32> to vector<8x4xf32>
    %231 = vector.extract_strided_slice %8 {offsets = [0, 20], sizes = [8, 4], strides = [1, 1]} : vector<8x32xf32> to vector<8x4xf32>
    %cst_172 = arith.constant dense<0.000000e+00> : vector<8x8xf32>
    %232 = tpu.matmul %229, %230, %cst_172 {dimension_numbers = #tpu.dot_dimension_numbers<[1], [1], [0], [0], [0, 0, 1, 0], [], []>} : vector<8x4xf32>, vector<8x4xf32>, vector<8x8xf32> -> vector<8x8xf32>
    %c5 = arith.constant 5 : index
    %c0_173 = arith.constant 0 : index
    %c0_174 = arith.constant 0 : index
    %233 = vector.load %arg13[%c5, %c0_173, %c0_174] : memref<8x8x1xf32, #tpu.memory_space<vmem>>, vector<1x8x1xf32>
    %234 = vector.shape_cast %233 : vector<1x8x1xf32> to vector<8x1xf32>
    %cst_175 = arith.constant dense<0xFF800000> : vector<8xf32>
    %235 = vector.multi_reduction <maximumf>, %232, %cst_175 [1] : vector<8x8xf32> to vector<8xf32>
    %236 = vector.shape_cast %235 : vector<8xf32> to vector<8x1xf32>
    %237 = arith.maximumf %234, %236 : vector<8x1xf32>
    %238 = arith.subf %234, %237 : vector<8x1xf32>
    %239 = math.exp %238 : vector<8x1xf32>
    %240 = vector.broadcast %237 : vector<8x1xf32> to vector<8x8xf32>
    %241 = arith.subf %232, %240 : vector<8x8xf32>
    %242 = math.exp %241 : vector<8x8xf32>
    %c5_176 = arith.constant 5 : index
    %c0_177 = arith.constant 0 : index
    %c0_178 = arith.constant 0 : index
    %243 = vector.load %arg14[%c5_176, %c0_177, %c0_178] : memref<8x8x1xf32, #tpu.memory_space<vmem>>, vector<1x8x1xf32>
    %244 = vector.shape_cast %243 : vector<1x8x1xf32> to vector<8x1xf32>
    %245 = arith.mulf %239, %244 : vector<8x1xf32>
    %cst_179 = arith.constant dense<0.000000e+00> : vector<8xf32>
    %246 = vector.multi_reduction <add>, %242, %cst_179 [1] : vector<8x8xf32> to vector<8xf32>
    %247 = vector.shape_cast %246 : vector<8xf32> to vector<8x1xf32>
    %248 = arith.addf %245, %247 : vector<8x1xf32>
    %c5_180 = arith.constant 5 : index
    %c0_181 = arith.constant 0 : index
    %c0_182 = arith.constant 0 : index
    %249 = vector.load %arg14[%c5_180, %c0_181, %c0_182] : memref<8x8x1xf32, #tpu.memory_space<vmem>>, vector<1x8x1xf32>
    %250 = vector.shape_cast %249 : vector<1x8x1xf32> to vector<8x1xf32>
    %251 = vector.shape_cast %248 : vector<8x1xf32> to vector<1x8x1xf32>
    tpu.vector_store %arg14[%c5_180, %c0_181, %c0_182], %251 {strides = array<i32>} : memref<8x8x1xf32, #tpu.memory_space<vmem>>, vector<1x8x1xf32>,
    %c5_183 = arith.constant 5 : index
    %c0_184 = arith.constant 0 : index
    %c0_185 = arith.constant 0 : index
    %252 = vector.load %arg15[%c5_183, %c0_184, %c0_185] : memref<8x8x4xf32, #tpu.memory_space<vmem>>, vector<1x8x4xf32>
    %253 = vector.shape_cast %252 : vector<1x8x4xf32> to vector<8x4xf32>
    %254 = vector.broadcast %239 : vector<8x1xf32> to vector<8x4xf32>
    %255 = arith.mulf %254, %253 : vector<8x4xf32>
    %cst_186 = arith.constant dense<0.000000e+00> : vector<8x4xf32>
    %256 = tpu.matmul %242, %231, %cst_186 {dimension_numbers = #tpu.dot_dimension_numbers<[1], [0], [0], [1], [0, 0, 1, 1], [], []>} : vector<8x8xf32>, vector<8x4xf32>, vector<8x4xf32> -> vector<8x4xf32>
    %257 = arith.addf %255, %256 : vector<8x4xf32>
    %c5_187 = arith.constant 5 : index
    %c0_188 = arith.constant 0 : index
    %c0_189 = arith.constant 0 : index
    %258 = vector.load %arg15[%c5_187, %c0_188, %c0_189] : memref<8x8x4xf32, #tpu.memory_space<vmem>>, vector<1x8x4xf32>
    %259 = vector.shape_cast %258 : vector<1x8x4xf32> to vector<8x4xf32>
    %260 = vector.shape_cast %257 : vector<8x4xf32> to vector<1x8x4xf32>
    tpu.vector_store %arg15[%c5_187, %c0_188, %c0_189], %260 {strides = array<i32>} : memref<8x8x4xf32, #tpu.memory_space<vmem>>, vector<1x8x4xf32>,
    %c5_190 = arith.constant 5 : index
    %c0_191 = arith.constant 0 : index
    %c0_192 = arith.constant 0 : index
    %261 = vector.load %arg16[%c5_190, %c0_191, %c0_192] : memref<8x8x4xf32, #tpu.memory_space<vmem>>, vector<1x8x4xf32>
    %262 = vector.shape_cast %261 : vector<1x8x4xf32> to vector<8x4xf32>
    %c5_193 = arith.constant 5 : index
    %c0_194 = arith.constant 0 : index
    %c0_195 = arith.constant 0 : index
    %263 = vector.load %arg8[%c5_193, %c0_194, %c0_195] : memref<8x8x8xf32, #tpu.memory_space<vmem>>, vector<1x8x8xf32>
    %264 = vector.shape_cast %263 : vector<1x8x8xf32> to vector<8x8xf32>
    %cst_196 = arith.constant dense<0.000000e+00> : vector<8x4xf32>
    %265 = tpu.matmul %264, %231, %cst_196 {dimension_numbers = #tpu.dot_dimension_numbers<[1], [0], [0], [1], [0, 0, 1, 1], [], []>} : vector<8x8xf32>, vector<8x4xf32>, vector<8x4xf32> -> vector<8x4xf32>
    %266 = arith.addf %262, %265 : vector<8x4xf32>
    %c5_197 = arith.constant 5 : index
    %c0_198 = arith.constant 0 : index
    %c0_199 = arith.constant 0 : index
    %267 = vector.load %arg16[%c5_197, %c0_198, %c0_199] : memref<8x8x4xf32, #tpu.memory_space<vmem>>, vector<1x8x4xf32>
    %268 = vector.shape_cast %267 : vector<1x8x4xf32> to vector<8x4xf32>
    %269 = vector.shape_cast %266 : vector<8x4xf32> to vector<1x8x4xf32>
    tpu.vector_store %arg16[%c5_197, %c0_198, %c0_199], %269 {strides = array<i32>} : memref<8x8x4xf32, #tpu.memory_space<vmem>>, vector<1x8x4xf32>,
    %c5_200 = arith.constant 5 : index
    %c0_201 = arith.constant 0 : index
    %c0_202 = arith.constant 0 : index
    %270 = vector.load %arg13[%c5_200, %c0_201, %c0_202] : memref<8x8x1xf32, #tpu.memory_space<vmem>>, vector<1x8x1xf32>
    %271 = vector.shape_cast %270 : vector<1x8x1xf32> to vector<8x1xf32>
    %272 = vector.shape_cast %237 : vector<8x1xf32> to vector<1x8x1xf32>
    tpu.vector_store %arg13[%c5_200, %c0_201, %c0_202], %272 {strides = array<i32>} : memref<8x8x1xf32, #tpu.memory_space<vmem>>, vector<1x8x1xf32>,
    %c0_203 = arith.constant 0 : index
    %c24 = arith.constant 24 : index
    %273 = vector.load %arg12[%c0_203, %c24] : memref<8x32xf32, #tpu.memory_space<vmem>>, vector<8x4xf32>
    %274 = vector.extract_strided_slice %6 {offsets = [0, 24], sizes = [8, 4], strides = [1, 1]} : vector<8x32xf32> to vector<8x4xf32>
    %275 = vector.extract_strided_slice %8 {offsets = [0, 24], sizes = [8, 4], strides = [1, 1]} : vector<8x32xf32> to vector<8x4xf32>
    %cst_204 = arith.constant dense<0.000000e+00> : vector<8x8xf32>
    %276 = tpu.matmul %273, %274, %cst_204 {dimension_numbers = #tpu.dot_dimension_numbers<[1], [1], [0], [0], [0, 0, 1, 0], [], []>} : vector<8x4xf32>, vector<8x4xf32>, vector<8x8xf32> -> vector<8x8xf32>
    %c6 = arith.constant 6 : index
    %c0_205 = arith.constant 0 : index
    %c0_206 = arith.constant 0 : index
    %277 = vector.load %arg13[%c6, %c0_205, %c0_206] : memref<8x8x1xf32, #tpu.memory_space<vmem>>, vector<1x8x1xf32>
    %278 = vector.shape_cast %277 : vector<1x8x1xf32> to vector<8x1xf32>
    %cst_207 = arith.constant dense<0xFF800000> : vector<8xf32>
    %279 = vector.multi_reduction <maximumf>, %276, %cst_207 [1] : vector<8x8xf32> to vector<8xf32>
    %280 = vector.shape_cast %279 : vector<8xf32> to vector<8x1xf32>
    %281 = arith.maximumf %278, %280 : vector<8x1xf32>
    %282 = arith.subf %278, %281 : vector<8x1xf32>
    %283 = math.exp %282 : vector<8x1xf32>
    %284 = vector.broadcast %281 : vector<8x1xf32> to vector<8x8xf32>
    %285 = arith.subf %276, %284 : vector<8x8xf32>
    %286 = math.exp %285 : vector<8x8xf32>
    %c6_208 = arith.constant 6 : index
    %c0_209 = arith.constant 0 : index
    %c0_210 = arith.constant 0 : index
    %287 = vector.load %arg14[%c6_208, %c0_209, %c0_210] : memref<8x8x1xf32, #tpu.memory_space<vmem>>, vector<1x8x1xf32>
    %288 = vector.shape_cast %287 : vector<1x8x1xf32> to vector<8x1xf32>
    %289 = arith.mulf %283, %288 : vector<8x1xf32>
    %cst_211 = arith.constant dense<0.000000e+00> : vector<8xf32>
    %290 = vector.multi_reduction <add>, %286, %cst_211 [1] : vector<8x8xf32> to vector<8xf32>
    %291 = vector.shape_cast %290 : vector<8xf32> to vector<8x1xf32>
    %292 = arith.addf %289, %291 : vector<8x1xf32>
    %c6_212 = arith.constant 6 : index
    %c0_213 = arith.constant 0 : index
    %c0_214 = arith.constant 0 : index
    %293 = vector.load %arg14[%c6_212, %c0_213, %c0_214] : memref<8x8x1xf32, #tpu.memory_space<vmem>>, vector<1x8x1xf32>
    %294 = vector.shape_cast %293 : vector<1x8x1xf32> to vector<8x1xf32>
    %295 = vector.shape_cast %292 : vector<8x1xf32> to vector<1x8x1xf32>
    tpu.vector_store %arg14[%c6_212, %c0_213, %c0_214], %295 {strides = array<i32>} : memref<8x8x1xf32, #tpu.memory_space<vmem>>, vector<1x8x1xf32>,
    %c6_215 = arith.constant 6 : index
    %c0_216 = arith.constant 0 : index
    %c0_217 = arith.constant 0 : index
    %296 = vector.load %arg15[%c6_215, %c0_216, %c0_217] : memref<8x8x4xf32, #tpu.memory_space<vmem>>, vector<1x8x4xf32>
    %297 = vector.shape_cast %296 : vector<1x8x4xf32> to vector<8x4xf32>
    %298 = vector.broadcast %283 : vector<8x1xf32> to vector<8x4xf32>
    %299 = arith.mulf %298, %297 : vector<8x4xf32>
    %cst_218 = arith.constant dense<0.000000e+00> : vector<8x4xf32>
    %300 = tpu.matmul %286, %275, %cst_218 {dimension_numbers = #tpu.dot_dimension_numbers<[1], [0], [0], [1], [0, 0, 1, 1], [], []>} : vector<8x8xf32>, vector<8x4xf32>, vector<8x4xf32> -> vector<8x4xf32>
    %301 = arith.addf %299, %300 : vector<8x4xf32>
    %c6_219 = arith.constant 6 : index
    %c0_220 = arith.constant 0 : index
    %c0_221 = arith.constant 0 : index
    %302 = vector.load %arg15[%c6_219, %c0_220, %c0_221] : memref<8x8x4xf32, #tpu.memory_space<vmem>>, vector<1x8x4xf32>
    %303 = vector.shape_cast %302 : vector<1x8x4xf32> to vector<8x4xf32>
    %304 = vector.shape_cast %301 : vector<8x4xf32> to vector<1x8x4xf32>
    tpu.vector_store %arg15[%c6_219, %c0_220, %c0_221], %304 {strides = array<i32>} : memref<8x8x4xf32, #tpu.memory_space<vmem>>, vector<1x8x4xf32>,
    %c6_222 = arith.constant 6 : index
    %c0_223 = arith.constant 0 : index
    %c0_224 = arith.constant 0 : index
    %305 = vector.load %arg16[%c6_222, %c0_223, %c0_224] : memref<8x8x4xf32, #tpu.memory_space<vmem>>, vector<1x8x4xf32>
    %306 = vector.shape_cast %305 : vector<1x8x4xf32> to vector<8x4xf32>
    %c6_225 = arith.constant 6 : index
    %c0_226 = arith.constant 0 : index
    %c0_227 = arith.constant 0 : index
    %307 = vector.load %arg8[%c6_225, %c0_226, %c0_227] : memref<8x8x8xf32, #tpu.memory_space<vmem>>, vector<1x8x8xf32>
    %308 = vector.shape_cast %307 : vector<1x8x8xf32> to vector<8x8xf32>
    %cst_228 = arith.constant dense<0.000000e+00> : vector<8x4xf32>
    %309 = tpu.matmul %308, %275, %cst_228 {dimension_numbers = #tpu.dot_dimension_numbers<[1], [0], [0], [1], [0, 0, 1, 1], [], []>} : vector<8x8xf32>, vector<8x4xf32>, vector<8x4xf32> -> vector<8x4xf32>
    %310 = arith.addf %306, %309 : vector<8x4xf32>
    %c6_229 = arith.constant 6 : index
    %c0_230 = arith.constant 0 : index
    %c0_231 = arith.constant 0 : index
    %311 = vector.load %arg16[%c6_229, %c0_230, %c0_231] : memref<8x8x4xf32, #tpu.memory_space<vmem>>, vector<1x8x4xf32>
    %312 = vector.shape_cast %311 : vector<1x8x4xf32> to vector<8x4xf32>
    %313 = vector.shape_cast %310 : vector<8x4xf32> to vector<1x8x4xf32>
    tpu.vector_store %arg16[%c6_229, %c0_230, %c0_231], %313 {strides = array<i32>} : memref<8x8x4xf32, #tpu.memory_space<vmem>>, vector<1x8x4xf32>,
    %c6_232 = arith.constant 6 : index
    %c0_233 = arith.constant 0 : index
    %c0_234 = arith.constant 0 : index
    %314 = vector.load %arg13[%c6_232, %c0_233, %c0_234] : memref<8x8x1xf32, #tpu.memory_space<vmem>>, vector<1x8x1xf32>
    %315 = vector.shape_cast %314 : vector<1x8x1xf32> to vector<8x1xf32>
    %316 = vector.shape_cast %281 : vector<8x1xf32> to vector<1x8x1xf32>
    tpu.vector_store %arg13[%c6_232, %c0_233, %c0_234], %316 {strides = array<i32>} : memref<8x8x1xf32, #tpu.memory_space<vmem>>, vector<1x8x1xf32>,
    %c0_235 = arith.constant 0 : index
    %c28 = arith.constant 28 : index
    %317 = vector.load %arg12[%c0_235, %c28] : memref<8x32xf32, #tpu.memory_space<vmem>>, vector<8x4xf32>
    %318 = vector.extract_strided_slice %6 {offsets = [0, 28], sizes = [8, 4], strides = [1, 1]} : vector<8x32xf32> to vector<8x4xf32>
    %319 = vector.extract_strided_slice %8 {offsets = [0, 28], sizes = [8, 4], strides = [1, 1]} : vector<8x32xf32> to vector<8x4xf32>
    %cst_236 = arith.constant dense<0.000000e+00> : vector<8x8xf32>
    %320 = tpu.matmul %317, %318, %cst_236 {dimension_numbers = #tpu.dot_dimension_numbers<[1], [1], [0], [0], [0, 0, 1, 0], [], []>} : vector<8x4xf32>, vector<8x4xf32>, vector<8x8xf32> -> vector<8x8xf32>
    %c7 = arith.constant 7 : index
    %c0_237 = arith.constant 0 : index
    %c0_238 = arith.constant 0 : index
    %321 = vector.load %arg13[%c7, %c0_237, %c0_238] : memref<8x8x1xf32, #tpu.memory_space<vmem>>, vector<1x8x1xf32>
    %322 = vector.shape_cast %321 : vector<1x8x1xf32> to vector<8x1xf32>
    %cst_239 = arith.constant dense<0xFF800000> : vector<8xf32>
    %323 = vector.multi_reduction <maximumf>, %320, %cst_239 [1] : vector<8x8xf32> to vector<8xf32>
    %324 = vector.shape_cast %323 : vector<8xf32> to vector<8x1xf32>
    %325 = arith.maximumf %322, %324 : vector<8x1xf32>
    %326 = arith.subf %322, %325 : vector<8x1xf32>
    %327 = math.exp %326 : vector<8x1xf32>
    %328 = vector.broadcast %325 : vector<8x1xf32> to vector<8x8xf32>
    %329 = arith.subf %320, %328 : vector<8x8xf32>
    %330 = math.exp %329 : vector<8x8xf32>
    %c7_240 = arith.constant 7 : index
    %c0_241 = arith.constant 0 : index
    %c0_242 = arith.constant 0 : index
    %331 = vector.load %arg14[%c7_240, %c0_241, %c0_242] : memref<8x8x1xf32, #tpu.memory_space<vmem>>, vector<1x8x1xf32>
    %332 = vector.shape_cast %331 : vector<1x8x1xf32> to vector<8x1xf32>
    %333 = arith.mulf %327, %332 : vector<8x1xf32>
    %cst_243 = arith.constant dense<0.000000e+00> : vector<8xf32>
    %334 = vector.multi_reduction <add>, %330, %cst_243 [1] : vector<8x8xf32> to vector<8xf32>
    %335 = vector.shape_cast %334 : vector<8xf32> to vector<8x1xf32>
    %336 = arith.addf %333, %335 : vector<8x1xf32>
    %c7_244 = arith.constant 7 : index
    %c0_245 = arith.constant 0 : index
    %c0_246 = arith.constant 0 : index
    %337 = vector.load %arg14[%c7_244, %c0_245, %c0_246] : memref<8x8x1xf32, #tpu.memory_space<vmem>>, vector<1x8x1xf32>
    %338 = vector.shape_cast %337 : vector<1x8x1xf32> to vector<8x1xf32>
    %339 = vector.shape_cast %336 : vector<8x1xf32> to vector<1x8x1xf32>
    tpu.vector_store %arg14[%c7_244, %c0_245, %c0_246], %339 {strides = array<i32>} : memref<8x8x1xf32, #tpu.memory_space<vmem>>, vector<1x8x1xf32>,
    %c7_247 = arith.constant 7 : index
    %c0_248 = arith.constant 0 : index
    %c0_249 = arith.constant 0 : index
    %340 = vector.load %arg15[%c7_247, %c0_248, %c0_249] : memref<8x8x4xf32, #tpu.memory_space<vmem>>, vector<1x8x4xf32>
    %341 = vector.shape_cast %340 : vector<1x8x4xf32> to vector<8x4xf32>
    %342 = vector.broadcast %327 : vector<8x1xf32> to vector<8x4xf32>
    %343 = arith.mulf %342, %341 : vector<8x4xf32>
    %cst_250 = arith.constant dense<0.000000e+00> : vector<8x4xf32>
    %344 = tpu.matmul %330, %319, %cst_250 {dimension_numbers = #tpu.dot_dimension_numbers<[1], [0], [0], [1], [0, 0, 1, 1], [], []>} : vector<8x8xf32>, vector<8x4xf32>, vector<8x4xf32> -> vector<8x4xf32>
    %345 = arith.addf %343, %344 : vector<8x4xf32>
    %c7_251 = arith.constant 7 : index
    %c0_252 = arith.constant 0 : index
    %c0_253 = arith.constant 0 : index
    %346 = vector.load %arg15[%c7_251, %c0_252, %c0_253] : memref<8x8x4xf32, #tpu.memory_space<vmem>>, vector<1x8x4xf32>
    %347 = vector.shape_cast %346 : vector<1x8x4xf32> to vector<8x4xf32>
    %348 = vector.shape_cast %345 : vector<8x4xf32> to vector<1x8x4xf32>
    tpu.vector_store %arg15[%c7_251, %c0_252, %c0_253], %348 {strides = array<i32>} : memref<8x8x4xf32, #tpu.memory_space<vmem>>, vector<1x8x4xf32>,
    %c7_254 = arith.constant 7 : index
    %c0_255 = arith.constant 0 : index
    %c0_256 = arith.constant 0 : index
    %349 = vector.load %arg16[%c7_254, %c0_255, %c0_256] : memref<8x8x4xf32, #tpu.memory_space<vmem>>, vector<1x8x4xf32>
    %350 = vector.shape_cast %349 : vector<1x8x4xf32> to vector<8x4xf32>
    %c7_257 = arith.constant 7 : index
    %c0_258 = arith.constant 0 : index
    %c0_259 = arith.constant 0 : index
    %351 = vector.load %arg8[%c7_257, %c0_258, %c0_259] : memref<8x8x8xf32, #tpu.memory_space<vmem>>, vector<1x8x8xf32>
    %352 = vector.shape_cast %351 : vector<1x8x8xf32> to vector<8x8xf32>
    %cst_260 = arith.constant dense<0.000000e+00> : vector<8x4xf32>
    %353 = tpu.matmul %352, %319, %cst_260 {dimension_numbers = #tpu.dot_dimension_numbers<[1], [0], [0], [1], [0, 0, 1, 1], [], []>} : vector<8x8xf32>, vector<8x4xf32>, vector<8x4xf32> -> vector<8x4xf32>
    %354 = arith.addf %350, %353 : vector<8x4xf32>
    %c7_261 = arith.constant 7 : index
    %c0_262 = arith.constant 0 : index
    %c0_263 = arith.constant 0 : index
    %355 = vector.load %arg16[%c7_261, %c0_262, %c0_263] : memref<8x8x4xf32, #tpu.memory_space<vmem>>, vector<1x8x4xf32>
    %356 = vector.shape_cast %355 : vector<1x8x4xf32> to vector<8x4xf32>
    %357 = vector.shape_cast %354 : vector<8x4xf32> to vector<1x8x4xf32>
    tpu.vector_store %arg16[%c7_261, %c0_262, %c0_263], %357 {strides = array<i32>} : memref<8x8x4xf32, #tpu.memory_space<vmem>>, vector<1x8x4xf32>,
    %c7_264 = arith.constant 7 : index
    %c0_265 = arith.constant 0 : index
    %c0_266 = arith.constant 0 : index
    %358 = vector.load %arg13[%c7_264, %c0_265, %c0_266] : memref<8x8x1xf32, #tpu.memory_space<vmem>>, vector<1x8x1xf32>
    %359 = vector.shape_cast %358 : vector<1x8x1xf32> to vector<8x1xf32>
    %360 = vector.shape_cast %325 : vector<8x1xf32> to vector<1x8x1xf32>
    tpu.vector_store %arg13[%c7_264, %c0_265, %c0_266], %360 {strides = array<i32>} : memref<8x8x1xf32, #tpu.memory_space<vmem>>, vector<1x8x1xf32>,
    %c0_i32_267 = arith.constant 0 : i32
    %361 = arith.cmpi eq, %arg2, %c0_i32_267 : i32
    %362 = arith.extui %361 : i1 to i32
    %c0_i32_268 = arith.constant 0 : i32
    %363 = arith.cmpi ne, %362, %c0_i32_268 : i32
    scf.if %363 {
      %c0_269 = arith.constant 0 : index
      %c0_270 = arith.constant 0 : index
      %c0_271 = arith.constant 0 : index
      %364 = vector.load %arg14[%c0_269, %c0_270, %c0_271] : memref<8x8x1xf32, #tpu.memory_space<vmem>>, vector<1x8x1xf32>
      %365 = vector.shape_cast %364 : vector<1x8x1xf32> to vector<8x1xf32>
      %cst_272 = arith.constant 1.000000e+00 : f32
      %366 = vector.broadcast %cst_272 : f32 to vector<8x1xf32>
      %367 = arith.divf %366, %365 : vector<8x1xf32>
      %c0_273 = arith.constant 0 : index
      %c0_274 = arith.constant 0 : index
      %c0_275 = arith.constant 0 : index
      %368 = vector.load %arg15[%c0_273, %c0_274, %c0_275] : memref<8x8x4xf32, #tpu.memory_space<vmem>>, vector<1x8x4xf32>
      %369 = vector.shape_cast %368 : vector<1x8x4xf32> to vector<8x4xf32>
      %370 = vector.broadcast %367 : vector<8x1xf32> to vector<8x4xf32>
      %371 = arith.mulf %369, %370 : vector<8x4xf32>
      %c0_276 = arith.constant 0 : index
      %c0_277 = arith.constant 0 : index
      %c0_278 = arith.constant 0 : index
      %372 = vector.load %arg16[%c0_276, %c0_277, %c0_278] : memref<8x8x4xf32, #tpu.memory_space<vmem>>, vector<1x8x4xf32>
      %373 = vector.shape_cast %372 : vector<1x8x4xf32> to vector<8x4xf32>
      %374 = arith.addf %371, %373 : vector<8x4xf32>
      %c0_279 = arith.constant 0 : index
      %c0_280 = arith.constant 0 : index
      %375 = vector.load %arg17[%c0_279, %c0_280] : memref<8x32xf32, #tpu.memory_space<vmem>>, vector<8x4xf32>
      tpu.vector_store %arg17[%c0_279, %c0_280], %374 {strides = array<i32>} : memref<8x32xf32, #tpu.memory_space<vmem>>, vector<8x4xf32>,
      %c1_281 = arith.constant 1 : index
      %c0_282 = arith.constant 0 : index
      %c0_283 = arith.constant 0 : index
      %376 = vector.load %arg14[%c1_281, %c0_282, %c0_283] : memref<8x8x1xf32, #tpu.memory_space<vmem>>, vector<1x8x1xf32>
      %377 = vector.shape_cast %376 : vector<1x8x1xf32> to vector<8x1xf32>
      %cst_284 = arith.constant 1.000000e+00 : f32
      %378 = vector.broadcast %cst_284 : f32 to vector<8x1xf32>
      %379 = arith.divf %378, %377 : vector<8x1xf32>
      %c1_285 = arith.constant 1 : index
      %c0_286 = arith.constant 0 : index
      %c0_287 = arith.constant 0 : index
      %380 = vector.load %arg15[%c1_285, %c0_286, %c0_287] : memref<8x8x4xf32, #tpu.memory_space<vmem>>, vector<1x8x4xf32>
      %381 = vector.shape_cast %380 : vector<1x8x4xf32> to vector<8x4xf32>
      %382 = vector.broadcast %379 : vector<8x1xf32> to vector<8x4xf32>
      %383 = arith.mulf %381, %382 : vector<8x4xf32>
      %c1_288 = arith.constant 1 : index
      %c0_289 = arith.constant 0 : index
      %c0_290 = arith.constant 0 : index
      %384 = vector.load %arg16[%c1_288, %c0_289, %c0_290] : memref<8x8x4xf32, #tpu.memory_space<vmem>>, vector<1x8x4xf32>
      %385 = vector.shape_cast %384 : vector<1x8x4xf32> to vector<8x4xf32>
      %386 = arith.addf %383, %385 : vector<8x4xf32>
      %c0_291 = arith.constant 0 : index
      %c4_292 = arith.constant 4 : index
      %387 = vector.load %arg17[%c0_291, %c4_292] : memref<8x32xf32, #tpu.memory_space<vmem>>, vector<8x4xf32>
      tpu.vector_store %arg17[%c0_291, %c4_292], %386 {strides = array<i32>} : memref<8x32xf32, #tpu.memory_space<vmem>>, vector<8x4xf32>,
      %c2_293 = arith.constant 2 : index
      %c0_294 = arith.constant 0 : index
      %c0_295 = arith.constant 0 : index
      %388 = vector.load %arg14[%c2_293, %c0_294, %c0_295] : memref<8x8x1xf32, #tpu.memory_space<vmem>>, vector<1x8x1xf32>
      %389 = vector.shape_cast %388 : vector<1x8x1xf32> to vector<8x1xf32>
      %cst_296 = arith.constant 1.000000e+00 : f32
      %390 = vector.broadcast %cst_296 : f32 to vector<8x1xf32>
      %391 = arith.divf %390, %389 : vector<8x1xf32>
      %c2_297 = arith.constant 2 : index
      %c0_298 = arith.constant 0 : index
      %c0_299 = arith.constant 0 : index
      %392 = vector.load %arg15[%c2_297, %c0_298, %c0_299] : memref<8x8x4xf32, #tpu.memory_space<vmem>>, vector<1x8x4xf32>
      %393 = vector.shape_cast %392 : vector<1x8x4xf32> to vector<8x4xf32>
      %394 = vector.broadcast %391 : vector<8x1xf32> to vector<8x4xf32>
      %395 = arith.mulf %393, %394 : vector<8x4xf32>
      %c2_300 = arith.constant 2 : index
      %c0_301 = arith.constant 0 : index
      %c0_302 = arith.constant 0 : index
      %396 = vector.load %arg16[%c2_300, %c0_301, %c0_302] : memref<8x8x4xf32, #tpu.memory_space<vmem>>, vector<1x8x4xf32>
      %397 = vector.shape_cast %396 : vector<1x8x4xf32> to vector<8x4xf32>
      %398 = arith.addf %395, %397 : vector<8x4xf32>
      %c0_303 = arith.constant 0 : index
      %c8_304 = arith.constant 8 : index
      %399 = vector.load %arg17[%c0_303, %c8_304] : memref<8x32xf32, #tpu.memory_space<vmem>>, vector<8x4xf32>
      tpu.vector_store %arg17[%c0_303, %c8_304], %398 {strides = array<i32>} : memref<8x32xf32, #tpu.memory_space<vmem>>, vector<8x4xf32>,
      %c3_305 = arith.constant 3 : index
      %c0_306 = arith.constant 0 : index
      %c0_307 = arith.constant 0 : index
      %400 = vector.load %arg14[%c3_305, %c0_306, %c0_307] : memref<8x8x1xf32, #tpu.memory_space<vmem>>, vector<1x8x1xf32>
      %401 = vector.shape_cast %400 : vector<1x8x1xf32> to vector<8x1xf32>
      %cst_308 = arith.constant 1.000000e+00 : f32
      %402 = vector.broadcast %cst_308 : f32 to vector<8x1xf32>
      %403 = arith.divf %402, %401 : vector<8x1xf32>
      %c3_309 = arith.constant 3 : index
      %c0_310 = arith.constant 0 : index
      %c0_311 = arith.constant 0 : index
      %404 = vector.load %arg15[%c3_309, %c0_310, %c0_311] : memref<8x8x4xf32, #tpu.memory_space<vmem>>, vector<1x8x4xf32>
      %405 = vector.shape_cast %404 : vector<1x8x4xf32> to vector<8x4xf32>
      %406 = vector.broadcast %403 : vector<8x1xf32> to vector<8x4xf32>
      %407 = arith.mulf %405, %406 : vector<8x4xf32>
      %c3_312 = arith.constant 3 : index
      %c0_313 = arith.constant 0 : index
      %c0_314 = arith.constant 0 : index
      %408 = vector.load %arg16[%c3_312, %c0_313, %c0_314] : memref<8x8x4xf32, #tpu.memory_space<vmem>>, vector<1x8x4xf32>
      %409 = vector.shape_cast %408 : vector<1x8x4xf32> to vector<8x4xf32>
      %410 = arith.addf %407, %409 : vector<8x4xf32>
      %c0_315 = arith.constant 0 : index
      %c12_316 = arith.constant 12 : index
      %411 = vector.load %arg17[%c0_315, %c12_316] : memref<8x32xf32, #tpu.memory_space<vmem>>, vector<8x4xf32>
      tpu.vector_store %arg17[%c0_315, %c12_316], %410 {strides = array<i32>} : memref<8x32xf32, #tpu.memory_space<vmem>>, vector<8x4xf32>,
      %c4_317 = arith.constant 4 : index
      %c0_318 = arith.constant 0 : index
      %c0_319 = arith.constant 0 : index
      %412 = vector.load %arg14[%c4_317, %c0_318, %c0_319] : memref<8x8x1xf32, #tpu.memory_space<vmem>>, vector<1x8x1xf32>
      %413 = vector.shape_cast %412 : vector<1x8x1xf32> to vector<8x1xf32>
      %cst_320 = arith.constant 1.000000e+00 : f32
      %414 = vector.broadcast %cst_320 : f32 to vector<8x1xf32>
      %415 = arith.divf %414, %413 : vector<8x1xf32>
      %c4_321 = arith.constant 4 : index
      %c0_322 = arith.constant 0 : index
      %c0_323 = arith.constant 0 : index
      %416 = vector.load %arg15[%c4_321, %c0_322, %c0_323] : memref<8x8x4xf32, #tpu.memory_space<vmem>>, vector<1x8x4xf32>
      %417 = vector.shape_cast %416 : vector<1x8x4xf32> to vector<8x4xf32>
      %418 = vector.broadcast %415 : vector<8x1xf32> to vector<8x4xf32>
      %419 = arith.mulf %417, %418 : vector<8x4xf32>
      %c4_324 = arith.constant 4 : index
      %c0_325 = arith.constant 0 : index
      %c0_326 = arith.constant 0 : index
      %420 = vector.load %arg16[%c4_324, %c0_325, %c0_326] : memref<8x8x4xf32, #tpu.memory_space<vmem>>, vector<1x8x4xf32>
      %421 = vector.shape_cast %420 : vector<1x8x4xf32> to vector<8x4xf32>
      %422 = arith.addf %419, %421 : vector<8x4xf32>
      %c0_327 = arith.constant 0 : index
      %c16_328 = arith.constant 16 : index
      %423 = vector.load %arg17[%c0_327, %c16_328] : memref<8x32xf32, #tpu.memory_space<vmem>>, vector<8x4xf32>
      tpu.vector_store %arg17[%c0_327, %c16_328], %422 {strides = array<i32>} : memref<8x32xf32, #tpu.memory_space<vmem>>, vector<8x4xf32>,
      %c5_329 = arith.constant 5 : index
      %c0_330 = arith.constant 0 : index
      %c0_331 = arith.constant 0 : index
      %424 = vector.load %arg14[%c5_329, %c0_330, %c0_331] : memref<8x8x1xf32, #tpu.memory_space<vmem>>, vector<1x8x1xf32>
      %425 = vector.shape_cast %424 : vector<1x8x1xf32> to vector<8x1xf32>
      %cst_332 = arith.constant 1.000000e+00 : f32
      %426 = vector.broadcast %cst_332 : f32 to vector<8x1xf32>
      %427 = arith.divf %426, %425 : vector<8x1xf32>
      %c5_333 = arith.constant 5 : index
      %c0_334 = arith.constant 0 : index
      %c0_335 = arith.constant 0 : index
      %428 = vector.load %arg15[%c5_333, %c0_334, %c0_335] : memref<8x8x4xf32, #tpu.memory_space<vmem>>, vector<1x8x4xf32>
      %429 = vector.shape_cast %428 : vector<1x8x4xf32> to vector<8x4xf32>
      %430 = vector.broadcast %427 : vector<8x1xf32> to vector<8x4xf32>
      %431 = arith.mulf %429, %430 : vector<8x4xf32>
      %c5_336 = arith.constant 5 : index
      %c0_337 = arith.constant 0 : index
      %c0_338 = arith.constant 0 : index
      %432 = vector.load %arg16[%c5_336, %c0_337, %c0_338] : memref<8x8x4xf32, #tpu.memory_space<vmem>>, vector<1x8x4xf32>
      %433 = vector.shape_cast %432 : vector<1x8x4xf32> to vector<8x4xf32>
      %434 = arith.addf %431, %433 : vector<8x4xf32>
      %c0_339 = arith.constant 0 : index
      %c20_340 = arith.constant 20 : index
      %435 = vector.load %arg17[%c0_339, %c20_340] : memref<8x32xf32, #tpu.memory_space<vmem>>, vector<8x4xf32>
      tpu.vector_store %arg17[%c0_339, %c20_340], %434 {strides = array<i32>} : memref<8x32xf32, #tpu.memory_space<vmem>>, vector<8x4xf32>,
      %c6_341 = arith.constant 6 : index
      %c0_342 = arith.constant 0 : index
      %c0_343 = arith.constant 0 : index
      %436 = vector.load %arg14[%c6_341, %c0_342, %c0_343] : memref<8x8x1xf32, #tpu.memory_space<vmem>>, vector<1x8x1xf32>
      %437 = vector.shape_cast %436 : vector<1x8x1xf32> to vector<8x1xf32>
      %cst_344 = arith.constant 1.000000e+00 : f32
      %438 = vector.broadcast %cst_344 : f32 to vector<8x1xf32>
      %439 = arith.divf %438, %437 : vector<8x1xf32>
      %c6_345 = arith.constant 6 : index
      %c0_346 = arith.constant 0 : index
      %c0_347 = arith.constant 0 : index
      %440 = vector.load %arg15[%c6_345, %c0_346, %c0_347] : memref<8x8x4xf32, #tpu.memory_space<vmem>>, vector<1x8x4xf32>
      %441 = vector.shape_cast %440 : vector<1x8x4xf32> to vector<8x4xf32>
      %442 = vector.broadcast %439 : vector<8x1xf32> to vector<8x4xf32>
      %443 = arith.mulf %441, %442 : vector<8x4xf32>
      %c6_348 = arith.constant 6 : index
      %c0_349 = arith.constant 0 : index
      %c0_350 = arith.constant 0 : index
      %444 = vector.load %arg16[%c6_348, %c0_349, %c0_350] : memref<8x8x4xf32, #tpu.memory_space<vmem>>, vector<1x8x4xf32>
      %445 = vector.shape_cast %444 : vector<1x8x4xf32> to vector<8x4xf32>
      %446 = arith.addf %443, %445 : vector<8x4xf32>
      %c0_351 = arith.constant 0 : index
      %c24_352 = arith.constant 24 : index
      %447 = vector.load %arg17[%c0_351, %c24_352] : memref<8x32xf32, #tpu.memory_space<vmem>>, vector<8x4xf32>
      tpu.vector_store %arg17[%c0_351, %c24_352], %446 {strides = array<i32>} : memref<8x32xf32, #tpu.memory_space<vmem>>, vector<8x4xf32>,
      %c7_353 = arith.constant 7 : index
      %c0_354 = arith.constant 0 : index
      %c0_355 = arith.constant 0 : index
      %448 = vector.load %arg14[%c7_353, %c0_354, %c0_355] : memref<8x8x1xf32, #tpu.memory_space<vmem>>, vector<1x8x1xf32>
      %449 = vector.shape_cast %448 : vector<1x8x1xf32> to vector<8x1xf32>
      %cst_356 = arith.constant 1.000000e+00 : f32
      %450 = vector.broadcast %cst_356 : f32 to vector<8x1xf32>
      %451 = arith.divf %450, %449 : vector<8x1xf32>
      %c7_357 = arith.constant 7 : index
      %c0_358 = arith.constant 0 : index
      %c0_359 = arith.constant 0 : index
      %452 = vector.load %arg15[%c7_357, %c0_358, %c0_359] : memref<8x8x4xf32, #tpu.memory_space<vmem>>, vector<1x8x4xf32>
      %453 = vector.shape_cast %452 : vector<1x8x4xf32> to vector<8x4xf32>
      %454 = vector.broadcast %451 : vector<8x1xf32> to vector<8x4xf32>
      %455 = arith.mulf %453, %454 : vector<8x4xf32>
      %c7_360 = arith.constant 7 : index
      %c0_361 = arith.constant 0 : index
      %c0_362 = arith.constant 0 : index
      %456 = vector.load %arg16[%c7_360, %c0_361, %c0_362] : memref<8x8x4xf32, #tpu.memory_space<vmem>>, vector<1x8x4xf32>
      %457 = vector.shape_cast %456 : vector<1x8x4xf32> to vector<8x4xf32>
      %458 = arith.addf %455, %457 : vector<8x4xf32>
      %c0_363 = arith.constant 0 : index
      %c28_364 = arith.constant 28 : index
      %459 = vector.load %arg17[%c0_363, %c28_364] : memref<8x32xf32, #tpu.memory_space<vmem>>, vector<8x4xf32>
      tpu.vector_store %arg17[%c0_363, %c28_364], %458 {strides = array<i32>} : memref<8x32xf32, #tpu.memory_space<vmem>>, vector<8x4xf32>,
      %c0_365 = arith.constant 0 : index
      %c0_366 = arith.constant 0 : index
      %460 = vector.load %arg17[%c0_365, %c0_366] : memref<8x32xf32, #tpu.memory_space<vmem>>, vector<8x32xf32>
      %cst_367 = arith.constant dense<0.000000e+00> : vector<8xf32>
      %461 = vector.multi_reduction <add>, %460, %cst_367 [1] : vector<8x32xf32> to vector<8xf32>
      %462 = vector.shape_cast %461 : vector<8xf32> to vector<8x1xf32>
      %cst_368 = arith.constant 3.200000e+01 : f32
      %463 = vector.broadcast %cst_368 : f32 to vector<8x1xf32>
      %464 = arith.divf %462, %463 : vector<8x1xf32>
      %465 = vector.broadcast %464 : vector<8x1xf32> to vector<8x32xf32>
      %466 = arith.subf %460, %465 : vector<8x32xf32>
      %467 = arith.mulf %466, %466 : vector<8x32xf32>
      %cst_369 = arith.constant dense<0.000000e+00> : vector<8xf32>
      %468 = vector.multi_reduction <add>, %467, %cst_369 [1] : vector<8x32xf32> to vector<8xf32>
      %469 = vector.shape_cast %468 : vector<8xf32> to vector<8x1xf32>
      %cst_370 = arith.constant 3.200000e+01 : f32
      %470 = vector.broadcast %cst_370 : f32 to vector<8x1xf32>
      %471 = arith.divf %469, %470 : vector<8x1xf32>
      %472 = vector.broadcast %464 : vector<8x1xf32> to vector<8x32xf32>
      %473 = arith.subf %460, %472 : vector<8x32xf32>
      %cst_371 = arith.constant 9.99999974E-6 : f32
      %474 = vector.broadcast %cst_371 : f32 to vector<8x1xf32>
      %475 = arith.addf %471, %474 : vector<8x1xf32>
      %476 = math.rsqrt %475 : vector<8x1xf32>
      %477 = vector.broadcast %476 : vector<8x1xf32> to vector<8x32xf32>
      %478 = arith.mulf %473, %477 : vector<8x32xf32>
      %c0_372 = arith.constant 0 : index
      %c0_373 = arith.constant 0 : index
      %479 = vector.load %arg9[%c0_372, %c0_373] : memref<1x32xf32, #tpu.memory_space<vmem>>, vector<1x32xf32>
      %480 = vector.broadcast %479 : vector<1x32xf32> to vector<8x32xf32>
      %481 = arith.mulf %478, %480 : vector<8x32xf32>
      %c0_374 = arith.constant 0 : index
      %c0_375 = arith.constant 0 : index
      %482 = vector.load %arg10[%c0_374, %c0_375] : memref<1x32xf32, #tpu.memory_space<vmem>>, vector<1x32xf32>
      %483 = vector.broadcast %482 : vector<1x32xf32> to vector<8x32xf32>
      %484 = arith.addf %481, %483 : vector<8x32xf32>
      %c0_376 = arith.constant 0 : index
      %c0_377 = arith.constant 0 : index
      %c0_378 = arith.constant 0 : index
      %485 = vector.load %arg11[%c0_376, %c0_377, %c0_378] : memref<1x8x32xf32, #tpu.memory_space<vmem>>, vector<1x8x32xf32>
      %486 = vector.shape_cast %485 : vector<1x8x32xf32> to vector<8x32xf32>
      %487 = vector.shape_cast %484 : vector<8x32xf32> to vector<1x8x32xf32>
      tpu.vector_store %arg11[%c0_376, %c0_377, %c0_378], %487 {strides = array<i32>} : memref<1x8x32xf32, #tpu.memory_space<vmem>>, vector<1x8x32xf32>,
    } else {
    }
    return
  }
  func.func @transform_0(%arg0: i32, %arg1: i32, %arg2: i32) -> (i32, i32, i32) {
    %c0_i32 = arith.constant 0 : i32
    %c0_i32_0 = arith.constant 0 : i32
    return %arg0, %arg1, %c0_i32 : i32, i32, i32
  }
  func.func @transform_1(%arg0: i32, %arg1: i32, %arg2: i32) -> (i32, i32, i32) {
    %c0_i32 = arith.constant 0 : i32
    %c0_i32_0 = arith.constant 0 : i32
    return %arg0, %arg2, %c0_i32 : i32, i32, i32
  }
  func.func @transform_2(%arg0: i32, %arg1: i32, %arg2: i32) -> (i32, i32) {
    %c0_i32 = arith.constant 0 : i32
    %c0_i32_0 = arith.constant 0 : i32
    %c0_i32_1 = arith.constant 0 : i32
    return %c0_i32, %c0_i32_0 : i32, i32
  }
  func.func @transform_3(%arg0: i32, %arg1: i32, %arg2: i32) -> (i32, i32) {
    %c0_i32 = arith.constant 0 : i32
    %c0_i32_0 = arith.constant 0 : i32
    %c0_i32_1 = arith.constant 0 : i32
    return %c0_i32, %c0_i32_0 : i32, i32
  }
  func.func @transform_4(%arg0: i32, %arg1: i32, %arg2: i32) -> (i32, i32) {
    %c0_i32 = arith.constant 0 : i32
    %c0_i32_0 = arith.constant 0 : i32
    %c0_i32_1 = arith.constant 0 : i32
    return %c0_i32, %c0_i32_0 : i32, i32
  }
  func.func @transform_5(%arg0: i32, %arg1: i32, %arg2: i32) -> (i32, i32, i32) {
    %c0_i32 = arith.constant 0 : i32
    %c0_i32_0 = arith.constant 0 : i32
    return %c0_i32, %arg1, %arg2 : i32, i32, i32
  }
  func.func @transform_6(%arg0: i32, %arg1: i32, %arg2: i32) -> (i32, i32) {
    %c0_i32 = arith.constant 0 : i32
    %c0_i32_0 = arith.constant 0 : i32
    %c0_i32_1 = arith.constant 0 : i32
    return %c0_i32, %c0_i32_0 : i32, i32
  }
  func.func @transform_7(%arg0: i32, %arg1: i32, %arg2: i32) -> (i32, i32) {
    %c0_i32 = arith.constant 0 : i32
    %c0_i32_0 = arith.constant 0 : i32
    %c0_i32_1 = arith.constant 0 : i32
    return %c0_i32, %c0_i32_0 : i32, i32
  }
  func.func @transform_8(%arg0: i32, %arg1: i32, %arg2: i32) -> (i32, i32, i32) {
    %c0_i32 = arith.constant 0 : i32
    %c0_i32_0 = arith.constant 0 : i32
    return %arg0, %arg1, %c0_i32 : i32, i32, i32
  }
}

module attributes {stable_mosaic.version = 11 : i64} {
  func.func @_attn_rel_scl_kernel(%arg0: i32, %arg1: i32, %arg2: i32, %arg3: memref<1x8x32xf32, #tpu.memory_space<vmem>>, %arg4: memref<1x8x32xf32, #tpu.memory_space<vmem>>, %arg5: memref<32x32xf32, #tpu.memory_space<vmem>>, %arg6: memref<32x32xf32, #tpu.memory_space<vmem>>, %arg7: memref<32x32xf32, #tpu.memory_space<vmem>>, %arg8: memref<8x8x8xf32, #tpu.memory_space<vmem>>, %arg9: memref<1x32xf32, #tpu.memory_space<vmem>>, %arg10: memref<1x32xf32, #tpu.memory_space<vmem>>, %arg11: memref<1x8x32xf32, #tpu.memory_space<vmem>>, %arg12: memref<8x32xf32, #tpu.memory_space<vmem>>, %arg13: memref<8x8x1xf32, #tpu.memory_space<vmem>>, %arg14: memref<8x8x1xf32, #tpu.memory_space<vmem>>, %arg15: memref<8x8x4xf32, #tpu.memory_space<vmem>>, %arg16: memref<8x8x4xf32, #tpu.memory_space<vmem>>, %arg17: memref<8x32xf32, #tpu.memory_space<vmem>>) attributes {dimension_semantics = [#tpu.dimension_semantics<parallel>, #tpu.dimension_semantics<parallel>, #tpu.dimension_semantics<arbitrary>], iteration_bounds = array<i64: 2, 1, 1>, scalar_prefetch = 0 : i64, scratch_operands = 6 : i64, tpu.core_type = #tpu.core_type<tc>, window_params = [{transform_indices = @transform_0, window_bounds = array<i64: 1, 8, 32>}, {transform_indices = @transform_1, window_bounds = array<i64: 1, 8, 32>}, {pipeline_mode = #tpu.pipeline_mode<synchronous>, transform_indices = @transform_2, window_bounds = array<i64: 32, 32>}, {pipeline_mode = #tpu.pipeline_mode<synchronous>, transform_indices = @transform_3, window_bounds = array<i64: 32, 32>}, {pipeline_mode = #tpu.pipeline_mode<synchronous>, transform_indices = @transform_4, window_bounds = array<i64: 32, 32>}, {transform_indices = @transform_5, window_bounds = array<i64: 8, 8, 8>}, {pipeline_mode = #tpu.pipeline_mode<synchronous>, transform_indices = @transform_6, window_bounds = array<i64: 1, 32>}, {pipeline_mode = #tpu.pipeline_mode<synchronous>, transform_indices = @transform_7, window_bounds = array<i64: 1, 32>}, {transform_indices = @transform_8, window_bounds = array<i64: 1, 8, 32>}]} {
    %c0_i32 = arith.constant 0 : i32
    %0 = arith.cmpi eq, %arg2, %c0_i32 : i32
    %1 = arith.extui %0 : i1 to i32
    %c0_i32_0 = arith.constant 0 : i32
    %2 = arith.cmpi ne, %1, %c0_i32_0 : i32
    scf.if %2 {
      %c0_269 = arith.constant 0 : index
      %c0_270 = arith.constant 0 : index
      %c0_271 = arith.constant 0 : index
      %364 = vector.load %arg3[%c0_269, %c0_270, %c0_271] : memref<1x8x32xf32, #tpu.memory_space<vmem>>, vector<1x8x32xf32>
      %365 = vector.shape_cast %364 : vector<1x8x32xf32> to vector<8x32xf32>
      %c0_272 = arith.constant 0 : index
      %c0_273 = arith.constant 0 : index
      %366 = vector.load %arg5[%c0_272, %c0_273] : memref<32x32xf32, #tpu.memory_space<vmem>>, vector<32x32xf32>
      %cst_274 = arith.constant dense<0.000000e+00> : vector<8x32xf32>
      %367 = tpu.matmul %365, %366, %cst_274 {dimension_numbers = #tpu.dot_dimension_numbers<[1], [0], [0], [1], [0, 0, 1, 1], [], []>} : vector<8x32xf32>, vector<32x32xf32>, vector<8x32xf32> -> vector<8x32xf32>
      %c0_275 = arith.constant 0 : index
      %c0_276 = arith.constant 0 : index
      %368 = vector.load %arg12[%c0_275, %c0_276] : memref<8x32xf32, #tpu.memory_space<vmem>>, vector<8x32xf32>
      tpu.vector_store %arg12[%c0_275, %c0_276], %367 {strides = array<i32>} : memref<8x32xf32, #tpu.memory_space<vmem>>, vector<8x32xf32>,
      %cst_277 = arith.constant 0xFF800000 : f32
      %369 = vector.broadcast %cst_277 : f32 to vector<8x8x1xf32>
      %c0_278 = arith.constant 0 : index
      %c0_279 = arith.constant 0 : index
      %c0_280 = arith.constant 0 : index
      %370 = vector.load %arg13[%c0_278, %c0_279, %c0_280] : memref<8x8x1xf32, #tpu.memory_space<vmem>>, vector<8x8x1xf32>
      tpu.vector_store %arg13[%c0_278, %c0_279, %c0_280], %369 {strides = array<i32>} : memref<8x8x1xf32, #tpu.memory_space<vmem>>, vector<8x8x1xf32>,
      %cst_281 = arith.constant 0.000000e+00 : f32
      %371 = vector.broadcast %cst_281 : f32 to vector<8x8x1xf32>
      %c0_282 = arith.constant 0 : index
      %c0_283 = arith.constant 0 : index
      %c0_284 = arith.constant 0 : index
      %372 = vector.load %arg14[%c0_282, %c0_283, %c0_284] : memref<8x8x1xf32, #tpu.memory_space<vmem>>, vector<8x8x1xf32>
      tpu.vector_store %arg14[%c0_282, %c0_283, %c0_284], %371 {strides = array<i32>} : memref<8x8x1xf32, #tpu.memory_space<vmem>>, vector<8x8x1xf32>,
      %cst_285 = arith.constant 0.000000e+00 : f32
      %373 = vector.broadcast %cst_285 : f32 to vector<8x8x4xf32>
      %c0_286 = arith.constant 0 : index
      %c0_287 = arith.constant 0 : index
      %c0_288 = arith.constant 0 : index
      %374 = vector.load %arg15[%c0_286, %c0_287, %c0_288] : memref<8x8x4xf32, #tpu.memory_space<vmem>>, vector<8x8x4xf32>
      tpu.vector_store %arg15[%c0_286, %c0_287, %c0_288], %373 {strides = array<i32>} : memref<8x8x4xf32, #tpu.memory_space<vmem>>, vector<8x8x4xf32>,
      %cst_289 = arith.constant 0.000000e+00 : f32
      %375 = vector.broadcast %cst_289 : f32 to vector<8x8x4xf32>
      %c0_290 = arith.constant 0 : index
      %c0_291 = arith.constant 0 : index
      %c0_292 = arith.constant 0 : index
      %376 = vector.load %arg16[%c0_290, %c0_291, %c0_292] : memref<8x8x4xf32, #tpu.memory_space<vmem>>, vector<8x8x4xf32>
      tpu.vector_store %arg16[%c0_290, %c0_291, %c0_292], %375 {strides = array<i32>} : memref<8x8x4xf32, #tpu.memory_space<vmem>>, vector<8x8x4xf32>,
    } else {
    }
    %c0 = arith.constant 0 : index
    %c0_1 = arith.constant 0 : index
    %c0_2 = arith.constant 0 : index
    %3 = vector.load %arg4[%c0, %c0_1, %c0_2] : memref<1x8x32xf32, #tpu.memory_space<vmem>>, vector<1x8x32xf32>
    %4 = vector.shape_cast %3 : vector<1x8x32xf32> to vector<8x32xf32>
    %c0_3 = arith.constant 0 : index
    %c0_4 = arith.constant 0 : index
    %5 = vector.load %arg6[%c0_3, %c0_4] : memref<32x32xf32, #tpu.memory_space<vmem>>, vector<32x32xf32>
    %cst = arith.constant dense<0.000000e+00> : vector<8x32xf32>
    %6 = tpu.matmul %4, %5, %cst {dimension_numbers = #tpu.dot_dimension_numbers<[1], [0], [0], [1], [0, 0, 1, 1], [], []>} : vector<8x32xf32>, vector<32x32xf32>, vector<8x32xf32> -> vector<8x32xf32>
    %c0_5 = arith.constant 0 : index
    %c0_6 = arith.constant 0 : index
    %7 = vector.load %arg7[%c0_5, %c0_6] : memref<32x32xf32, #tpu.memory_space<vmem>>, vector<32x32xf32>
    %cst_7 = arith.constant dense<0.000000e+00> : vector<8x32xf32>
    %8 = tpu.matmul %4, %7, %cst_7 {dimension_numbers = #tpu.dot_dimension_numbers<[1], [0], [0], [1], [0, 0, 1, 1], [], []>} : vector<8x32xf32>, vector<32x32xf32>, vector<8x32xf32> -> vector<8x32xf32>
    %c0_8 = arith.constant 0 : index
    %c0_9 = arith.constant 0 : index
    %9 = vector.load %arg12[%c0_8, %c0_9] : memref<8x32xf32, #tpu.memory_space<vmem>>, vector<8x4xf32>
    %10 = vector.extract_strided_slice %6 {offsets = [0, 0], sizes = [8, 4], strides = [1, 1]} : vector<8x32xf32> to vector<8x4xf32>
    %11 = vector.extract_strided_slice %8 {offsets = [0, 0], sizes = [8, 4], strides = [1, 1]} : vector<8x32xf32> to vector<8x4xf32>
    %cst_10 = arith.constant dense<0.000000e+00> : vector<8x8xf32>
    %12 = tpu.matmul %9, %10, %cst_10 {dimension_numbers = #tpu.dot_dimension_numbers<[1], [1], [0], [0], [0, 0, 1, 0], [], []>} : vector<8x4xf32>, vector<8x4xf32>, vector<8x8xf32> -> vector<8x8xf32>
    %c0_11 = arith.constant 0 : index
    %c0_12 = arith.constant 0 : index
    %c0_13 = arith.constant 0 : index
    %13 = vector.load %arg13[%c0_11, %c0_12, %c0_13] : memref<8x8x1xf32, #tpu.memory_space<vmem>>, vector<1x8x1xf32>
    %14 = vector.shape_cast %13 : vector<1x8x1xf32> to vector<8x1xf32>
    %cst_14 = arith.constant dense<0xFF800000> : vector<8xf32>
    %15 = vector.multi_reduction <maximumf>, %12, %cst_14 [1] : vector<8x8xf32> to vector<8xf32>
    %16 = vector.shape_cast %15 : vector<8xf32> to vector<8x1xf32>
    %17 = arith.maximumf %14, %16 : vector<8x1xf32>
    %18 = arith.subf %14, %17 : vector<8x1xf32>
    %19 = math.exp %18 : vector<8x1xf32>
    %20 = vector.broadcast %17 : vector<8x1xf32> to vector<8x8xf32>
    %21 = arith.subf %12, %20 : vector<8x8xf32>
    %22 = math.exp %21 : vector<8x8xf32>
    %c0_15 = arith.constant 0 : index
    %c0_16 = arith.constant 0 : index
    %c0_17 = arith.constant 0 : index
    %23 = vector.load %arg14[%c0_15, %c0_16, %c0_17] : memref<8x8x1xf32, #tpu.memory_space<vmem>>, vector<1x8x1xf32>
    %24 = vector.shape_cast %23 : vector<1x8x1xf32> to vector<8x1xf32>
    %25 = arith.mulf %19, %24 : vector<8x1xf32>
    %cst_18 = arith.constant dense<0.000000e+00> : vector<8xf32>
    %26 = vector.multi_reduction <add>, %22, %cst_18 [1] : vector<8x8xf32> to vector<8xf32>
    %27 = vector.shape_cast %26 : vector<8xf32> to vector<8x1xf32>
    %28 = arith.addf %25, %27 : vector<8x1xf32>
    %c0_19 = arith.constant 0 : index
    %c0_20 = arith.constant 0 : index
    %c0_21 = arith.constant 0 : index
    %29 = vector.load %arg14[%c0_19, %c0_20, %c0_21] : memref<8x8x1xf32, #tpu.memory_space<vmem>>, vector<1x8x1xf32>
    %30 = vector.shape_cast %29 : vector<1x8x1xf32> to vector<8x1xf32>
    %31 = vector.shape_cast %28 : vector<8x1xf32> to vector<1x8x1xf32>
    tpu.vector_store %arg14[%c0_19, %c0_20, %c0_21], %31 {strides = array<i32>} : memref<8x8x1xf32, #tpu.memory_space<vmem>>, vector<1x8x1xf32>,
    %c0_22 = arith.constant 0 : index
    %c0_23 = arith.constant 0 : index
    %c0_24 = arith.constant 0 : index
    %32 = vector.load %arg15[%c0_22, %c0_23, %c0_24] : memref<8x8x4xf32, #tpu.memory_space<vmem>>, vector<1x8x4xf32>
    %33 = vector.shape_cast %32 : vector<1x8x4xf32> to vector<8x4xf32>
    %34 = vector.broadcast %19 : vector<8x1xf32> to vector<8x4xf32>
    %35 = arith.mulf %34, %33 : vector<8x4xf32>
    %cst_25 = arith.constant dense<0.000000e+00> : vector<8x4xf32>
    %36 = tpu.matmul %22, %11, %cst_25 {dimension_numbers = #tpu.dot_dimension_numbers<[1], [0], [0], [1], [0, 0, 1, 1], [], []>} : vector<8x8xf32>, vector<8x4xf32>, vector<8x4xf32> -> vector<8x4xf32>
    %37 = arith.addf %35, %36 : vector<8x4xf32>
    %c0_26 = arith.constant 0 : index
    %c0_27 = arith.constant 0 : index
    %c0_28 = arith.constant 0 : index
    %38 = vector.load %arg15[%c0_26, %c0_27, %c0_28] : memref<8x8x4xf32, #tpu.memory_space<vmem>>, vector<1x8x4xf32>
    %39 = vector.shape_cast %38 : vector<1x8x4xf32> to vector<8x4xf32>
    %40 = vector.shape_cast %37 : vector<8x4xf32> to vector<1x8x4xf32>
    tpu.vector_store %arg15[%c0_26, %c0_27, %c0_28], %40 {strides = array<i32>} : memref<8x8x4xf32, #tpu.memory_space<vmem>>, vector<1x8x4xf32>,
    %c0_29 = arith.constant 0 : index
    %c0_30 = arith.constant 0 : index
    %c0_31 = arith.constant 0 : index
    %41 = vector.load %arg16[%c0_29, %c0_30, %c0_31] : memref<8x8x4xf32, #tpu.memory_space<vmem>>, vector<1x8x4xf32>
    %42 = vector.shape_cast %41 : vector<1x8x4xf32> to vector<8x4xf32>
    %c0_32 = arith.constant 0 : index
    %c0_33 = arith.constant 0 : index
    %c0_34 = arith.constant 0 : index
    %43 = vector.load %arg8[%c0_32, %c0_33, %c0_34] : memref<8x8x8xf32, #tpu.memory_space<vmem>>, vector<1x8x8xf32>
    %44 = vector.shape_cast %43 : vector<1x8x8xf32> to vector<8x8xf32>
    %cst_35 = arith.constant dense<0.000000e+00> : vector<8x4xf32>
    %45 = tpu.matmul %44, %11, %cst_35 {dimension_numbers = #tpu.dot_dimension_numbers<[1], [0], [0], [1], [0, 0, 1, 1], [], []>} : vector<8x8xf32>, vector<8x4xf32>, vector<8x4xf32> -> vector<8x4xf32>
    %46 = arith.addf %42, %45 : vector<8x4xf32>
    %c0_36 = arith.constant 0 : index
    %c0_37 = arith.constant 0 : index
    %c0_38 = arith.constant 0 : index
    %47 = vector.load %arg16[%c0_36, %c0_37, %c0_38] : memref<8x8x4xf32, #tpu.memory_space<vmem>>, vector<1x8x4xf32>
    %48 = vector.shape_cast %47 : vector<1x8x4xf32> to vector<8x4xf32>
    %49 = vector.shape_cast %46 : vector<8x4xf32> to vector<1x8x4xf32>
    tpu.vector_store %arg16[%c0_36, %c0_37, %c0_38], %49 {strides = array<i32>} : memref<8x8x4xf32, #tpu.memory_space<vmem>>, vector<1x8x4xf32>,
    %c0_39 = arith.constant 0 : index
    %c0_40 = arith.constant 0 : index
    %c0_41 = arith.constant 0 : index
    %50 = vector.load %arg13[%c0_39, %c0_40, %c0_41] : memref<8x8x1xf32, #tpu.memory_space<vmem>>, vector<1x8x1xf32>
    %51 = vector.shape_cast %50 : vector<1x8x1xf32> to vector<8x1xf32>
    %52 = vector.shape_cast %17 : vector<8x1xf32> to vector<1x8x1xf32>
    tpu.vector_store %arg13[%c0_39, %c0_40, %c0_41], %52 {strides = array<i32>} : memref<8x8x1xf32, #tpu.memory_space<vmem>>, vector<1x8x1xf32>,
    %c0_42 = arith.constant 0 : index
    %c4 = arith.constant 4 : index
    %53 = vector.load %arg12[%c0_42, %c4] : memref<8x32xf32, #tpu.memory_space<vmem>>, vector<8x4xf32>
    %54 = vector.extract_strided_slice %6 {offsets = [0, 4], sizes = [8, 4], strides = [1, 1]} : vector<8x32xf32> to vector<8x4xf32>
    %55 = vector.extract_strided_slice %8 {offsets = [0, 4], sizes = [8, 4], strides = [1, 1]} : vector<8x32xf32> to vector<8x4xf32>
    %cst_43 = arith.constant dense<0.000000e+00> : vector<8x8xf32>
    %56 = tpu.matmul %53, %54, %cst_43 {dimension_numbers = #tpu.dot_dimension_numbers<[1], [1], [0], [0], [0, 0, 1, 0], [], []>} : vector<8x4xf32>, vector<8x4xf32>, vector<8x8xf32> -> vector<8x8xf32>
    %c1 = arith.constant 1 : index
    %c0_44 = arith.constant 0 : index
    %c0_45 = arith.constant 0 : index
    %57 = vector.load %arg13[%c1, %c0_44, %c0_45] : memref<8x8x1xf32, #tpu.memory_space<vmem>>, vector<1x8x1xf32>
    %58 = vector.shape_cast %57 : vector<1x8x1xf32> to vector<8x1xf32>
    %cst_46 = arith.constant dense<0xFF800000> : vector<8xf32>
    %59 = vector.multi_reduction <maximumf>, %56, %cst_46 [1] : vector<8x8xf32> to vector<8xf32>
    %60 = vector.shape_cast %59 : vector<8xf32> to vector<8x1xf32>
    %61 = arith.maximumf %58, %60 : vector<8x1xf32>
    %62 = arith.subf %58, %61 : vector<8x1xf32>
    %63 = math.exp %62 : vector<8x1xf32>
    %64 = vector.broadcast %61 : vector<8x1xf32> to vector<8x8xf32>
    %65 = arith.subf %56, %64 : vector<8x8xf32>
    %66 = math.exp %65 : vector<8x8xf32>
    %c1_47 = arith.constant 1 : index
    %c0_48 = arith.constant 0 : index
    %c0_49 = arith.constant 0 : index
    %67 = vector.load %arg14[%c1_47, %c0_48, %c0_49] : memref<8x8x1xf32, #tpu.memory_space<vmem>>, vector<1x8x1xf32>
    %68 = vector.shape_cast %67 : vector<1x8x1xf32> to vector<8x1xf32>
    %69 = arith.mulf %63, %68 : vector<8x1xf32>
    %cst_50 = arith.constant dense<0.000000e+00> : vector<8xf32>
    %70 = vector.multi_reduction <add>, %66, %cst_50 [1] : vector<8x8xf32> to vector<8xf32>
    %71 = vector.shape_cast %70 : vector<8xf32> to vector<8x1xf32>
    %72 = arith.addf %69, %71 : vector<8x1xf32>
    %c1_51 = arith.constant 1 : index
    %c0_52 = arith.constant 0 : index
    %c0_53 = arith.constant 0 : index
    %73 = vector.load %arg14[%c1_51, %c0_52, %c0_53] : memref<8x8x1xf32, #tpu.memory_space<vmem>>, vector<1x8x1xf32>
    %74 = vector.shape_cast %73 : vector<1x8x1xf32> to vector<8x1xf32>
    %75 = vector.shape_cast %72 : vector<8x1xf32> to vector<1x8x1xf32>
    tpu.vector_store %arg14[%c1_51, %c0_52, %c0_53], %75 {strides = array<i32>} : memref<8x8x1xf32, #tpu.memory_space<vmem>>, vector<1x8x1xf32>,
    %c1_54 = arith.constant 1 : index
    %c0_55 = arith.constant 0 : index
    %c0_56 = arith.constant 0 : index
    %76 = vector.load %arg15[%c1_54, %c0_55, %c0_56] : memref<8x8x4xf32, #tpu.memory_space<vmem>>, vector<1x8x4xf32>
    %77 = vector.shape_cast %76 : vector<1x8x4xf32> to vector<8x4xf32>
    %78 = vector.broadcast %63 : vector<8x1xf32> to vector<8x4xf32>
    %79 = arith.mulf %78, %77 : vector<8x4xf32>
    %cst_57 = arith.constant dense<0.000000e+00> : vector<8x4xf32>
    %80 = tpu.matmul %66, %55, %cst_57 {dimension_numbers = #tpu.dot_dimension_numbers<[1], [0], [0], [1], [0, 0, 1, 1], [], []>} : vector<8x8xf32>, vector<8x4xf32>, vector<8x4xf32> -> vector<8x4xf32>
    %81 = arith.addf %79, %80 : vector<8x4xf32>
    %c1_58 = arith.constant 1 : index
    %c0_59 = arith.constant 0 : index
    %c0_60 = arith.constant 0 : index
    %82 = vector.load %arg15[%c1_58, %c0_59, %c0_60] : memref<8x8x4xf32, #tpu.memory_space<vmem>>, vector<1x8x4xf32>
    %83 = vector.shape_cast %82 : vector<1x8x4xf32> to vector<8x4xf32>
    %84 = vector.shape_cast %81 : vector<8x4xf32> to vector<1x8x4xf32>
    tpu.vector_store %arg15[%c1_58, %c0_59, %c0_60], %84 {strides = array<i32>} : memref<8x8x4xf32, #tpu.memory_space<vmem>>, vector<1x8x4xf32>,
    %c1_61 = arith.constant 1 : index
    %c0_62 = arith.constant 0 : index
    %c0_63 = arith.constant 0 : index
    %85 = vector.load %arg16[%c1_61, %c0_62, %c0_63] : memref<8x8x4xf32, #tpu.memory_space<vmem>>, vector<1x8x4xf32>
    %86 = vector.shape_cast %85 : vector<1x8x4xf32> to vector<8x4xf32>
    %c1_64 = arith.constant 1 : index
    %c0_65 = arith.constant 0 : index
    %c0_66 = arith.constant 0 : index
    %87 = vector.load %arg8[%c1_64, %c0_65, %c0_66] : memref<8x8x8xf32, #tpu.memory_space<vmem>>, vector<1x8x8xf32>
    %88 = vector.shape_cast %87 : vector<1x8x8xf32> to vector<8x8xf32>
    %cst_67 = arith.constant dense<0.000000e+00> : vector<8x4xf32>
    %89 = tpu.matmul %88, %55, %cst_67 {dimension_numbers = #tpu.dot_dimension_numbers<[1], [0], [0], [1], [0, 0, 1, 1], [], []>} : vector<8x8xf32>, vector<8x4xf32>, vector<8x4xf32> -> vector<8x4xf32>
    %90 = arith.addf %86, %89 : vector<8x4xf32>
    %c1_68 = arith.constant 1 : index
    %c0_69 = arith.constant 0 : index
    %c0_70 = arith.constant 0 : index
    %91 = vector.load %arg16[%c1_68, %c0_69, %c0_70] : memref<8x8x4xf32, #tpu.memory_space<vmem>>, vector<1x8x4xf32>
    %92 = vector.shape_cast %91 : vector<1x8x4xf32> to vector<8x4xf32>
    %93 = vector.shape_cast %90 : vector<8x4xf32> to vector<1x8x4xf32>
    tpu.vector_store %arg16[%c1_68, %c0_69, %c0_70], %93 {strides = array<i32>} : memref<8x8x4xf32, #tpu.memory_space<vmem>>, vector<1x8x4xf32>,
    %c1_71 = arith.constant 1 : index
    %c0_72 = arith.constant 0 : index
    %c0_73 = arith.constant 0 : index
    %94 = vector.load %arg13[%c1_71, %c0_72, %c0_73] : memref<8x8x1xf32, #tpu.memory_space<vmem>>, vector<1x8x1xf32>
    %95 = vector.shape_cast %94 : vector<1x8x1xf32> to vector<8x1xf32>
    %96 = vector.shape_cast %61 : vector<8x1xf32> to vector<1x8x1xf32>
    tpu.vector_store %arg13[%c1_71, %c0_72, %c0_73], %96 {strides = array<i32>} : memref<8x8x1xf32, #tpu.memory_space<vmem>>, vector<1x8x1xf32>,
    %c0_74 = arith.constant 0 : index
    %c8 = arith.constant 8 : index
    %97 = vector.load %arg12[%c0_74, %c8] : memref<8x32xf32, #tpu.memory_space<vmem>>, vector<8x4xf32>
    %98 = vector.extract_strided_slice %6 {offsets = [0, 8], sizes = [8, 4], strides = [1, 1]} : vector<8x32xf32> to vector<8x4xf32>
    %99 = vector.extract_strided_slice %8 {offsets = [0, 8], sizes = [8, 4], strides = [1, 1]} : vector<8x32xf32> to vector<8x4xf32>
    %cst_75 = arith.constant dense<0.000000e+00> : vector<8x8xf32>
    %100 = tpu.matmul %97, %98, %cst_75 {dimension_numbers = #tpu.dot_dimension_numbers<[1], [1], [0], [0], [0, 0, 1, 0], [], []>} : vector<8x4xf32>, vector<8x4xf32>, vector<8x8xf32> -> vector<8x8xf32>
    %c2 = arith.constant 2 : index
    %c0_76 = arith.constant 0 : index
    %c0_77 = arith.constant 0 : index
    %101 = vector.load %arg13[%c2, %c0_76, %c0_77] : memref<8x8x1xf32, #tpu.memory_space<vmem>>, vector<1x8x1xf32>
    %102 = vector.shape_cast %101 : vector<1x8x1xf32> to vector<8x1xf32>
    %cst_78 = arith.constant dense<0xFF800000> : vector<8xf32>
    %103 = vector.multi_reduction <maximumf>, %100, %cst_78 [1] : vector<8x8xf32> to vector<8xf32>
    %104 = vector.shape_cast %103 : vector<8xf32> to vector<8x1xf32>
    %105 = arith.maximumf %102, %104 : vector<8x1xf32>
    %106 = arith.subf %102, %105 : vector<8x1xf32>
    %107 = math.exp %106 : vector<8x1xf32>
    %108 = vector.broadcast %105 : vector<8x1xf32> to vector<8x8xf32>
    %109 = arith.subf %100, %108 : vector<8x8xf32>
    %110 = math.exp %109 : vector<8x8xf32>
    %c2_79 = arith.constant 2 : index
    %c0_80 = arith.constant 0 : index
    %c0_81 = arith.constant 0 : index
    %111 = vector.load %arg14[%c2_79, %c0_80, %c0_81] : memref<8x8x1xf32, #tpu.memory_space<vmem>>, vector<1x8x1xf32>
    %112 = vector.shape_cast %111 : vector<1x8x1xf32> to vector<8x1xf32>
    %113 = arith.mulf %107, %112 : vector<8x1xf32>
    %cst_82 = arith.constant dense<0.000000e+00> : vector<8xf32>
    %114 = vector.multi_reduction <add>, %110, %cst_82 [1] : vector<8x8xf32> to vector<8xf32>
    %115 = vector.shape_cast %114 : vector<8xf32> to vector<8x1xf32>
    %116 = arith.addf %113, %115 : vector<8x1xf32>
    %c2_83 = arith.constant 2 : index
    %c0_84 = arith.constant 0 : index
    %c0_85 = arith.constant 0 : index
    %117 = vector.load %arg14[%c2_83, %c0_84, %c0_85] : memref<8x8x1xf32, #tpu.memory_space<vmem>>, vector<1x8x1xf32>
    %118 = vector.shape_cast %117 : vector<1x8x1xf32> to vector<8x1xf32>
    %119 = vector.shape_cast %116 : vector<8x1xf32> to vector<1x8x1xf32>
    tpu.vector_store %arg14[%c2_83, %c0_84, %c0_85], %119 {strides = array<i32>} : memref<8x8x1xf32, #tpu.memory_space<vmem>>, vector<1x8x1xf32>,
    %c2_86 = arith.constant 2 : index
    %c0_87 = arith.constant 0 : index
    %c0_88 = arith.constant 0 : index
    %120 = vector.load %arg15[%c2_86, %c0_87, %c0_88] : memref<8x8x4xf32, #tpu.memory_space<vmem>>, vector<1x8x4xf32>
    %121 = vector.shape_cast %120 : vector<1x8x4xf32> to vector<8x4xf32>
    %122 = vector.broadcast %107 : vector<8x1xf32> to vector<8x4xf32>
    %123 = arith.mulf %122, %121 : vector<8x4xf32>
    %cst_89 = arith.constant dense<0.000000e+00> : vector<8x4xf32>
    %124 = tpu.matmul %110, %99, %cst_89 {dimension_numbers = #tpu.dot_dimension_numbers<[1], [0], [0], [1], [0, 0, 1, 1], [], []>} : vector<8x8xf32>, vector<8x4xf32>, vector<8x4xf32> -> vector<8x4xf32>
    %125 = arith.addf %123, %124 : vector<8x4xf32>
    %c2_90 = arith.constant 2 : index
    %c0_91 = arith.constant 0 : index
    %c0_92 = arith.constant 0 : index
    %126 = vector.load %arg15[%c2_90, %c0_91, %c0_92] : memref<8x8x4xf32, #tpu.memory_space<vmem>>, vector<1x8x4xf32>
    %127 = vector.shape_cast %126 : vector<1x8x4xf32> to vector<8x4xf32>
    %128 = vector.shape_cast %125 : vector<8x4xf32> to vector<1x8x4xf32>
    tpu.vector_store %arg15[%c2_90, %c0_91, %c0_92], %128 {strides = array<i32>} : memref<8x8x4xf32, #tpu.memory_space<vmem>>, vector<1x8x4xf32>,
    %c2_93 = arith.constant 2 : index
    %c0_94 = arith.constant 0 : index
    %c0_95 = arith.constant 0 : index
    %129 = vector.load %arg16[%c2_93, %c0_94, %c0_95] : memref<8x8x4xf32, #tpu.memory_space<vmem>>, vector<1x8x4xf32>
    %130 = vector.shape_cast %129 : vector<1x8x4xf32> to vector<8x4xf32>
    %c2_96 = arith.constant 2 : index
    %c0_97 = arith.constant 0 : index
    %c0_98 = arith.constant 0 : index
    %131 = vector.load %arg8[%c2_96, %c0_97, %c0_98] : memref<8x8x8xf32, #tpu.memory_space<vmem>>, vector<1x8x8xf32>
    %132 = vector.shape_cast %131 : vector<1x8x8xf32> to vector<8x8xf32>
    %cst_99 = arith.constant dense<0.000000e+00> : vector<8x4xf32>
    %133 = tpu.matmul %132, %99, %cst_99 {dimension_numbers = #tpu.dot_dimension_numbers<[1], [0], [0], [1], [0, 0, 1, 1], [], []>} : vector<8x8xf32>, vector<8x4xf32>, vector<8x4xf32> -> vector<8x4xf32>
    %134 = arith.addf %130, %133 : vector<8x4xf32>
    %c2_100 = arith.constant 2 : index
    %c0_101 = arith.constant 0 : index
    %c0_102 = arith.constant 0 : index
    %135 = vector.load %arg16[%c2_100, %c0_101, %c0_102] : memref<8x8x4xf32, #tpu.memory_space<vmem>>, vector<1x8x4xf32>
    %136 = vector.shape_cast %135 : vector<1x8x4xf32> to vector<8x4xf32>
    %137 = vector.shape_cast %134 : vector<8x4xf32> to vector<1x8x4xf32>
    tpu.vector_store %arg16[%c2_100, %c0_101, %c0_102], %137 {strides = array<i32>} : memref<8x8x4xf32, #tpu.memory_space<vmem>>, vector<1x8x4xf32>,
    %c2_103 = arith.constant 2 : index
    %c0_104 = arith.constant 0 : index
    %c0_105 = arith.constant 0 : index
    %138 = vector.load %arg13[%c2_103, %c0_104, %c0_105] : memref<8x8x1xf32, #tpu.memory_space<vmem>>, vector<1x8x1xf32>
    %139 = vector.shape_cast %138 : vector<1x8x1xf32> to vector<8x1xf32>
    %140 = vector.shape_cast %105 : vector<8x1xf32> to vector<1x8x1xf32>
    tpu.vector_store %arg13[%c2_103, %c0_104, %c0_105], %140 {strides = array<i32>} : memref<8x8x1xf32, #tpu.memory_space<vmem>>, vector<1x8x1xf32>,
    %c0_106 = arith.constant 0 : index
    %c12 = arith.constant 12 : index
    %141 = vector.load %arg12[%c0_106, %c12] : memref<8x32xf32, #tpu.memory_space<vmem>>, vector<8x4xf32>
    %142 = vector.extract_strided_slice %6 {offsets = [0, 12], sizes = [8, 4], strides = [1, 1]} : vector<8x32xf32> to vector<8x4xf32>
    %143 = vector.extract_strided_slice %8 {offsets = [0, 12], sizes = [8, 4], strides = [1, 1]} : vector<8x32xf32> to vector<8x4xf32>
    %cst_107 = arith.constant dense<0.000000e+00> : vector<8x8xf32>
    %144 = tpu.matmul %141, %142, %cst_107 {dimension_numbers = #tpu.dot_dimension_numbers<[1], [1], [0], [0], [0, 0, 1, 0], [], []>} : vector<8x4xf32>, vector<8x4xf32>, vector<8x8xf32> -> vector<8x8xf32>
    %c3 = arith.constant 3 : index
    %c0_108 = arith.constant 0 : index
    %c0_109 = arith.constant 0 : index
    %145 = vector.load %arg13[%c3, %c0_108, %c0_109] : memref<8x8x1xf32, #tpu.memory_space<vmem>>, vector<1x8x1xf32>
    %146 = vector.shape_cast %145 : vector<1x8x1xf32> to vector<8x1xf32>
    %cst_110 = arith.constant dense<0xFF800000> : vector<8xf32>
    %147 = vector.multi_reduction <maximumf>, %144, %cst_110 [1] : vector<8x8xf32> to vector<8xf32>
    %148 = vector.shape_cast %147 : vector<8xf32> to vector<8x1xf32>
    %149 = arith.maximumf %146, %148 : vector<8x1xf32>
    %150 = arith.subf %146, %149 : vector<8x1xf32>
    %151 = math.exp %150 : vector<8x1xf32>
    %152 = vector.broadcast %149 : vector<8x1xf32> to vector<8x8xf32>
    %153 = arith.subf %144, %152 : vector<8x8xf32>
    %154 = math.exp %153 : vector<8x8xf32>
    %c3_111 = arith.constant 3 : index
    %c0_112 = arith.constant 0 : index
    %c0_113 = arith.constant 0 : index
    %155 = vector.load %arg14[%c3_111, %c0_112, %c0_113] : memref<8x8x1xf32, #tpu.memory_space<vmem>>, vector<1x8x1xf32>
    %156 = vector.shape_cast %155 : vector<1x8x1xf32> to vector<8x1xf32>
    %157 = arith.mulf %151, %156 : vector<8x1xf32>
    %cst_114 = arith.constant dense<0.000000e+00> : vector<8xf32>
    %158 = vector.multi_reduction <add>, %154, %cst_114 [1] : vector<8x8xf32> to vector<8xf32>
    %159 = vector.shape_cast %158 : vector<8xf32> to vector<8x1xf32>
    %160 = arith.addf %157, %159 : vector<8x1xf32>
    %c3_115 = arith.constant 3 : index
    %c0_116 = arith.constant 0 : index
    %c0_117 = arith.constant 0 : index
    %161 = vector.load %arg14[%c3_115, %c0_116, %c0_117] : memref<8x8x1xf32, #tpu.memory_space<vmem>>, vector<1x8x1xf32>
    %162 = vector.shape_cast %161 : vector<1x8x1xf32> to vector<8x1xf32>
    %163 = vector.shape_cast %160 : vector<8x1xf32> to vector<1x8x1xf32>
    tpu.vector_store %arg14[%c3_115, %c0_116, %c0_117], %163 {strides = array<i32>} : memref<8x8x1xf32, #tpu.memory_space<vmem>>, vector<1x8x1xf32>,
    %c3_118 = arith.constant 3 : index
    %c0_119 = arith.constant 0 : index
    %c0_120 = arith.constant 0 : index
    %164 = vector.load %arg15[%c3_118, %c0_119, %c0_120] : memref<8x8x4xf32, #tpu.memory_space<vmem>>, vector<1x8x4xf32>
    %165 = vector.shape_cast %164 : vector<1x8x4xf32> to vector<8x4xf32>
    %166 = vector.broadcast %151 : vector<8x1xf32> to vector<8x4xf32>
    %167 = arith.mulf %166, %165 : vector<8x4xf32>
    %cst_121 = arith.constant dense<0.000000e+00> : vector<8x4xf32>
    %168 = tpu.matmul %154, %143, %cst_121 {dimension_numbers = #tpu.dot_dimension_numbers<[1], [0], [0], [1], [0, 0, 1, 1], [], []>} : vector<8x8xf32>, vector<8x4xf32>, vector<8x4xf32> -> vector<8x4xf32>
    %169 = arith.addf %167, %168 : vector<8x4xf32>
    %c3_122 = arith.constant 3 : index
    %c0_123 = arith.constant 0 : index
    %c0_124 = arith.constant 0 : index
    %170 = vector.load %arg15[%c3_122, %c0_123, %c0_124] : memref<8x8x4xf32, #tpu.memory_space<vmem>>, vector<1x8x4xf32>
    %171 = vector.shape_cast %170 : vector<1x8x4xf32> to vector<8x4xf32>
    %172 = vector.shape_cast %169 : vector<8x4xf32> to vector<1x8x4xf32>
    tpu.vector_store %arg15[%c3_122, %c0_123, %c0_124], %172 {strides = array<i32>} : memref<8x8x4xf32, #tpu.memory_space<vmem>>, vector<1x8x4xf32>,
    %c3_125 = arith.constant 3 : index
    %c0_126 = arith.constant 0 : index
    %c0_127 = arith.constant 0 : index
    %173 = vector.load %arg16[%c3_125, %c0_126, %c0_127] : memref<8x8x4xf32, #tpu.memory_space<vmem>>, vector<1x8x4xf32>
    %174 = vector.shape_cast %173 : vector<1x8x4xf32> to vector<8x4xf32>
    %c3_128 = arith.constant 3 : index
    %c0_129 = arith.constant 0 : index
    %c0_130 = arith.constant 0 : index
    %175 = vector.load %arg8[%c3_128, %c0_129, %c0_130] : memref<8x8x8xf32, #tpu.memory_space<vmem>>, vector<1x8x8xf32>
    %176 = vector.shape_cast %175 : vector<1x8x8xf32> to vector<8x8xf32>
    %cst_131 = arith.constant dense<0.000000e+00> : vector<8x4xf32>
    %177 = tpu.matmul %176, %143, %cst_131 {dimension_numbers = #tpu.dot_dimension_numbers<[1], [0], [0], [1], [0, 0, 1, 1], [], []>} : vector<8x8xf32>, vector<8x4xf32>, vector<8x4xf32> -> vector<8x4xf32>
    %178 = arith.addf %174, %177 : vector<8x4xf32>
    %c3_132 = arith.constant 3 : index
    %c0_133 = arith.constant 0 : index
    %c0_134 = arith.constant 0 : index
    %179 = vector.load %arg16[%c3_132, %c0_133, %c0_134] : memref<8x8x4xf32, #tpu.memory_space<vmem>>, vector<1x8x4xf32>
    %180 = vector.shape_cast %179 : vector<1x8x4xf32> to vector<8x4xf32>
    %181 = vector.shape_cast %178 : vector<8x4xf32> to vector<1x8x4xf32>
    tpu.vector_store %arg16[%c3_132, %c0_133, %c0_134], %181 {strides = array<i32>} : memref<8x8x4xf32, #tpu.memory_space<vmem>>, vector<1x8x4xf32>,
    %c3_135 = arith.constant 3 : index
    %c0_136 = arith.constant 0 : index
    %c0_137 = arith.constant 0 : index
    %182 = vector.load %arg13[%c3_135, %c0_136, %c0_137] : memref<8x8x1xf32, #tpu.memory_space<vmem>>, vector<1x8x1xf32>
    %183 = vector.shape_cast %182 : vector<1x8x1xf32> to vector<8x1xf32>
    %184 = vector.shape_cast %149 : vector<8x1xf32> to vector<1x8x1xf32>
    tpu.vector_store %arg13[%c3_135, %c0_136, %c0_137], %184 {strides = array<i32>} : memref<8x8x1xf32, #tpu.memory_space<vmem>>, vector<1x8x1xf32>,
    %c0_138 = arith.constant 0 : index
    %c16 = arith.constant 16 : index
    %185 = vector.load %arg12[%c0_138, %c16] : memref<8x32xf32, #tpu.memory_space<vmem>>, vector<8x4xf32>
    %186 = vector.extract_strided_slice %6 {offsets = [0, 16], sizes = [8, 4], strides = [1, 1]} : vector<8x32xf32> to vector<8x4xf32>
    %187 = vector.extract_strided_slice %8 {offsets = [0, 16], sizes = [8, 4], strides = [1, 1]} : vector<8x32xf32> to vector<8x4xf32>
    %cst_139 = arith.constant dense<0.000000e+00> : vector<8x8xf32>
    %188 = tpu.matmul %185, %186, %cst_139 {dimension_numbers = #tpu.dot_dimension_numbers<[1], [1], [0], [0], [0, 0, 1, 0], [], []>} : vector<8x4xf32>, vector<8x4xf32>, vector<8x8xf32> -> vector<8x8xf32>
    %c4_140 = arith.constant 4 : index
    %c0_141 = arith.constant 0 : index
    %c0_142 = arith.constant 0 : index
    %189 = vector.load %arg13[%c4_140, %c0_141, %c0_142] : memref<8x8x1xf32, #tpu.memory_space<vmem>>, vector<1x8x1xf32>
    %190 = vector.shape_cast %189 : vector<1x8x1xf32> to vector<8x1xf32>
    %cst_143 = arith.constant dense<0xFF800000> : vector<8xf32>
    %191 = vector.multi_reduction <maximumf>, %188, %cst_143 [1] : vector<8x8xf32> to vector<8xf32>
    %192 = vector.shape_cast %191 : vector<8xf32> to vector<8x1xf32>
    %193 = arith.maximumf %190, %192 : vector<8x1xf32>
    %194 = arith.subf %190, %193 : vector<8x1xf32>
    %195 = math.exp %194 : vector<8x1xf32>
    %196 = vector.broadcast %193 : vector<8x1xf32> to vector<8x8xf32>
    %197 = arith.subf %188, %196 : vector<8x8xf32>
    %198 = math.exp %197 : vector<8x8xf32>
    %c4_144 = arith.constant 4 : index
    %c0_145 = arith.constant 0 : index
    %c0_146 = arith.constant 0 : index
    %199 = vector.load %arg14[%c4_144, %c0_145, %c0_146] : memref<8x8x1xf32, #tpu.memory_space<vmem>>, vector<1x8x1xf32>
    %200 = vector.shape_cast %199 : vector<1x8x1xf32> to vector<8x1xf32>
    %201 = arith.mulf %195, %200 : vector<8x1xf32>
    %cst_147 = arith.constant dense<0.000000e+00> : vector<8xf32>
    %202 = vector.multi_reduction <add>, %198, %cst_147 [1] : vector<8x8xf32> to vector<8xf32>
    %203 = vector.shape_cast %202 : vector<8xf32> to vector<8x1xf32>
    %204 = arith.addf %201, %203 : vector<8x1xf32>
    %c4_148 = arith.constant 4 : index
    %c0_149 = arith.constant 0 : index
    %c0_150 = arith.constant 0 : index
    %205 = vector.load %arg14[%c4_148, %c0_149, %c0_150] : memref<8x8x1xf32, #tpu.memory_space<vmem>>, vector<1x8x1xf32>
    %206 = vector.shape_cast %205 : vector<1x8x1xf32> to vector<8x1xf32>
    %207 = vector.shape_cast %204 : vector<8x1xf32> to vector<1x8x1xf32>
    tpu.vector_store %arg14[%c4_148, %c0_149, %c0_150], %207 {strides = array<i32>} : memref<8x8x1xf32, #tpu.memory_space<vmem>>, vector<1x8x1xf32>,
    %c4_151 = arith.constant 4 : index
    %c0_152 = arith.constant 0 : index
    %c0_153 = arith.constant 0 : index
    %208 = vector.load %arg15[%c4_151, %c0_152, %c0_153] : memref<8x8x4xf32, #tpu.memory_space<vmem>>, vector<1x8x4xf32>
    %209 = vector.shape_cast %208 : vector<1x8x4xf32> to vector<8x4xf32>
    %210 = vector.broadcast %195 : vector<8x1xf32> to vector<8x4xf32>
    %211 = arith.mulf %210, %209 : vector<8x4xf32>
    %cst_154 = arith.constant dense<0.000000e+00> : vector<8x4xf32>
    %212 = tpu.matmul %198, %187, %cst_154 {dimension_numbers = #tpu.dot_dimension_numbers<[1], [0], [0], [1], [0, 0, 1, 1], [], []>} : vector<8x8xf32>, vector<8x4xf32>, vector<8x4xf32> -> vector<8x4xf32>
    %213 = arith.addf %211, %212 : vector<8x4xf32>
    %c4_155 = arith.constant 4 : index
    %c0_156 = arith.constant 0 : index
    %c0_157 = arith.constant 0 : index
    %214 = vector.load %arg15[%c4_155, %c0_156, %c0_157] : memref<8x8x4xf32, #tpu.memory_space<vmem>>, vector<1x8x4xf32>
    %215 = vector.shape_cast %214 : vector<1x8x4xf32> to vector<8x4xf32>
    %216 = vector.shape_cast %213 : vector<8x4xf32> to vector<1x8x4xf32>
    tpu.vector_store %arg15[%c4_155, %c0_156, %c0_157], %216 {strides = array<i32>} : memref<8x8x4xf32, #tpu.memory_space<vmem>>, vector<1x8x4xf32>,
    %c4_158 = arith.constant 4 : index
    %c0_159 = arith.constant 0 : index
    %c0_160 = arith.constant 0 : index
    %217 = vector.load %arg16[%c4_158, %c0_159, %c0_160] : memref<8x8x4xf32, #tpu.memory_space<vmem>>, vector<1x8x4xf32>
    %218 = vector.shape_cast %217 : vector<1x8x4xf32> to vector<8x4xf32>
    %c4_161 = arith.constant 4 : index
    %c0_162 = arith.constant 0 : index
    %c0_163 = arith.constant 0 : index
    %219 = vector.load %arg8[%c4_161, %c0_162, %c0_163] : memref<8x8x8xf32, #tpu.memory_space<vmem>>, vector<1x8x8xf32>
    %220 = vector.shape_cast %219 : vector<1x8x8xf32> to vector<8x8xf32>
    %cst_164 = arith.constant dense<0.000000e+00> : vector<8x4xf32>
    %221 = tpu.matmul %220, %187, %cst_164 {dimension_numbers = #tpu.dot_dimension_numbers<[1], [0], [0], [1], [0, 0, 1, 1], [], []>} : vector<8x8xf32>, vector<8x4xf32>, vector<8x4xf32> -> vector<8x4xf32>
    %222 = arith.addf %218, %221 : vector<8x4xf32>
    %c4_165 = arith.constant 4 : index
    %c0_166 = arith.constant 0 : index
    %c0_167 = arith.constant 0 : index
    %223 = vector.load %arg16[%c4_165, %c0_166, %c0_167] : memref<8x8x4xf32, #tpu.memory_space<vmem>>, vector<1x8x4xf32>
    %224 = vector.shape_cast %223 : vector<1x8x4xf32> to vector<8x4xf32>
    %225 = vector.shape_cast %222 : vector<8x4xf32> to vector<1x8x4xf32>
    tpu.vector_store %arg16[%c4_165, %c0_166, %c0_167], %225 {strides = array<i32>} : memref<8x8x4xf32, #tpu.memory_space<vmem>>, vector<1x8x4xf32>,
    %c4_168 = arith.constant 4 : index
    %c0_169 = arith.constant 0 : index
    %c0_170 = arith.constant 0 : index
    %226 = vector.load %arg13[%c4_168, %c0_169, %c0_170] : memref<8x8x1xf32, #tpu.memory_space<vmem>>, vector<1x8x1xf32>
    %227 = vector.shape_cast %226 : vector<1x8x1xf32> to vector<8x1xf32>
    %228 = vector.shape_cast %193 : vector<8x1xf32> to vector<1x8x1xf32>
    tpu.vector_store %arg13[%c4_168, %c0_169, %c0_170], %228 {strides = array<i32>} : memref<8x8x1xf32, #tpu.memory_space<vmem>>, vector<1x8x1xf32>,
    %c0_171 = arith.constant 0 : index
    %c20 = arith.constant 20 : index
    %229 = vector.load %arg12[%c0_171, %c20] : memref<8x32xf32, #tpu.memory_space<vmem>>, vector<8x4xf32>
    %230 = vector.extract_strided_slice %6 {offsets = [0, 20], sizes = [8, 4], strides = [1, 1]} : vector<8x32xf32> to vector<8x4xf32>
    %231 = vector.extract_strided_slice %8 {offsets = [0, 20], sizes = [8, 4], strides = [1, 1]} : vector<8x32xf32> to vector<8x4xf32>
    %cst_172 = arith.constant dense<0.000000e+00> : vector<8x8xf32>
    %232 = tpu.matmul %229, %230, %cst_172 {dimension_numbers = #tpu.dot_dimension_numbers<[1], [1], [0], [0], [0, 0, 1, 0], [], []>} : vector<8x4xf32>, vector<8x4xf32>, vector<8x8xf32> -> vector<8x8xf32>
    %c5 = arith.constant 5 : index
    %c0_173 = arith.constant 0 : index
    %c0_174 = arith.constant 0 : index
    %233 = vector.load %arg13[%c5, %c0_173, %c0_174] : memref<8x8x1xf32, #tpu.memory_space<vmem>>, vector<1x8x1xf32>
    %234 = vector.shape_cast %233 : vector<1x8x1xf32> to vector<8x1xf32>
    %cst_175 = arith.constant dense<0xFF800000> : vector<8xf32>
    %235 = vector.multi_reduction <maximumf>, %232, %cst_175 [1] : vector<8x8xf32> to vector<8xf32>
    %236 = vector.shape_cast %235 : vector<8xf32> to vector<8x1xf32>
    %237 = arith.maximumf %234, %236 : vector<8x1xf32>
    %238 = arith.subf %234, %237 : vector<8x1xf32>
    %239 = math.exp %238 : vector<8x1xf32>
    %240 = vector.broadcast %237 : vector<8x1xf32> to vector<8x8xf32>
    %241 = arith.subf %232, %240 : vector<8x8xf32>
    %242 = math.exp %241 : vector<8x8xf32>
    %c5_176 = arith.constant 5 : index
    %c0_177 = arith.constant 0 : index
    %c0_178 = arith.constant 0 : index
    %243 = vector.load %arg14[%c5_176, %c0_177, %c0_178] : memref<8x8x1xf32, #tpu.memory_space<vmem>>, vector<1x8x1xf32>
    %244 = vector.shape_cast %243 : vector<1x8x1xf32> to vector<8x1xf32>
    %245 = arith.mulf %239, %244 : vector<8x1xf32>
    %cst_179 = arith.constant dense<0.000000e+00> : vector<8xf32>
    %246 = vector.multi_reduction <add>, %242, %cst_179 [1] : vector<8x8xf32> to vector<8xf32>
    %247 = vector.shape_cast %246 : vector<8xf32> to vector<8x1xf32>
    %248 = arith.addf %245, %247 : vector<8x1xf32>
    %c5_180 = arith.constant 5 : index
    %c0_181 = arith.constant 0 : index
    %c0_182 = arith.constant 0 : index
    %249 = vector.load %arg14[%c5_180, %c0_181, %c0_182] : memref<8x8x1xf32, #tpu.memory_space<vmem>>, vector<1x8x1xf32>
    %250 = vector.shape_cast %249 : vector<1x8x1xf32> to vector<8x1xf32>
    %251 = vector.shape_cast %248 : vector<8x1xf32> to vector<1x8x1xf32>
    tpu.vector_store %arg14[%c5_180, %c0_181, %c0_182], %251 {strides = array<i32>} : memref<8x8x1xf32, #tpu.memory_space<vmem>>, vector<1x8x1xf32>,
    %c5_183 = arith.constant 5 : index
    %c0_184 = arith.constant 0 : index
    %c0_185 = arith.constant 0 : index
    %252 = vector.load %arg15[%c5_183, %c0_184, %c0_185] : memref<8x8x4xf32, #tpu.memory_space<vmem>>, vector<1x8x4xf32>
    %253 = vector.shape_cast %252 : vector<1x8x4xf32> to vector<8x4xf32>
    %254 = vector.broadcast %239 : vector<8x1xf32> to vector<8x4xf32>
    %255 = arith.mulf %254, %253 : vector<8x4xf32>
    %cst_186 = arith.constant dense<0.000000e+00> : vector<8x4xf32>
    %256 = tpu.matmul %242, %231, %cst_186 {dimension_numbers = #tpu.dot_dimension_numbers<[1], [0], [0], [1], [0, 0, 1, 1], [], []>} : vector<8x8xf32>, vector<8x4xf32>, vector<8x4xf32> -> vector<8x4xf32>
    %257 = arith.addf %255, %256 : vector<8x4xf32>
    %c5_187 = arith.constant 5 : index
    %c0_188 = arith.constant 0 : index
    %c0_189 = arith.constant 0 : index
    %258 = vector.load %arg15[%c5_187, %c0_188, %c0_189] : memref<8x8x4xf32, #tpu.memory_space<vmem>>, vector<1x8x4xf32>
    %259 = vector.shape_cast %258 : vector<1x8x4xf32> to vector<8x4xf32>
    %260 = vector.shape_cast %257 : vector<8x4xf32> to vector<1x8x4xf32>
    tpu.vector_store %arg15[%c5_187, %c0_188, %c0_189], %260 {strides = array<i32>} : memref<8x8x4xf32, #tpu.memory_space<vmem>>, vector<1x8x4xf32>,
    %c5_190 = arith.constant 5 : index
    %c0_191 = arith.constant 0 : index
    %c0_192 = arith.constant 0 : index
    %261 = vector.load %arg16[%c5_190, %c0_191, %c0_192] : memref<8x8x4xf32, #tpu.memory_space<vmem>>, vector<1x8x4xf32>
    %262 = vector.shape_cast %261 : vector<1x8x4xf32> to vector<8x4xf32>
    %c5_193 = arith.constant 5 : index
    %c0_194 = arith.constant 0 : index
    %c0_195 = arith.constant 0 : index
    %263 = vector.load %arg8[%c5_193, %c0_194, %c0_195] : memref<8x8x8xf32, #tpu.memory_space<vmem>>, vector<1x8x8xf32>
    %264 = vector.shape_cast %263 : vector<1x8x8xf32> to vector<8x8xf32>
    %cst_196 = arith.constant dense<0.000000e+00> : vector<8x4xf32>
    %265 = tpu.matmul %264, %231, %cst_196 {dimension_numbers = #tpu.dot_dimension_numbers<[1], [0], [0], [1], [0, 0, 1, 1], [], []>} : vector<8x8xf32>, vector<8x4xf32>, vector<8x4xf32> -> vector<8x4xf32>
    %266 = arith.addf %262, %265 : vector<8x4xf32>
    %c5_197 = arith.constant 5 : index
    %c0_198 = arith.constant 0 : index
    %c0_199 = arith.constant 0 : index
    %267 = vector.load %arg16[%c5_197, %c0_198, %c0_199] : memref<8x8x4xf32, #tpu.memory_space<vmem>>, vector<1x8x4xf32>
    %268 = vector.shape_cast %267 : vector<1x8x4xf32> to vector<8x4xf32>
    %269 = vector.shape_cast %266 : vector<8x4xf32> to vector<1x8x4xf32>
    tpu.vector_store %arg16[%c5_197, %c0_198, %c0_199], %269 {strides = array<i32>} : memref<8x8x4xf32, #tpu.memory_space<vmem>>, vector<1x8x4xf32>,
    %c5_200 = arith.constant 5 : index
    %c0_201 = arith.constant 0 : index
    %c0_202 = arith.constant 0 : index
    %270 = vector.load %arg13[%c5_200, %c0_201, %c0_202] : memref<8x8x1xf32, #tpu.memory_space<vmem>>, vector<1x8x1xf32>
    %271 = vector.shape_cast %270 : vector<1x8x1xf32> to vector<8x1xf32>
    %272 = vector.shape_cast %237 : vector<8x1xf32> to vector<1x8x1xf32>
    tpu.vector_store %arg13[%c5_200, %c0_201, %c0_202], %272 {strides = array<i32>} : memref<8x8x1xf32, #tpu.memory_space<vmem>>, vector<1x8x1xf32>,
    %c0_203 = arith.constant 0 : index
    %c24 = arith.constant 24 : index
    %273 = vector.load %arg12[%c0_203, %c24] : memref<8x32xf32, #tpu.memory_space<vmem>>, vector<8x4xf32>
    %274 = vector.extract_strided_slice %6 {offsets = [0, 24], sizes = [8, 4], strides = [1, 1]} : vector<8x32xf32> to vector<8x4xf32>
    %275 = vector.extract_strided_slice %8 {offsets = [0, 24], sizes = [8, 4], strides = [1, 1]} : vector<8x32xf32> to vector<8x4xf32>
    %cst_204 = arith.constant dense<0.000000e+00> : vector<8x8xf32>
    %276 = tpu.matmul %273, %274, %cst_204 {dimension_numbers = #tpu.dot_dimension_numbers<[1], [1], [0], [0], [0, 0, 1, 0], [], []>} : vector<8x4xf32>, vector<8x4xf32>, vector<8x8xf32> -> vector<8x8xf32>
    %c6 = arith.constant 6 : index
    %c0_205 = arith.constant 0 : index
    %c0_206 = arith.constant 0 : index
    %277 = vector.load %arg13[%c6, %c0_205, %c0_206] : memref<8x8x1xf32, #tpu.memory_space<vmem>>, vector<1x8x1xf32>
    %278 = vector.shape_cast %277 : vector<1x8x1xf32> to vector<8x1xf32>
    %cst_207 = arith.constant dense<0xFF800000> : vector<8xf32>
    %279 = vector.multi_reduction <maximumf>, %276, %cst_207 [1] : vector<8x8xf32> to vector<8xf32>
    %280 = vector.shape_cast %279 : vector<8xf32> to vector<8x1xf32>
    %281 = arith.maximumf %278, %280 : vector<8x1xf32>
    %282 = arith.subf %278, %281 : vector<8x1xf32>
    %283 = math.exp %282 : vector<8x1xf32>
    %284 = vector.broadcast %281 : vector<8x1xf32> to vector<8x8xf32>
    %285 = arith.subf %276, %284 : vector<8x8xf32>
    %286 = math.exp %285 : vector<8x8xf32>
    %c6_208 = arith.constant 6 : index
    %c0_209 = arith.constant 0 : index
    %c0_210 = arith.constant 0 : index
    %287 = vector.load %arg14[%c6_208, %c0_209, %c0_210] : memref<8x8x1xf32, #tpu.memory_space<vmem>>, vector<1x8x1xf32>
    %288 = vector.shape_cast %287 : vector<1x8x1xf32> to vector<8x1xf32>
    %289 = arith.mulf %283, %288 : vector<8x1xf32>
    %cst_211 = arith.constant dense<0.000000e+00> : vector<8xf32>
    %290 = vector.multi_reduction <add>, %286, %cst_211 [1] : vector<8x8xf32> to vector<8xf32>
    %291 = vector.shape_cast %290 : vector<8xf32> to vector<8x1xf32>
    %292 = arith.addf %289, %291 : vector<8x1xf32>
    %c6_212 = arith.constant 6 : index
    %c0_213 = arith.constant 0 : index
    %c0_214 = arith.constant 0 : index
    %293 = vector.load %arg14[%c6_212, %c0_213, %c0_214] : memref<8x8x1xf32, #tpu.memory_space<vmem>>, vector<1x8x1xf32>
    %294 = vector.shape_cast %293 : vector<1x8x1xf32> to vector<8x1xf32>
    %295 = vector.shape_cast %292 : vector<8x1xf32> to vector<1x8x1xf32>
    tpu.vector_store %arg14[%c6_212, %c0_213, %c0_214], %295 {strides = array<i32>} : memref<8x8x1xf32, #tpu.memory_space<vmem>>, vector<1x8x1xf32>,
    %c6_215 = arith.constant 6 : index
    %c0_216 = arith.constant 0 : index
    %c0_217 = arith.constant 0 : index
    %296 = vector.load %arg15[%c6_215, %c0_216, %c0_217] : memref<8x8x4xf32, #tpu.memory_space<vmem>>, vector<1x8x4xf32>
    %297 = vector.shape_cast %296 : vector<1x8x4xf32> to vector<8x4xf32>
    %298 = vector.broadcast %283 : vector<8x1xf32> to vector<8x4xf32>
    %299 = arith.mulf %298, %297 : vector<8x4xf32>
    %cst_218 = arith.constant dense<0.000000e+00> : vector<8x4xf32>
    %300 = tpu.matmul %286, %275, %cst_218 {dimension_numbers = #tpu.dot_dimension_numbers<[1], [0], [0], [1], [0, 0, 1, 1], [], []>} : vector<8x8xf32>, vector<8x4xf32>, vector<8x4xf32> -> vector<8x4xf32>
    %301 = arith.addf %299, %300 : vector<8x4xf32>
    %c6_219 = arith.constant 6 : index
    %c0_220 = arith.constant 0 : index
    %c0_221 = arith.constant 0 : index
    %302 = vector.load %arg15[%c6_219, %c0_220, %c0_221] : memref<8x8x4xf32, #tpu.memory_space<vmem>>, vector<1x8x4xf32>
    %303 = vector.shape_cast %302 : vector<1x8x4xf32> to vector<8x4xf32>
    %304 = vector.shape_cast %301 : vector<8x4xf32> to vector<1x8x4xf32>
    tpu.vector_store %arg15[%c6_219, %c0_220, %c0_221], %304 {strides = array<i32>} : memref<8x8x4xf32, #tpu.memory_space<vmem>>, vector<1x8x4xf32>,
    %c6_222 = arith.constant 6 : index
    %c0_223 = arith.constant 0 : index
    %c0_224 = arith.constant 0 : index
    %305 = vector.load %arg16[%c6_222, %c0_223, %c0_224] : memref<8x8x4xf32, #tpu.memory_space<vmem>>, vector<1x8x4xf32>
    %306 = vector.shape_cast %305 : vector<1x8x4xf32> to vector<8x4xf32>
    %c6_225 = arith.constant 6 : index
    %c0_226 = arith.constant 0 : index
    %c0_227 = arith.constant 0 : index
    %307 = vector.load %arg8[%c6_225, %c0_226, %c0_227] : memref<8x8x8xf32, #tpu.memory_space<vmem>>, vector<1x8x8xf32>
    %308 = vector.shape_cast %307 : vector<1x8x8xf32> to vector<8x8xf32>
    %cst_228 = arith.constant dense<0.000000e+00> : vector<8x4xf32>
    %309 = tpu.matmul %308, %275, %cst_228 {dimension_numbers = #tpu.dot_dimension_numbers<[1], [0], [0], [1], [0, 0, 1, 1], [], []>} : vector<8x8xf32>, vector<8x4xf32>, vector<8x4xf32> -> vector<8x4xf32>
    %310 = arith.addf %306, %309 : vector<8x4xf32>
    %c6_229 = arith.constant 6 : index
    %c0_230 = arith.constant 0 : index
    %c0_231 = arith.constant 0 : index
    %311 = vector.load %arg16[%c6_229, %c0_230, %c0_231] : memref<8x8x4xf32, #tpu.memory_space<vmem>>, vector<1x8x4xf32>
    %312 = vector.shape_cast %311 : vector<1x8x4xf32> to vector<8x4xf32>
    %313 = vector.shape_cast %310 : vector<8x4xf32> to vector<1x8x4xf32>
    tpu.vector_store %arg16[%c6_229, %c0_230, %c0_231], %313 {strides = array<i32>} : memref<8x8x4xf32, #tpu.memory_space<vmem>>, vector<1x8x4xf32>,
    %c6_232 = arith.constant 6 : index
    %c0_233 = arith.constant 0 : index
    %c0_234 = arith.constant 0 : index
    %314 = vector.load %arg13[%c6_232, %c0_233, %c0_234] : memref<8x8x1xf32, #tpu.memory_space<vmem>>, vector<1x8x1xf32>
    %315 = vector.shape_cast %314 : vector<1x8x1xf32> to vector<8x1xf32>
    %316 = vector.shape_cast %281 : vector<8x1xf32> to vector<1x8x1xf32>
    tpu.vector_store %arg13[%c6_232, %c0_233, %c0_234], %316 {strides = array<i32>} : memref<8x8x1xf32, #tpu.memory_space<vmem>>, vector<1x8x1xf32>,
    %c0_235 = arith.constant 0 : index
    %c28 = arith.constant 28 : index
    %317 = vector.load %arg12[%c0_235, %c28] : memref<8x32xf32, #tpu.memory_space<vmem>>, vector<8x4xf32>
    %318 = vector.extract_strided_slice %6 {offsets = [0, 28], sizes = [8, 4], strides = [1, 1]} : vector<8x32xf32> to vector<8x4xf32>
    %319 = vector.extract_strided_slice %8 {offsets = [0, 28], sizes = [8, 4], strides = [1, 1]} : vector<8x32xf32> to vector<8x4xf32>
    %cst_236 = arith.constant dense<0.000000e+00> : vector<8x8xf32>
    %320 = tpu.matmul %317, %318, %cst_236 {dimension_numbers = #tpu.dot_dimension_numbers<[1], [1], [0], [0], [0, 0, 1, 0], [], []>} : vector<8x4xf32>, vector<8x4xf32>, vector<8x8xf32> -> vector<8x8xf32>
    %c7 = arith.constant 7 : index
    %c0_237 = arith.constant 0 : index
    %c0_238 = arith.constant 0 : index
    %321 = vector.load %arg13[%c7, %c0_237, %c0_238] : memref<8x8x1xf32, #tpu.memory_space<vmem>>, vector<1x8x1xf32>
    %322 = vector.shape_cast %321 : vector<1x8x1xf32> to vector<8x1xf32>
    %cst_239 = arith.constant dense<0xFF800000> : vector<8xf32>
    %323 = vector.multi_reduction <maximumf>, %320, %cst_239 [1] : vector<8x8xf32> to vector<8xf32>
    %324 = vector.shape_cast %323 : vector<8xf32> to vector<8x1xf32>
    %325 = arith.maximumf %322, %324 : vector<8x1xf32>
    %326 = arith.subf %322, %325 : vector<8x1xf32>
    %327 = math.exp %326 : vector<8x1xf32>
    %328 = vector.broadcast %325 : vector<8x1xf32> to vector<8x8xf32>
    %329 = arith.subf %320, %328 : vector<8x8xf32>
    %330 = math.exp %329 : vector<8x8xf32>
    %c7_240 = arith.constant 7 : index
    %c0_241 = arith.constant 0 : index
    %c0_242 = arith.constant 0 : index
    %331 = vector.load %arg14[%c7_240, %c0_241, %c0_242] : memref<8x8x1xf32, #tpu.memory_space<vmem>>, vector<1x8x1xf32>
    %332 = vector.shape_cast %331 : vector<1x8x1xf32> to vector<8x1xf32>
    %333 = arith.mulf %327, %332 : vector<8x1xf32>
    %cst_243 = arith.constant dense<0.000000e+00> : vector<8xf32>
    %334 = vector.multi_reduction <add>, %330, %cst_243 [1] : vector<8x8xf32> to vector<8xf32>
    %335 = vector.shape_cast %334 : vector<8xf32> to vector<8x1xf32>
    %336 = arith.addf %333, %335 : vector<8x1xf32>
    %c7_244 = arith.constant 7 : index
    %c0_245 = arith.constant 0 : index
    %c0_246 = arith.constant 0 : index
    %337 = vector.load %arg14[%c7_244, %c0_245, %c0_246] : memref<8x8x1xf32, #tpu.memory_space<vmem>>, vector<1x8x1xf32>
    %338 = vector.shape_cast %337 : vector<1x8x1xf32> to vector<8x1xf32>
    %339 = vector.shape_cast %336 : vector<8x1xf32> to vector<1x8x1xf32>
    tpu.vector_store %arg14[%c7_244, %c0_245, %c0_246], %339 {strides = array<i32>} : memref<8x8x1xf32, #tpu.memory_space<vmem>>, vector<1x8x1xf32>,
    %c7_247 = arith.constant 7 : index
    %c0_248 = arith.constant 0 : index
    %c0_249 = arith.constant 0 : index
    %340 = vector.load %arg15[%c7_247, %c0_248, %c0_249] : memref<8x8x4xf32, #tpu.memory_space<vmem>>, vector<1x8x4xf32>
    %341 = vector.shape_cast %340 : vector<1x8x4xf32> to vector<8x4xf32>
    %342 = vector.broadcast %327 : vector<8x1xf32> to vector<8x4xf32>
    %343 = arith.mulf %342, %341 : vector<8x4xf32>
    %cst_250 = arith.constant dense<0.000000e+00> : vector<8x4xf32>
    %344 = tpu.matmul %330, %319, %cst_250 {dimension_numbers = #tpu.dot_dimension_numbers<[1], [0], [0], [1], [0, 0, 1, 1], [], []>} : vector<8x8xf32>, vector<8x4xf32>, vector<8x4xf32> -> vector<8x4xf32>
    %345 = arith.addf %343, %344 : vector<8x4xf32>
    %c7_251 = arith.constant 7 : index
    %c0_252 = arith.constant 0 : index
    %c0_253 = arith.constant 0 : index
    %346 = vector.load %arg15[%c7_251, %c0_252, %c0_253] : memref<8x8x4xf32, #tpu.memory_space<vmem>>, vector<1x8x4xf32>
    %347 = vector.shape_cast %346 : vector<1x8x4xf32> to vector<8x4xf32>
    %348 = vector.shape_cast %345 : vector<8x4xf32> to vector<1x8x4xf32>
    tpu.vector_store %arg15[%c7_251, %c0_252, %c0_253], %348 {strides = array<i32>} : memref<8x8x4xf32, #tpu.memory_space<vmem>>, vector<1x8x4xf32>,
    %c7_254 = arith.constant 7 : index
    %c0_255 = arith.constant 0 : index
    %c0_256 = arith.constant 0 : index
    %349 = vector.load %arg16[%c7_254, %c0_255, %c0_256] : memref<8x8x4xf32, #tpu.memory_space<vmem>>, vector<1x8x4xf32>
    %350 = vector.shape_cast %349 : vector<1x8x4xf32> to vector<8x4xf32>
    %c7_257 = arith.constant 7 : index
    %c0_258 = arith.constant 0 : index
    %c0_259 = arith.constant 0 : index
    %351 = vector.load %arg8[%c7_257, %c0_258, %c0_259] : memref<8x8x8xf32, #tpu.memory_space<vmem>>, vector<1x8x8xf32>
    %352 = vector.shape_cast %351 : vector<1x8x8xf32> to vector<8x8xf32>
    %cst_260 = arith.constant dense<0.000000e+00> : vector<8x4xf32>
    %353 = tpu.matmul %352, %319, %cst_260 {dimension_numbers = #tpu.dot_dimension_numbers<[1], [0], [0], [1], [0, 0, 1, 1], [], []>} : vector<8x8xf32>, vector<8x4xf32>, vector<8x4xf32> -> vector<8x4xf32>
    %354 = arith.addf %350, %353 : vector<8x4xf32>
    %c7_261 = arith.constant 7 : index
    %c0_262 = arith.constant 0 : index
    %c0_263 = arith.constant 0 : index
    %355 = vector.load %arg16[%c7_261, %c0_262, %c0_263] : memref<8x8x4xf32, #tpu.memory_space<vmem>>, vector<1x8x4xf32>
    %356 = vector.shape_cast %355 : vector<1x8x4xf32> to vector<8x4xf32>
    %357 = vector.shape_cast %354 : vector<8x4xf32> to vector<1x8x4xf32>
    tpu.vector_store %arg16[%c7_261, %c0_262, %c0_263], %357 {strides = array<i32>} : memref<8x8x4xf32, #tpu.memory_space<vmem>>, vector<1x8x4xf32>,
    %c7_264 = arith.constant 7 : index
    %c0_265 = arith.constant 0 : index
    %c0_266 = arith.constant 0 : index
    %358 = vector.load %arg13[%c7_264, %c0_265, %c0_266] : memref<8x8x1xf32, #tpu.memory_space<vmem>>, vector<1x8x1xf32>
    %359 = vector.shape_cast %358 : vector<1x8x1xf32> to vector<8x1xf32>
    %360 = vector.shape_cast %325 : vector<8x1xf32> to vector<1x8x1xf32>
    tpu.vector_store %arg13[%c7_264, %c0_265, %c0_266], %360 {strides = array<i32>} : memref<8x8x1xf32, #tpu.memory_space<vmem>>, vector<1x8x1xf32>,
    %c0_i32_267 = arith.constant 0 : i32
    %361 = arith.cmpi eq, %arg2, %c0_i32_267 : i32
    %362 = arith.extui %361 : i1 to i32
    %c0_i32_268 = arith.constant 0 : i32
    %363 = arith.cmpi ne, %362, %c0_i32_268 : i32
    scf.if %363 {
      %c0_269 = arith.constant 0 : index
      %c0_270 = arith.constant 0 : index
      %c0_271 = arith.constant 0 : index
      %364 = vector.load %arg14[%c0_269, %c0_270, %c0_271] : memref<8x8x1xf32, #tpu.memory_space<vmem>>, vector<1x8x1xf32>
      %365 = vector.shape_cast %364 : vector<1x8x1xf32> to vector<8x1xf32>
      %cst_272 = arith.constant 1.000000e+00 : f32
      %366 = vector.broadcast %cst_272 : f32 to vector<8x1xf32>
      %367 = arith.divf %366, %365 : vector<8x1xf32>
      %c0_273 = arith.constant 0 : index
      %c0_274 = arith.constant 0 : index
      %c0_275 = arith.constant 0 : index
      %368 = vector.load %arg15[%c0_273, %c0_274, %c0_275] : memref<8x8x4xf32, #tpu.memory_space<vmem>>, vector<1x8x4xf32>
      %369 = vector.shape_cast %368 : vector<1x8x4xf32> to vector<8x4xf32>
      %370 = vector.broadcast %367 : vector<8x1xf32> to vector<8x4xf32>
      %371 = arith.mulf %369, %370 : vector<8x4xf32>
      %c0_276 = arith.constant 0 : index
      %c0_277 = arith.constant 0 : index
      %c0_278 = arith.constant 0 : index
      %372 = vector.load %arg16[%c0_276, %c0_277, %c0_278] : memref<8x8x4xf32, #tpu.memory_space<vmem>>, vector<1x8x4xf32>
      %373 = vector.shape_cast %372 : vector<1x8x4xf32> to vector<8x4xf32>
      %374 = arith.addf %371, %373 : vector<8x4xf32>
      %c0_279 = arith.constant 0 : index
      %c0_280 = arith.constant 0 : index
      %375 = vector.load %arg17[%c0_279, %c0_280] : memref<8x32xf32, #tpu.memory_space<vmem>>, vector<8x4xf32>
      tpu.vector_store %arg17[%c0_279, %c0_280], %374 {strides = array<i32>} : memref<8x32xf32, #tpu.memory_space<vmem>>, vector<8x4xf32>,
      %c1_281 = arith.constant 1 : index
      %c0_282 = arith.constant 0 : index
      %c0_283 = arith.constant 0 : index
      %376 = vector.load %arg14[%c1_281, %c0_282, %c0_283] : memref<8x8x1xf32, #tpu.memory_space<vmem>>, vector<1x8x1xf32>
      %377 = vector.shape_cast %376 : vector<1x8x1xf32> to vector<8x1xf32>
      %cst_284 = arith.constant 1.000000e+00 : f32
      %378 = vector.broadcast %cst_284 : f32 to vector<8x1xf32>
      %379 = arith.divf %378, %377 : vector<8x1xf32>
      %c1_285 = arith.constant 1 : index
      %c0_286 = arith.constant 0 : index
      %c0_287 = arith.constant 0 : index
      %380 = vector.load %arg15[%c1_285, %c0_286, %c0_287] : memref<8x8x4xf32, #tpu.memory_space<vmem>>, vector<1x8x4xf32>
      %381 = vector.shape_cast %380 : vector<1x8x4xf32> to vector<8x4xf32>
      %382 = vector.broadcast %379 : vector<8x1xf32> to vector<8x4xf32>
      %383 = arith.mulf %381, %382 : vector<8x4xf32>
      %c1_288 = arith.constant 1 : index
      %c0_289 = arith.constant 0 : index
      %c0_290 = arith.constant 0 : index
      %384 = vector.load %arg16[%c1_288, %c0_289, %c0_290] : memref<8x8x4xf32, #tpu.memory_space<vmem>>, vector<1x8x4xf32>
      %385 = vector.shape_cast %384 : vector<1x8x4xf32> to vector<8x4xf32>
      %386 = arith.addf %383, %385 : vector<8x4xf32>
      %c0_291 = arith.constant 0 : index
      %c4_292 = arith.constant 4 : index
      %387 = vector.load %arg17[%c0_291, %c4_292] : memref<8x32xf32, #tpu.memory_space<vmem>>, vector<8x4xf32>
      tpu.vector_store %arg17[%c0_291, %c4_292], %386 {strides = array<i32>} : memref<8x32xf32, #tpu.memory_space<vmem>>, vector<8x4xf32>,
      %c2_293 = arith.constant 2 : index
      %c0_294 = arith.constant 0 : index
      %c0_295 = arith.constant 0 : index
      %388 = vector.load %arg14[%c2_293, %c0_294, %c0_295] : memref<8x8x1xf32, #tpu.memory_space<vmem>>, vector<1x8x1xf32>
      %389 = vector.shape_cast %388 : vector<1x8x1xf32> to vector<8x1xf32>
      %cst_296 = arith.constant 1.000000e+00 : f32
      %390 = vector.broadcast %cst_296 : f32 to vector<8x1xf32>
      %391 = arith.divf %390, %389 : vector<8x1xf32>
      %c2_297 = arith.constant 2 : index
      %c0_298 = arith.constant 0 : index
      %c0_299 = arith.constant 0 : index
      %392 = vector.load %arg15[%c2_297, %c0_298, %c0_299] : memref<8x8x4xf32, #tpu.memory_space<vmem>>, vector<1x8x4xf32>
      %393 = vector.shape_cast %392 : vector<1x8x4xf32> to vector<8x4xf32>
      %394 = vector.broadcast %391 : vector<8x1xf32> to vector<8x4xf32>
      %395 = arith.mulf %393, %394 : vector<8x4xf32>
      %c2_300 = arith.constant 2 : index
      %c0_301 = arith.constant 0 : index
      %c0_302 = arith.constant 0 : index
      %396 = vector.load %arg16[%c2_300, %c0_301, %c0_302] : memref<8x8x4xf32, #tpu.memory_space<vmem>>, vector<1x8x4xf32>
      %397 = vector.shape_cast %396 : vector<1x8x4xf32> to vector<8x4xf32>
      %398 = arith.addf %395, %397 : vector<8x4xf32>
      %c0_303 = arith.constant 0 : index
      %c8_304 = arith.constant 8 : index
      %399 = vector.load %arg17[%c0_303, %c8_304] : memref<8x32xf32, #tpu.memory_space<vmem>>, vector<8x4xf32>
      tpu.vector_store %arg17[%c0_303, %c8_304], %398 {strides = array<i32>} : memref<8x32xf32, #tpu.memory_space<vmem>>, vector<8x4xf32>,
      %c3_305 = arith.constant 3 : index
      %c0_306 = arith.constant 0 : index
      %c0_307 = arith.constant 0 : index
      %400 = vector.load %arg14[%c3_305, %c0_306, %c0_307] : memref<8x8x1xf32, #tpu.memory_space<vmem>>, vector<1x8x1xf32>
      %401 = vector.shape_cast %400 : vector<1x8x1xf32> to vector<8x1xf32>
      %cst_308 = arith.constant 1.000000e+00 : f32
      %402 = vector.broadcast %cst_308 : f32 to vector<8x1xf32>
      %403 = arith.divf %402, %401 : vector<8x1xf32>
      %c3_309 = arith.constant 3 : index
      %c0_310 = arith.constant 0 : index
      %c0_311 = arith.constant 0 : index
      %404 = vector.load %arg15[%c3_309, %c0_310, %c0_311] : memref<8x8x4xf32, #tpu.memory_space<vmem>>, vector<1x8x4xf32>
      %405 = vector.shape_cast %404 : vector<1x8x4xf32> to vector<8x4xf32>
      %406 = vector.broadcast %403 : vector<8x1xf32> to vector<8x4xf32>
      %407 = arith.mulf %405, %406 : vector<8x4xf32>
      %c3_312 = arith.constant 3 : index
      %c0_313 = arith.constant 0 : index
      %c0_314 = arith.constant 0 : index
      %408 = vector.load %arg16[%c3_312, %c0_313, %c0_314] : memref<8x8x4xf32, #tpu.memory_space<vmem>>, vector<1x8x4xf32>
      %409 = vector.shape_cast %408 : vector<1x8x4xf32> to vector<8x4xf32>
      %410 = arith.addf %407, %409 : vector<8x4xf32>
      %c0_315 = arith.constant 0 : index
      %c12_316 = arith.constant 12 : index
      %411 = vector.load %arg17[%c0_315, %c12_316] : memref<8x32xf32, #tpu.memory_space<vmem>>, vector<8x4xf32>
      tpu.vector_store %arg17[%c0_315, %c12_316], %410 {strides = array<i32>} : memref<8x32xf32, #tpu.memory_space<vmem>>, vector<8x4xf32>,
      %c4_317 = arith.constant 4 : index
      %c0_318 = arith.constant 0 : index
      %c0_319 = arith.constant 0 : index
      %412 = vector.load %arg14[%c4_317, %c0_318, %c0_319] : memref<8x8x1xf32, #tpu.memory_space<vmem>>, vector<1x8x1xf32>
      %413 = vector.shape_cast %412 : vector<1x8x1xf32> to vector<8x1xf32>
      %cst_320 = arith.constant 1.000000e+00 : f32
      %414 = vector.broadcast %cst_320 : f32 to vector<8x1xf32>
      %415 = arith.divf %414, %413 : vector<8x1xf32>
      %c4_321 = arith.constant 4 : index
      %c0_322 = arith.constant 0 : index
      %c0_323 = arith.constant 0 : index
      %416 = vector.load %arg15[%c4_321, %c0_322, %c0_323] : memref<8x8x4xf32, #tpu.memory_space<vmem>>, vector<1x8x4xf32>
      %417 = vector.shape_cast %416 : vector<1x8x4xf32> to vector<8x4xf32>
      %418 = vector.broadcast %415 : vector<8x1xf32> to vector<8x4xf32>
      %419 = arith.mulf %417, %418 : vector<8x4xf32>
      %c4_324 = arith.constant 4 : index
      %c0_325 = arith.constant 0 : index
      %c0_326 = arith.constant 0 : index
      %420 = vector.load %arg16[%c4_324, %c0_325, %c0_326] : memref<8x8x4xf32, #tpu.memory_space<vmem>>, vector<1x8x4xf32>
      %421 = vector.shape_cast %420 : vector<1x8x4xf32> to vector<8x4xf32>
      %422 = arith.addf %419, %421 : vector<8x4xf32>
      %c0_327 = arith.constant 0 : index
      %c16_328 = arith.constant 16 : index
      %423 = vector.load %arg17[%c0_327, %c16_328] : memref<8x32xf32, #tpu.memory_space<vmem>>, vector<8x4xf32>
      tpu.vector_store %arg17[%c0_327, %c16_328], %422 {strides = array<i32>} : memref<8x32xf32, #tpu.memory_space<vmem>>, vector<8x4xf32>,
      %c5_329 = arith.constant 5 : index
      %c0_330 = arith.constant 0 : index
      %c0_331 = arith.constant 0 : index
      %424 = vector.load %arg14[%c5_329, %c0_330, %c0_331] : memref<8x8x1xf32, #tpu.memory_space<vmem>>, vector<1x8x1xf32>
      %425 = vector.shape_cast %424 : vector<1x8x1xf32> to vector<8x1xf32>
      %cst_332 = arith.constant 1.000000e+00 : f32
      %426 = vector.broadcast %cst_332 : f32 to vector<8x1xf32>
      %427 = arith.divf %426, %425 : vector<8x1xf32>
      %c5_333 = arith.constant 5 : index
      %c0_334 = arith.constant 0 : index
      %c0_335 = arith.constant 0 : index
      %428 = vector.load %arg15[%c5_333, %c0_334, %c0_335] : memref<8x8x4xf32, #tpu.memory_space<vmem>>, vector<1x8x4xf32>
      %429 = vector.shape_cast %428 : vector<1x8x4xf32> to vector<8x4xf32>
      %430 = vector.broadcast %427 : vector<8x1xf32> to vector<8x4xf32>
      %431 = arith.mulf %429, %430 : vector<8x4xf32>
      %c5_336 = arith.constant 5 : index
      %c0_337 = arith.constant 0 : index
      %c0_338 = arith.constant 0 : index
      %432 = vector.load %arg16[%c5_336, %c0_337, %c0_338] : memref<8x8x4xf32, #tpu.memory_space<vmem>>, vector<1x8x4xf32>
      %433 = vector.shape_cast %432 : vector<1x8x4xf32> to vector<8x4xf32>
      %434 = arith.addf %431, %433 : vector<8x4xf32>
      %c0_339 = arith.constant 0 : index
      %c20_340 = arith.constant 20 : index
      %435 = vector.load %arg17[%c0_339, %c20_340] : memref<8x32xf32, #tpu.memory_space<vmem>>, vector<8x4xf32>
      tpu.vector_store %arg17[%c0_339, %c20_340], %434 {strides = array<i32>} : memref<8x32xf32, #tpu.memory_space<vmem>>, vector<8x4xf32>,
      %c6_341 = arith.constant 6 : index
      %c0_342 = arith.constant 0 : index
      %c0_343 = arith.constant 0 : index
      %436 = vector.load %arg14[%c6_341, %c0_342, %c0_343] : memref<8x8x1xf32, #tpu.memory_space<vmem>>, vector<1x8x1xf32>
      %437 = vector.shape_cast %436 : vector<1x8x1xf32> to vector<8x1xf32>
      %cst_344 = arith.constant 1.000000e+00 : f32
      %438 = vector.broadcast %cst_344 : f32 to vector<8x1xf32>
      %439 = arith.divf %438, %437 : vector<8x1xf32>
      %c6_345 = arith.constant 6 : index
      %c0_346 = arith.constant 0 : index
      %c0_347 = arith.constant 0 : index
      %440 = vector.load %arg15[%c6_345, %c0_346, %c0_347] : memref<8x8x4xf32, #tpu.memory_space<vmem>>, vector<1x8x4xf32>
      %441 = vector.shape_cast %440 : vector<1x8x4xf32> to vector<8x4xf32>
      %442 = vector.broadcast %439 : vector<8x1xf32> to vector<8x4xf32>
      %443 = arith.mulf %441, %442 : vector<8x4xf32>
      %c6_348 = arith.constant 6 : index
      %c0_349 = arith.constant 0 : index
      %c0_350 = arith.constant 0 : index
      %444 = vector.load %arg16[%c6_348, %c0_349, %c0_350] : memref<8x8x4xf32, #tpu.memory_space<vmem>>, vector<1x8x4xf32>
      %445 = vector.shape_cast %444 : vector<1x8x4xf32> to vector<8x4xf32>
      %446 = arith.addf %443, %445 : vector<8x4xf32>
      %c0_351 = arith.constant 0 : index
      %c24_352 = arith.constant 24 : index
      %447 = vector.load %arg17[%c0_351, %c24_352] : memref<8x32xf32, #tpu.memory_space<vmem>>, vector<8x4xf32>
      tpu.vector_store %arg17[%c0_351, %c24_352], %446 {strides = array<i32>} : memref<8x32xf32, #tpu.memory_space<vmem>>, vector<8x4xf32>,
      %c7_353 = arith.constant 7 : index
      %c0_354 = arith.constant 0 : index
      %c0_355 = arith.constant 0 : index
      %448 = vector.load %arg14[%c7_353, %c0_354, %c0_355] : memref<8x8x1xf32, #tpu.memory_space<vmem>>, vector<1x8x1xf32>
      %449 = vector.shape_cast %448 : vector<1x8x1xf32> to vector<8x1xf32>
      %cst_356 = arith.constant 1.000000e+00 : f32
      %450 = vector.broadcast %cst_356 : f32 to vector<8x1xf32>
      %451 = arith.divf %450, %449 : vector<8x1xf32>
      %c7_357 = arith.constant 7 : index
      %c0_358 = arith.constant 0 : index
      %c0_359 = arith.constant 0 : index
      %452 = vector.load %arg15[%c7_357, %c0_358, %c0_359] : memref<8x8x4xf32, #tpu.memory_space<vmem>>, vector<1x8x4xf32>
      %453 = vector.shape_cast %452 : vector<1x8x4xf32> to vector<8x4xf32>
      %454 = vector.broadcast %451 : vector<8x1xf32> to vector<8x4xf32>
      %455 = arith.mulf %453, %454 : vector<8x4xf32>
      %c7_360 = arith.constant 7 : index
      %c0_361 = arith.constant 0 : index
      %c0_362 = arith.constant 0 : index
      %456 = vector.load %arg16[%c7_360, %c0_361, %c0_362] : memref<8x8x4xf32, #tpu.memory_space<vmem>>, vector<1x8x4xf32>
      %457 = vector.shape_cast %456 : vector<1x8x4xf32> to vector<8x4xf32>
      %458 = arith.addf %455, %457 : vector<8x4xf32>
      %c0_363 = arith.constant 0 : index
      %c28_364 = arith.constant 28 : index
      %459 = vector.load %arg17[%c0_363, %c28_364] : memref<8x32xf32, #tpu.memory_space<vmem>>, vector<8x4xf32>
      tpu.vector_store %arg17[%c0_363, %c28_364], %458 {strides = array<i32>} : memref<8x32xf32, #tpu.memory_space<vmem>>, vector<8x4xf32>,
      %c0_365 = arith.constant 0 : index
      %c0_366 = arith.constant 0 : index
      %460 = vector.load %arg17[%c0_365, %c0_366] : memref<8x32xf32, #tpu.memory_space<vmem>>, vector<8x32xf32>
      %cst_367 = arith.constant dense<0.000000e+00> : vector<8xf32>
      %461 = vector.multi_reduction <add>, %460, %cst_367 [1] : vector<8x32xf32> to vector<8xf32>
      %462 = vector.shape_cast %461 : vector<8xf32> to vector<8x1xf32>
      %cst_368 = arith.constant 3.200000e+01 : f32
      %463 = vector.broadcast %cst_368 : f32 to vector<8x1xf32>
      %464 = arith.divf %462, %463 : vector<8x1xf32>
      %465 = vector.broadcast %464 : vector<8x1xf32> to vector<8x32xf32>
      %466 = arith.subf %460, %465 : vector<8x32xf32>
      %467 = arith.mulf %466, %466 : vector<8x32xf32>
      %cst_369 = arith.constant dense<0.000000e+00> : vector<8xf32>
      %468 = vector.multi_reduction <add>, %467, %cst_369 [1] : vector<8x32xf32> to vector<8xf32>
      %469 = vector.shape_cast %468 : vector<8xf32> to vector<8x1xf32>
      %cst_370 = arith.constant 3.200000e+01 : f32
      %470 = vector.broadcast %cst_370 : f32 to vector<8x1xf32>
      %471 = arith.divf %469, %470 : vector<8x1xf32>
      %472 = vector.broadcast %464 : vector<8x1xf32> to vector<8x32xf32>
      %473 = arith.subf %460, %472 : vector<8x32xf32>
      %cst_371 = arith.constant 9.99999974E-6 : f32
      %474 = vector.broadcast %cst_371 : f32 to vector<8x1xf32>
      %475 = arith.addf %471, %474 : vector<8x1xf32>
      %476 = math.rsqrt %475 : vector<8x1xf32>
      %477 = vector.broadcast %476 : vector<8x1xf32> to vector<8x32xf32>
      %478 = arith.mulf %473, %477 : vector<8x32xf32>
      %c0_372 = arith.constant 0 : index
      %c0_373 = arith.constant 0 : index
      %479 = vector.load %arg9[%c0_372, %c0_373] : memref<1x32xf32, #tpu.memory_space<vmem>>, vector<1x32xf32>
      %480 = vector.broadcast %479 : vector<1x32xf32> to vector<8x32xf32>
      %481 = arith.mulf %478, %480 : vector<8x32xf32>
      %c0_374 = arith.constant 0 : index
      %c0_375 = arith.constant 0 : index
      %482 = vector.load %arg10[%c0_374, %c0_375] : memref<1x32xf32, #tpu.memory_space<vmem>>, vector<1x32xf32>
      %483 = vector.broadcast %482 : vector<1x32xf32> to vector<8x32xf32>
      %484 = arith.addf %481, %483 : vector<8x32xf32>
      %c0_376 = arith.constant 0 : index
      %c0_377 = arith.constant 0 : index
      %c0_378 = arith.constant 0 : index
      %485 = vector.load %arg11[%c0_376, %c0_377, %c0_378] : memref<1x8x32xf32, #tpu.memory_space<vmem>>, vector<1x8x32xf32>
      %486 = vector.shape_cast %485 : vector<1x8x32xf32> to vector<8x32xf32>
      %487 = vector.shape_cast %484 : vector<8x32xf32> to vector<1x8x32xf32>
      tpu.vector_store %arg11[%c0_376, %c0_377, %c0_378], %487 {strides = array<i32>} : memref<1x8x32xf32, #tpu.memory_space<vmem>>, vector<1x8x32xf32>,
    } else {
    }
    return
  }
  func.func @transform_0(%arg0: i32, %arg1: i32, %arg2: i32) -> (i32, i32, i32) {
    %c0_i32 = arith.constant 0 : i32
    %c0_i32_0 = arith.constant 0 : i32
    return %arg0, %arg1, %c0_i32 : i32, i32, i32
  }
  func.func @transform_1(%arg0: i32, %arg1: i32, %arg2: i32) -> (i32, i32, i32) {
    %c0_i32 = arith.constant 0 : i32
    %c0_i32_0 = arith.constant 0 : i32
    return %arg0, %arg2, %c0_i32 : i32, i32, i32
  }
  func.func @transform_2(%arg0: i32, %arg1: i32, %arg2: i32) -> (i32, i32) {
    %c0_i32 = arith.constant 0 : i32
    %c0_i32_0 = arith.constant 0 : i32
    %c0_i32_1 = arith.constant 0 : i32
    return %c0_i32, %c0_i32_0 : i32, i32
  }
  func.func @transform_3(%arg0: i32, %arg1: i32, %arg2: i32) -> (i32, i32) {
    %c0_i32 = arith.constant 0 : i32
    %c0_i32_0 = arith.constant 0 : i32
    %c0_i32_1 = arith.constant 0 : i32
    return %c0_i32, %c0_i32_0 : i32, i32
  }
  func.func @transform_4(%arg0: i32, %arg1: i32, %arg2: i32) -> (i32, i32) {
    %c0_i32 = arith.constant 0 : i32
    %c0_i32_0 = arith.constant 0 : i32
    %c0_i32_1 = arith.constant 0 : i32
    return %c0_i32, %c0_i32_0 : i32, i32
  }
  func.func @transform_5(%arg0: i32, %arg1: i32, %arg2: i32) -> (i32, i32, i32) {
    %c0_i32 = arith.constant 0 : i32
    %c0_i32_0 = arith.constant 0 : i32
    return %c0_i32, %arg1, %arg2 : i32, i32, i32
  }
  func.func @transform_6(%arg0: i32, %arg1: i32, %arg2: i32) -> (i32, i32) {
    %c0_i32 = arith.constant 0 : i32
    %c0_i32_0 = arith.constant 0 : i32
    %c0_i32_1 = arith.constant 0 : i32
    return %c0_i32, %c0_i32_0 : i32, i32
  }
  func.func @transform_7(%arg0: i32, %arg1: i32, %arg2: i32) -> (i32, i32) {
    %c0_i32 = arith.constant 0 : i32
    %c0_i32_0 = arith.constant 0 : i32
    %c0_i32_1 = arith.constant 0 : i32
    return %c0_i32, %c0_i32_0 : i32, i32
  }
  func.func @transform_8(%arg0: i32, %arg1: i32, %arg2: i32) -> (i32, i32, i32) {
    %c0_i32 = arith.constant 0 : i32
    %c0_i32_0 = arith.constant 0 : i32
    return %arg0, %arg1, %c0_i32 : i32, i32, i32
  }
}

</mosaic_0001>

<llo_original>
// kernel: tpu_custom_call.1
$region0: #{tpu_custom_call.1}
  #allocation0 [shape = 'u32[]', space=smem, size = 0x4, offset = 0x4, fixed_abs, tag = 'smem constant byte address 0x4 - core index']
  #allocation1 [shape = 'u32[72,128]{1,0:T(1,128)}', space=vmem, size = 0x9000, scoped, tag = 'internal scratch']
  #allocation2 [shape = 'f32[8,32]{1,0:T(8,128)}', space=vmem, size = 0x1000, scoped, tag = 'scratch operand']
  #allocation3 [shape = 'f32[8,8,1]{2,1,0:T(8,128)}', space=vmem, size = 0x8000, scoped, tag = 'scratch operand']
  #allocation4 [shape = 'f32[8,8,1]{2,1,0:T(8,128)}', space=vmem, size = 0x8000, scoped, tag = 'scratch operand']
  #allocation5 [shape = 'f32[8,8,4]{2,1,0:T(8,128)}', space=vmem, size = 0x8000, scoped, tag = 'scratch operand']
  #allocation6 [shape = 'f32[8,8,4]{2,1,0:T(8,128)}', space=vmem, size = 0x8000, scoped, tag = 'scratch operand']
  #allocation7 [shape = 'f32[8,32]{1,0:T(8,128)}', space=vmem, size = 0x1000, scoped, tag = 'scratch operand']
  %s0 = inlined_call_operand.hbm [shape: f32[2,8,32], index: 0, kind: input, shape index: {}]
  %s1 = inlined_call_operand.hbm [shape: f32[2,8,32], index: 1, kind: input, shape index: {}]
  %s2 = inlined_call_operand.hbm [shape: f32[32,32], index: 2, kind: input, shape index: {}]
  %s3 = inlined_call_operand.hbm [shape: f32[32,32], index: 3, kind: input, shape index: {}]
  %s4 = inlined_call_operand.hbm [shape: f32[32,32], index: 4, kind: input, shape index: {}]
  %s5 = inlined_call_operand.hbm [shape: f32[8,8,8], index: 5, kind: input, shape index: {}]
  %s6 = inlined_call_operand.vmem [shape: f32[1,32], index: 6, kind: input, shape index: {}]
  %s7 = inlined_call_operand.vmem [shape: f32[1,32], index: 7, kind: input, shape index: {}]
  %s8 = inlined_call_operand.hbm [shape: f32[2,8,32], index: 8, kind: output, shape index: {}]
  %s9 = sld [smem:[#allocation0]]
  $region97: #{tpu_custom_call.1} parent=0
    _
  %s11 = ssub.s32 1, %s9
  %s12 = scalar_select 0, %s11, %s9
  $region1: #{tpu_custom_call.1} parent=0
    #allocation8 [shape = 'u8[8192]{0}', space=vmem, size = 0x2000, scoped, tag = 'input window, operand 0']
    #allocation9 [shape = 's32[2]{0}', space=sflag, size = 0x8, scoped, tag = 'scoped memory for tpu_custom_call.1']
    #allocation10 [shape = 's32[2]{0}', space=sflag, size = 0x8, scoped, tag = 'scoped memory for tpu_custom_call.1']
    #allocation11 [shape = 'u8[8192]{0}', space=vmem, size = 0x2000, scoped, tag = 'input window, operand 1']
    #allocation12 [shape = 's32[2]{0}', space=sflag, size = 0x8, scoped, tag = 'scoped memory for tpu_custom_call.1']
    #allocation13 [shape = 'u8[16384]{0}', space=vmem, size = 0x4000, scoped, tag = 'input window, operand 2, single buffered']
    #allocation14 [shape = 'u8[16384]{0}', space=vmem, size = 0x4000, scoped, tag = 'input window, operand 3, single buffered']
    #allocation15 [shape = 's32[1]{0}', space=sflag, size = 0x4, scoped, tag = 'scoped memory for tpu_custom_call.1']
    #allocation16 [shape = 'u8[16384]{0}', space=vmem, size = 0x4000, scoped, tag = 'input window, operand 4, single buffered']
    #allocation17 [shape = 'u8[32768]{0}', space=vmem, size = 0x8000, scoped, tag = 'input window, operand 5, single buffered']
    #allocation18 [shape = 's32[1]{0}', space=sflag, size = 0x4, scoped, tag = 'scoped memory for tpu_custom_call.1']
    #allocation19 [shape = 'u8[8192]{0}', space=vmem, size = 0x2000, scoped, tag = 'output window, operand 0']
    %13 = vsyncpa [#allocation9], 0
    %s14 = scalar_lea.sflag [#allocation9], 1
    %15 = vsyncpa %s14, 0
    %16 = vsyncpa [#allocation12], 0
    %s17 = scalar_lea.sflag [#allocation12], 1
    %18 = vsyncpa %s17, 0
    %19 = vsyncpa [#allocation15], 0
    %20 = vsyncpa [#allocation18], 0
    %21 = vsyncpa [#allocation10], 0
    %s22 = scalar_lea.sflag [#allocation10], 1
    %23 = vsyncpa %s22, 0
    loop: start=0, step=1, limit=4
    $region2: #{tpu_custom_call.1} parent=1 // loop_pre_header
      _
    $region3: #{tpu_custom_call.1} parent=1 // loop_header
      %s25 = sphi 0, %s29
      %p26 = scmp.ge.s32.totalorder %s25, 4
      %s32 = sphi 0, %s51
      %s33 = sphi 0, %s47
      %s34 = sphi 0, %s43
      %s35 = sphi 0, %s32
      %s36 = sphi 0, %s33
      %s37 = sphi 0, %s34
      %s38 = sphi 0, %s35
      %s39 = sphi 0, %s36
      %s40 = sphi 0, %s37
      %s56 = sphi 0, %s58
      %s59 = sphi 0, %s56
      %s60 = sphi 0, %s59
      %s76 = sphi 0, %s60
      %s84 = sphi 0, %s86
      %s87 = sphi 0, %s84
      %s88 = sphi 0, %s87
      %s104 = sphi 0, %s88
      %s108 = sphi 0, %s108
      %s110 = sphi 0, %s108
      %s111 = sphi 0, %s110
      %s125 = sphi 0, %s111
      %s129 = sphi 0, %s129
      %s131 = sphi 0, %s129
      %s132 = sphi 0, %s131
      %s146 = sphi 0, %s132
      %s150 = sphi 0, %s150
      %s152 = sphi 0, %s150
      %s153 = sphi 0, %s152
      %s167 = sphi 0, %s153
      %s175 = sphi 0, %s177
      %s178 = sphi 0, %s175
      %s179 = sphi 0, %s178
      %s195 = sphi 0, %s179
      %s199 = sphi 0, %s199
      %s201 = sphi 0, %s199
      %s202 = sphi 0, %s201
      %s216 = sphi 0, %s202
      %s220 = sphi 0, %s220
      %s222 = sphi 0, %s220
      %s223 = sphi 0, %s222
      %s237 = sphi 0, %s223
      %s245 = sphi 0, %s247
      %s248 = sphi 0, %s245
      %s249 = sphi 0, %s248
      %s265 = sphi 0, %s249
    $region4: #{tpu_custom_call.1} parent=1 // loop_header_branch
      %28 = sbr.rel (%p26) target = $region8
    $region5: #{tpu_custom_call.1} parent=1 // loop_body
      %s30 = ssub.s32 %s25, 1
      %s31 = ssub.s32 %s25, 2
      %s41 = sadd.s32 1, %s34
      %p42 = scmp.ge.s32.totalorder %s41, 1
      %s43 = scalar_select %p42, 0, %s41
      %s44 = sadd.s32 1, %s33
      %s45 = scalar_select %p42, %s44, %s33
      %p46 = scmp.ge.s32.totalorder %s45, 1
      %s47 = scalar_select %p46, 0, %s45
      %s48 = sadd.s32 1, %s32
      %s49 = scalar_select %p46, %s48, %s32
      %p50 = scmp.ge.s32.totalorder %s49, 2
      %s51 = scalar_select %p50, 0, %s49
      %s52 = ssub.s32 %s32, %s51
      %s53 = ssub.s32 %s33, %s47
      %s54 = sor.u32 %s52, %s53
      %p55 = scmp.eq.s32.totalorder %s54, 0
      %s57 = sadd.s32 %s56, 1
      %s58 = scalar_select %p55, %s56, %s57
      %p61 = pneg %p55
      %p62 = scmp.eq.s32.totalorder %s25, 1
      %p63 = por %p61, %p62
      %p64 = scmp.ne.s32.totalorder %s56, %s59
      %p65 = scmp.eq.s32.totalorder %s25, 0
      %p66 = por %p64, %p65
      %p67 = scmp.ne.s32.totalorder %s56, %s59
      %p68 = scmp.eq.s32.totalorder %s30, 1
      %p69 = por %p67, %p68
      %p70 = scmp.ne.s32.totalorder %s59, %s60
      %p71 = scmp.eq.s32.totalorder %s30, 0
      %p72 = por %p70, %p71
      %p73 = scmp.ne.s32.totalorder %s59, %s60
      %p74 = scmp.eq.s32.totalorder %s31, 1
      %p75 = por %p73, %p74
      %p77 = scmp.ne.s32.totalorder %s60, %s76
      %p78 = scmp.eq.s32.totalorder %s31, 0
      %p79 = por %p77, %p78
      %s80 = ssub.s32 %s32, %s51
      %s81 = ssub.s32 %s34, %s43
      %s82 = sor.u32 %s80, %s81
      %p83 = scmp.eq.s32.totalorder %s82, 0
      %s85 = sadd.s32 %s84, 1
      %s86 = scalar_select %p83, %s84, %s85
      %p89 = pneg %p83
      %p90 = scmp.eq.s32.totalorder %s25, 1
      %p91 = por %p89, %p90
      %p92 = scmp.ne.s32.totalorder %s84, %s87
      %p93 = scmp.eq.s32.totalorder %s25, 0
      %p94 = por %p92, %p93
      %p95 = scmp.ne.s32.totalorder %s84, %s87
      %p96 = scmp.eq.s32.totalorder %s30, 1
      %p97 = por %p95, %p96
      %p98 = scmp.ne.s32.totalorder %s87, %s88
      %p99 = scmp.eq.s32.totalorder %s30, 0
      %p100 = por %p98, %p99
      %p101 = scmp.ne.s32.totalorder %s87, %s88
      %p102 = scmp.eq.s32.totalorder %s31, 1
      %p103 = por %p101, %p102
      %p105 = scmp.ne.s32.totalorder %s88, %s104
      %p106 = scmp.eq.s32.totalorder %s31, 0
      %p107 = por %p105, %p106
      %s109 = sadd.s32 %s108, 1
      %p112 = scmp.eq.s32.totalorder %s25, 1
      %p113 = scmp.ne.s32.totalorder %s108, %s110
      %p114 = scmp.eq.s32.totalorder %s25, 0
      %p115 = por %p113, %p114
      %p116 = scmp.ne.s32.totalorder %s108, %s110
      %p117 = scmp.eq.s32.totalorder %s30, 1
      %p118 = por %p116, %p117
      %p119 = scmp.ne.s32.totalorder %s110, %s111
      %p120 = scmp.eq.s32.totalorder %s30, 0
      %p121 = por %p119, %p120
      %p122 = scmp.ne.s32.totalorder %s110, %s111
      %p123 = scmp.eq.s32.totalorder %s31, 1
      %p124 = por %p122, %p123
      %p126 = scmp.ne.s32.totalorder %s111, %s125
      %p127 = scmp.eq.s32.totalorder %s31, 0
      %p128 = por %p126, %p127
      %s130 = sadd.s32 %s129, 1
      %p133 = scmp.eq.s32.totalorder %s25, 1
      %p134 = scmp.ne.s32.totalorder %s129, %s131
      %p135 = scmp.eq.s32.totalorder %s25, 0
      %p136 = por %p134, %p135
      %p137 = scmp.ne.s32.totalorder %s129, %s131
      %p138 = scmp.eq.s32.totalorder %s30, 1
      %p139 = por %p137, %p138
      %p140 = scmp.ne.s32.totalorder %s131, %s132
      %p141 = scmp.eq.s32.totalorder %s30, 0
      %p142 = por %p140, %p141
      %p143 = scmp.ne.s32.totalorder %s131, %s132
      %p144 = scmp.eq.s32.totalorder %s31, 1
      %p145 = por %p143, %p144
      %p147 = scmp.ne.s32.totalorder %s132, %s146
      %p148 = scmp.eq.s32.totalorder %s31, 0
      %p149 = por %p147, %p148
      %s151 = sadd.s32 %s150, 1
      %p154 = scmp.eq.s32.totalorder %s25, 1
      %p155 = scmp.ne.s32.totalorder %s150, %s152
      %p156 = scmp.eq.s32.totalorder %s25, 0
      %p157 = por %p155, %p156
      %p158 = scmp.ne.s32.totalorder %s150, %s152
      %p159 = scmp.eq.s32.totalorder %s30, 1
      %p160 = por %p158, %p159
      %p161 = scmp.ne.s32.totalorder %s152, %s153
      %p162 = scmp.eq.s32.totalorder %s30, 0
      %p163 = por %p161, %p162
      %p164 = scmp.ne.s32.totalorder %s152, %s153
      %p165 = scmp.eq.s32.totalorder %s31, 1
      %p166 = por %p164, %p165
      %p168 = scmp.ne.s32.totalorder %s153, %s167
      %p169 = scmp.eq.s32.totalorder %s31, 0
      %p170 = por %p168, %p169
      %s171 = ssub.s32 %s33, %s47
      %s172 = ssub.s32 %s34, %s43
      %s173 = sor.u32 %s171, %s172
      %p174 = scmp.eq.s32.totalorder %s173, 0
      %s176 = sadd.s32 %s175, 1
      %s177 = scalar_select %p174, %s175, %s176
      %p180 = pneg %p174
      %p181 = scmp.eq.s32.totalorder %s25, 1
      %p182 = por %p180, %p181
      %p183 = scmp.ne.s32.totalorder %s175, %s178
      %p184 = scmp.eq.s32.totalorder %s25, 0
      %p185 = por %p183, %p184
      %p186 = scmp.ne.s32.totalorder %s175, %s178
      %p187 = scmp.eq.s32.totalorder %s30, 1
      %p188 = por %p186, %p187
      %p189 = scmp.ne.s32.totalorder %s178, %s179
      %p190 = scmp.eq.s32.totalorder %s30, 0
      %p191 = por %p189, %p190
      %p192 = scmp.ne.s32.totalorder %s178, %s179
      %p193 = scmp.eq.s32.totalorder %s31, 1
      %p194 = por %p192, %p193
      %p196 = scmp.ne.s32.totalorder %s179, %s195
      %p197 = scmp.eq.s32.totalorder %s31, 0
      %p198 = por %p196, %p197
      %s200 = sadd.s32 %s199, 1
      %p203 = scmp.eq.s32.totalorder %s25, 1
      %p204 = scmp.ne.s32.totalorder %s199, %s201
      %p205 = scmp.eq.s32.totalorder %s25, 0
      %p206 = por %p204, %p205
      %p207 = scmp.ne.s32.totalorder %s199, %s201
      %p208 = scmp.eq.s32.totalorder %s30, 1
      %p209 = por %p207, %p208
      %p210 = scmp.ne.s32.totalorder %s201, %s202
      %p211 = scmp.eq.s32.totalorder %s30, 0
      %p212 = por %p210, %p211
      %p213 = scmp.ne.s32.totalorder %s201, %s202
      %p214 = scmp.eq.s32.totalorder %s31, 1
      %p215 = por %p213, %p214
      %p217 = scmp.ne.s32.totalorder %s202, %s216
      %p218 = scmp.eq.s32.totalorder %s31, 0
      %p219 = por %p217, %p218
      %s221 = sadd.s32 %s220, 1
      %p224 = scmp.eq.s32.totalorder %s25, 1
      %p225 = scmp.ne.s32.totalorder %s220, %s222
      %p226 = scmp.eq.s32.totalorder %s25, 0
      %p227 = por %p225, %p226
      %p228 = scmp.ne.s32.totalorder %s220, %s222
      %p229 = scmp.eq.s32.totalorder %s30, 1
      %p230 = por %p228, %p229
      %p231 = scmp.ne.s32.totalorder %s222, %s223
      %p232 = scmp.eq.s32.totalorder %s30, 0
      %p233 = por %p231, %p232
      %p234 = scmp.ne.s32.totalorder %s222, %s223
      %p235 = scmp.eq.s32.totalorder %s31, 1
      %p236 = por %p234, %p235
      %p238 = scmp.ne.s32.totalorder %s223, %s237
      %p239 = scmp.eq.s32.totalorder %s31, 0
      %p240 = por %p238, %p239
      %s241 = ssub.s32 %s32, %s51
      %s242 = ssub.s32 %s33, %s47
      %s243 = sor.u32 %s241, %s242
      %p244 = scmp.eq.s32.totalorder %s243, 0
      %s246 = sadd.s32 %s245, 1
      %s247 = scalar_select %p244, %s245, %s246
      %p250 = pneg %p244
      %p251 = scmp.eq.s32.totalorder %s25, 1
      %p252 = por %p250, %p251
      %p253 = scmp.ne.s32.totalorder %s245, %s248
      %p254 = scmp.eq.s32.totalorder %s25, 0
      %p255 = por %p253, %p254
      %p256 = scmp.ne.s32.totalorder %s245, %s248
      %p257 = scmp.eq.s32.totalorder %s30, 1
      %p258 = por %p256, %p257
      %p259 = scmp.ne.s32.totalorder %s248, %s249
      %p260 = scmp.eq.s32.totalorder %s30, 0
      %p261 = por %p259, %p260
      %p262 = scmp.ne.s32.totalorder %s248, %s249
      %p263 = scmp.eq.s32.totalorder %s31, 1
      %p264 = por %p262, %p263
      %p266 = scmp.ne.s32.totalorder %s249, %s265
      %p267 = scmp.eq.s32.totalorder %s31, 0
      %p268 = por %p266, %p267
      %p269 = scmp.le.s32.totalorder 1, %s25
      %p270 = scmp.lt.s32.totalorder %s25, 3
      %p271 = pnand %p269, %p270
      %p272 = pneg %p271
      // Predicated region
      $region9: #{tpu_custom_call.1} parent=5 // pred_check
        _
      $region10: #{tpu_custom_call.1} parent=5 // pred_check_branch
        %274 = sbr.rel (%p271) target = $region12
      $region11: #{tpu_custom_call.1} parent=5 // pred_region
        %s275 = ssub.s32 %s25, 1
        // Predicated region
        $region13: #{tpu_custom_call.1} parent=11 // pred_check
          %p276 = pneg %p121
        $region14: #{tpu_custom_call.1} parent=11 // pred_check_branch
          %278 = sbr.rel (%p276) target = $region16
        $region15: #{tpu_custom_call.1} parent=11 // pred_region
          %280 = vsyncadd [#allocation12], 0
          %s281 = sshll.u32 %s2, 4
          %s282 = int_to_ptr.hbm [resolvable:$true] %s281
          %s283 = sshll.u32 [#allocation13], 4
          %s284 = int_to_ptr.vmem [resolvable:$true] %s283
          %289 = dma.hbm_to_vmem [thread:$0]  %s282, 512, %s284, [#allocation12], 128, 128, 8
        $region16: #{tpu_custom_call.1} parent=11 // pred_fallthru
          _
        // Predicated region
        $region17: #{tpu_custom_call.1} parent=11 // pred_check
          %p290 = pneg %p142
        $region18: #{tpu_custom_call.1} parent=11 // pred_check_branch
          %292 = sbr.rel (%p290) target = $region20
        $region19: #{tpu_custom_call.1} parent=11 // pred_region
          %294 = vsyncadd [#allocation15], 0
          %s295 = sshll.u32 %s3, 4
          %s296 = int_to_ptr.hbm [resolvable:$true] %s295
          %s297 = sshll.u32 [#allocation14], 4
          %s298 = int_to_ptr.vmem [resolvable:$true] %s297
          %303 = dma.hbm_to_vmem [thread:$0]  %s296, 512, %s298, [#allocation15], 128, 128, 8
        $region20: #{tpu_custom_call.1} parent=11 // pred_fallthru
          _
        // Predicated region
        $region21: #{tpu_custom_call.1} parent=11 // pred_check
          %p304 = pneg %p163
        $region22: #{tpu_custom_call.1} parent=11 // pred_check_branch
          %306 = sbr.rel (%p304) target = $region24
        $region23: #{tpu_custom_call.1} parent=11 // pred_region
          %308 = vsyncadd [#allocation15], 0
          %s309 = sshll.u32 %s4, 4
          %s310 = int_to_ptr.hbm [resolvable:$true] %s309
          %s311 = sshll.u32 [#allocation16], 4
          %s312 = int_to_ptr.vmem [resolvable:$true] %s311
          %317 = dma.hbm_to_vmem [thread:$0]  %s310, 512, %s312, [#allocation15], 128, 128, 8
        $region24: #{tpu_custom_call.1} parent=11 // pred_fallthru
          _
        // Predicated region
        $region25: #{tpu_custom_call.1} parent=11 // pred_check
          %p318 = pneg %p191
        $region26: #{tpu_custom_call.1} parent=11 // pred_check_branch
          %320 = sbr.rel (%p318) target = $region28
        $region27: #{tpu_custom_call.1} parent=11 // pred_region
          %322 = vsyncadd [#allocation18], 0
          %s323 = sadd.s32 %s37, %s36
          %s324 = smul.addr %s323, 8
          %s325 = scalar_lea.hbm %s5, %s324
          %s326 = sshll.u32 %s325, 4
          %s327 = int_to_ptr.hbm [resolvable:$true] %s326
          %s328 = sshll.u32 [#allocation17], 4
          %s329 = int_to_ptr.vmem [resolvable:$true] %s328
          %334 = dma.hbm_to_vmem [thread:$0]  %s327, 1024, %s329, [#allocation18], 128, 128, 8
        $region28: #{tpu_custom_call.1} parent=11 // pred_fallthru
          _
        // Predicated region
        $region29: #{tpu_custom_call.1} parent=11 // pred_check
          %p335 = pneg %p212
        $region30: #{tpu_custom_call.1} parent=11 // pred_check_branch
          %337 = sbr.rel (%p335) target = $region32
        $region31: #{tpu_custom_call.1} parent=11 // pred_region
          _
        $region32: #{tpu_custom_call.1} parent=11 // pred_fallthru
          _
        // Predicated region
        $region33: #{tpu_custom_call.1} parent=11 // pred_check
          %p338 = pneg %p233
        $region34: #{tpu_custom_call.1} parent=11 // pred_check_branch
          %340 = sbr.rel (%p338) target = $region36
        $region35: #{tpu_custom_call.1} parent=11 // pred_region
          _
        $region36: #{tpu_custom_call.1} parent=11 // pred_fallthru
          _
      $region12: #{tpu_custom_call.1} parent=5 // pred_fallthru
        _
      %p341 = scmp.lt.s32.totalorder %s25, 2
      // Predicated region
      $region37: #{tpu_custom_call.1} parent=5 // pred_check
        %p342 = pneg %p341
      $region38: #{tpu_custom_call.1} parent=5 // pred_check_branch
        %344 = sbr.rel (%p342) target = $region40
      $region39: #{tpu_custom_call.1} parent=5 // pred_region
        // Predicated region
        $region41: #{tpu_custom_call.1} parent=39 // pred_check
          %p345 = pneg %p66
        $region42: #{tpu_custom_call.1} parent=39 // pred_check_branch
          %347 = sbr.rel (%p345) target = $region44
        $region43: #{tpu_custom_call.1} parent=39 // pred_region
          %s348 = sand.u32 %s56, 1
          %s349 = scalar_lea.sflag [#allocation9], %s348
          %s350 = sand.u32 %s56, 1
          %s351 = smul.addr %s350, 8
          %s352 = scalar_lea.vmem [#allocation8], %s351
          %354 = vsyncadd %s349, 0
          %s355 = sadd.s32 %s33, %s32
          %s356 = smul.addr %s355, 8
          %s357 = scalar_lea.hbm %s0, %s356
          %s359 = sshll.u32 %s357, 4
          %s360 = int_to_ptr.hbm [resolvable:$true] %s359
          %s361 = sshll.u32 %s352, 4
          %s362 = int_to_ptr.vmem [resolvable:$true] %s361
          %364 = dma.hbm_to_vmem [thread:$0]  %s360, 128, %s362, %s349
        $region44: #{tpu_custom_call.1} parent=39 // pred_fallthru
          _
        // Predicated region
        $region45: #{tpu_custom_call.1} parent=39 // pred_check
          %p365 = pneg %p94
        $region46: #{tpu_custom_call.1} parent=39 // pred_check_branch
          %367 = sbr.rel (%p365) target = $region48
        $region47: #{tpu_custom_call.1} parent=39 // pred_region
          %s368 = sand.u32 %s25, 1
          %s369 = scalar_lea.sflag [#allocation12], %s368
          %s370 = sand.u32 %s84, 1
          %s371 = smul.addr %s370, 8
          %s372 = scalar_lea.vmem [#allocation11], %s371
          %374 = vsyncadd %s369, 0
          %s375 = sadd.s32 %s34, %s32
          %s376 = smul.addr %s375, 8
          %s377 = scalar_lea.hbm %s1, %s376
          %s379 = sshll.u32 %s377, 4
          %s380 = int_to_ptr.hbm [resolvable:$true] %s379
          %s381 = sshll.u32 %s372, 4
          %s382 = int_to_ptr.vmem [resolvable:$true] %s381
          %384 = dma.hbm_to_vmem [thread:$0]  %s380, 128, %s382, %s369
        $region48: #{tpu_custom_call.1} parent=39 // pred_fallthru
          _
      $region40: #{tpu_custom_call.1} parent=5 // pred_fallthru
        _
      %p385 = scmp.le.s32.totalorder 1, %s25
      %p386 = scmp.lt.s32.totalorder %s25, 3
      %p387 = pnand %p385, %p386
      %p388 = pneg %p387
      // Predicated region
      $region49: #{tpu_custom_call.1} parent=5 // pred_check
        _
      $region50: #{tpu_custom_call.1} parent=5 // pred_check_branch
        %390 = sbr.rel (%p387) target = $region52
      $region51: #{tpu_custom_call.1} parent=5 // pred_region
        %s391 = ssub.s32 %s25, 1
        %s392 = sand.u32 %s59, 1
        %s393 = scalar_lea.sflag [#allocation9], %s392
        %s394 = sand.u32 %s59, 1
        %s395 = smul.addr %s394, 8
        %s396 = scalar_lea.vmem [#allocation8], %s395
        // Predicated region
        $region53: #{tpu_custom_call.1} parent=51 // pred_check
          %p397 = pneg %p72
        $region54: #{tpu_custom_call.1} parent=51 // pred_check_branch
          %399 = sbr.rel (%p397) target = $region56
        $region55: #{tpu_custom_call.1} parent=51 // pred_region
          %401 = dma.done %s393, 128
        $region56: #{tpu_custom_call.1} parent=51 // pred_fallthru
          _
        %s402 = sand.u32 %s30, 1
        %s403 = scalar_lea.sflag [#allocation12], %s402
        %s404 = sand.u32 %s87, 1
        %s405 = smul.addr %s404, 8
        %s406 = scalar_lea.vmem [#allocation11], %s405
        // Predicated region
        $region57: #{tpu_custom_call.1} parent=51 // pred_check
          %p407 = pneg %p100
        $region58: #{tpu_custom_call.1} parent=51 // pred_check_branch
          %409 = sbr.rel (%p407) target = $region60
        $region59: #{tpu_custom_call.1} parent=51 // pred_region
          %411 = dma.done %s403, 128
        $region60: #{tpu_custom_call.1} parent=51 // pred_fallthru
          _
        // Predicated region
        $region61: #{tpu_custom_call.1} parent=51 // pred_check
          %p412 = pneg %p121
        $region62: #{tpu_custom_call.1} parent=51 // pred_check_branch
          %414 = sbr.rel (%p412) target = $region64
        $region63: #{tpu_custom_call.1} parent=51 // pred_region
          %416 = dma.done [#allocation12], 512
        $region64: #{tpu_custom_call.1} parent=51 // pred_fallthru
          _
        // Predicated region
        $region65: #{tpu_custom_call.1} parent=51 // pred_check
          %p417 = pneg %p142
        $region66: #{tpu_custom_call.1} parent=51 // pred_check_branch
          %419 = sbr.rel (%p417) target = $region68
        $region67: #{tpu_custom_call.1} parent=51 // pred_region
          %421 = dma.done [#allocation15], 512
        $region68: #{tpu_custom_call.1} parent=51 // pred_fallthru
          _
        // Predicated region
        $region69: #{tpu_custom_call.1} parent=51 // pred_check
          %p422 = pneg %p163
        $region70: #{tpu_custom_call.1} parent=51 // pred_check_branch
          %424 = sbr.rel (%p422) target = $region72
        $region71: #{tpu_custom_call.1} parent=51 // pred_region
          %426 = dma.done [#allocation15], 512
        $region72: #{tpu_custom_call.1} parent=51 // pred_fallthru
          _
        // Predicated region
        $region73: #{tpu_custom_call.1} parent=51 // pred_check
          %p427 = pneg %p191
        $region74: #{tpu_custom_call.1} parent=51 // pred_check_branch
          %429 = sbr.rel (%p427) target = $region76
        $region75: #{tpu_custom_call.1} parent=51 // pred_region
          %431 = dma.done [#allocation18], 1024
        $region76: #{tpu_custom_call.1} parent=51 // pred_fallthru
          _
        %s432 = sand.u32 %s59, 1
        %s433 = scalar_lea.sflag [#allocation9], %s432
        %s434 = sand.u32 %s59, 1
        %s435 = smul.addr %s434, 8
        %s436 = scalar_lea.vmem [#allocation8], %s435
        %p437 = pneg %p72
        %p438 = pneg %p69
        %s439 = sand.u32 %s30, 1
        %s440 = scalar_lea.sflag [#allocation12], %s439
        %s441 = sand.u32 %s87, 1
        %s442 = smul.addr %s441, 8
        %s443 = scalar_lea.vmem [#allocation11], %s442
        %p444 = pneg %p100
        %p445 = pneg %p97
        %p446 = pneg %p121
        %p447 = pneg %p118
        %p448 = pneg %p142
        %p449 = pneg %p139
        %p450 = pneg %p163
        %p451 = pneg %p160
        %p452 = pneg %p191
        %p453 = pneg %p188
        %p454 = pneg %p212
        %p455 = pneg %p209
        %p456 = pneg %p233
        %p457 = pneg %p230
        %p458 = pneg %p261
        %p459 = pneg %p258
        %s460 = sand.u32 %s248, 1
        %s461 = scalar_lea.sflag [#allocation10], %s460
        %s462 = sand.u32 %s248, 1
        %s463 = smul.addr %s462, 8
        %s464 = scalar_lea.vmem [#allocation19], %s463
        %p465 = scmp.eq.s32.totalorder %s37, 0
        // Predicated region
        $region77: #{tpu_custom_call.1} parent=51 // pred_check
          %p466 = pneg %p465
        $region78: #{tpu_custom_call.1} parent=51 // pred_check_branch
          %468 = sbr.rel (%p466) target = $region80
        $region79: #{tpu_custom_call.1} parent=51 // pred_region
          %v469 = vld [vmem:[%s396] sm:$0xff]
          %v470 = vld [vmem:[#allocation13] sm:$0xff]
          %v471 = vld [vmem:[#allocation13 + $0x8] sm:$0xff]
          %v472 = vld [vmem:[#allocation13 + $0x10] sm:$0xff]
          %v473 = vld [vmem:[#allocation13 + $0x18] sm:$0xff]
          %vm474 = vcmask 261120
          %v476 = vsel %vm474, %v469, 0
          %478 = vmatpush.msra.mxu0 0.0
          %479 = vmatpush.msra.mxu0 0.0
          %480 = vmatpush.msra.mxu0 0.0
          %481 = vmatpush.msra.mxu0 0.0
          %482 = vmatpush.msra.mxu0 0.0
          %483 = vmatpush.msra.mxu0 0.0
          %484 = vmatpush.msra.mxu0 0.0
          %485 = vmatpush.msra.mxu0 0.0
          %486 = vmatpush.msra.mxu0 0.0
          %487 = vmatpush.msra.mxu0 0.0
          %488 = vmatpush.msra.mxu0 0.0
          %489 = vmatpush.msra.mxu0 0.0
          %490 = vmatpush.msra.mxu0 %v473
          %491 = vmatpush.msra.mxu0 %v472
          %492 = vmatpush.msra.mxu0 %v471
          %493 = vmatpush.msra.mxu0 %v470
          %494 = vmatmul.f32.gmra.mxu0 %v476
          %v495 = vpop.f32.mrf.mxu0
          %v496 = vadd.f32 0.0, %v495
          %497 = vdwg.mxu0
          %498 = vst.msk [vmem:[#allocation2] sm:$0xff] %vm474, %v496
          %vm499 = vcmask 7168
          %500 = vst.msk [vmem:[#allocation3] sm:$0xff] %vm499, -inf
          %501 = vst.msk [vmem:[#allocation3 + $0x8] sm:$0xff] %vm499, -inf
          %502 = vst.msk [vmem:[#allocation3 + $0x10] sm:$0xff] %vm499, -inf
          %503 = vst.msk [vmem:[#allocation3 + $0x18] sm:$0xff] %vm499, -inf
          %504 = vst.msk [vmem:[#allocation3 + $0x20] sm:$0xff] %vm499, -inf
          %505 = vst.msk [vmem:[#allocation3 + $0x28] sm:$0xff] %vm499, -inf
          %506 = vst.msk [vmem:[#allocation3 + $0x30] sm:$0xff] %vm499, -inf
          %507 = vst.msk [vmem:[#allocation3 + $0x38] sm:$0xff] %vm499, -inf
          %508 = vst.msk [vmem:[#allocation4] sm:$0xff] %vm499, 0.0
          %509 = vst.msk [vmem:[#allocation4 + $0x8] sm:$0xff] %vm499, 0.0
          %510 = vst.msk [vmem:[#allocation4 + $0x10] sm:$0xff] %vm499, 0.0
          %511 = vst.msk [vmem:[#allocation4 + $0x18] sm:$0xff] %vm499, 0.0
          %512 = vst.msk [vmem:[#allocation4 + $0x20] sm:$0xff] %vm499, 0.0
          %513 = vst.msk [vmem:[#allocation4 + $0x28] sm:$0xff] %vm499, 0.0
          %514 = vst.msk [vmem:[#allocation4 + $0x30] sm:$0xff] %vm499, 0.0
          %515 = vst.msk [vmem:[#allocation4 + $0x38] sm:$0xff] %vm499, 0.0
          %vm516 = vcmask 31744
          %517 = vst.msk [vmem:[#allocation5] sm:$0xff] %vm516, 0.0
          %518 = vst.msk [vmem:[#allocation5 + $0x8] sm:$0xff] %vm516, 0.0
          %519 = vst.msk [vmem:[#allocation5 + $0x10] sm:$0xff] %vm516, 0.0
          %520 = vst.msk [vmem:[#allocation5 + $0x18] sm:$0xff] %vm516, 0.0
          %521 = vst.msk [vmem:[#allocation5 + $0x20] sm:$0xff] %vm516, 0.0
          %522 = vst.msk [vmem:[#allocation5 + $0x28] sm:$0xff] %vm516, 0.0
          %523 = vst.msk [vmem:[#allocation5 + $0x30] sm:$0xff] %vm516, 0.0
          %524 = vst.msk [vmem:[#allocation5 + $0x38] sm:$0xff] %vm516, 0.0
          %525 = vst.msk [vmem:[#allocation6] sm:$0xff] %vm516, 0.0
          %526 = vst.msk [vmem:[#allocation6 + $0x8] sm:$0xff] %vm516, 0.0
          %527 = vst.msk [vmem:[#allocation6 + $0x10] sm:$0xff] %vm516, 0.0
          %528 = vst.msk [vmem:[#allocation6 + $0x18] sm:$0xff] %vm516, 0.0
          %529 = vst.msk [vmem:[#allocation6 + $0x20] sm:$0xff] %vm516, 0.0
          %530 = vst.msk [vmem:[#allocation6 + $0x28] sm:$0xff] %vm516, 0.0
          %531 = vst.msk [vmem:[#allocation6 + $0x30] sm:$0xff] %vm516, 0.0
          %532 = vst.msk [vmem:[#allocation6 + $0x38] sm:$0xff] %vm516, 0.0
        $region80: #{tpu_custom_call.1} parent=51 // pred_fallthru
          _
        %v533 = vld [vmem:[%s406] sm:$0xff]
        %v534 = vld [vmem:[#allocation14] sm:$0xff]
        %v535 = vld [vmem:[#allocation14 + $0x8] sm:$0xff]
        %v536 = vld [vmem:[#allocation14 + $0x10] sm:$0xff]
        %v537 = vld [vmem:[#allocation14 + $0x18] sm:$0xff]
        %vm538 = vcmask 261120
        %v540 = vsel %vm538, %v533, 0
        %542 = vmatpush.msra.mxu0 0.0
        %543 = vmatpush.msra.mxu0 0.0
        %544 = vmatpush.msra.mxu0 0.0
        %545 = vmatpush.msra.mxu0 0.0
        %546 = vmatpush.msra.mxu0 0.0
        %547 = vmatpush.msra.mxu0 0.0
        %548 = vmatpush.msra.mxu0 0.0
        %549 = vmatpush.msra.mxu0 0.0
        %550 = vmatpush.msra.mxu0 0.0
        %551 = vmatpush.msra.mxu0 0.0
        %552 = vmatpush.msra.mxu0 0.0
        %553 = vmatpush.msra.mxu0 0.0
        %554 = vmatpush.msra.mxu0 %v537
        %555 = vmatpush.msra.mxu0 %v536
        %556 = vmatpush.msra.mxu0 %v535
        %557 = vmatpush.msra.mxu0 %v534
        %558 = vmatmul.f32.gmra.mxu0 %v540
        %v559 = vpop.f32.mrf.mxu0
        %v560 = vadd.f32 0.0, %v559
        %561 = vdwg.mxu0
        %v562 = vld [vmem:[#allocation16] sm:$0xff]
        %v563 = vld [vmem:[#allocation16 + $0x8] sm:$0xff]
        %v564 = vld [vmem:[#allocation16 + $0x10] sm:$0xff]
        %v565 = vld [vmem:[#allocation16 + $0x18] sm:$0xff]
        %566 = vmatpush.msra.mxu0 0.0
        %567 = vmatpush.msra.mxu0 0.0
        %568 = vmatpush.msra.mxu0 0.0
        %569 = vmatpush.msra.mxu0 0.0
        %570 = vmatpush.msra.mxu0 0.0
        %571 = vmatpush.msra.mxu0 0.0
        %572 = vmatpush.msra.mxu0 0.0
        %573 = vmatpush.msra.mxu0 0.0
        %574 = vmatpush.msra.mxu0 0.0
        %575 = vmatpush.msra.mxu0 0.0
        %576 = vmatpush.msra.mxu0 0.0
        %577 = vmatpush.msra.mxu0 0.0
        %578 = vmatpush.msra.mxu0 %v565
        %579 = vmatpush.msra.mxu0 %v564
        %580 = vmatpush.msra.mxu0 %v563
        %581 = vmatpush.msra.mxu0 %v562
        %582 = vmatmul.f32.gmra.mxu0 %v540
        %v583 = vpop.f32.mrf.mxu0
        %v584 = vadd.f32 0.0, %v583
        %585 = vdwg.mxu0
        %v586 = vld [vmem:[#allocation2] sm:$0xff]
        %vm587 = vcmask 31744
        %v589 = vsel %vm587, %v586, 0
        %v592 = vsel %vm587, %v560, 0
        %594 = vmatpush.xpose.msra.mxu0 0.0
        %595 = vmatpush.xpose.msra.mxu0 0.0
        %596 = vmatpush.xpose.msra.mxu0 0.0
        %597 = vmatpush.xpose.msra.mxu0 0.0
        %598 = vmatpush.xpose.msra.mxu0 0.0
        %599 = vmatpush.xpose.msra.mxu0 0.0
        %600 = vmatpush.xpose.msra.mxu0 0.0
        %601 = vmatpush.xpose.msra.mxu0 0.0
        %602 = vmatpush.xpose.msra.mxu0 0.0
        %603 = vmatpush.xpose.msra.mxu0 0.0
        %604 = vmatpush.xpose.msra.mxu0 0.0
        %605 = vmatpush.xpose.msra.mxu0 0.0
        %606 = vmatpush.xpose.msra.mxu0 0.0
        %607 = vmatpush.xpose.msra.mxu0 0.0
        %608 = vmatpush.xpose.msra.mxu0 0.0
        %609 = vmatpush.xpose.msra.mxu0 %v592
        %610 = vmatmul.f32.gmra.mxu0 %v589
        %v611 = vpop.f32.mrf.mxu0
        %v612 = vadd.f32 0.0, %v611
        %613 = vdwg.mxu0
        %v614 = vld [vmem:[#allocation3] sm:$0xff]
        %vm615 = vcmask 64512
        %v616 = vsel %vm615, %v612, -inf
        %617 = vmax.xlane.f32.xlu0 %v616
        %v618 = vpop.xlane.xlu0 %617
        %v619 = vmax.f32 %v614, %v618
        %v620 = vsub.f32 %v614, %v619
        %v621 = vmul.f32 %v620, 1.442695
        %v622 = vpow.pop %v621
        %624 = vset.pattern.permute.xlu0 0
        %625 = vperm.xlu0 %624, %v619
        %v626 = vpop.permute.xlu0 %625
        %v628 = vsub.f32 %v612, %v626
        %v629 = vmul.f32 %v628, 1.442695
        %v630 = vpow.pop %v629
        %v631 = vld [vmem:[#allocation4] sm:$0xff]
        %v632 = vmul.f32 %v622, %v631
        %v633 = vsel %vm615, %v630, 0.0
        %634 = vadd.xlane.f32.xlu0 %v633
        %v635 = vpop.xlane.xlu0 %634
        %v636 = vadd.f32 %v632, %v635
        %vm637 = vcmask 7168
        %638 = vst.msk [vmem:[#allocation4] sm:$0xff] %vm637, %v636
        %v639 = vld [vmem:[#allocation5] sm:$0xff]
        %641 = vset.pattern.permute.xlu0 0
        %642 = vperm.xlu0 %641, %v622
        %v643 = vpop.permute.xlu0 %642
        %v645 = vmul.f32 %v643, %v639
        %v647 = vsel %vm615, %v630, 0
        %649 = vmatpush.msra.mxu0 0.0
        %650 = vmatpush.msra.mxu0 0.0
        %651 = vmatpush.msra.mxu0 0.0
        %652 = vmatpush.msra.mxu0 0.0
        %653 = vmatpush.msra.mxu0 0.0
        %654 = vmatpush.msra.mxu0 0.0
        %655 = vmatpush.msra.mxu0 0.0
        %656 = vmatpush.msra.mxu0 0.0
        %657 = vmatpush.msra.mxu0 0.0
        %658 = vmatpush.msra.mxu0 0.0
        %659 = vmatpush.msra.mxu0 0.0
        %660 = vmatpush.msra.mxu0 0.0
        %661 = vmatpush.msra.mxu0 0.0
        %662 = vmatpush.msra.mxu0 0.0
        %663 = vmatpush.msra.mxu0 0.0
        %664 = vmatpush.msra.mxu0 %v584
        %665 = vmatmul.f32.gmra.mxu0 %v647
        %v666 = vpop.f32.mrf.mxu0
        %v667 = vadd.f32 0.0, %v666
        %668 = vdwg.mxu0
        %v669 = vadd.f32 %v645, %v667
        %670 = vst.msk [vmem:[#allocation5] sm:$0xff] %vm587, %v669
        %v671 = vld [vmem:[#allocation6] sm:$0xff]
        %v672 = vld [vmem:[#allocation17] sm:$0xff]
        %v674 = vsel %vm615, %v672, 0
        %676 = vmatpush.msra.mxu0 0.0
        %677 = vmatpush.msra.mxu0 0.0
        %678 = vmatpush.msra.mxu0 0.0
        %679 = vmatpush.msra.mxu0 0.0
        %680 = vmatpush.msra.mxu0 0.0
        %681 = vmatpush.msra.mxu0 0.0
        %682 = vmatpush.msra.mxu0 0.0
        %683 = vmatpush.msra.mxu0 0.0
        %684 = vmatpush.msra.mxu0 0.0
        %685 = vmatpush.msra.mxu0 0.0
        %686 = vmatpush.msra.mxu0 0.0
        %687 = vmatpush.msra.mxu0 0.0
        %688 = vmatpush.msra.mxu0 0.0
        %689 = vmatpush.msra.mxu0 0.0
        %690 = vmatpush.msra.mxu0 0.0
        %691 = vmatpush.msra.mxu0 %v584
        %692 = vmatmul.f32.gmra.mxu0 %v674
        %v693 = vpop.f32.mrf.mxu0
        %v694 = vadd.f32 0.0, %v693
        %695 = vdwg.mxu0
        %v696 = vadd.f32 %v671, %v694
        %697 = vst.msk [vmem:[#allocation6] sm:$0xff] %vm587, %v696
        %698 = vst.msk [vmem:[#allocation3] sm:$0xff] %vm637, %v619
        %v699 = vld [vmem:[#allocation2] sm:$0xff]
        %701 = vrot.lane.b32.xlu0 %v699, 124
        %v702 = vpop.permute.xlu0 %701
        %703 = vrot.lane.b32.xlu0 %v560, 124
        %v704 = vpop.permute.xlu0 %703
        %v705 = vsel %vm587, %v702, 0
        %v707 = vsel %vm587, %v704, 0
        %709 = vmatpush.xpose.msra.mxu0 0.0
        %710 = vmatpush.xpose.msra.mxu0 0.0
        %711 = vmatpush.xpose.msra.mxu0 0.0
        %712 = vmatpush.xpose.msra.mxu0 0.0
        %713 = vmatpush.xpose.msra.mxu0 0.0
        %714 = vmatpush.xpose.msra.mxu0 0.0
        %715 = vmatpush.xpose.msra.mxu0 0.0
        %716 = vmatpush.xpose.msra.mxu0 0.0
        %717 = vmatpush.xpose.msra.mxu0 0.0
        %718 = vmatpush.xpose.msra.mxu0 0.0
        %719 = vmatpush.xpose.msra.mxu0 0.0
        %720 = vmatpush.xpose.msra.mxu0 0.0
        %721 = vmatpush.xpose.msra.mxu0 0.0
        %722 = vmatpush.xpose.msra.mxu0 0.0
        %723 = vmatpush.xpose.msra.mxu0 0.0
        %724 = vmatpush.xpose.msra.mxu0 %v707
        %725 = vmatmul.f32.gmra.mxu0 %v705
        %v726 = vpop.f32.mrf.mxu0
        %v727 = vadd.f32 0.0, %v726
        %728 = vdwg.mxu0
        %s729 = scalar_lea.vmem [#allocation3], 8
        %v730 = vld [vmem:[%s729] sm:$0xff]
        %v731 = vsel %vm615, %v727, -inf
        %732 = vmax.xlane.f32.xlu0 %v731
        %v733 = vpop.xlane.xlu0 %732
        %v734 = vmax.f32 %v730, %v733
        %v735 = vsub.f32 %v730, %v734
        %v736 = vmul.f32 %v735, 1.442695
        %v737 = vpow.pop %v736
        %739 = vset.pattern.permute.xlu0 0
        %740 = vperm.xlu0 %739, %v734
        %v741 = vpop.permute.xlu0 %740
        %v743 = vsub.f32 %v727, %v741
        %v744 = vmul.f32 %v743, 1.442695
        %v745 = vpow.pop %v744
        %s746 = scalar_lea.vmem [#allocation4], 8
        %v747 = vld [vmem:[%s746] sm:$0xff]
        %v748 = vmul.f32 %v737, %v747
        %v749 = vsel %vm615, %v745, 0.0
        %750 = vadd.xlane.f32.xlu0 %v749
        %v751 = vpop.xlane.xlu0 %750
        %v752 = vadd.f32 %v748, %v751
        %753 = vst.msk [vmem:[%s746] sm:$0xff] %vm637, %v752
        %s754 = scalar_lea.vmem [#allocation5], 8
        %v755 = vld [vmem:[%s754] sm:$0xff]
        %757 = vset.pattern.permute.xlu0 0
        %758 = vperm.xlu0 %757, %v737
        %v759 = vpop.permute.xlu0 %758
        %v761 = vmul.f32 %v759, %v755
        %763 = vrot.lane.b32.xlu0 %v584, 124
        %v764 = vpop.permute.xlu0 %763
        %v767 = vsel %vm615, %v745, 0
        %769 = vmatpush.msra.mxu0 0.0
        %770 = vmatpush.msra.mxu0 0.0
        %771 = vmatpush.msra.mxu0 0.0
        %772 = vmatpush.msra.mxu0 0.0
        %773 = vmatpush.msra.mxu0 0.0
        %774 = vmatpush.msra.mxu0 0.0
        %775 = vmatpush.msra.mxu0 0.0
        %776 = vmatpush.msra.mxu0 0.0
        %777 = vmatpush.msra.mxu0 0.0
        %778 = vmatpush.msra.mxu0 0.0
        %779 = vmatpush.msra.mxu0 0.0
        %780 = vmatpush.msra.mxu0 0.0
        %781 = vmatpush.msra.mxu0 0.0
        %782 = vmatpush.msra.mxu0 0.0
        %783 = vmatpush.msra.mxu0 0.0
        %784 = vmatpush.msra.mxu0 %v764
        %785 = vmatmul.f32.gmra.mxu0 %v767
        %v786 = vpop.f32.mrf.mxu0
        %v787 = vadd.f32 0.0, %v786
        %788 = vdwg.mxu0
        %v789 = vadd.f32 %v761, %v787
        %790 = vst.msk [vmem:[%s754] sm:$0xff] %vm587, %v789
        %s791 = scalar_lea.vmem [#allocation6], 8
        %v792 = vld [vmem:[%s791] sm:$0xff]
        %s793 = scalar_lea.vmem [#allocation17], 8
        %v794 = vld [vmem:[%s793] sm:$0xff]
        %v796 = vsel %vm615, %v794, 0
        %798 = vmatpush.msra.mxu0 0.0
        %799 = vmatpush.msra.mxu0 0.0
        %800 = vmatpush.msra.mxu0 0.0
        %801 = vmatpush.msra.mxu0 0.0
        %802 = vmatpush.msra.mxu0 0.0
        %803 = vmatpush.msra.mxu0 0.0
        %804 = vmatpush.msra.mxu0 0.0
        %805 = vmatpush.msra.mxu0 0.0
        %806 = vmatpush.msra.mxu0 0.0
        %807 = vmatpush.msra.mxu0 0.0
        %808 = vmatpush.msra.mxu0 0.0
        %809 = vmatpush.msra.mxu0 0.0
        %810 = vmatpush.msra.mxu0 0.0
        %811 = vmatpush.msra.mxu0 0.0
        %812 = vmatpush.msra.mxu0 0.0
        %813 = vmatpush.msra.mxu0 %v764
        %814 = vmatmul.f32.gmra.mxu0 %v796
        %v815 = vpop.f32.mrf.mxu0
        %v816 = vadd.f32 0.0, %v815
        %817 = vdwg.mxu0
        %v818 = vadd.f32 %v792, %v816
        %819 = vst.msk [vmem:[%s791] sm:$0xff] %vm587, %v818
        %820 = vst.msk [vmem:[%s729] sm:$0xff] %vm637, %v734
        %v821 = vld [vmem:[#allocation2] sm:$0xff]
        %823 = vrot.lane.b32.xlu0 %v821, 120
        %v824 = vpop.permute.xlu0 %823
        %825 = vrot.lane.b32.xlu0 %v560, 120
        %v826 = vpop.permute.xlu0 %825
        %v827 = vsel %vm587, %v824, 0
        %v829 = vsel %vm587, %v826, 0
        %831 = vmatpush.xpose.msra.mxu0 0.0
        %832 = vmatpush.xpose.msra.mxu0 0.0
        %833 = vmatpush.xpose.msra.mxu0 0.0
        %834 = vmatpush.xpose.msra.mxu0 0.0
        %835 = vmatpush.xpose.msra.mxu0 0.0
        %836 = vmatpush.xpose.msra.mxu0 0.0
        %837 = vmatpush.xpose.msra.mxu0 0.0
        %838 = vmatpush.xpose.msra.mxu0 0.0
        %839 = vmatpush.xpose.msra.mxu0 0.0
        %840 = vmatpush.xpose.msra.mxu0 0.0
        %841 = vmatpush.xpose.msra.mxu0 0.0
        %842 = vmatpush.xpose.msra.mxu0 0.0
        %843 = vmatpush.xpose.msra.mxu0 0.0
        %844 = vmatpush.xpose.msra.mxu0 0.0
        %845 = vmatpush.xpose.msra.mxu0 0.0
        %846 = vmatpush.xpose.msra.mxu0 %v829
        %847 = vmatmul.f32.gmra.mxu0 %v827
        %v848 = vpop.f32.mrf.mxu0
        %v849 = vadd.f32 0.0, %v848
        %850 = vdwg.mxu0
        %s851 = scalar_lea.vmem [#allocation3], 16
        %v852 = vld [vmem:[%s851] sm:$0xff]
        %v853 = vsel %vm615, %v849, -inf
        %854 = vmax.xlane.f32.xlu0 %v853
        %v855 = vpop.xlane.xlu0 %854
        %v856 = vmax.f32 %v852, %v855
        %v857 = vsub.f32 %v852, %v856
        %v858 = vmul.f32 %v857, 1.442695
        %v859 = vpow.pop %v858
        %861 = vset.pattern.permute.xlu0 0
        %862 = vperm.xlu0 %861, %v856
        %v863 = vpop.permute.xlu0 %862
        %v865 = vsub.f32 %v849, %v863
        %v866 = vmul.f32 %v865, 1.442695
        %v867 = vpow.pop %v866
        %s868 = scalar_lea.vmem [#allocation4], 16
        %v869 = vld [vmem:[%s868] sm:$0xff]
        %v870 = vmul.f32 %v859, %v869
        %v871 = vsel %vm615, %v867, 0.0
        %872 = vadd.xlane.f32.xlu0 %v871
        %v873 = vpop.xlane.xlu0 %872
        %v874 = vadd.f32 %v870, %v873
        %875 = vst.msk [vmem:[%s868] sm:$0xff] %vm637, %v874
        %s876 = scalar_lea.vmem [#allocation5], 16
        %v877 = vld [vmem:[%s876] sm:$0xff]
        %879 = vset.pattern.permute.xlu0 0
        %880 = vperm.xlu0 %879, %v859
        %v881 = vpop.permute.xlu0 %880
        %v883 = vmul.f32 %v881, %v877
        %884 = vrot.lane.b32.xlu0 %v584, 120
        %v885 = vpop.permute.xlu0 %884
        %v888 = vsel %vm615, %v867, 0
        %890 = vmatpush.msra.mxu0 0.0
        %891 = vmatpush.msra.mxu0 0.0
        %892 = vmatpush.msra.mxu0 0.0
        %893 = vmatpush.msra.mxu0 0.0
        %894 = vmatpush.msra.mxu0 0.0
        %895 = vmatpush.msra.mxu0 0.0
        %896 = vmatpush.msra.mxu0 0.0
        %897 = vmatpush.msra.mxu0 0.0
        %898 = vmatpush.msra.mxu0 0.0
        %899 = vmatpush.msra.mxu0 0.0
        %900 = vmatpush.msra.mxu0 0.0
        %901 = vmatpush.msra.mxu0 0.0
        %902 = vmatpush.msra.mxu0 0.0
        %903 = vmatpush.msra.mxu0 0.0
        %904 = vmatpush.msra.mxu0 0.0
        %905 = vmatpush.msra.mxu0 %v885
        %906 = vmatmul.f32.gmra.mxu0 %v888
        %v907 = vpop.f32.mrf.mxu0
        %v908 = vadd.f32 0.0, %v907
        %909 = vdwg.mxu0
        %v910 = vadd.f32 %v883, %v908
        %911 = vst.msk [vmem:[%s876] sm:$0xff] %vm587, %v910
        %s912 = scalar_lea.vmem [#allocation6], 16
        %v913 = vld [vmem:[%s912] sm:$0xff]
        %s914 = scalar_lea.vmem [#allocation17], 16
        %v915 = vld [vmem:[%s914] sm:$0xff]
        %v917 = vsel %vm615, %v915, 0
        %919 = vmatpush.msra.mxu0 0.0
        %920 = vmatpush.msra.mxu0 0.0
        %921 = vmatpush.msra.mxu0 0.0
        %922 = vmatpush.msra.mxu0 0.0
        %923 = vmatpush.msra.mxu0 0.0
        %924 = vmatpush.msra.mxu0 0.0
        %925 = vmatpush.msra.mxu0 0.0
        %926 = vmatpush.msra.mxu0 0.0
        %927 = vmatpush.msra.mxu0 0.0
        %928 = vmatpush.msra.mxu0 0.0
        %929 = vmatpush.msra.mxu0 0.0
        %930 = vmatpush.msra.mxu0 0.0
        %931 = vmatpush.msra.mxu0 0.0
        %932 = vmatpush.msra.mxu0 0.0
        %933 = vmatpush.msra.mxu0 0.0
        %934 = vmatpush.msra.mxu0 %v885
        %935 = vmatmul.f32.gmra.mxu0 %v917
        %v936 = vpop.f32.mrf.mxu0
        %v937 = vadd.f32 0.0, %v936
        %938 = vdwg.mxu0
        %v939 = vadd.f32 %v913, %v937
        %940 = vst.msk [vmem:[%s912] sm:$0xff] %vm587, %v939
        %941 = vst.msk [vmem:[%s851] sm:$0xff] %vm637, %v856
        %v942 = vld [vmem:[#allocation2] sm:$0xff]
        %944 = vrot.lane.b32.xlu0 %v942, 116
        %v945 = vpop.permute.xlu0 %944
        %946 = vrot.lane.b32.xlu0 %v560, 116
        %v947 = vpop.permute.xlu0 %946
        %v948 = vsel %vm587, %v945, 0
        %v950 = vsel %vm587, %v947, 0
        %952 = vmatpush.xpose.msra.mxu0 0.0
        %953 = vmatpush.xpose.msra.mxu0 0.0
        %954 = vmatpush.xpose.msra.mxu0 0.0
        %955 = vmatpush.xpose.msra.mxu0 0.0
        %956 = vmatpush.xpose.msra.mxu0 0.0
        %957 = vmatpush.xpose.msra.mxu0 0.0
        %958 = vmatpush.xpose.msra.mxu0 0.0
        %959 = vmatpush.xpose.msra.mxu0 0.0
        %960 = vmatpush.xpose.msra.mxu0 0.0
        %961 = vmatpush.xpose.msra.mxu0 0.0
        %962 = vmatpush.xpose.msra.mxu0 0.0
        %963 = vmatpush.xpose.msra.mxu0 0.0
        %964 = vmatpush.xpose.msra.mxu0 0.0
        %965 = vmatpush.xpose.msra.mxu0 0.0
        %966 = vmatpush.xpose.msra.mxu0 0.0
        %967 = vmatpush.xpose.msra.mxu0 %v950
        %968 = vmatmul.f32.gmra.mxu0 %v948
        %v969 = vpop.f32.mrf.mxu0
        %v970 = vadd.f32 0.0, %v969
        %971 = vdwg.mxu0
        %s972 = scalar_lea.vmem [#allocation3], 24
        %v973 = vld [vmem:[%s972] sm:$0xff]
        %v974 = vsel %vm615, %v970, -inf
        %975 = vmax.xlane.f32.xlu0 %v974
        %v976 = vpop.xlane.xlu0 %975
        %v977 = vmax.f32 %v973, %v976
        %v978 = vsub.f32 %v973, %v977
        %v979 = vmul.f32 %v978, 1.442695
        %v980 = vpow.pop %v979
        %982 = vset.pattern.permute.xlu0 0
        %983 = vperm.xlu0 %982, %v977
        %v984 = vpop.permute.xlu0 %983
        %v986 = vsub.f32 %v970, %v984
        %v987 = vmul.f32 %v986, 1.442695
        %v988 = vpow.pop %v987
        %s989 = scalar_lea.vmem [#allocation4], 24
        %v990 = vld [vmem:[%s989] sm:$0xff]
        %v991 = vmul.f32 %v980, %v990
        %v992 = vsel %vm615, %v988, 0.0
        %993 = vadd.xlane.f32.xlu0 %v992
        %v994 = vpop.xlane.xlu0 %993
        %v995 = vadd.f32 %v991, %v994
        %996 = vst.msk [vmem:[%s989] sm:$0xff] %vm637, %v995
        %s997 = scalar_lea.vmem [#allocation5], 24
        %v998 = vld [vmem:[%s997] sm:$0xff]
        %1000 = vset.pattern.permute.xlu0 0
        %1001 = vperm.xlu0 %1000, %v980
        %v1002 = vpop.permute.xlu0 %1001
        %v1004 = vmul.f32 %v1002, %v998
        %1005 = vrot.lane.b32.xlu0 %v584, 116
        %v1006 = vpop.permute.xlu0 %1005
        %v1009 = vsel %vm615, %v988, 0
        %1011 = vmatpush.msra.mxu0 0.0
        %1012 = vmatpush.msra.mxu0 0.0
        %1013 = vmatpush.msra.mxu0 0.0
        %1014 = vmatpush.msra.mxu0 0.0
        %1015 = vmatpush.msra.mxu0 0.0
        %1016 = vmatpush.msra.mxu0 0.0
        %1017 = vmatpush.msra.mxu0 0.0
        %1018 = vmatpush.msra.mxu0 0.0
        %1019 = vmatpush.msra.mxu0 0.0
        %1020 = vmatpush.msra.mxu0 0.0
        %1021 = vmatpush.msra.mxu0 0.0
        %1022 = vmatpush.msra.mxu0 0.0
        %1023 = vmatpush.msra.mxu0 0.0
        %1024 = vmatpush.msra.mxu0 0.0
        %1025 = vmatpush.msra.mxu0 0.0
        %1026 = vmatpush.msra.mxu0 %v1006
        %1027 = vmatmul.f32.gmra.mxu0 %v1009
        %v1028 = vpop.f32.mrf.mxu0
        %v1029 = vadd.f32 0.0, %v1028
        %1030 = vdwg.mxu0
        %v1031 = vadd.f32 %v1004, %v1029
        %1032 = vst.msk [vmem:[%s997] sm:$0xff] %vm587, %v1031
        %s1033 = scalar_lea.vmem [#allocation6], 24
        %v1034 = vld [vmem:[%s1033] sm:$0xff]
        %s1035 = scalar_lea.vmem [#allocation17], 24
        %v1036 = vld [vmem:[%s1035] sm:$0xff]
        %v1038 = vsel %vm615, %v1036, 0
        %1040 = vmatpush.msra.mxu0 0.0
        %1041 = vmatpush.msra.mxu0 0.0
        %1042 = vmatpush.msra.mxu0 0.0
        %1043 = vmatpush.msra.mxu0 0.0
        %1044 = vmatpush.msra.mxu0 0.0
        %1045 = vmatpush.msra.mxu0 0.0
        %1046 = vmatpush.msra.mxu0 0.0
        %1047 = vmatpush.msra.mxu0 0.0
        %1048 = vmatpush.msra.mxu0 0.0
        %1049 = vmatpush.msra.mxu0 0.0
        %1050 = vmatpush.msra.mxu0 0.0
        %1051 = vmatpush.msra.mxu0 0.0
        %1052 = vmatpush.msra.mxu0 0.0
        %1053 = vmatpush.msra.mxu0 0.0
        %1054 = vmatpush.msra.mxu0 0.0
        %1055 = vmatpush.msra.mxu0 %v1006
        %1056 = vmatmul.f32.gmra.mxu0 %v1038
        %v1057 = vpop.f32.mrf.mxu0
        %v1058 = vadd.f32 0.0, %v1057
        %1059 = vdwg.mxu0
        %v1060 = vadd.f32 %v1034, %v1058
        %1061 = vst.msk [vmem:[%s1033] sm:$0xff] %vm587, %v1060
        %1062 = vst.msk [vmem:[%s972] sm:$0xff] %vm637, %v977
        %v1063 = vld [vmem:[#allocation2] sm:$0xff]
        %1065 = vrot.lane.b32.xlu0 %v1063, 112
        %v1066 = vpop.permute.xlu0 %1065
        %1067 = vrot.lane.b32.xlu0 %v560, 112
        %v1068 = vpop.permute.xlu0 %1067
        %v1069 = vsel %vm587, %v1066, 0
        %v1071 = vsel %vm587, %v1068, 0
        %1073 = vmatpush.xpose.msra.mxu0 0.0
        %1074 = vmatpush.xpose.msra.mxu0 0.0
        %1075 = vmatpush.xpose.msra.mxu0 0.0
        %1076 = vmatpush.xpose.msra.mxu0 0.0
        %1077 = vmatpush.xpose.msra.mxu0 0.0
        %1078 = vmatpush.xpose.msra.mxu0 0.0
        %1079 = vmatpush.xpose.msra.mxu0 0.0
        %1080 = vmatpush.xpose.msra.mxu0 0.0
        %1081 = vmatpush.xpose.msra.mxu0 0.0
        %1082 = vmatpush.xpose.msra.mxu0 0.0
        %1083 = vmatpush.xpose.msra.mxu0 0.0
        %1084 = vmatpush.xpose.msra.mxu0 0.0
        %1085 = vmatpush.xpose.msra.mxu0 0.0
        %1086 = vmatpush.xpose.msra.mxu0 0.0
        %1087 = vmatpush.xpose.msra.mxu0 0.0
        %1088 = vmatpush.xpose.msra.mxu0 %v1071
        %1089 = vmatmul.f32.gmra.mxu0 %v1069
        %v1090 = vpop.f32.mrf.mxu0
        %v1091 = vadd.f32 0.0, %v1090
        %1092 = vdwg.mxu0
        %s1093 = scalar_lea.vmem [#allocation3], 32
        %v1094 = vld [vmem:[%s1093] sm:$0xff]
        %v1095 = vsel %vm615, %v1091, -inf
        %1096 = vmax.xlane.f32.xlu0 %v1095
        %v1097 = vpop.xlane.xlu0 %1096
        %v1098 = vmax.f32 %v1094, %v1097
        %v1099 = vsub.f32 %v1094, %v1098
        %v1100 = vmul.f32 %v1099, 1.442695
        %v1101 = vpow.pop %v1100
        %1103 = vset.pattern.permute.xlu0 0
        %1104 = vperm.xlu0 %1103, %v1098
        %v1105 = vpop.permute.xlu0 %1104
        %v1107 = vsub.f32 %v1091, %v1105
        %v1108 = vmul.f32 %v1107, 1.442695
        %v1109 = vpow.pop %v1108
        %s1110 = scalar_lea.vmem [#allocation4], 32
        %v1111 = vld [vmem:[%s1110] sm:$0xff]
        %v1112 = vmul.f32 %v1101, %v1111
        %v1113 = vsel %vm615, %v1109, 0.0
        %1114 = vadd.xlane.f32.xlu0 %v1113
        %v1115 = vpop.xlane.xlu0 %1114
        %v1116 = vadd.f32 %v1112, %v1115
        %1117 = vst.msk [vmem:[%s1110] sm:$0xff] %vm637, %v1116
        %s1118 = scalar_lea.vmem [#allocation5], 32
        %v1119 = vld [vmem:[%s1118] sm:$0xff]
        %1121 = vset.pattern.permute.xlu0 0
        %1122 = vperm.xlu0 %1121, %v1101
        %v1123 = vpop.permute.xlu0 %1122
        %v1125 = vmul.f32 %v1123, %v1119
        %1126 = vrot.lane.b32.xlu0 %v584, 112
        %v1127 = vpop.permute.xlu0 %1126
        %v1130 = vsel %vm615, %v1109, 0
        %1132 = vmatpush.msra.mxu0 0.0
        %1133 = vmatpush.msra.mxu0 0.0
        %1134 = vmatpush.msra.mxu0 0.0
        %1135 = vmatpush.msra.mxu0 0.0
        %1136 = vmatpush.msra.mxu0 0.0
        %1137 = vmatpush.msra.mxu0 0.0
        %1138 = vmatpush.msra.mxu0 0.0
        %1139 = vmatpush.msra.mxu0 0.0
        %1140 = vmatpush.msra.mxu0 0.0
        %1141 = vmatpush.msra.mxu0 0.0
        %1142 = vmatpush.msra.mxu0 0.0
        %1143 = vmatpush.msra.mxu0 0.0
        %1144 = vmatpush.msra.mxu0 0.0
        %1145 = vmatpush.msra.mxu0 0.0
        %1146 = vmatpush.msra.mxu0 0.0
        %1147 = vmatpush.msra.mxu0 %v1127
        %1148 = vmatmul.f32.gmra.mxu0 %v1130
        %v1149 = vpop.f32.mrf.mxu0
        %v1150 = vadd.f32 0.0, %v1149
        %1151 = vdwg.mxu0
        %v1152 = vadd.f32 %v1125, %v1150
        %1153 = vst.msk [vmem:[%s1118] sm:$0xff] %vm587, %v1152
        %s1154 = scalar_lea.vmem [#allocation6], 32
        %v1155 = vld [vmem:[%s1154] sm:$0xff]
        %s1156 = scalar_lea.vmem [#allocation17], 32
        %v1157 = vld [vmem:[%s1156] sm:$0xff]
        %v1159 = vsel %vm615, %v1157, 0
        %1161 = vmatpush.msra.mxu0 0.0
        %1162 = vmatpush.msra.mxu0 0.0
        %1163 = vmatpush.msra.mxu0 0.0
        %1164 = vmatpush.msra.mxu0 0.0
        %1165 = vmatpush.msra.mxu0 0.0
        %1166 = vmatpush.msra.mxu0 0.0
        %1167 = vmatpush.msra.mxu0 0.0
        %1168 = vmatpush.msra.mxu0 0.0
        %1169 = vmatpush.msra.mxu0 0.0
        %1170 = vmatpush.msra.mxu0 0.0
        %1171 = vmatpush.msra.mxu0 0.0
        %1172 = vmatpush.msra.mxu0 0.0
        %1173 = vmatpush.msra.mxu0 0.0
        %1174 = vmatpush.msra.mxu0 0.0
        %1175 = vmatpush.msra.mxu0 0.0
        %1176 = vmatpush.msra.mxu0 %v1127
        %1177 = vmatmul.f32.gmra.mxu0 %v1159
        %v1178 = vpop.f32.mrf.mxu0
        %v1179 = vadd.f32 0.0, %v1178
        %1180 = vdwg.mxu0
        %v1181 = vadd.f32 %v1155, %v1179
        %1182 = vst.msk [vmem:[%s1154] sm:$0xff] %vm587, %v1181
        %1183 = vst.msk [vmem:[%s1093] sm:$0xff] %vm637, %v1098
        %v1184 = vld [vmem:[#allocation2] sm:$0xff]
        %1186 = vrot.lane.b32.xlu0 %v1184, 108
        %v1187 = vpop.permute.xlu0 %1186
        %1188 = vrot.lane.b32.xlu0 %v560, 108
        %v1189 = vpop.permute.xlu0 %1188
        %v1190 = vsel %vm587, %v1187, 0
        %v1192 = vsel %vm587, %v1189, 0
        %1194 = vmatpush.xpose.msra.mxu0 0.0
        %1195 = vmatpush.xpose.msra.mxu0 0.0
        %1196 = vmatpush.xpose.msra.mxu0 0.0
        %1197 = vmatpush.xpose.msra.mxu0 0.0
        %1198 = vmatpush.xpose.msra.mxu0 0.0
        %1199 = vmatpush.xpose.msra.mxu0 0.0
        %1200 = vmatpush.xpose.msra.mxu0 0.0
        %1201 = vmatpush.xpose.msra.mxu0 0.0
        %1202 = vmatpush.xpose.msra.mxu0 0.0
        %1203 = vmatpush.xpose.msra.mxu0 0.0
        %1204 = vmatpush.xpose.msra.mxu0 0.0
        %1205 = vmatpush.xpose.msra.mxu0 0.0
        %1206 = vmatpush.xpose.msra.mxu0 0.0
        %1207 = vmatpush.xpose.msra.mxu0 0.0
        %1208 = vmatpush.xpose.msra.mxu0 0.0
        %1209 = vmatpush.xpose.msra.mxu0 %v1192
        %1210 = vmatmul.f32.gmra.mxu0 %v1190
        %v1211 = vpop.f32.mrf.mxu0
        %v1212 = vadd.f32 0.0, %v1211
        %1213 = vdwg.mxu0
        %s1214 = scalar_lea.vmem [#allocation3], 40
        %v1215 = vld [vmem:[%s1214] sm:$0xff]
        %v1216 = vsel %vm615, %v1212, -inf
        %1217 = vmax.xlane.f32.xlu0 %v1216
        %v1218 = vpop.xlane.xlu0 %1217
        %v1219 = vmax.f32 %v1215, %v1218
        %v1220 = vsub.f32 %v1215, %v1219
        %v1221 = vmul.f32 %v1220, 1.442695
        %v1222 = vpow.pop %v1221
        %1224 = vset.pattern.permute.xlu0 0
        %1225 = vperm.xlu0 %1224, %v1219
        %v1226 = vpop.permute.xlu0 %1225
        %v1228 = vsub.f32 %v1212, %v1226
        %v1229 = vmul.f32 %v1228, 1.442695
        %v1230 = vpow.pop %v1229
        %s1231 = scalar_lea.vmem [#allocation4], 40
        %v1232 = vld [vmem:[%s1231] sm:$0xff]
        %v1233 = vmul.f32 %v1222, %v1232
        %v1234 = vsel %vm615, %v1230, 0.0
        %1235 = vadd.xlane.f32.xlu0 %v1234
        %v1236 = vpop.xlane.xlu0 %1235
        %v1237 = vadd.f32 %v1233, %v1236
        %1238 = vst.msk [vmem:[%s1231] sm:$0xff] %vm637, %v1237
        %s1239 = scalar_lea.vmem [#allocation5], 40
        %v1240 = vld [vmem:[%s1239] sm:$0xff]
        %1242 = vset.pattern.permute.xlu0 0
        %1243 = vperm.xlu0 %1242, %v1222
        %v1244 = vpop.permute.xlu0 %1243
        %v1246 = vmul.f32 %v1244, %v1240
        %1247 = vrot.lane.b32.xlu0 %v584, 108
        %v1248 = vpop.permute.xlu0 %1247
        %v1251 = vsel %vm615, %v1230, 0
        %1253 = vmatpush.msra.mxu0 0.0
        %1254 = vmatpush.msra.mxu0 0.0
        %1255 = vmatpush.msra.mxu0 0.0
        %1256 = vmatpush.msra.mxu0 0.0
        %1257 = vmatpush.msra.mxu0 0.0
        %1258 = vmatpush.msra.mxu0 0.0
        %1259 = vmatpush.msra.mxu0 0.0
        %1260 = vmatpush.msra.mxu0 0.0
        %1261 = vmatpush.msra.mxu0 0.0
        %1262 = vmatpush.msra.mxu0 0.0
        %1263 = vmatpush.msra.mxu0 0.0
        %1264 = vmatpush.msra.mxu0 0.0
        %1265 = vmatpush.msra.mxu0 0.0
        %1266 = vmatpush.msra.mxu0 0.0
        %1267 = vmatpush.msra.mxu0 0.0
        %1268 = vmatpush.msra.mxu0 %v1248
        %1269 = vmatmul.f32.gmra.mxu0 %v1251
        %v1270 = vpop.f32.mrf.mxu0
        %v1271 = vadd.f32 0.0, %v1270
        %1272 = vdwg.mxu0
        %v1273 = vadd.f32 %v1246, %v1271
        %1274 = vst.msk [vmem:[%s1239] sm:$0xff] %vm587, %v1273
        %s1275 = scalar_lea.vmem [#allocation6], 40
        %v1276 = vld [vmem:[%s1275] sm:$0xff]
        %s1277 = scalar_lea.vmem [#allocation17], 40
        %v1278 = vld [vmem:[%s1277] sm:$0xff]
        %v1280 = vsel %vm615, %v1278, 0
        %1282 = vmatpush.msra.mxu0 0.0
        %1283 = vmatpush.msra.mxu0 0.0
        %1284 = vmatpush.msra.mxu0 0.0
        %1285 = vmatpush.msra.mxu0 0.0
        %1286 = vmatpush.msra.mxu0 0.0
        %1287 = vmatpush.msra.mxu0 0.0
        %1288 = vmatpush.msra.mxu0 0.0
        %1289 = vmatpush.msra.mxu0 0.0
        %1290 = vmatpush.msra.mxu0 0.0
        %1291 = vmatpush.msra.mxu0 0.0
        %1292 = vmatpush.msra.mxu0 0.0
        %1293 = vmatpush.msra.mxu0 0.0
        %1294 = vmatpush.msra.mxu0 0.0
        %1295 = vmatpush.msra.mxu0 0.0
        %1296 = vmatpush.msra.mxu0 0.0
        %1297 = vmatpush.msra.mxu0 %v1248
        %1298 = vmatmul.f32.gmra.mxu0 %v1280
        %v1299 = vpop.f32.mrf.mxu0
        %v1300 = vadd.f32 0.0, %v1299
        %1301 = vdwg.mxu0
        %v1302 = vadd.f32 %v1276, %v1300
        %1303 = vst.msk [vmem:[%s1275] sm:$0xff] %vm587, %v1302
        %1304 = vst.msk [vmem:[%s1214] sm:$0xff] %vm637, %v1219
        %v1305 = vld [vmem:[#allocation2] sm:$0xff]
        %1307 = vrot.lane.b32.xlu0 %v1305, 104
        %v1308 = vpop.permute.xlu0 %1307
        %1309 = vrot.lane.b32.xlu0 %v560, 104
        %v1310 = vpop.permute.xlu0 %1309
        %v1311 = vsel %vm587, %v1308, 0
        %v1313 = vsel %vm587, %v1310, 0
        %1315 = vmatpush.xpose.msra.mxu0 0.0
        %1316 = vmatpush.xpose.msra.mxu0 0.0
        %1317 = vmatpush.xpose.msra.mxu0 0.0
        %1318 = vmatpush.xpose.msra.mxu0 0.0
        %1319 = vmatpush.xpose.msra.mxu0 0.0
        %1320 = vmatpush.xpose.msra.mxu0 0.0
        %1321 = vmatpush.xpose.msra.mxu0 0.0
        %1322 = vmatpush.xpose.msra.mxu0 0.0
        %1323 = vmatpush.xpose.msra.mxu0 0.0
        %1324 = vmatpush.xpose.msra.mxu0 0.0
        %1325 = vmatpush.xpose.msra.mxu0 0.0
        %1326 = vmatpush.xpose.msra.mxu0 0.0
        %1327 = vmatpush.xpose.msra.mxu0 0.0
        %1328 = vmatpush.xpose.msra.mxu0 0.0
        %1329 = vmatpush.xpose.msra.mxu0 0.0
        %1330 = vmatpush.xpose.msra.mxu0 %v1313
        %1331 = vmatmul.f32.gmra.mxu0 %v1311
        %v1332 = vpop.f32.mrf.mxu0
        %v1333 = vadd.f32 0.0, %v1332
        %1334 = vdwg.mxu0
        %s1335 = scalar_lea.vmem [#allocation3], 48
        %v1336 = vld [vmem:[%s1335] sm:$0xff]
        %v1337 = vsel %vm615, %v1333, -inf
        %1338 = vmax.xlane.f32.xlu0 %v1337
        %v1339 = vpop.xlane.xlu0 %1338
        %v1340 = vmax.f32 %v1336, %v1339
        %v1341 = vsub.f32 %v1336, %v1340
        %v1342 = vmul.f32 %v1341, 1.442695
        %v1343 = vpow.pop %v1342
        %1345 = vset.pattern.permute.xlu0 0
        %1346 = vperm.xlu0 %1345, %v1340
        %v1347 = vpop.permute.xlu0 %1346
        %v1349 = vsub.f32 %v1333, %v1347
        %v1350 = vmul.f32 %v1349, 1.442695
        %v1351 = vpow.pop %v1350
        %s1352 = scalar_lea.vmem [#allocation4], 48
        %v1353 = vld [vmem:[%s1352] sm:$0xff]
        %v1354 = vmul.f32 %v1343, %v1353
        %v1355 = vsel %vm615, %v1351, 0.0
        %1356 = vadd.xlane.f32.xlu0 %v1355
        %v1357 = vpop.xlane.xlu0 %1356
        %v1358 = vadd.f32 %v1354, %v1357
        %1359 = vst.msk [vmem:[%s1352] sm:$0xff] %vm637, %v1358
        %s1360 = scalar_lea.vmem [#allocation5], 48
        %v1361 = vld [vmem:[%s1360] sm:$0xff]
        %1363 = vset.pattern.permute.xlu0 0
        %1364 = vperm.xlu0 %1363, %v1343
        %v1365 = vpop.permute.xlu0 %1364
        %v1367 = vmul.f32 %v1365, %v1361
        %1368 = vrot.lane.b32.xlu0 %v584, 104
        %v1369 = vpop.permute.xlu0 %1368
        %v1372 = vsel %vm615, %v1351, 0
        %1374 = vmatpush.msra.mxu0 0.0
        %1375 = vmatpush.msra.mxu0 0.0
        %1376 = vmatpush.msra.mxu0 0.0
        %1377 = vmatpush.msra.mxu0 0.0
        %1378 = vmatpush.msra.mxu0 0.0
        %1379 = vmatpush.msra.mxu0 0.0
        %1380 = vmatpush.msra.mxu0 0.0
        %1381 = vmatpush.msra.mxu0 0.0
        %1382 = vmatpush.msra.mxu0 0.0
        %1383 = vmatpush.msra.mxu0 0.0
        %1384 = vmatpush.msra.mxu0 0.0
        %1385 = vmatpush.msra.mxu0 0.0
        %1386 = vmatpush.msra.mxu0 0.0
        %1387 = vmatpush.msra.mxu0 0.0
        %1388 = vmatpush.msra.mxu0 0.0
        %1389 = vmatpush.msra.mxu0 %v1369
        %1390 = vmatmul.f32.gmra.mxu0 %v1372
        %v1391 = vpop.f32.mrf.mxu0
        %v1392 = vadd.f32 0.0, %v1391
        %1393 = vdwg.mxu0
        %v1394 = vadd.f32 %v1367, %v1392
        %1395 = vst.msk [vmem:[%s1360] sm:$0xff] %vm587, %v1394
        %s1396 = scalar_lea.vmem [#allocation6], 48
        %v1397 = vld [vmem:[%s1396] sm:$0xff]
        %s1398 = scalar_lea.vmem [#allocation17], 48
        %v1399 = vld [vmem:[%s1398] sm:$0xff]
        %v1401 = vsel %vm615, %v1399, 0
        %1403 = vmatpush.msra.mxu0 0.0
        %1404 = vmatpush.msra.mxu0 0.0
        %1405 = vmatpush.msra.mxu0 0.0
        %1406 = vmatpush.msra.mxu0 0.0
        %1407 = vmatpush.msra.mxu0 0.0
        %1408 = vmatpush.msra.mxu0 0.0
        %1409 = vmatpush.msra.mxu0 0.0
        %1410 = vmatpush.msra.mxu0 0.0
        %1411 = vmatpush.msra.mxu0 0.0
        %1412 = vmatpush.msra.mxu0 0.0
        %1413 = vmatpush.msra.mxu0 0.0
        %1414 = vmatpush.msra.mxu0 0.0
        %1415 = vmatpush.msra.mxu0 0.0
        %1416 = vmatpush.msra.mxu0 0.0
        %1417 = vmatpush.msra.mxu0 0.0
        %1418 = vmatpush.msra.mxu0 %v1369
        %1419 = vmatmul.f32.gmra.mxu0 %v1401
        %v1420 = vpop.f32.mrf.mxu0
        %v1421 = vadd.f32 0.0, %v1420
        %1422 = vdwg.mxu0
        %v1423 = vadd.f32 %v1397, %v1421
        %1424 = vst.msk [vmem:[%s1396] sm:$0xff] %vm587, %v1423
        %1425 = vst.msk [vmem:[%s1335] sm:$0xff] %vm637, %v1340
        %v1426 = vld [vmem:[#allocation2] sm:$0xff]
        %1428 = vrot.lane.b32.xlu0 %v1426, 100
        %v1429 = vpop.permute.xlu0 %1428
        %1430 = vrot.lane.b32.xlu0 %v560, 100
        %v1431 = vpop.permute.xlu0 %1430
        %v1432 = vsel %vm587, %v1429, 0
        %v1434 = vsel %vm587, %v1431, 0
        %1436 = vmatpush.xpose.msra.mxu0 0.0
        %1437 = vmatpush.xpose.msra.mxu0 0.0
        %1438 = vmatpush.xpose.msra.mxu0 0.0
        %1439 = vmatpush.xpose.msra.mxu0 0.0
        %1440 = vmatpush.xpose.msra.mxu0 0.0
        %1441 = vmatpush.xpose.msra.mxu0 0.0
        %1442 = vmatpush.xpose.msra.mxu0 0.0
        %1443 = vmatpush.xpose.msra.mxu0 0.0
        %1444 = vmatpush.xpose.msra.mxu0 0.0
        %1445 = vmatpush.xpose.msra.mxu0 0.0
        %1446 = vmatpush.xpose.msra.mxu0 0.0
        %1447 = vmatpush.xpose.msra.mxu0 0.0
        %1448 = vmatpush.xpose.msra.mxu0 0.0
        %1449 = vmatpush.xpose.msra.mxu0 0.0
        %1450 = vmatpush.xpose.msra.mxu0 0.0
        %1451 = vmatpush.xpose.msra.mxu0 %v1434
        %1452 = vmatmul.f32.gmra.mxu0 %v1432
        %v1453 = vpop.f32.mrf.mxu0
        %v1454 = vadd.f32 0.0, %v1453
        %1455 = vdwg.mxu0
        %s1456 = scalar_lea.vmem [#allocation3], 56
        %v1457 = vld [vmem:[%s1456] sm:$0xff]
        %v1458 = vsel %vm615, %v1454, -inf
        %1459 = vmax.xlane.f32.xlu0 %v1458
        %v1460 = vpop.xlane.xlu0 %1459
        %v1461 = vmax.f32 %v1457, %v1460
        %v1462 = vsub.f32 %v1457, %v1461
        %v1463 = vmul.f32 %v1462, 1.442695
        %v1464 = vpow.pop %v1463
        %1466 = vset.pattern.permute.xlu0 0
        %1467 = vperm.xlu0 %1466, %v1461
        %v1468 = vpop.permute.xlu0 %1467
        %v1470 = vsub.f32 %v1454, %v1468
        %v1471 = vmul.f32 %v1470, 1.442695
        %v1472 = vpow.pop %v1471
        %s1473 = scalar_lea.vmem [#allocation4], 56
        %v1474 = vld [vmem:[%s1473] sm:$0xff]
        %v1475 = vmul.f32 %v1464, %v1474
        %v1476 = vsel %vm615, %v1472, 0.0
        %1477 = vadd.xlane.f32.xlu0 %v1476
        %v1478 = vpop.xlane.xlu0 %1477
        %v1479 = vadd.f32 %v1475, %v1478
        %1480 = vst.msk [vmem:[%s1473] sm:$0xff] %vm637, %v1479
        %s1481 = scalar_lea.vmem [#allocation5], 56
        %v1482 = vld [vmem:[%s1481] sm:$0xff]
        %1484 = vset.pattern.permute.xlu0 0
        %1485 = vperm.xlu0 %1484, %v1464
        %v1486 = vpop.permute.xlu0 %1485
        %v1488 = vmul.f32 %v1486, %v1482
        %1489 = vrot.lane.b32.xlu0 %v584, 100
        %v1490 = vpop.permute.xlu0 %1489
        %v1493 = vsel %vm615, %v1472, 0
        %1495 = vmatpush.msra.mxu0 0.0
        %1496 = vmatpush.msra.mxu0 0.0
        %1497 = vmatpush.msra.mxu0 0.0
        %1498 = vmatpush.msra.mxu0 0.0
        %1499 = vmatpush.msra.mxu0 0.0
        %1500 = vmatpush.msra.mxu0 0.0
        %1501 = vmatpush.msra.mxu0 0.0
        %1502 = vmatpush.msra.mxu0 0.0
        %1503 = vmatpush.msra.mxu0 0.0
        %1504 = vmatpush.msra.mxu0 0.0
        %1505 = vmatpush.msra.mxu0 0.0
        %1506 = vmatpush.msra.mxu0 0.0
        %1507 = vmatpush.msra.mxu0 0.0
        %1508 = vmatpush.msra.mxu0 0.0
        %1509 = vmatpush.msra.mxu0 0.0
        %1510 = vmatpush.msra.mxu0 %v1490
        %1511 = vmatmul.f32.gmra.mxu0 %v1493
        %v1512 = vpop.f32.mrf.mxu0
        %v1513 = vadd.f32 0.0, %v1512
        %1514 = vdwg.mxu0
        %v1515 = vadd.f32 %v1488, %v1513
        %1516 = vst.msk [vmem:[%s1481] sm:$0xff] %vm587, %v1515
        %s1517 = scalar_lea.vmem [#allocation6], 56
        %v1518 = vld [vmem:[%s1517] sm:$0xff]
        %s1519 = scalar_lea.vmem [#allocation17], 56
        %v1520 = vld [vmem:[%s1519] sm:$0xff]
        %v1522 = vsel %vm615, %v1520, 0
        %1524 = vmatpush.msra.mxu0 0.0
        %1525 = vmatpush.msra.mxu0 0.0
        %1526 = vmatpush.msra.mxu0 0.0
        %1527 = vmatpush.msra.mxu0 0.0
        %1528 = vmatpush.msra.mxu0 0.0
        %1529 = vmatpush.msra.mxu0 0.0
        %1530 = vmatpush.msra.mxu0 0.0
        %1531 = vmatpush.msra.mxu0 0.0
        %1532 = vmatpush.msra.mxu0 0.0
        %1533 = vmatpush.msra.mxu0 0.0
        %1534 = vmatpush.msra.mxu0 0.0
        %1535 = vmatpush.msra.mxu0 0.0
        %1536 = vmatpush.msra.mxu0 0.0
        %1537 = vmatpush.msra.mxu0 0.0
        %1538 = vmatpush.msra.mxu0 0.0
        %1539 = vmatpush.msra.mxu0 %v1490
        %1540 = vmatmul.f32.gmra.mxu0 %v1522
        %v1541 = vpop.f32.mrf.mxu0
        %v1542 = vadd.f32 0.0, %v1541
        %1543 = vdwg.mxu0
        %v1544 = vadd.f32 %v1518, %v1542
        %1545 = vst.msk [vmem:[%s1517] sm:$0xff] %vm587, %v1544
        %1546 = vst.msk [vmem:[%s1456] sm:$0xff] %vm637, %v1461
        // Predicated region
        $region81: #{tpu_custom_call.1} parent=51 // pred_check
          %p1547 = pneg %p465
        $region82: #{tpu_custom_call.1} parent=51 // pred_check_branch
          %1549 = sbr.rel (%p1547) target = $region84
        $region83: #{tpu_custom_call.1} parent=51 // pred_region
          %v1550 = vld [vmem:[#allocation4] sm:$0xff]
          %v1551 = vrcp.pop %v1550
          %v1552 = vmul.f32 %v1550, %v1551
          %v1553 = vsub.f32 1.0, %v1552
          %v1554 = vmul.f32 %v1551, %v1553
          %v1555 = vadd.f32 %v1551, %v1554
          %vm1556 = vweird.f32 %v1550
          %vm1557 = vweird.f32 %v1551
          %vm1558 = vmor %vm1556, %vm1557
          %v1559 = vsel %vm1558, %v1551, %v1555
          %v1560 = vand.u32 2147483647, %v1550
          %vm1561 = vcmp.eq.f32.partialorder %v1560, 8.507059e+37
          %v1562 = vand.u32 %v1550, 2147483648
          %v1563 = vor.u32 1.1754944e-38, %v1562
          %v1564 = vsel %vm1561, %v1563, %v1559
          %v1565 = vmul.f32 1.0, %v1564
          %v1566 = vld [vmem:[#allocation5] sm:$0xff]
          %1568 = vset.pattern.permute.xlu0 0
          %1569 = vperm.xlu0 %1568, %v1565
          %v1570 = vpop.permute.xlu0 %1569
          %v1572 = vmul.f32 %v1566, %v1570
          %v1573 = vld [vmem:[#allocation6] sm:$0xff]
          %v1574 = vadd.f32 %v1572, %v1573
          %1575 = vst.msk [vmem:[#allocation7] sm:$0xff] %vm587, %v1574
          %v1576 = vld [vmem:[%s746] sm:$0xff]
          %v1577 = vrcp.pop %v1576
          %v1578 = vmul.f32 %v1576, %v1577
          %v1579 = vsub.f32 1.0, %v1578
          %v1580 = vmul.f32 %v1577, %v1579
          %v1581 = vadd.f32 %v1577, %v1580
          %vm1582 = vweird.f32 %v1576
          %vm1583 = vweird.f32 %v1577
          %vm1584 = vmor %vm1582, %vm1583
          %v1585 = vsel %vm1584, %v1577, %v1581
          %v1586 = vand.u32 2147483647, %v1576
          %vm1587 = vcmp.eq.f32.partialorder %v1586, 8.507059e+37
          %v1588 = vand.u32 %v1576, 2147483648
          %v1589 = vor.u32 1.1754944e-38, %v1588
          %v1590 = vsel %vm1587, %v1589, %v1585
          %v1591 = vmul.f32 1.0, %v1590
          %v1592 = vld [vmem:[%s754] sm:$0xff]
          %1594 = vset.pattern.permute.xlu0 0
          %1595 = vperm.xlu0 %1594, %v1591
          %v1596 = vpop.permute.xlu0 %1595
          %v1598 = vmul.f32 %v1592, %v1596
          %v1599 = vld [vmem:[%s791] sm:$0xff]
          %v1600 = vadd.f32 %v1598, %v1599
          %1602 = vrot.lane.b32.xlu0 %v1600, 4
          %v1603 = vpop.permute.xlu0 %1602
          %vm1605 = vcmask 64544
          %1606 = vst.msk [vmem:[#allocation7] sm:$0xff] %vm1605, %v1603
          %v1607 = vld [vmem:[%s868] sm:$0xff]
          %v1608 = vrcp.pop %v1607
          %v1609 = vmul.f32 %v1607, %v1608
          %v1610 = vsub.f32 1.0, %v1609
          %v1611 = vmul.f32 %v1608, %v1610
          %v1612 = vadd.f32 %v1608, %v1611
          %vm1613 = vweird.f32 %v1607
          %vm1614 = vweird.f32 %v1608
          %vm1615 = vmor %vm1613, %vm1614
          %v1616 = vsel %vm1615, %v1608, %v1612
          %v1617 = vand.u32 2147483647, %v1607
          %vm1618 = vcmp.eq.f32.partialorder %v1617, 8.507059e+37
          %v1619 = vand.u32 %v1607, 2147483648
          %v1620 = vor.u32 1.1754944e-38, %v1619
          %v1621 = vsel %vm1618, %v1620, %v1616
          %v1622 = vmul.f32 1.0, %v1621
          %v1623 = vld [vmem:[%s876] sm:$0xff]
          %1625 = vset.pattern.permute.xlu0 0
          %1626 = vperm.xlu0 %1625, %v1622
          %v1627 = vpop.permute.xlu0 %1626
          %v1629 = vmul.f32 %v1623, %v1627
          %v1630 = vld [vmem:[%s912] sm:$0xff]
          %v1631 = vadd.f32 %v1629, %v1630
          %1633 = vrot.lane.b32.xlu0 %v1631, 8
          %v1634 = vpop.permute.xlu0 %1633
          %vm1636 = vcmask 97344
          %1637 = vst.msk [vmem:[#allocation7] sm:$0xff] %vm1636, %v1634
          %v1638 = vld [vmem:[%s989] sm:$0xff]
          %v1639 = vrcp.pop %v1638
          %v1640 = vmul.f32 %v1638, %v1639
          %v1641 = vsub.f32 1.0, %v1640
          %v1642 = vmul.f32 %v1639, %v1641
          %v1643 = vadd.f32 %v1639, %v1642
          %vm1644 = vweird.f32 %v1638
          %vm1645 = vweird.f32 %v1639
          %vm1646 = vmor %vm1644, %vm1645
          %v1647 = vsel %vm1646, %v1639, %v1643
          %v1648 = vand.u32 2147483647, %v1638
          %vm1649 = vcmp.eq.f32.partialorder %v1648, 8.507059e+37
          %v1650 = vand.u32 %v1638, 2147483648
          %v1651 = vor.u32 1.1754944e-38, %v1650
          %v1652 = vsel %vm1649, %v1651, %v1647
          %v1653 = vmul.f32 1.0, %v1652
          %v1654 = vld [vmem:[%s997] sm:$0xff]
          %1656 = vset.pattern.permute.xlu0 0
          %1657 = vperm.xlu0 %1656, %v1653
          %v1658 = vpop.permute.xlu0 %1657
          %v1660 = vmul.f32 %v1654, %v1658
          %v1661 = vld [vmem:[%s1033] sm:$0xff]
          %v1662 = vadd.f32 %v1660, %v1661
          %1664 = vrot.lane.b32.xlu0 %v1662, 12
          %v1665 = vpop.permute.xlu0 %1664
          %vm1667 = vcmask 130144
          %1668 = vst.msk [vmem:[#allocation7] sm:$0xff] %vm1667, %v1665
          %v1669 = vld [vmem:[%s1110] sm:$0xff]
          %v1670 = vrcp.pop %v1669
          %v1671 = vmul.f32 %v1669, %v1670
          %v1672 = vsub.f32 1.0, %v1671
          %v1673 = vmul.f32 %v1670, %v1672
          %v1674 = vadd.f32 %v1670, %v1673
          %vm1675 = vweird.f32 %v1669
          %vm1676 = vweird.f32 %v1670
          %vm1677 = vmor %vm1675, %vm1676
          %v1678 = vsel %vm1677, %v1670, %v1674
          %v1679 = vand.u32 2147483647, %v1669
          %vm1680 = vcmp.eq.f32.partialorder %v1679, 8.507059e+37
          %v1681 = vand.u32 %v1669, 2147483648
          %v1682 = vor.u32 1.1754944e-38, %v1681
          %v1683 = vsel %vm1680, %v1682, %v1678
          %v1684 = vmul.f32 1.0, %v1683
          %v1685 = vld [vmem:[%s1118] sm:$0xff]
          %1687 = vset.pattern.permute.xlu0 0
          %1688 = vperm.xlu0 %1687, %v1684
          %v1689 = vpop.permute.xlu0 %1688
          %v1691 = vmul.f32 %v1685, %v1689
          %v1692 = vld [vmem:[%s1154] sm:$0xff]
          %v1693 = vadd.f32 %v1691, %v1692
          %1695 = vrot.lane.b32.xlu0 %v1693, 16
          %v1696 = vpop.permute.xlu0 %1695
          %vm1698 = vcmask 162944
          %1699 = vst.msk [vmem:[#allocation7] sm:$0xff] %vm1698, %v1696
          %v1700 = vld [vmem:[%s1231] sm:$0xff]
          %v1701 = vrcp.pop %v1700
          %v1702 = vmul.f32 %v1700, %v1701
          %v1703 = vsub.f32 1.0, %v1702
          %v1704 = vmul.f32 %v1701, %v1703
          %v1705 = vadd.f32 %v1701, %v1704
          %vm1706 = vweird.f32 %v1700
          %vm1707 = vweird.f32 %v1701
          %vm1708 = vmor %vm1706, %vm1707
          %v1709 = vsel %vm1708, %v1701, %v1705
          %v1710 = vand.u32 2147483647, %v1700
          %vm1711 = vcmp.eq.f32.partialorder %v1710, 8.507059e+37
          %v1712 = vand.u32 %v1700, 2147483648
          %v1713 = vor.u32 1.1754944e-38, %v1712
          %v1714 = vsel %vm1711, %v1713, %v1709
          %v1715 = vmul.f32 1.0, %v1714
          %v1716 = vld [vmem:[%s1239] sm:$0xff]
          %1718 = vset.pattern.permute.xlu0 0
          %1719 = vperm.xlu0 %1718, %v1715
          %v1720 = vpop.permute.xlu0 %1719
          %v1722 = vmul.f32 %v1716, %v1720
          %v1723 = vld [vmem:[%s1275] sm:$0xff]
          %v1724 = vadd.f32 %v1722, %v1723
          %1726 = vrot.lane.b32.xlu0 %v1724, 20
          %v1727 = vpop.permute.xlu0 %1726
          %vm1729 = vcmask 195744
          %1730 = vst.msk [vmem:[#allocation7] sm:$0xff] %vm1729, %v1727
          %v1731 = vld [vmem:[%s1352] sm:$0xff]
          %v1732 = vrcp.pop %v1731
          %v1733 = vmul.f32 %v1731, %v1732
          %v1734 = vsub.f32 1.0, %v1733
          %v1735 = vmul.f32 %v1732, %v1734
          %v1736 = vadd.f32 %v1732, %v1735
          %vm1737 = vweird.f32 %v1731
          %vm1738 = vweird.f32 %v1732
          %vm1739 = vmor %vm1737, %vm1738
          %v1740 = vsel %vm1739, %v1732, %v1736
          %v1741 = vand.u32 2147483647, %v1731
          %vm1742 = vcmp.eq.f32.partialorder %v1741, 8.507059e+37
          %v1743 = vand.u32 %v1731, 2147483648
          %v1744 = vor.u32 1.1754944e-38, %v1743
          %v1745 = vsel %vm1742, %v1744, %v1740
          %v1746 = vmul.f32 1.0, %v1745
          %v1747 = vld [vmem:[%s1360] sm:$0xff]
          %1749 = vset.pattern.permute.xlu0 0
          %1750 = vperm.xlu0 %1749, %v1746
          %v1751 = vpop.permute.xlu0 %1750
          %v1753 = vmul.f32 %v1747, %v1751
          %v1754 = vld [vmem:[%s1396] sm:$0xff]
          %v1755 = vadd.f32 %v1753, %v1754
          %1757 = vrot.lane.b32.xlu0 %v1755, 24
          %v1758 = vpop.permute.xlu0 %1757
          %vm1760 = vcmask 228544
          %1761 = vst.msk [vmem:[#allocation7] sm:$0xff] %vm1760, %v1758
          %v1762 = vld [vmem:[%s1473] sm:$0xff]
          %v1763 = vrcp.pop %v1762
          %v1764 = vmul.f32 %v1762, %v1763
          %v1765 = vsub.f32 1.0, %v1764
          %v1766 = vmul.f32 %v1763, %v1765
          %v1767 = vadd.f32 %v1763, %v1766
          %vm1768 = vweird.f32 %v1762
          %vm1769 = vweird.f32 %v1763
          %vm1770 = vmor %vm1768, %vm1769
          %v1771 = vsel %vm1770, %v1763, %v1767
          %v1772 = vand.u32 2147483647, %v1762
          %vm1773 = vcmp.eq.f32.partialorder %v1772, 8.507059e+37
          %v1774 = vand.u32 %v1762, 2147483648
          %v1775 = vor.u32 1.1754944e-38, %v1774
          %v1776 = vsel %vm1773, %v1775, %v1771
          %v1777 = vmul.f32 1.0, %v1776
          %v1778 = vld [vmem:[%s1481] sm:$0xff]
          %1780 = vset.pattern.permute.xlu0 0
          %1781 = vperm.xlu0 %1780, %v1777
          %v1782 = vpop.permute.xlu0 %1781
          %v1784 = vmul.f32 %v1778, %v1782
          %v1785 = vld [vmem:[%s1517] sm:$0xff]
          %v1786 = vadd.f32 %v1784, %v1785
          %1788 = vrot.lane.b32.xlu0 %v1786, 28
          %v1789 = vpop.permute.xlu0 %1788
          %vm1791 = vcmask 261344
          %1792 = vst.msk [vmem:[#allocation7] sm:$0xff] %vm1791, %v1789
          %v1793 = vld [vmem:[#allocation7] sm:$0xff]
          %v1794 = vsel %vm538, %v1793, 0.0
          %1795 = vadd.xlane.f32.xlu0 %v1794
          %v1796 = vpop.xlane.xlu0 %1795
          %v1797 = vrcp.pop 32.0
          %v1798 = vmul.f32 32.0, %v1797
          %v1799 = vsub.f32 1.0, %v1798
          %v1800 = vmul.f32 %v1797, %v1799
          %v1801 = vadd.f32 %v1797, %v1800
          %vm1802 = vweird.f32 %v1797
          %v1803 = vsel %vm1802, %v1797, %v1801
          %v1804 = vmul.f32 %v1796, %v1803
          %v1805 = vsub.f32 %v1793, %v1804
          %v1806 = vmul.f32 %v1805, %v1805
          %v1807 = vsel %vm538, %v1806, 0.0
          %1808 = vadd.xlane.f32.xlu0 %v1807
          %v1809 = vpop.xlane.xlu0 %1808
          %v1810 = vmul.f32 %v1809, %v1803
          %v1811 = vadd.f32 %v1810, 1e-05
          %v1812 = vrsqrt.pop %v1811
          %v1813 = vmul.f32 %v1812, %v1811
          %v1814 = vmul.f32 %v1813, %v1812
          %v1815 = vmul.f32 0.5, %v1814
          %v1816 = vsub.f32 1.5, %v1815
          %v1817 = vmul.f32 %v1812, %v1816
          %vm1818 = vweird.f32 %v1811
          %vm1819 = vweird.f32 %v1812
          %vm1820 = vmor %vm1818, %vm1819
          %v1821 = vsel %vm1820, %v1812, %v1817
          %v1822 = vmul.f32 %v1805, %v1821
          %v1823 = vld [vmem:[%s6] sm:$0x1]
          %v1825 = vperm.slane %v1823, 0
          %v1827 = vmul.f32 %v1822, %v1825
          %v1828 = vld [vmem:[%s7] sm:$0x1]
          %v1830 = vperm.slane %v1828, 0
          %v1832 = vadd.f32 %v1827, %v1830
          %1833 = vst.msk [vmem:[%s464] sm:$0xff] %vm538, %v1832
        $region84: #{tpu_custom_call.1} parent=51 // pred_fallthru
          _
        %s1834 = sand.u32 %s248, 1
        %s1835 = scalar_lea.sflag [#allocation10], %s1834
        %s1836 = sand.u32 %s248, 1
        %s1837 = smul.addr %s1836, 8
        %s1838 = scalar_lea.vmem [#allocation19], %s1837
        // Predicated region
        $region85: #{tpu_custom_call.1} parent=51 // pred_check
          %p1839 = pneg %p258
        $region86: #{tpu_custom_call.1} parent=51 // pred_check_branch
          %1841 = sbr.rel (%p1839) target = $region88
        $region87: #{tpu_custom_call.1} parent=51 // pred_region
          %1843 = vsyncadd %s1835, 0
          %s1844 = sadd.s32 %s36, %s35
          %s1845 = smul.addr %s1844, 8
          %s1846 = scalar_lea.hbm %s8, %s1845
          %s1848 = sshll.u32 %s1838, 4
          %s1849 = int_to_ptr.vmem [resolvable:$true] %s1848
          %s1850 = sshll.u32 %s1846, 4
          %s1851 = int_to_ptr.hbm [resolvable:$true] %s1850
          %1853 = dma.vmem_to_hbm [thread:$0]  %s1849, 128, %s1851, %s1835
        $region88: #{tpu_custom_call.1} parent=51 // pred_fallthru
          _
      $region52: #{tpu_custom_call.1} parent=5 // pred_fallthru
        _
      %p1854 = scmp.le.s32.totalorder 2, %s25
      // Predicated region
      $region89: #{tpu_custom_call.1} parent=5 // pred_check
        %p1855 = pneg %p1854
      $region90: #{tpu_custom_call.1} parent=5 // pred_check_branch
        %1857 = sbr.rel (%p1855) target = $region92
      $region91: #{tpu_custom_call.1} parent=5 // pred_region
        %s1858 = ssub.s32 %s25, 2
        // Predicated region
        $region93: #{tpu_custom_call.1} parent=91 // pred_check
          %p1859 = pneg %p264
        $region94: #{tpu_custom_call.1} parent=91 // pred_check_branch
          %1861 = sbr.rel (%p1859) target = $region96
        $region95: #{tpu_custom_call.1} parent=91 // pred_region
          %s1862 = sand.u32 %s249, 1
          %s1863 = scalar_lea.sflag [#allocation10], %s1862
          %s1864 = sand.u32 %s249, 1
          %s1865 = smul.addr %s1864, 8
          %s1866 = scalar_lea.vmem [#allocation19], %s1865
          %1868 = dma.done %s1863, 128
        $region96: #{tpu_custom_call.1} parent=91 // pred_fallthru
          _
      $region92: #{tpu_custom_call.1} parent=5 // pred_fallthru
        _
    $region6: #{tpu_custom_call.1} parent=1 // loop_footer
      %s29 = sadd.s32 1, %s25
    $region7: #{tpu_custom_call.1} parent=1 // loop_footer_branch
      %24 = sbr.rel target = $region3
    $region8: #{tpu_custom_call.1} parent=1 // loop_exit
      _
    %1869 = vsyncpa [#allocation9], 1
    %s1870 = scalar_lea.sflag [#allocation9], 1
    %1871 = vsyncpa %s1870, 1
    %1872 = vsyncpa [#allocation12], 1
    %s1873 = scalar_lea.sflag [#allocation12], 1
    %1874 = vsyncpa %s1873, 1
    %1875 = vsyncpa [#allocation15], 1
    %1876 = vsyncpa [#allocation18], 1
    %1877 = vsyncpa [#allocation10], 1
    %s1878 = scalar_lea.sflag [#allocation10], 1
    %1879 = vsyncpa %s1878, 1

// kernel: tpu_custom_call.1
$region0: #{tpu_custom_call.1}
  #allocation0 [shape = 'u32[]', space=smem, size = 0x4, offset = 0x4, fixed_abs, tag = 'smem constant byte address 0x4 - core index']
  #allocation1 [shape = 'u32[72,128]{1,0:T(1,128)}', space=vmem, size = 0x9000, scoped, tag = 'internal scratch']
  #allocation2 [shape = 'f32[8,32]{1,0:T(8,128)}', space=vmem, size = 0x1000, scoped, tag = 'scratch operand']
  #allocation3 [shape = 'f32[8,8,1]{2,1,0:T(8,128)}', space=vmem, size = 0x8000, scoped, tag = 'scratch operand']
  #allocation4 [shape = 'f32[8,8,1]{2,1,0:T(8,128)}', space=vmem, size = 0x8000, scoped, tag = 'scratch operand']
  #allocation5 [shape = 'f32[8,8,4]{2,1,0:T(8,128)}', space=vmem, size = 0x8000, scoped, tag = 'scratch operand']
  #allocation6 [shape = 'f32[8,8,4]{2,1,0:T(8,128)}', space=vmem, size = 0x8000, scoped, tag = 'scratch operand']
  #allocation7 [shape = 'f32[8,32]{1,0:T(8,128)}', space=vmem, size = 0x1000, scoped, tag = 'scratch operand']
  %s0 = inlined_call_operand.hbm [shape: f32[2,8,32], index: 0, kind: input, shape index: {}]
  %s1 = inlined_call_operand.hbm [shape: f32[2,8,32], index: 1, kind: input, shape index: {}]
  %s2 = inlined_call_operand.hbm [shape: f32[32,32], index: 2, kind: input, shape index: {}]
  %s3 = inlined_call_operand.hbm [shape: f32[32,32], index: 3, kind: input, shape index: {}]
  %s4 = inlined_call_operand.hbm [shape: f32[32,32], index: 4, kind: input, shape index: {}]
  %s5 = inlined_call_operand.hbm [shape: f32[8,8,8], index: 5, kind: input, shape index: {}]
  %s6 = inlined_call_operand.vmem [shape: f32[1,32], index: 6, kind: input, shape index: {}]
  %s7 = inlined_call_operand.vmem [shape: f32[1,32], index: 7, kind: input, shape index: {}]
  %s8 = inlined_call_operand.hbm [shape: f32[2,8,32], index: 8, kind: output, shape index: {}]
  %s9 = sld [smem:[#allocation0]]
  $region97: #{tpu_custom_call.1} parent=0
    _
  %s11 = ssub.s32 1, %s9
  %s12 = scalar_select 0, %s11, %s9
  $region1: #{tpu_custom_call.1} parent=0
    #allocation8 [shape = 'u8[8192]{0}', space=vmem, size = 0x2000, scoped, tag = 'input window, operand 0']
    #allocation9 [shape = 's32[2]{0}', space=sflag, size = 0x8, scoped, tag = 'scoped memory for tpu_custom_call.1']
    #allocation10 [shape = 's32[2]{0}', space=sflag, size = 0x8, scoped, tag = 'scoped memory for tpu_custom_call.1']
    #allocation11 [shape = 'u8[8192]{0}', space=vmem, size = 0x2000, scoped, tag = 'input window, operand 1']
    #allocation12 [shape = 's32[2]{0}', space=sflag, size = 0x8, scoped, tag = 'scoped memory for tpu_custom_call.1']
    #allocation13 [shape = 'u8[16384]{0}', space=vmem, size = 0x4000, scoped, tag = 'input window, operand 2, single buffered']
    #allocation14 [shape = 'u8[16384]{0}', space=vmem, size = 0x4000, scoped, tag = 'input window, operand 3, single buffered']
    #allocation15 [shape = 's32[1]{0}', space=sflag, size = 0x4, scoped, tag = 'scoped memory for tpu_custom_call.1']
    #allocation16 [shape = 'u8[16384]{0}', space=vmem, size = 0x4000, scoped, tag = 'input window, operand 4, single buffered']
    #allocation17 [shape = 'u8[32768]{0}', space=vmem, size = 0x8000, scoped, tag = 'input window, operand 5, single buffered']
    #allocation18 [shape = 's32[1]{0}', space=sflag, size = 0x4, scoped, tag = 'scoped memory for tpu_custom_call.1']
    #allocation19 [shape = 'u8[8192]{0}', space=vmem, size = 0x2000, scoped, tag = 'output window, operand 0']
    %13 = vsyncpa [#allocation9], 0
    %s14 = scalar_lea.sflag [#allocation9], 1
    %15 = vsyncpa %s14, 0
    %16 = vsyncpa [#allocation12], 0
    %s17 = scalar_lea.sflag [#allocation12], 1
    %18 = vsyncpa %s17, 0
    %19 = vsyncpa [#allocation15], 0
    %20 = vsyncpa [#allocation18], 0
    %21 = vsyncpa [#allocation10], 0
    %s22 = scalar_lea.sflag [#allocation10], 1
    %23 = vsyncpa %s22, 0
    loop: start=0, step=1, limit=4
    $region2: #{tpu_custom_call.1} parent=1 // loop_pre_header
      _
    $region3: #{tpu_custom_call.1} parent=1 // loop_header
      %s25 = sphi 0, %s29
      %p26 = scmp.ge.s32.totalorder %s25, 4
      %s32 = sphi 0, %s51
      %s33 = sphi 0, %s47
      %s34 = sphi 0, %s43
      %s35 = sphi 0, %s32
      %s36 = sphi 0, %s33
      %s37 = sphi 0, %s34
      %s38 = sphi 0, %s35
      %s39 = sphi 0, %s36
      %s40 = sphi 0, %s37
      %s56 = sphi 0, %s58
      %s59 = sphi 0, %s56
      %s60 = sphi 0, %s59
      %s76 = sphi 0, %s60
      %s84 = sphi 0, %s86
      %s87 = sphi 0, %s84
      %s88 = sphi 0, %s87
      %s104 = sphi 0, %s88
      %s108 = sphi 0, %s108
      %s110 = sphi 0, %s108
      %s111 = sphi 0, %s110
      %s125 = sphi 0, %s111
      %s129 = sphi 0, %s129
      %s131 = sphi 0, %s129
      %s132 = sphi 0, %s131
      %s146 = sphi 0, %s132
      %s150 = sphi 0, %s150
      %s152 = sphi 0, %s150
      %s153 = sphi 0, %s152
      %s167 = sphi 0, %s153
      %s175 = sphi 0, %s177
      %s178 = sphi 0, %s175
      %s179 = sphi 0, %s178
      %s195 = sphi 0, %s179
      %s199 = sphi 0, %s199
      %s201 = sphi 0, %s199
      %s202 = sphi 0, %s201
      %s216 = sphi 0, %s202
      %s220 = sphi 0, %s220
      %s222 = sphi 0, %s220
      %s223 = sphi 0, %s222
      %s237 = sphi 0, %s223
      %s245 = sphi 0, %s247
      %s248 = sphi 0, %s245
      %s249 = sphi 0, %s248
      %s265 = sphi 0, %s249
    $region4: #{tpu_custom_call.1} parent=1 // loop_header_branch
      %28 = sbr.rel (%p26) target = $region8
    $region5: #{tpu_custom_call.1} parent=1 // loop_body
      %s30 = ssub.s32 %s25, 1
      %s31 = ssub.s32 %s25, 2
      %s41 = sadd.s32 1, %s34
      %p42 = scmp.ge.s32.totalorder %s41, 1
      %s43 = scalar_select %p42, 0, %s41
      %s44 = sadd.s32 1, %s33
      %s45 = scalar_select %p42, %s44, %s33
      %p46 = scmp.ge.s32.totalorder %s45, 1
      %s47 = scalar_select %p46, 0, %s45
      %s48 = sadd.s32 1, %s32
      %s49 = scalar_select %p46, %s48, %s32
      %p50 = scmp.ge.s32.totalorder %s49, 2
      %s51 = scalar_select %p50, 0, %s49
      %s52 = ssub.s32 %s32, %s51
      %s53 = ssub.s32 %s33, %s47
      %s54 = sor.u32 %s52, %s53
      %p55 = scmp.eq.s32.totalorder %s54, 0
      %s57 = sadd.s32 %s56, 1
      %s58 = scalar_select %p55, %s56, %s57
      %p61 = pneg %p55
      %p62 = scmp.eq.s32.totalorder %s25, 1
      %p63 = por %p61, %p62
      %p64 = scmp.ne.s32.totalorder %s56, %s59
      %p65 = scmp.eq.s32.totalorder %s25, 0
      %p66 = por %p64, %p65
      %p67 = scmp.ne.s32.totalorder %s56, %s59
      %p68 = scmp.eq.s32.totalorder %s30, 1
      %p69 = por %p67, %p68
      %p70 = scmp.ne.s32.totalorder %s59, %s60
      %p71 = scmp.eq.s32.totalorder %s30, 0
      %p72 = por %p70, %p71
      %p73 = scmp.ne.s32.totalorder %s59, %s60
      %p74 = scmp.eq.s32.totalorder %s31, 1
      %p75 = por %p73, %p74
      %p77 = scmp.ne.s32.totalorder %s60, %s76
      %p78 = scmp.eq.s32.totalorder %s31, 0
      %p79 = por %p77, %p78
      %s80 = ssub.s32 %s32, %s51
      %s81 = ssub.s32 %s34, %s43
      %s82 = sor.u32 %s80, %s81
      %p83 = scmp.eq.s32.totalorder %s82, 0
      %s85 = sadd.s32 %s84, 1
      %s86 = scalar_select %p83, %s84, %s85
      %p89 = pneg %p83
      %p90 = scmp.eq.s32.totalorder %s25, 1
      %p91 = por %p89, %p90
      %p92 = scmp.ne.s32.totalorder %s84, %s87
      %p93 = scmp.eq.s32.totalorder %s25, 0
      %p94 = por %p92, %p93
      %p95 = scmp.ne.s32.totalorder %s84, %s87
      %p96 = scmp.eq.s32.totalorder %s30, 1
      %p97 = por %p95, %p96
      %p98 = scmp.ne.s32.totalorder %s87, %s88
      %p99 = scmp.eq.s32.totalorder %s30, 0
      %p100 = por %p98, %p99
      %p101 = scmp.ne.s32.totalorder %s87, %s88
      %p102 = scmp.eq.s32.totalorder %s31, 1
      %p103 = por %p101, %p102
      %p105 = scmp.ne.s32.totalorder %s88, %s104
      %p106 = scmp.eq.s32.totalorder %s31, 0
      %p107 = por %p105, %p106
      %s109 = sadd.s32 %s108, 1
      %p112 = scmp.eq.s32.totalorder %s25, 1
      %p113 = scmp.ne.s32.totalorder %s108, %s110
      %p114 = scmp.eq.s32.totalorder %s25, 0
      %p115 = por %p113, %p114
      %p116 = scmp.ne.s32.totalorder %s108, %s110
      %p117 = scmp.eq.s32.totalorder %s30, 1
      %p118 = por %p116, %p117
      %p119 = scmp.ne.s32.totalorder %s110, %s111
      %p120 = scmp.eq.s32.totalorder %s30, 0
      %p121 = por %p119, %p120
      %p122 = scmp.ne.s32.totalorder %s110, %s111
      %p123 = scmp.eq.s32.totalorder %s31, 1
      %p124 = por %p122, %p123
      %p126 = scmp.ne.s32.totalorder %s111, %s125
      %p127 = scmp.eq.s32.totalorder %s31, 0
      %p128 = por %p126, %p127
      %s130 = sadd.s32 %s129, 1
      %p133 = scmp.eq.s32.totalorder %s25, 1
      %p134 = scmp.ne.s32.totalorder %s129, %s131
      %p135 = scmp.eq.s32.totalorder %s25, 0
      %p136 = por %p134, %p135
      %p137 = scmp.ne.s32.totalorder %s129, %s131
      %p138 = scmp.eq.s32.totalorder %s30, 1
      %p139 = por %p137, %p138
      %p140 = scmp.ne.s32.totalorder %s131, %s132
      %p141 = scmp.eq.s32.totalorder %s30, 0
      %p142 = por %p140, %p141
      %p143 = scmp.ne.s32.totalorder %s131, %s132
      %p144 = scmp.eq.s32.totalorder %s31, 1
      %p145 = por %p143, %p144
      %p147 = scmp.ne.s32.totalorder %s132, %s146
      %p148 = scmp.eq.s32.totalorder %s31, 0
      %p149 = por %p147, %p148
      %s151 = sadd.s32 %s150, 1
      %p154 = scmp.eq.s32.totalorder %s25, 1
      %p155 = scmp.ne.s32.totalorder %s150, %s152
      %p156 = scmp.eq.s32.totalorder %s25, 0
      %p157 = por %p155, %p156
      %p158 = scmp.ne.s32.totalorder %s150, %s152
      %p159 = scmp.eq.s32.totalorder %s30, 1
      %p160 = por %p158, %p159
      %p161 = scmp.ne.s32.totalorder %s152, %s153
      %p162 = scmp.eq.s32.totalorder %s30, 0
      %p163 = por %p161, %p162
      %p164 = scmp.ne.s32.totalorder %s152, %s153
      %p165 = scmp.eq.s32.totalorder %s31, 1
      %p166 = por %p164, %p165
      %p168 = scmp.ne.s32.totalorder %s153, %s167
      %p169 = scmp.eq.s32.totalorder %s31, 0
      %p170 = por %p168, %p169
      %s171 = ssub.s32 %s33, %s47
      %s172 = ssub.s32 %s34, %s43
      %s173 = sor.u32 %s171, %s172
      %p174 = scmp.eq.s32.totalorder %s173, 0
      %s176 = sadd.s32 %s175, 1
      %s177 = scalar_select %p174, %s175, %s176
      %p180 = pneg %p174
      %p181 = scmp.eq.s32.totalorder %s25, 1
      %p182 = por %p180, %p181
      %p183 = scmp.ne.s32.totalorder %s175, %s178
      %p184 = scmp.eq.s32.totalorder %s25, 0
      %p185 = por %p183, %p184
      %p186 = scmp.ne.s32.totalorder %s175, %s178
      %p187 = scmp.eq.s32.totalorder %s30, 1
      %p188 = por %p186, %p187
      %p189 = scmp.ne.s32.totalorder %s178, %s179
      %p190 = scmp.eq.s32.totalorder %s30, 0
      %p191 = por %p189, %p190
      %p192 = scmp.ne.s32.totalorder %s178, %s179
      %p193 = scmp.eq.s32.totalorder %s31, 1
      %p194 = por %p192, %p193
      %p196 = scmp.ne.s32.totalorder %s179, %s195
      %p197 = scmp.eq.s32.totalorder %s31, 0
      %p198 = por %p196, %p197
      %s200 = sadd.s32 %s199, 1
      %p203 = scmp.eq.s32.totalorder %s25, 1
      %p204 = scmp.ne.s32.totalorder %s199, %s201
      %p205 = scmp.eq.s32.totalorder %s25, 0
      %p206 = por %p204, %p205
      %p207 = scmp.ne.s32.totalorder %s199, %s201
      %p208 = scmp.eq.s32.totalorder %s30, 1
      %p209 = por %p207, %p208
      %p210 = scmp.ne.s32.totalorder %s201, %s202
      %p211 = scmp.eq.s32.totalorder %s30, 0
      %p212 = por %p210, %p211
      %p213 = scmp.ne.s32.totalorder %s201, %s202
      %p214 = scmp.eq.s32.totalorder %s31, 1
      %p215 = por %p213, %p214
      %p217 = scmp.ne.s32.totalorder %s202, %s216
      %p218 = scmp.eq.s32.totalorder %s31, 0
      %p219 = por %p217, %p218
      %s221 = sadd.s32 %s220, 1
      %p224 = scmp.eq.s32.totalorder %s25, 1
      %p225 = scmp.ne.s32.totalorder %s220, %s222
      %p226 = scmp.eq.s32.totalorder %s25, 0
      %p227 = por %p225, %p226
      %p228 = scmp.ne.s32.totalorder %s220, %s222
      %p229 = scmp.eq.s32.totalorder %s30, 1
      %p230 = por %p228, %p229
      %p231 = scmp.ne.s32.totalorder %s222, %s223
      %p232 = scmp.eq.s32.totalorder %s30, 0
      %p233 = por %p231, %p232
      %p234 = scmp.ne.s32.totalorder %s222, %s223
      %p235 = scmp.eq.s32.totalorder %s31, 1
      %p236 = por %p234, %p235
      %p238 = scmp.ne.s32.totalorder %s223, %s237
      %p239 = scmp.eq.s32.totalorder %s31, 0
      %p240 = por %p238, %p239
      %s241 = ssub.s32 %s32, %s51
      %s242 = ssub.s32 %s33, %s47
      %s243 = sor.u32 %s241, %s242
      %p244 = scmp.eq.s32.totalorder %s243, 0
      %s246 = sadd.s32 %s245, 1
      %s247 = scalar_select %p244, %s245, %s246
      %p250 = pneg %p244
      %p251 = scmp.eq.s32.totalorder %s25, 1
      %p252 = por %p250, %p251
      %p253 = scmp.ne.s32.totalorder %s245, %s248
      %p254 = scmp.eq.s32.totalorder %s25, 0
      %p255 = por %p253, %p254
      %p256 = scmp.ne.s32.totalorder %s245, %s248
      %p257 = scmp.eq.s32.totalorder %s30, 1
      %p258 = por %p256, %p257
      %p259 = scmp.ne.s32.totalorder %s248, %s249
      %p260 = scmp.eq.s32.totalorder %s30, 0
      %p261 = por %p259, %p260
      %p262 = scmp.ne.s32.totalorder %s248, %s249
      %p263 = scmp.eq.s32.totalorder %s31, 1
      %p264 = por %p262, %p263
      %p266 = scmp.ne.s32.totalorder %s249, %s265
      %p267 = scmp.eq.s32.totalorder %s31, 0
      %p268 = por %p266, %p267
      %p269 = scmp.le.s32.totalorder 1, %s25
      %p270 = scmp.lt.s32.totalorder %s25, 3
      %p271 = pnand %p269, %p270
      %p272 = pneg %p271
      // Predicated region
      $region9: #{tpu_custom_call.1} parent=5 // pred_check
        _
      $region10: #{tpu_custom_call.1} parent=5 // pred_check_branch
        %274 = sbr.rel (%p271) target = $region12
      $region11: #{tpu_custom_call.1} parent=5 // pred_region
        %s275 = ssub.s32 %s25, 1
        // Predicated region
        $region13: #{tpu_custom_call.1} parent=11 // pred_check
          %p276 = pneg %p121
        $region14: #{tpu_custom_call.1} parent=11 // pred_check_branch
          %278 = sbr.rel (%p276) target = $region16
        $region15: #{tpu_custom_call.1} parent=11 // pred_region
          %280 = vsyncadd [#allocation12], 0
          %s281 = sshll.u32 %s2, 4
          %s282 = int_to_ptr.hbm [resolvable:$true] %s281
          %s283 = sshll.u32 [#allocation13], 4
          %s284 = int_to_ptr.vmem [resolvable:$true] %s283
          %289 = dma.hbm_to_vmem [thread:$0]  %s282, 512, %s284, [#allocation12], 128, 128, 8
        $region16: #{tpu_custom_call.1} parent=11 // pred_fallthru
          _
        // Predicated region
        $region17: #{tpu_custom_call.1} parent=11 // pred_check
          %p290 = pneg %p142
        $region18: #{tpu_custom_call.1} parent=11 // pred_check_branch
          %292 = sbr.rel (%p290) target = $region20
        $region19: #{tpu_custom_call.1} parent=11 // pred_region
          %294 = vsyncadd [#allocation15], 0
          %s295 = sshll.u32 %s3, 4
          %s296 = int_to_ptr.hbm [resolvable:$true] %s295
          %s297 = sshll.u32 [#allocation14], 4
          %s298 = int_to_ptr.vmem [resolvable:$true] %s297
          %303 = dma.hbm_to_vmem [thread:$0]  %s296, 512, %s298, [#allocation15], 128, 128, 8
        $region20: #{tpu_custom_call.1} parent=11 // pred_fallthru
          _
        // Predicated region
        $region21: #{tpu_custom_call.1} parent=11 // pred_check
          %p304 = pneg %p163
        $region22: #{tpu_custom_call.1} parent=11 // pred_check_branch
          %306 = sbr.rel (%p304) target = $region24
        $region23: #{tpu_custom_call.1} parent=11 // pred_region
          %308 = vsyncadd [#allocation15], 0
          %s309 = sshll.u32 %s4, 4
          %s310 = int_to_ptr.hbm [resolvable:$true] %s309
          %s311 = sshll.u32 [#allocation16], 4
          %s312 = int_to_ptr.vmem [resolvable:$true] %s311
          %317 = dma.hbm_to_vmem [thread:$0]  %s310, 512, %s312, [#allocation15], 128, 128, 8
        $region24: #{tpu_custom_call.1} parent=11 // pred_fallthru
          _
        // Predicated region
        $region25: #{tpu_custom_call.1} parent=11 // pred_check
          %p318 = pneg %p191
        $region26: #{tpu_custom_call.1} parent=11 // pred_check_branch
          %320 = sbr.rel (%p318) target = $region28
        $region27: #{tpu_custom_call.1} parent=11 // pred_region
          %322 = vsyncadd [#allocation18], 0
          %s323 = sadd.s32 %s37, %s36
          %s324 = smul.addr %s323, 8
          %s325 = scalar_lea.hbm %s5, %s324
          %s326 = sshll.u32 %s325, 4
          %s327 = int_to_ptr.hbm [resolvable:$true] %s326
          %s328 = sshll.u32 [#allocation17], 4
          %s329 = int_to_ptr.vmem [resolvable:$true] %s328
          %334 = dma.hbm_to_vmem [thread:$0]  %s327, 1024, %s329, [#allocation18], 128, 128, 8
        $region28: #{tpu_custom_call.1} parent=11 // pred_fallthru
          _
        // Predicated region
        $region29: #{tpu_custom_call.1} parent=11 // pred_check
          %p335 = pneg %p212
        $region30: #{tpu_custom_call.1} parent=11 // pred_check_branch
          %337 = sbr.rel (%p335) target = $region32
        $region31: #{tpu_custom_call.1} parent=11 // pred_region
          _
        $region32: #{tpu_custom_call.1} parent=11 // pred_fallthru
          _
        // Predicated region
        $region33: #{tpu_custom_call.1} parent=11 // pred_check
          %p338 = pneg %p233
        $region34: #{tpu_custom_call.1} parent=11 // pred_check_branch
          %340 = sbr.rel (%p338) target = $region36
        $region35: #{tpu_custom_call.1} parent=11 // pred_region
          _
        $region36: #{tpu_custom_call.1} parent=11 // pred_fallthru
          _
      $region12: #{tpu_custom_call.1} parent=5 // pred_fallthru
        _
      %p341 = scmp.lt.s32.totalorder %s25, 2
      // Predicated region
      $region37: #{tpu_custom_call.1} parent=5 // pred_check
        %p342 = pneg %p341
      $region38: #{tpu_custom_call.1} parent=5 // pred_check_branch
        %344 = sbr.rel (%p342) target = $region40
      $region39: #{tpu_custom_call.1} parent=5 // pred_region
        // Predicated region
        $region41: #{tpu_custom_call.1} parent=39 // pred_check
          %p345 = pneg %p66
        $region42: #{tpu_custom_call.1} parent=39 // pred_check_branch
          %347 = sbr.rel (%p345) target = $region44
        $region43: #{tpu_custom_call.1} parent=39 // pred_region
          %s348 = sand.u32 %s56, 1
          %s349 = scalar_lea.sflag [#allocation9], %s348
          %s350 = sand.u32 %s56, 1
          %s351 = smul.addr %s350, 8
          %s352 = scalar_lea.vmem [#allocation8], %s351
          %354 = vsyncadd %s349, 0
          %s355 = sadd.s32 %s33, %s32
          %s356 = smul.addr %s355, 8
          %s357 = scalar_lea.hbm %s0, %s356
          %s359 = sshll.u32 %s357, 4
          %s360 = int_to_ptr.hbm [resolvable:$true] %s359
          %s361 = sshll.u32 %s352, 4
          %s362 = int_to_ptr.vmem [resolvable:$true] %s361
          %364 = dma.hbm_to_vmem [thread:$0]  %s360, 128, %s362, %s349
        $region44: #{tpu_custom_call.1} parent=39 // pred_fallthru
          _
        // Predicated region
        $region45: #{tpu_custom_call.1} parent=39 // pred_check
          %p365 = pneg %p94
        $region46: #{tpu_custom_call.1} parent=39 // pred_check_branch
          %367 = sbr.rel (%p365) target = $region48
        $region47: #{tpu_custom_call.1} parent=39 // pred_region
          %s368 = sand.u32 %s25, 1
          %s369 = scalar_lea.sflag [#allocation12], %s368
          %s370 = sand.u32 %s84, 1
          %s371 = smul.addr %s370, 8
          %s372 = scalar_lea.vmem [#allocation11], %s371
          %374 = vsyncadd %s369, 0
          %s375 = sadd.s32 %s34, %s32
          %s376 = smul.addr %s375, 8
          %s377 = scalar_lea.hbm %s1, %s376
          %s379 = sshll.u32 %s377, 4
          %s380 = int_to_ptr.hbm [resolvable:$true] %s379
          %s381 = sshll.u32 %s372, 4
          %s382 = int_to_ptr.vmem [resolvable:$true] %s381
          %384 = dma.hbm_to_vmem [thread:$0]  %s380, 128, %s382, %s369
        $region48: #{tpu_custom_call.1} parent=39 // pred_fallthru
          _
      $region40: #{tpu_custom_call.1} parent=5 // pred_fallthru
        _
      %p385 = scmp.le.s32.totalorder 1, %s25
      %p386 = scmp.lt.s32.totalorder %s25, 3
      %p387 = pnand %p385, %p386
      %p388 = pneg %p387
      // Predicated region
      $region49: #{tpu_custom_call.1} parent=5 // pred_check
        _
      $region50: #{tpu_custom_call.1} parent=5 // pred_check_branch
        %390 = sbr.rel (%p387) target = $region52
      $region51: #{tpu_custom_call.1} parent=5 // pred_region
        %s391 = ssub.s32 %s25, 1
        %s392 = sand.u32 %s59, 1
        %s393 = scalar_lea.sflag [#allocation9], %s392
        %s394 = sand.u32 %s59, 1
        %s395 = smul.addr %s394, 8
        %s396 = scalar_lea.vmem [#allocation8], %s395
        // Predicated region
        $region53: #{tpu_custom_call.1} parent=51 // pred_check
          %p397 = pneg %p72
        $region54: #{tpu_custom_call.1} parent=51 // pred_check_branch
          %399 = sbr.rel (%p397) target = $region56
        $region55: #{tpu_custom_call.1} parent=51 // pred_region
          %401 = dma.done %s393, 128
        $region56: #{tpu_custom_call.1} parent=51 // pred_fallthru
          _
        %s402 = sand.u32 %s30, 1
        %s403 = scalar_lea.sflag [#allocation12], %s402
        %s404 = sand.u32 %s87, 1
        %s405 = smul.addr %s404, 8
        %s406 = scalar_lea.vmem [#allocation11], %s405
        // Predicated region
        $region57: #{tpu_custom_call.1} parent=51 // pred_check
          %p407 = pneg %p100
        $region58: #{tpu_custom_call.1} parent=51 // pred_check_branch
          %409 = sbr.rel (%p407) target = $region60
        $region59: #{tpu_custom_call.1} parent=51 // pred_region
          %411 = dma.done %s403, 128
        $region60: #{tpu_custom_call.1} parent=51 // pred_fallthru
          _
        // Predicated region
        $region61: #{tpu_custom_call.1} parent=51 // pred_check
          %p412 = pneg %p121
        $region62: #{tpu_custom_call.1} parent=51 // pred_check_branch
          %414 = sbr.rel (%p412) target = $region64
        $region63: #{tpu_custom_call.1} parent=51 // pred_region
          %416 = dma.done [#allocation12], 512
        $region64: #{tpu_custom_call.1} parent=51 // pred_fallthru
          _
        // Predicated region
        $region65: #{tpu_custom_call.1} parent=51 // pred_check
          %p417 = pneg %p142
        $region66: #{tpu_custom_call.1} parent=51 // pred_check_branch
          %419 = sbr.rel (%p417) target = $region68
        $region67: #{tpu_custom_call.1} parent=51 // pred_region
          %421 = dma.done [#allocation15], 512
        $region68: #{tpu_custom_call.1} parent=51 // pred_fallthru
          _
        // Predicated region
        $region69: #{tpu_custom_call.1} parent=51 // pred_check
          %p422 = pneg %p163
        $region70: #{tpu_custom_call.1} parent=51 // pred_check_branch
          %424 = sbr.rel (%p422) target = $region72
        $region71: #{tpu_custom_call.1} parent=51 // pred_region
          %426 = dma.done [#allocation15], 512
        $region72: #{tpu_custom_call.1} parent=51 // pred_fallthru
          _
        // Predicated region
        $region73: #{tpu_custom_call.1} parent=51 // pred_check
          %p427 = pneg %p191
        $region74: #{tpu_custom_call.1} parent=51 // pred_check_branch
          %429 = sbr.rel (%p427) target = $region76
        $region75: #{tpu_custom_call.1} parent=51 // pred_region
          %431 = dma.done [#allocation18], 1024
        $region76: #{tpu_custom_call.1} parent=51 // pred_fallthru
          _
        %s432 = sand.u32 %s59, 1
        %s433 = scalar_lea.sflag [#allocation9], %s432
        %s434 = sand.u32 %s59, 1
        %s435 = smul.addr %s434, 8
        %s436 = scalar_lea.vmem [#allocation8], %s435
        %p437 = pneg %p72
        %p438 = pneg %p69
        %s439 = sand.u32 %s30, 1
        %s440 = scalar_lea.sflag [#allocation12], %s439
        %s441 = sand.u32 %s87, 1
        %s442 = smul.addr %s441, 8
        %s443 = scalar_lea.vmem [#allocation11], %s442
        %p444 = pneg %p100
        %p445 = pneg %p97
        %p446 = pneg %p121
        %p447 = pneg %p118
        %p448 = pneg %p142
        %p449 = pneg %p139
        %p450 = pneg %p163
        %p451 = pneg %p160
        %p452 = pneg %p191
        %p453 = pneg %p188
        %p454 = pneg %p212
        %p455 = pneg %p209
        %p456 = pneg %p233
        %p457 = pneg %p230
        %p458 = pneg %p261
        %p459 = pneg %p258
        %s460 = sand.u32 %s248, 1
        %s461 = scalar_lea.sflag [#allocation10], %s460
        %s462 = sand.u32 %s248, 1
        %s463 = smul.addr %s462, 8
        %s464 = scalar_lea.vmem [#allocation19], %s463
        %p465 = scmp.eq.s32.totalorder %s37, 0
        // Predicated region
        $region77: #{tpu_custom_call.1} parent=51 // pred_check
          %p466 = pneg %p465
        $region78: #{tpu_custom_call.1} parent=51 // pred_check_branch
          %468 = sbr.rel (%p466) target = $region80
        $region79: #{tpu_custom_call.1} parent=51 // pred_region
          %v469 = vld [vmem:[%s396] sm:$0xff]
          %v470 = vld [vmem:[#allocation13] sm:$0xff]
          %v471 = vld [vmem:[#allocation13 + $0x8] sm:$0xff]
          %v472 = vld [vmem:[#allocation13 + $0x10] sm:$0xff]
          %v473 = vld [vmem:[#allocation13 + $0x18] sm:$0xff]
          %vm474 = vcmask 261120
          %v476 = vsel %vm474, %v469, 0
          %478 = vmatpush.msra.mxu0 0.0
          %479 = vmatpush.msra.mxu0 0.0
          %480 = vmatpush.msra.mxu0 0.0
          %481 = vmatpush.msra.mxu0 0.0
          %482 = vmatpush.msra.mxu0 0.0
          %483 = vmatpush.msra.mxu0 0.0
          %484 = vmatpush.msra.mxu0 0.0
          %485 = vmatpush.msra.mxu0 0.0
          %486 = vmatpush.msra.mxu0 0.0
          %487 = vmatpush.msra.mxu0 0.0
          %488 = vmatpush.msra.mxu0 0.0
          %489 = vmatpush.msra.mxu0 0.0
          %490 = vmatpush.msra.mxu0 %v473
          %491 = vmatpush.msra.mxu0 %v472
          %492 = vmatpush.msra.mxu0 %v471
          %493 = vmatpush.msra.mxu0 %v470
          %494 = vmatmul.f32.gmra.mxu0 %v476
          %v495 = vpop.f32.mrf.mxu0
          %v496 = vadd.f32 0.0, %v495
          %497 = vdwg.mxu0
          %498 = vst.msk [vmem:[#allocation2] sm:$0xff] %vm474, %v496
          %vm499 = vcmask 7168
          %500 = vst.msk [vmem:[#allocation3] sm:$0xff] %vm499, -inf
          %501 = vst.msk [vmem:[#allocation3 + $0x8] sm:$0xff] %vm499, -inf
          %502 = vst.msk [vmem:[#allocation3 + $0x10] sm:$0xff] %vm499, -inf
          %503 = vst.msk [vmem:[#allocation3 + $0x18] sm:$0xff] %vm499, -inf
          %504 = vst.msk [vmem:[#allocation3 + $0x20] sm:$0xff] %vm499, -inf
          %505 = vst.msk [vmem:[#allocation3 + $0x28] sm:$0xff] %vm499, -inf
          %506 = vst.msk [vmem:[#allocation3 + $0x30] sm:$0xff] %vm499, -inf
          %507 = vst.msk [vmem:[#allocation3 + $0x38] sm:$0xff] %vm499, -inf
          %508 = vst.msk [vmem:[#allocation4] sm:$0xff] %vm499, 0.0
          %509 = vst.msk [vmem:[#allocation4 + $0x8] sm:$0xff] %vm499, 0.0
          %510 = vst.msk [vmem:[#allocation4 + $0x10] sm:$0xff] %vm499, 0.0
          %511 = vst.msk [vmem:[#allocation4 + $0x18] sm:$0xff] %vm499, 0.0
          %512 = vst.msk [vmem:[#allocation4 + $0x20] sm:$0xff] %vm499, 0.0
          %513 = vst.msk [vmem:[#allocation4 + $0x28] sm:$0xff] %vm499, 0.0
          %514 = vst.msk [vmem:[#allocation4 + $0x30] sm:$0xff] %vm499, 0.0
          %515 = vst.msk [vmem:[#allocation4 + $0x38] sm:$0xff] %vm499, 0.0
          %vm516 = vcmask 31744
          %517 = vst.msk [vmem:[#allocation5] sm:$0xff] %vm516, 0.0
          %518 = vst.msk [vmem:[#allocation5 + $0x8] sm:$0xff] %vm516, 0.0
          %519 = vst.msk [vmem:[#allocation5 + $0x10] sm:$0xff] %vm516, 0.0
          %520 = vst.msk [vmem:[#allocation5 + $0x18] sm:$0xff] %vm516, 0.0
          %521 = vst.msk [vmem:[#allocation5 + $0x20] sm:$0xff] %vm516, 0.0
          %522 = vst.msk [vmem:[#allocation5 + $0x28] sm:$0xff] %vm516, 0.0
          %523 = vst.msk [vmem:[#allocation5 + $0x30] sm:$0xff] %vm516, 0.0
          %524 = vst.msk [vmem:[#allocation5 + $0x38] sm:$0xff] %vm516, 0.0
          %525 = vst.msk [vmem:[#allocation6] sm:$0xff] %vm516, 0.0
          %526 = vst.msk [vmem:[#allocation6 + $0x8] sm:$0xff] %vm516, 0.0
          %527 = vst.msk [vmem:[#allocation6 + $0x10] sm:$0xff] %vm516, 0.0
          %528 = vst.msk [vmem:[#allocation6 + $0x18] sm:$0xff] %vm516, 0.0
          %529 = vst.msk [vmem:[#allocation6 + $0x20] sm:$0xff] %vm516, 0.0
          %530 = vst.msk [vmem:[#allocation6 + $0x28] sm:$0xff] %vm516, 0.0
          %531 = vst.msk [vmem:[#allocation6 + $0x30] sm:$0xff] %vm516, 0.0
          %532 = vst.msk [vmem:[#allocation6 + $0x38] sm:$0xff] %vm516, 0.0
        $region80: #{tpu_custom_call.1} parent=51 // pred_fallthru
          _
        %v533 = vld [vmem:[%s406] sm:$0xff]
        %v534 = vld [vmem:[#allocation14] sm:$0xff]
        %v535 = vld [vmem:[#allocation14 + $0x8] sm:$0xff]
        %v536 = vld [vmem:[#allocation14 + $0x10] sm:$0xff]
        %v537 = vld [vmem:[#allocation14 + $0x18] sm:$0xff]
        %vm538 = vcmask 261120
        %v540 = vsel %vm538, %v533, 0
        %542 = vmatpush.msra.mxu0 0.0
        %543 = vmatpush.msra.mxu0 0.0
        %544 = vmatpush.msra.mxu0 0.0
        %545 = vmatpush.msra.mxu0 0.0
        %546 = vmatpush.msra.mxu0 0.0
        %547 = vmatpush.msra.mxu0 0.0
        %548 = vmatpush.msra.mxu0 0.0
        %549 = vmatpush.msra.mxu0 0.0
        %550 = vmatpush.msra.mxu0 0.0
        %551 = vmatpush.msra.mxu0 0.0
        %552 = vmatpush.msra.mxu0 0.0
        %553 = vmatpush.msra.mxu0 0.0
        %554 = vmatpush.msra.mxu0 %v537
        %555 = vmatpush.msra.mxu0 %v536
        %556 = vmatpush.msra.mxu0 %v535
        %557 = vmatpush.msra.mxu0 %v534
        %558 = vmatmul.f32.gmra.mxu0 %v540
        %v559 = vpop.f32.mrf.mxu0
        %v560 = vadd.f32 0.0, %v559
        %561 = vdwg.mxu0
        %v562 = vld [vmem:[#allocation16] sm:$0xff]
        %v563 = vld [vmem:[#allocation16 + $0x8] sm:$0xff]
        %v564 = vld [vmem:[#allocation16 + $0x10] sm:$0xff]
        %v565 = vld [vmem:[#allocation16 + $0x18] sm:$0xff]
        %566 = vmatpush.msra.mxu0 0.0
        %567 = vmatpush.msra.mxu0 0.0
        %568 = vmatpush.msra.mxu0 0.0
        %569 = vmatpush.msra.mxu0 0.0
        %570 = vmatpush.msra.mxu0 0.0
        %571 = vmatpush.msra.mxu0 0.0
        %572 = vmatpush.msra.mxu0 0.0
        %573 = vmatpush.msra.mxu0 0.0
        %574 = vmatpush.msra.mxu0 0.0
        %575 = vmatpush.msra.mxu0 0.0
        %576 = vmatpush.msra.mxu0 0.0
        %577 = vmatpush.msra.mxu0 0.0
        %578 = vmatpush.msra.mxu0 %v565
        %579 = vmatpush.msra.mxu0 %v564
        %580 = vmatpush.msra.mxu0 %v563
        %581 = vmatpush.msra.mxu0 %v562
        %582 = vmatmul.f32.gmra.mxu0 %v540
        %v583 = vpop.f32.mrf.mxu0
        %v584 = vadd.f32 0.0, %v583
        %585 = vdwg.mxu0
        %v586 = vld [vmem:[#allocation2] sm:$0xff]
        %vm587 = vcmask 31744
        %v589 = vsel %vm587, %v586, 0
        %v592 = vsel %vm587, %v560, 0
        %594 = vmatpush.xpose.msra.mxu0 0.0
        %595 = vmatpush.xpose.msra.mxu0 0.0
        %596 = vmatpush.xpose.msra.mxu0 0.0
        %597 = vmatpush.xpose.msra.mxu0 0.0
        %598 = vmatpush.xpose.msra.mxu0 0.0
        %599 = vmatpush.xpose.msra.mxu0 0.0
        %600 = vmatpush.xpose.msra.mxu0 0.0
        %601 = vmatpush.xpose.msra.mxu0 0.0
        %602 = vmatpush.xpose.msra.mxu0 0.0
        %603 = vmatpush.xpose.msra.mxu0 0.0
        %604 = vmatpush.xpose.msra.mxu0 0.0
        %605 = vmatpush.xpose.msra.mxu0 0.0
        %606 = vmatpush.xpose.msra.mxu0 0.0
        %607 = vmatpush.xpose.msra.mxu0 0.0
        %608 = vmatpush.xpose.msra.mxu0 0.0
        %609 = vmatpush.xpose.msra.mxu0 %v592
        %610 = vmatmul.f32.gmra.mxu0 %v589
        %v611 = vpop.f32.mrf.mxu0
        %v612 = vadd.f32 0.0, %v611
        %613 = vdwg.mxu0
        %v614 = vld [vmem:[#allocation3] sm:$0xff]
        %vm615 = vcmask 64512
        %v616 = vsel %vm615, %v612, -inf
        %617 = vmax.xlane.f32.xlu0 %v616
        %v618 = vpop.xlane.xlu0 %617
        %v619 = vmax.f32 %v614, %v618
        %v620 = vsub.f32 %v614, %v619
        %v621 = vmul.f32 %v620, 1.442695
        %v622 = vpow.pop %v621
        %624 = vset.pattern.permute.xlu0 0
        %625 = vperm.xlu0 %624, %v619
        %v626 = vpop.permute.xlu0 %625
        %v628 = vsub.f32 %v612, %v626
        %v629 = vmul.f32 %v628, 1.442695
        %v630 = vpow.pop %v629
        %v631 = vld [vmem:[#allocation4] sm:$0xff]
        %v632 = vmul.f32 %v622, %v631
        %v633 = vsel %vm615, %v630, 0.0
        %634 = vadd.xlane.f32.xlu0 %v633
        %v635 = vpop.xlane.xlu0 %634
        %v636 = vadd.f32 %v632, %v635
        %vm637 = vcmask 7168
        %638 = vst.msk [vmem:[#allocation4] sm:$0xff] %vm637, %v636
        %v639 = vld [vmem:[#allocation5] sm:$0xff]
        %641 = vset.pattern.permute.xlu0 0
        %642 = vperm.xlu0 %641, %v622
        %v643 = vpop.permute.xlu0 %642
        %v645 = vmul.f32 %v643, %v639
        %v647 = vsel %vm615, %v630, 0
        %649 = vmatpush.msra.mxu0 0.0
        %650 = vmatpush.msra.mxu0 0.0
        %651 = vmatpush.msra.mxu0 0.0
        %652 = vmatpush.msra.mxu0 0.0
        %653 = vmatpush.msra.mxu0 0.0
        %654 = vmatpush.msra.mxu0 0.0
        %655 = vmatpush.msra.mxu0 0.0
        %656 = vmatpush.msra.mxu0 0.0
        %657 = vmatpush.msra.mxu0 0.0
        %658 = vmatpush.msra.mxu0 0.0
        %659 = vmatpush.msra.mxu0 0.0
        %660 = vmatpush.msra.mxu0 0.0
        %661 = vmatpush.msra.mxu0 0.0
        %662 = vmatpush.msra.mxu0 0.0
        %663 = vmatpush.msra.mxu0 0.0
        %664 = vmatpush.msra.mxu0 %v584
        %665 = vmatmul.f32.gmra.mxu0 %v647
        %v666 = vpop.f32.mrf.mxu0
        %v667 = vadd.f32 0.0, %v666
        %668 = vdwg.mxu0
        %v669 = vadd.f32 %v645, %v667
        %670 = vst.msk [vmem:[#allocation5] sm:$0xff] %vm587, %v669
        %v671 = vld [vmem:[#allocation6] sm:$0xff]
        %v672 = vld [vmem:[#allocation17] sm:$0xff]
        %v674 = vsel %vm615, %v672, 0
        %676 = vmatpush.msra.mxu0 0.0
        %677 = vmatpush.msra.mxu0 0.0
        %678 = vmatpush.msra.mxu0 0.0
        %679 = vmatpush.msra.mxu0 0.0
        %680 = vmatpush.msra.mxu0 0.0
        %681 = vmatpush.msra.mxu0 0.0
        %682 = vmatpush.msra.mxu0 0.0
        %683 = vmatpush.msra.mxu0 0.0
        %684 = vmatpush.msra.mxu0 0.0
        %685 = vmatpush.msra.mxu0 0.0
        %686 = vmatpush.msra.mxu0 0.0
        %687 = vmatpush.msra.mxu0 0.0
        %688 = vmatpush.msra.mxu0 0.0
        %689 = vmatpush.msra.mxu0 0.0
        %690 = vmatpush.msra.mxu0 0.0
        %691 = vmatpush.msra.mxu0 %v584
        %692 = vmatmul.f32.gmra.mxu0 %v674
        %v693 = vpop.f32.mrf.mxu0
        %v694 = vadd.f32 0.0, %v693
        %695 = vdwg.mxu0
        %v696 = vadd.f32 %v671, %v694
        %697 = vst.msk [vmem:[#allocation6] sm:$0xff] %vm587, %v696
        %698 = vst.msk [vmem:[#allocation3] sm:$0xff] %vm637, %v619
        %v699 = vld [vmem:[#allocation2] sm:$0xff]
        %701 = vrot.lane.b32.xlu0 %v699, 124
        %v702 = vpop.permute.xlu0 %701
        %703 = vrot.lane.b32.xlu0 %v560, 124
        %v704 = vpop.permute.xlu0 %703
        %v705 = vsel %vm587, %v702, 0
        %v707 = vsel %vm587, %v704, 0
        %709 = vmatpush.xpose.msra.mxu0 0.0
        %710 = vmatpush.xpose.msra.mxu0 0.0
        %711 = vmatpush.xpose.msra.mxu0 0.0
        %712 = vmatpush.xpose.msra.mxu0 0.0
        %713 = vmatpush.xpose.msra.mxu0 0.0
        %714 = vmatpush.xpose.msra.mxu0 0.0
        %715 = vmatpush.xpose.msra.mxu0 0.0
        %716 = vmatpush.xpose.msra.mxu0 0.0
        %717 = vmatpush.xpose.msra.mxu0 0.0
        %718 = vmatpush.xpose.msra.mxu0 0.0
        %719 = vmatpush.xpose.msra.mxu0 0.0
        %720 = vmatpush.xpose.msra.mxu0 0.0
        %721 = vmatpush.xpose.msra.mxu0 0.0
        %722 = vmatpush.xpose.msra.mxu0 0.0
        %723 = vmatpush.xpose.msra.mxu0 0.0
        %724 = vmatpush.xpose.msra.mxu0 %v707
        %725 = vmatmul.f32.gmra.mxu0 %v705
        %v726 = vpop.f32.mrf.mxu0
        %v727 = vadd.f32 0.0, %v726
        %728 = vdwg.mxu0
        %s729 = scalar_lea.vmem [#allocation3], 8
        %v730 = vld [vmem:[%s729] sm:$0xff]
        %v731 = vsel %vm615, %v727, -inf
        %732 = vmax.xlane.f32.xlu0 %v731
        %v733 = vpop.xlane.xlu0 %732
        %v734 = vmax.f32 %v730, %v733
        %v735 = vsub.f32 %v730, %v734
        %v736 = vmul.f32 %v735, 1.442695
        %v737 = vpow.pop %v736
        %739 = vset.pattern.permute.xlu0 0
        %740 = vperm.xlu0 %739, %v734
        %v741 = vpop.permute.xlu0 %740
        %v743 = vsub.f32 %v727, %v741
        %v744 = vmul.f32 %v743, 1.442695
        %v745 = vpow.pop %v744
        %s746 = scalar_lea.vmem [#allocation4], 8
        %v747 = vld [vmem:[%s746] sm:$0xff]
        %v748 = vmul.f32 %v737, %v747
        %v749 = vsel %vm615, %v745, 0.0
        %750 = vadd.xlane.f32.xlu0 %v749
        %v751 = vpop.xlane.xlu0 %750
        %v752 = vadd.f32 %v748, %v751
        %753 = vst.msk [vmem:[%s746] sm:$0xff] %vm637, %v752
        %s754 = scalar_lea.vmem [#allocation5], 8
        %v755 = vld [vmem:[%s754] sm:$0xff]
        %757 = vset.pattern.permute.xlu0 0
        %758 = vperm.xlu0 %757, %v737
        %v759 = vpop.permute.xlu0 %758
        %v761 = vmul.f32 %v759, %v755
        %763 = vrot.lane.b32.xlu0 %v584, 124
        %v764 = vpop.permute.xlu0 %763
        %v767 = vsel %vm615, %v745, 0
        %769 = vmatpush.msra.mxu0 0.0
        %770 = vmatpush.msra.mxu0 0.0
        %771 = vmatpush.msra.mxu0 0.0
        %772 = vmatpush.msra.mxu0 0.0
        %773 = vmatpush.msra.mxu0 0.0
        %774 = vmatpush.msra.mxu0 0.0
        %775 = vmatpush.msra.mxu0 0.0
        %776 = vmatpush.msra.mxu0 0.0
        %777 = vmatpush.msra.mxu0 0.0
        %778 = vmatpush.msra.mxu0 0.0
        %779 = vmatpush.msra.mxu0 0.0
        %780 = vmatpush.msra.mxu0 0.0
        %781 = vmatpush.msra.mxu0 0.0
        %782 = vmatpush.msra.mxu0 0.0
        %783 = vmatpush.msra.mxu0 0.0
        %784 = vmatpush.msra.mxu0 %v764
        %785 = vmatmul.f32.gmra.mxu0 %v767
        %v786 = vpop.f32.mrf.mxu0
        %v787 = vadd.f32 0.0, %v786
        %788 = vdwg.mxu0
        %v789 = vadd.f32 %v761, %v787
        %790 = vst.msk [vmem:[%s754] sm:$0xff] %vm587, %v789
        %s791 = scalar_lea.vmem [#allocation6], 8
        %v792 = vld [vmem:[%s791] sm:$0xff]
        %s793 = scalar_lea.vmem [#allocation17], 8
        %v794 = vld [vmem:[%s793] sm:$0xff]
        %v796 = vsel %vm615, %v794, 0
        %798 = vmatpush.msra.mxu0 0.0
        %799 = vmatpush.msra.mxu0 0.0
        %800 = vmatpush.msra.mxu0 0.0
        %801 = vmatpush.msra.mxu0 0.0
        %802 = vmatpush.msra.mxu0 0.0
        %803 = vmatpush.msra.mxu0 0.0
        %804 = vmatpush.msra.mxu0 0.0
        %805 = vmatpush.msra.mxu0 0.0
        %806 = vmatpush.msra.mxu0 0.0
        %807 = vmatpush.msra.mxu0 0.0
        %808 = vmatpush.msra.mxu0 0.0
        %809 = vmatpush.msra.mxu0 0.0
        %810 = vmatpush.msra.mxu0 0.0
        %811 = vmatpush.msra.mxu0 0.0
        %812 = vmatpush.msra.mxu0 0.0
        %813 = vmatpush.msra.mxu0 %v764
        %814 = vmatmul.f32.gmra.mxu0 %v796
        %v815 = vpop.f32.mrf.mxu0
        %v816 = vadd.f32 0.0, %v815
        %817 = vdwg.mxu0
        %v818 = vadd.f32 %v792, %v816
        %819 = vst.msk [vmem:[%s791] sm:$0xff] %vm587, %v818
        %820 = vst.msk [vmem:[%s729] sm:$0xff] %vm637, %v734
        %v821 = vld [vmem:[#allocation2] sm:$0xff]
        %823 = vrot.lane.b32.xlu0 %v821, 120
        %v824 = vpop.permute.xlu0 %823
        %825 = vrot.lane.b32.xlu0 %v560, 120
        %v826 = vpop.permute.xlu0 %825
        %v827 = vsel %vm587, %v824, 0
        %v829 = vsel %vm587, %v826, 0
        %831 = vmatpush.xpose.msra.mxu0 0.0
        %832 = vmatpush.xpose.msra.mxu0 0.0
        %833 = vmatpush.xpose.msra.mxu0 0.0
        %834 = vmatpush.xpose.msra.mxu0 0.0
        %835 = vmatpush.xpose.msra.mxu0 0.0
        %836 = vmatpush.xpose.msra.mxu0 0.0
        %837 = vmatpush.xpose.msra.mxu0 0.0
        %838 = vmatpush.xpose.msra.mxu0 0.0
        %839 = vmatpush.xpose.msra.mxu0 0.0
        %840 = vmatpush.xpose.msra.mxu0 0.0
        %841 = vmatpush.xpose.msra.mxu0 0.0
        %842 = vmatpush.xpose.msra.mxu0 0.0
        %843 = vmatpush.xpose.msra.mxu0 0.0
        %844 = vmatpush.xpose.msra.mxu0 0.0
        %845 = vmatpush.xpose.msra.mxu0 0.0
        %846 = vmatpush.xpose.msra.mxu0 %v829
        %847 = vmatmul.f32.gmra.mxu0 %v827
        %v848 = vpop.f32.mrf.mxu0
        %v849 = vadd.f32 0.0, %v848
        %850 = vdwg.mxu0
        %s851 = scalar_lea.vmem [#allocation3], 16
        %v852 = vld [vmem:[%s851] sm:$0xff]
        %v853 = vsel %vm615, %v849, -inf
        %854 = vmax.xlane.f32.xlu0 %v853
        %v855 = vpop.xlane.xlu0 %854
        %v856 = vmax.f32 %v852, %v855
        %v857 = vsub.f32 %v852, %v856
        %v858 = vmul.f32 %v857, 1.442695
        %v859 = vpow.pop %v858
        %861 = vset.pattern.permute.xlu0 0
        %862 = vperm.xlu0 %861, %v856
        %v863 = vpop.permute.xlu0 %862
        %v865 = vsub.f32 %v849, %v863
        %v866 = vmul.f32 %v865, 1.442695
        %v867 = vpow.pop %v866
        %s868 = scalar_lea.vmem [#allocation4], 16
        %v869 = vld [vmem:[%s868] sm:$0xff]
        %v870 = vmul.f32 %v859, %v869
        %v871 = vsel %vm615, %v867, 0.0
        %872 = vadd.xlane.f32.xlu0 %v871
        %v873 = vpop.xlane.xlu0 %872
        %v874 = vadd.f32 %v870, %v873
        %875 = vst.msk [vmem:[%s868] sm:$0xff] %vm637, %v874
        %s876 = scalar_lea.vmem [#allocation5], 16
        %v877 = vld [vmem:[%s876] sm:$0xff]
        %879 = vset.pattern.permute.xlu0 0
        %880 = vperm.xlu0 %879, %v859
        %v881 = vpop.permute.xlu0 %880
        %v883 = vmul.f32 %v881, %v877
        %884 = vrot.lane.b32.xlu0 %v584, 120
        %v885 = vpop.permute.xlu0 %884
        %v888 = vsel %vm615, %v867, 0
        %890 = vmatpush.msra.mxu0 0.0
        %891 = vmatpush.msra.mxu0 0.0
        %892 = vmatpush.msra.mxu0 0.0
        %893 = vmatpush.msra.mxu0 0.0
        %894 = vmatpush.msra.mxu0 0.0
        %895 = vmatpush.msra.mxu0 0.0
        %896 = vmatpush.msra.mxu0 0.0
        %897 = vmatpush.msra.mxu0 0.0
        %898 = vmatpush.msra.mxu0 0.0
        %899 = vmatpush.msra.mxu0 0.0
        %900 = vmatpush.msra.mxu0 0.0
        %901 = vmatpush.msra.mxu0 0.0
        %902 = vmatpush.msra.mxu0 0.0
        %903 = vmatpush.msra.mxu0 0.0
        %904 = vmatpush.msra.mxu0 0.0
        %905 = vmatpush.msra.mxu0 %v885
        %906 = vmatmul.f32.gmra.mxu0 %v888
        %v907 = vpop.f32.mrf.mxu0
        %v908 = vadd.f32 0.0, %v907
        %909 = vdwg.mxu0
        %v910 = vadd.f32 %v883, %v908
        %911 = vst.msk [vmem:[%s876] sm:$0xff] %vm587, %v910
        %s912 = scalar_lea.vmem [#allocation6], 16
        %v913 = vld [vmem:[%s912] sm:$0xff]
        %s914 = scalar_lea.vmem [#allocation17], 16
        %v915 = vld [vmem:[%s914] sm:$0xff]
        %v917 = vsel %vm615, %v915, 0
        %919 = vmatpush.msra.mxu0 0.0
        %920 = vmatpush.msra.mxu0 0.0
        %921 = vmatpush.msra.mxu0 0.0
        %922 = vmatpush.msra.mxu0 0.0
        %923 = vmatpush.msra.mxu0 0.0
        %924 = vmatpush.msra.mxu0 0.0
        %925 = vmatpush.msra.mxu0 0.0
        %926 = vmatpush.msra.mxu0 0.0
        %927 = vmatpush.msra.mxu0 0.0
        %928 = vmatpush.msra.mxu0 0.0
        %929 = vmatpush.msra.mxu0 0.0
        %930 = vmatpush.msra.mxu0 0.0
        %931 = vmatpush.msra.mxu0 0.0
        %932 = vmatpush.msra.mxu0 0.0
        %933 = vmatpush.msra.mxu0 0.0
        %934 = vmatpush.msra.mxu0 %v885
        %935 = vmatmul.f32.gmra.mxu0 %v917
        %v936 = vpop.f32.mrf.mxu0
        %v937 = vadd.f32 0.0, %v936
        %938 = vdwg.mxu0
        %v939 = vadd.f32 %v913, %v937
        %940 = vst.msk [vmem:[%s912] sm:$0xff] %vm587, %v939
        %941 = vst.msk [vmem:[%s851] sm:$0xff] %vm637, %v856
        %v942 = vld [vmem:[#allocation2] sm:$0xff]
        %944 = vrot.lane.b32.xlu0 %v942, 116
        %v945 = vpop.permute.xlu0 %944
        %946 = vrot.lane.b32.xlu0 %v560, 116
        %v947 = vpop.permute.xlu0 %946
        %v948 = vsel %vm587, %v945, 0
        %v950 = vsel %vm587, %v947, 0
        %952 = vmatpush.xpose.msra.mxu0 0.0
        %953 = vmatpush.xpose.msra.mxu0 0.0
        %954 = vmatpush.xpose.msra.mxu0 0.0
        %955 = vmatpush.xpose.msra.mxu0 0.0
        %956 = vmatpush.xpose.msra.mxu0 0.0
        %957 = vmatpush.xpose.msra.mxu0 0.0
        %958 = vmatpush.xpose.msra.mxu0 0.0
        %959 = vmatpush.xpose.msra.mxu0 0.0
        %960 = vmatpush.xpose.msra.mxu0 0.0
        %961 = vmatpush.xpose.msra.mxu0 0.0
        %962 = vmatpush.xpose.msra.mxu0 0.0
        %963 = vmatpush.xpose.msra.mxu0 0.0
        %964 = vmatpush.xpose.msra.mxu0 0.0
        %965 = vmatpush.xpose.msra.mxu0 0.0
        %966 = vmatpush.xpose.msra.mxu0 0.0
        %967 = vmatpush.xpose.msra.mxu0 %v950
        %968 = vmatmul.f32.gmra.mxu0 %v948
        %v969 = vpop.f32.mrf.mxu0
        %v970 = vadd.f32 0.0, %v969
        %971 = vdwg.mxu0
        %s972 = scalar_lea.vmem [#allocation3], 24
        %v973 = vld [vmem:[%s972] sm:$0xff]
        %v974 = vsel %vm615, %v970, -inf
        %975 = vmax.xlane.f32.xlu0 %v974
        %v976 = vpop.xlane.xlu0 %975
        %v977 = vmax.f32 %v973, %v976
        %v978 = vsub.f32 %v973, %v977
        %v979 = vmul.f32 %v978, 1.442695
        %v980 = vpow.pop %v979
        %982 = vset.pattern.permute.xlu0 0
        %983 = vperm.xlu0 %982, %v977
        %v984 = vpop.permute.xlu0 %983
        %v986 = vsub.f32 %v970, %v984
        %v987 = vmul.f32 %v986, 1.442695
        %v988 = vpow.pop %v987
        %s989 = scalar_lea.vmem [#allocation4], 24
        %v990 = vld [vmem:[%s989] sm:$0xff]
        %v991 = vmul.f32 %v980, %v990
        %v992 = vsel %vm615, %v988, 0.0
        %993 = vadd.xlane.f32.xlu0 %v992
        %v994 = vpop.xlane.xlu0 %993
        %v995 = vadd.f32 %v991, %v994
        %996 = vst.msk [vmem:[%s989] sm:$0xff] %vm637, %v995
        %s997 = scalar_lea.vmem [#allocation5], 24
        %v998 = vld [vmem:[%s997] sm:$0xff]
        %1000 = vset.pattern.permute.xlu0 0
        %1001 = vperm.xlu0 %1000, %v980
        %v1002 = vpop.permute.xlu0 %1001
        %v1004 = vmul.f32 %v1002, %v998
        %1005 = vrot.lane.b32.xlu0 %v584, 116
        %v1006 = vpop.permute.xlu0 %1005
        %v1009 = vsel %vm615, %v988, 0
        %1011 = vmatpush.msra.mxu0 0.0
        %1012 = vmatpush.msra.mxu0 0.0
        %1013 = vmatpush.msra.mxu0 0.0
        %1014 = vmatpush.msra.mxu0 0.0
        %1015 = vmatpush.msra.mxu0 0.0
        %1016 = vmatpush.msra.mxu0 0.0
        %1017 = vmatpush.msra.mxu0 0.0
        %1018 = vmatpush.msra.mxu0 0.0
        %1019 = vmatpush.msra.mxu0 0.0
        %1020 = vmatpush.msra.mxu0 0.0
        %1021 = vmatpush.msra.mxu0 0.0
        %1022 = vmatpush.msra.mxu0 0.0
        %1023 = vmatpush.msra.mxu0 0.0
        %1024 = vmatpush.msra.mxu0 0.0
        %1025 = vmatpush.msra.mxu0 0.0
        %1026 = vmatpush.msra.mxu0 %v1006
        %1027 = vmatmul.f32.gmra.mxu0 %v1009
        %v1028 = vpop.f32.mrf.mxu0
        %v1029 = vadd.f32 0.0, %v1028
        %1030 = vdwg.mxu0
        %v1031 = vadd.f32 %v1004, %v1029
        %1032 = vst.msk [vmem:[%s997] sm:$0xff] %vm587, %v1031
        %s1033 = scalar_lea.vmem [#allocation6], 24
        %v1034 = vld [vmem:[%s1033] sm:$0xff]
        %s1035 = scalar_lea.vmem [#allocation17], 24
        %v1036 = vld [vmem:[%s1035] sm:$0xff]
        %v1038 = vsel %vm615, %v1036, 0
        %1040 = vmatpush.msra.mxu0 0.0
        %1041 = vmatpush.msra.mxu0 0.0
        %1042 = vmatpush.msra.mxu0 0.0
        %1043 = vmatpush.msra.mxu0 0.0
        %1044 = vmatpush.msra.mxu0 0.0
        %1045 = vmatpush.msra.mxu0 0.0
        %1046 = vmatpush.msra.mxu0 0.0
        %1047 = vmatpush.msra.mxu0 0.0
        %1048 = vmatpush.msra.mxu0 0.0
        %1049 = vmatpush.msra.mxu0 0.0
        %1050 = vmatpush.msra.mxu0 0.0
        %1051 = vmatpush.msra.mxu0 0.0
        %1052 = vmatpush.msra.mxu0 0.0
        %1053 = vmatpush.msra.mxu0 0.0
        %1054 = vmatpush.msra.mxu0 0.0
        %1055 = vmatpush.msra.mxu0 %v1006
        %1056 = vmatmul.f32.gmra.mxu0 %v1038
        %v1057 = vpop.f32.mrf.mxu0
        %v1058 = vadd.f32 0.0, %v1057
        %1059 = vdwg.mxu0
        %v1060 = vadd.f32 %v1034, %v1058
        %1061 = vst.msk [vmem:[%s1033] sm:$0xff] %vm587, %v1060
        %1062 = vst.msk [vmem:[%s972] sm:$0xff] %vm637, %v977
        %v1063 = vld [vmem:[#allocation2] sm:$0xff]
        %1065 = vrot.lane.b32.xlu0 %v1063, 112
        %v1066 = vpop.permute.xlu0 %1065
        %1067 = vrot.lane.b32.xlu0 %v560, 112
        %v1068 = vpop.permute.xlu0 %1067
        %v1069 = vsel %vm587, %v1066, 0
        %v1071 = vsel %vm587, %v1068, 0
        %1073 = vmatpush.xpose.msra.mxu0 0.0
        %1074 = vmatpush.xpose.msra.mxu0 0.0
        %1075 = vmatpush.xpose.msra.mxu0 0.0
        %1076 = vmatpush.xpose.msra.mxu0 0.0
        %1077 = vmatpush.xpose.msra.mxu0 0.0
        %1078 = vmatpush.xpose.msra.mxu0 0.0
        %1079 = vmatpush.xpose.msra.mxu0 0.0
        %1080 = vmatpush.xpose.msra.mxu0 0.0
        %1081 = vmatpush.xpose.msra.mxu0 0.0
        %1082 = vmatpush.xpose.msra.mxu0 0.0
        %1083 = vmatpush.xpose.msra.mxu0 0.0
        %1084 = vmatpush.xpose.msra.mxu0 0.0
        %1085 = vmatpush.xpose.msra.mxu0 0.0
        %1086 = vmatpush.xpose.msra.mxu0 0.0
        %1087 = vmatpush.xpose.msra.mxu0 0.0
        %1088 = vmatpush.xpose.msra.mxu0 %v1071
        %1089 = vmatmul.f32.gmra.mxu0 %v1069
        %v1090 = vpop.f32.mrf.mxu0
        %v1091 = vadd.f32 0.0, %v1090
        %1092 = vdwg.mxu0
        %s1093 = scalar_lea.vmem [#allocation3], 32
        %v1094 = vld [vmem:[%s1093] sm:$0xff]
        %v1095 = vsel %vm615, %v1091, -inf
        %1096 = vmax.xlane.f32.xlu0 %v1095
        %v1097 = vpop.xlane.xlu0 %1096
        %v1098 = vmax.f32 %v1094, %v1097
        %v1099 = vsub.f32 %v1094, %v1098
        %v1100 = vmul.f32 %v1099, 1.442695
        %v1101 = vpow.pop %v1100
        %1103 = vset.pattern.permute.xlu0 0
        %1104 = vperm.xlu0 %1103, %v1098
        %v1105 = vpop.permute.xlu0 %1104
        %v1107 = vsub.f32 %v1091, %v1105
        %v1108 = vmul.f32 %v1107, 1.442695
        %v1109 = vpow.pop %v1108
        %s1110 = scalar_lea.vmem [#allocation4], 32
        %v1111 = vld [vmem:[%s1110] sm:$0xff]
        %v1112 = vmul.f32 %v1101, %v1111
        %v1113 = vsel %vm615, %v1109, 0.0
        %1114 = vadd.xlane.f32.xlu0 %v1113
        %v1115 = vpop.xlane.xlu0 %1114
        %v1116 = vadd.f32 %v1112, %v1115
        %1117 = vst.msk [vmem:[%s1110] sm:$0xff] %vm637, %v1116
        %s1118 = scalar_lea.vmem [#allocation5], 32
        %v1119 = vld [vmem:[%s1118] sm:$0xff]
        %1121 = vset.pattern.permute.xlu0 0
        %1122 = vperm.xlu0 %1121, %v1101
        %v1123 = vpop.permute.xlu0 %1122
        %v1125 = vmul.f32 %v1123, %v1119
        %1126 = vrot.lane.b32.xlu0 %v584, 112
        %v1127 = vpop.permute.xlu0 %1126
        %v1130 = vsel %vm615, %v1109, 0
        %1132 = vmatpush.msra.mxu0 0.0
        %1133 = vmatpush.msra.mxu0 0.0
        %1134 = vmatpush.msra.mxu0 0.0
        %1135 = vmatpush.msra.mxu0 0.0
        %1136 = vmatpush.msra.mxu0 0.0
        %1137 = vmatpush.msra.mxu0 0.0
        %1138 = vmatpush.msra.mxu0 0.0
        %1139 = vmatpush.msra.mxu0 0.0
        %1140 = vmatpush.msra.mxu0 0.0
        %1141 = vmatpush.msra.mxu0 0.0
        %1142 = vmatpush.msra.mxu0 0.0
        %1143 = vmatpush.msra.mxu0 0.0
        %1144 = vmatpush.msra.mxu0 0.0
        %1145 = vmatpush.msra.mxu0 0.0
        %1146 = vmatpush.msra.mxu0 0.0
        %1147 = vmatpush.msra.mxu0 %v1127
        %1148 = vmatmul.f32.gmra.mxu0 %v1130
        %v1149 = vpop.f32.mrf.mxu0
        %v1150 = vadd.f32 0.0, %v1149
        %1151 = vdwg.mxu0
        %v1152 = vadd.f32 %v1125, %v1150
        %1153 = vst.msk [vmem:[%s1118] sm:$0xff] %vm587, %v1152
        %s1154 = scalar_lea.vmem [#allocation6], 32
        %v1155 = vld [vmem:[%s1154] sm:$0xff]
        %s1156 = scalar_lea.vmem [#allocation17], 32
        %v1157 = vld [vmem:[%s1156] sm:$0xff]
        %v1159 = vsel %vm615, %v1157, 0
        %1161 = vmatpush.msra.mxu0 0.0
        %1162 = vmatpush.msra.mxu0 0.0
        %1163 = vmatpush.msra.mxu0 0.0
        %1164 = vmatpush.msra.mxu0 0.0
        %1165 = vmatpush.msra.mxu0 0.0
        %1166 = vmatpush.msra.mxu0 0.0
        %1167 = vmatpush.msra.mxu0 0.0
        %1168 = vmatpush.msra.mxu0 0.0
        %1169 = vmatpush.msra.mxu0 0.0
        %1170 = vmatpush.msra.mxu0 0.0
        %1171 = vmatpush.msra.mxu0 0.0
        %1172 = vmatpush.msra.mxu0 0.0
        %1173 = vmatpush.msra.mxu0 0.0
        %1174 = vmatpush.msra.mxu0 0.0
        %1175 = vmatpush.msra.mxu0 0.0
        %1176 = vmatpush.msra.mxu0 %v1127
        %1177 = vmatmul.f32.gmra.mxu0 %v1159
        %v1178 = vpop.f32.mrf.mxu0
        %v1179 = vadd.f32 0.0, %v1178
        %1180 = vdwg.mxu0
        %v1181 = vadd.f32 %v1155, %v1179
        %1182 = vst.msk [vmem:[%s1154] sm:$0xff] %vm587, %v1181
        %1183 = vst.msk [vmem:[%s1093] sm:$0xff] %vm637, %v1098
        %v1184 = vld [vmem:[#allocation2] sm:$0xff]
        %1186 = vrot.lane.b32.xlu0 %v1184, 108
        %v1187 = vpop.permute.xlu0 %1186
        %1188 = vrot.lane.b32.xlu0 %v560, 108
        %v1189 = vpop.permute.xlu0 %1188
        %v1190 = vsel %vm587, %v1187, 0
        %v1192 = vsel %vm587, %v1189, 0
        %1194 = vmatpush.xpose.msra.mxu0 0.0
        %1195 = vmatpush.xpose.msra.mxu0 0.0
        %1196 = vmatpush.xpose.msra.mxu0 0.0
        %1197 = vmatpush.xpose.msra.mxu0 0.0
        %1198 = vmatpush.xpose.msra.mxu0 0.0
        %1199 = vmatpush.xpose.msra.mxu0 0.0
        %1200 = vmatpush.xpose.msra.mxu0 0.0
        %1201 = vmatpush.xpose.msra.mxu0 0.0
        %1202 = vmatpush.xpose.msra.mxu0 0.0
        %1203 = vmatpush.xpose.msra.mxu0 0.0
        %1204 = vmatpush.xpose.msra.mxu0 0.0
        %1205 = vmatpush.xpose.msra.mxu0 0.0
        %1206 = vmatpush.xpose.msra.mxu0 0.0
        %1207 = vmatpush.xpose.msra.mxu0 0.0
        %1208 = vmatpush.xpose.msra.mxu0 0.0
        %1209 = vmatpush.xpose.msra.mxu0 %v1192
        %1210 = vmatmul.f32.gmra.mxu0 %v1190
        %v1211 = vpop.f32.mrf.mxu0
        %v1212 = vadd.f32 0.0, %v1211
        %1213 = vdwg.mxu0
        %s1214 = scalar_lea.vmem [#allocation3], 40
        %v1215 = vld [vmem:[%s1214] sm:$0xff]
        %v1216 = vsel %vm615, %v1212, -inf
        %1217 = vmax.xlane.f32.xlu0 %v1216
        %v1218 = vpop.xlane.xlu0 %1217
        %v1219 = vmax.f32 %v1215, %v1218
        %v1220 = vsub.f32 %v1215, %v1219
        %v1221 = vmul.f32 %v1220, 1.442695
        %v1222 = vpow.pop %v1221
        %1224 = vset.pattern.permute.xlu0 0
        %1225 = vperm.xlu0 %1224, %v1219
        %v1226 = vpop.permute.xlu0 %1225
        %v1228 = vsub.f32 %v1212, %v1226
        %v1229 = vmul.f32 %v1228, 1.442695
        %v1230 = vpow.pop %v1229
        %s1231 = scalar_lea.vmem [#allocation4], 40
        %v1232 = vld [vmem:[%s1231] sm:$0xff]
        %v1233 = vmul.f32 %v1222, %v1232
        %v1234 = vsel %vm615, %v1230, 0.0
        %1235 = vadd.xlane.f32.xlu0 %v1234
        %v1236 = vpop.xlane.xlu0 %1235
        %v1237 = vadd.f32 %v1233, %v1236
        %1238 = vst.msk [vmem:[%s1231] sm:$0xff] %vm637, %v1237
        %s1239 = scalar_lea.vmem [#allocation5], 40
        %v1240 = vld [vmem:[%s1239] sm:$0xff]
        %1242 = vset.pattern.permute.xlu0 0
        %1243 = vperm.xlu0 %1242, %v1222
        %v1244 = vpop.permute.xlu0 %1243
        %v1246 = vmul.f32 %v1244, %v1240
        %1247 = vrot.lane.b32.xlu0 %v584, 108
        %v1248 = vpop.permute.xlu0 %1247
        %v1251 = vsel %vm615, %v1230, 0
        %1253 = vmatpush.msra.mxu0 0.0
        %1254 = vmatpush.msra.mxu0 0.0
        %1255 = vmatpush.msra.mxu0 0.0
        %1256 = vmatpush.msra.mxu0 0.0
        %1257 = vmatpush.msra.mxu0 0.0
        %1258 = vmatpush.msra.mxu0 0.0
        %1259 = vmatpush.msra.mxu0 0.0
        %1260 = vmatpush.msra.mxu0 0.0
        %1261 = vmatpush.msra.mxu0 0.0
        %1262 = vmatpush.msra.mxu0 0.0
        %1263 = vmatpush.msra.mxu0 0.0
        %1264 = vmatpush.msra.mxu0 0.0
        %1265 = vmatpush.msra.mxu0 0.0
        %1266 = vmatpush.msra.mxu0 0.0
        %1267 = vmatpush.msra.mxu0 0.0
        %1268 = vmatpush.msra.mxu0 %v1248
        %1269 = vmatmul.f32.gmra.mxu0 %v1251
        %v1270 = vpop.f32.mrf.mxu0
        %v1271 = vadd.f32 0.0, %v1270
        %1272 = vdwg.mxu0
        %v1273 = vadd.f32 %v1246, %v1271
        %1274 = vst.msk [vmem:[%s1239] sm:$0xff] %vm587, %v1273
        %s1275 = scalar_lea.vmem [#allocation6], 40
        %v1276 = vld [vmem:[%s1275] sm:$0xff]
        %s1277 = scalar_lea.vmem [#allocation17], 40
        %v1278 = vld [vmem:[%s1277] sm:$0xff]
        %v1280 = vsel %vm615, %v1278, 0
        %1282 = vmatpush.msra.mxu0 0.0
        %1283 = vmatpush.msra.mxu0 0.0
        %1284 = vmatpush.msra.mxu0 0.0
        %1285 = vmatpush.msra.mxu0 0.0
        %1286 = vmatpush.msra.mxu0 0.0
        %1287 = vmatpush.msra.mxu0 0.0
        %1288 = vmatpush.msra.mxu0 0.0
        %1289 = vmatpush.msra.mxu0 0.0
        %1290 = vmatpush.msra.mxu0 0.0
        %1291 = vmatpush.msra.mxu0 0.0
        %1292 = vmatpush.msra.mxu0 0.0
        %1293 = vmatpush.msra.mxu0 0.0
        %1294 = vmatpush.msra.mxu0 0.0
        %1295 = vmatpush.msra.mxu0 0.0
        %1296 = vmatpush.msra.mxu0 0.0
        %1297 = vmatpush.msra.mxu0 %v1248
        %1298 = vmatmul.f32.gmra.mxu0 %v1280
        %v1299 = vpop.f32.mrf.mxu0
        %v1300 = vadd.f32 0.0, %v1299
        %1301 = vdwg.mxu0
        %v1302 = vadd.f32 %v1276, %v1300
        %1303 = vst.msk [vmem:[%s1275] sm:$0xff] %vm587, %v1302
        %1304 = vst.msk [vmem:[%s1214] sm:$0xff] %vm637, %v1219
        %v1305 = vld [vmem:[#allocation2] sm:$0xff]
        %1307 = vrot.lane.b32.xlu0 %v1305, 104
        %v1308 = vpop.permute.xlu0 %1307
        %1309 = vrot.lane.b32.xlu0 %v560, 104
        %v1310 = vpop.permute.xlu0 %1309
        %v1311 = vsel %vm587, %v1308, 0
        %v1313 = vsel %vm587, %v1310, 0
        %1315 = vmatpush.xpose.msra.mxu0 0.0
        %1316 = vmatpush.xpose.msra.mxu0 0.0
        %1317 = vmatpush.xpose.msra.mxu0 0.0
        %1318 = vmatpush.xpose.msra.mxu0 0.0
        %1319 = vmatpush.xpose.msra.mxu0 0.0
        %1320 = vmatpush.xpose.msra.mxu0 0.0
        %1321 = vmatpush.xpose.msra.mxu0 0.0
        %1322 = vmatpush.xpose.msra.mxu0 0.0
        %1323 = vmatpush.xpose.msra.mxu0 0.0
        %1324 = vmatpush.xpose.msra.mxu0 0.0
        %1325 = vmatpush.xpose.msra.mxu0 0.0
        %1326 = vmatpush.xpose.msra.mxu0 0.0
        %1327 = vmatpush.xpose.msra.mxu0 0.0
        %1328 = vmatpush.xpose.msra.mxu0 0.0
        %1329 = vmatpush.xpose.msra.mxu0 0.0
        %1330 = vmatpush.xpose.msra.mxu0 %v1313
        %1331 = vmatmul.f32.gmra.mxu0 %v1311
        %v1332 = vpop.f32.mrf.mxu0
        %v1333 = vadd.f32 0.0, %v1332
        %1334 = vdwg.mxu0
        %s1335 = scalar_lea.vmem [#allocation3], 48
        %v1336 = vld [vmem:[%s1335] sm:$0xff]
        %v1337 = vsel %vm615, %v1333, -inf
        %1338 = vmax.xlane.f32.xlu0 %v1337
        %v1339 = vpop.xlane.xlu0 %1338
        %v1340 = vmax.f32 %v1336, %v1339
        %v1341 = vsub.f32 %v1336, %v1340
        %v1342 = vmul.f32 %v1341, 1.442695
        %v1343 = vpow.pop %v1342
        %1345 = vset.pattern.permute.xlu0 0
        %1346 = vperm.xlu0 %1345, %v1340
        %v1347 = vpop.permute.xlu0 %1346
        %v1349 = vsub.f32 %v1333, %v1347
        %v1350 = vmul.f32 %v1349, 1.442695
        %v1351 = vpow.pop %v1350
        %s1352 = scalar_lea.vmem [#allocation4], 48
        %v1353 = vld [vmem:[%s1352] sm:$0xff]
        %v1354 = vmul.f32 %v1343, %v1353
        %v1355 = vsel %vm615, %v1351, 0.0
        %1356 = vadd.xlane.f32.xlu0 %v1355
        %v1357 = vpop.xlane.xlu0 %1356
        %v1358 = vadd.f32 %v1354, %v1357
        %1359 = vst.msk [vmem:[%s1352] sm:$0xff] %vm637, %v1358
        %s1360 = scalar_lea.vmem [#allocation5], 48
        %v1361 = vld [vmem:[%s1360] sm:$0xff]
        %1363 = vset.pattern.permute.xlu0 0
        %1364 = vperm.xlu0 %1363, %v1343
        %v1365 = vpop.permute.xlu0 %1364
        %v1367 = vmul.f32 %v1365, %v1361
        %1368 = vrot.lane.b32.xlu0 %v584, 104
        %v1369 = vpop.permute.xlu0 %1368
        %v1372 = vsel %vm615, %v1351, 0
        %1374 = vmatpush.msra.mxu0 0.0
        %1375 = vmatpush.msra.mxu0 0.0
        %1376 = vmatpush.msra.mxu0 0.0
        %1377 = vmatpush.msra.mxu0 0.0
        %1378 = vmatpush.msra.mxu0 0.0
        %1379 = vmatpush.msra.mxu0 0.0
        %1380 = vmatpush.msra.mxu0 0.0
        %1381 = vmatpush.msra.mxu0 0.0
        %1382 = vmatpush.msra.mxu0 0.0
        %1383 = vmatpush.msra.mxu0 0.0
        %1384 = vmatpush.msra.mxu0 0.0
        %1385 = vmatpush.msra.mxu0 0.0
        %1386 = vmatpush.msra.mxu0 0.0
        %1387 = vmatpush.msra.mxu0 0.0
        %1388 = vmatpush.msra.mxu0 0.0
        %1389 = vmatpush.msra.mxu0 %v1369
        %1390 = vmatmul.f32.gmra.mxu0 %v1372
        %v1391 = vpop.f32.mrf.mxu0
        %v1392 = vadd.f32 0.0, %v1391
        %1393 = vdwg.mxu0
        %v1394 = vadd.f32 %v1367, %v1392
        %1395 = vst.msk [vmem:[%s1360] sm:$0xff] %vm587, %v1394
        %s1396 = scalar_lea.vmem [#allocation6], 48
        %v1397 = vld [vmem:[%s1396] sm:$0xff]
        %s1398 = scalar_lea.vmem [#allocation17], 48
        %v1399 = vld [vmem:[%s1398] sm:$0xff]
        %v1401 = vsel %vm615, %v1399, 0
        %1403 = vmatpush.msra.mxu0 0.0
        %1404 = vmatpush.msra.mxu0 0.0
        %1405 = vmatpush.msra.mxu0 0.0
        %1406 = vmatpush.msra.mxu0 0.0
        %1407 = vmatpush.msra.mxu0 0.0
        %1408 = vmatpush.msra.mxu0 0.0
        %1409 = vmatpush.msra.mxu0 0.0
        %1410 = vmatpush.msra.mxu0 0.0
        %1411 = vmatpush.msra.mxu0 0.0
        %1412 = vmatpush.msra.mxu0 0.0
        %1413 = vmatpush.msra.mxu0 0.0
        %1414 = vmatpush.msra.mxu0 0.0
        %1415 = vmatpush.msra.mxu0 0.0
        %1416 = vmatpush.msra.mxu0 0.0
        %1417 = vmatpush.msra.mxu0 0.0
        %1418 = vmatpush.msra.mxu0 %v1369
        %1419 = vmatmul.f32.gmra.mxu0 %v1401
        %v1420 = vpop.f32.mrf.mxu0
        %v1421 = vadd.f32 0.0, %v1420
        %1422 = vdwg.mxu0
        %v1423 = vadd.f32 %v1397, %v1421
        %1424 = vst.msk [vmem:[%s1396] sm:$0xff] %vm587, %v1423
        %1425 = vst.msk [vmem:[%s1335] sm:$0xff] %vm637, %v1340
        %v1426 = vld [vmem:[#allocation2] sm:$0xff]
        %1428 = vrot.lane.b32.xlu0 %v1426, 100
        %v1429 = vpop.permute.xlu0 %1428
        %1430 = vrot.lane.b32.xlu0 %v560, 100
        %v1431 = vpop.permute.xlu0 %1430
        %v1432 = vsel %vm587, %v1429, 0
        %v1434 = vsel %vm587, %v1431, 0
        %1436 = vmatpush.xpose.msra.mxu0 0.0
        %1437 = vmatpush.xpose.msra.mxu0 0.0
        %1438 = vmatpush.xpose.msra.mxu0 0.0
        %1439 = vmatpush.xpose.msra.mxu0 0.0
        %1440 = vmatpush.xpose.msra.mxu0 0.0
        %1441 = vmatpush.xpose.msra.mxu0 0.0
        %1442 = vmatpush.xpose.msra.mxu0 0.0
        %1443 = vmatpush.xpose.msra.mxu0 0.0
        %1444 = vmatpush.xpose.msra.mxu0 0.0
        %1445 = vmatpush.xpose.msra.mxu0 0.0
        %1446 = vmatpush.xpose.msra.mxu0 0.0
        %1447 = vmatpush.xpose.msra.mxu0 0.0
        %1448 = vmatpush.xpose.msra.mxu0 0.0
        %1449 = vmatpush.xpose.msra.mxu0 0.0
        %1450 = vmatpush.xpose.msra.mxu0 0.0
        %1451 = vmatpush.xpose.msra.mxu0 %v1434
        %1452 = vmatmul.f32.gmra.mxu0 %v1432
        %v1453 = vpop.f32.mrf.mxu0
        %v1454 = vadd.f32 0.0, %v1453
        %1455 = vdwg.mxu0
        %s1456 = scalar_lea.vmem [#allocation3], 56
        %v1457 = vld [vmem:[%s1456] sm:$0xff]
        %v1458 = vsel %vm615, %v1454, -inf
        %1459 = vmax.xlane.f32.xlu0 %v1458
        %v1460 = vpop.xlane.xlu0 %1459
        %v1461 = vmax.f32 %v1457, %v1460
        %v1462 = vsub.f32 %v1457, %v1461
        %v1463 = vmul.f32 %v1462, 1.442695
        %v1464 = vpow.pop %v1463
        %1466 = vset.pattern.permute.xlu0 0
        %1467 = vperm.xlu0 %1466, %v1461
        %v1468 = vpop.permute.xlu0 %1467
        %v1470 = vsub.f32 %v1454, %v1468
        %v1471 = vmul.f32 %v1470, 1.442695
        %v1472 = vpow.pop %v1471
        %s1473 = scalar_lea.vmem [#allocation4], 56
        %v1474 = vld [vmem:[%s1473] sm:$0xff]
        %v1475 = vmul.f32 %v1464, %v1474
        %v1476 = vsel %vm615, %v1472, 0.0
        %1477 = vadd.xlane.f32.xlu0 %v1476
        %v1478 = vpop.xlane.xlu0 %1477
        %v1479 = vadd.f32 %v1475, %v1478
        %1480 = vst.msk [vmem:[%s1473] sm:$0xff] %vm637, %v1479
        %s1481 = scalar_lea.vmem [#allocation5], 56
        %v1482 = vld [vmem:[%s1481] sm:$0xff]
        %1484 = vset.pattern.permute.xlu0 0
        %1485 = vperm.xlu0 %1484, %v1464
        %v1486 = vpop.permute.xlu0 %1485
        %v1488 = vmul.f32 %v1486, %v1482
        %1489 = vrot.lane.b32.xlu0 %v584, 100
        %v1490 = vpop.permute.xlu0 %1489
        %v1493 = vsel %vm615, %v1472, 0
        %1495 = vmatpush.msra.mxu0 0.0
        %1496 = vmatpush.msra.mxu0 0.0
        %1497 = vmatpush.msra.mxu0 0.0
        %1498 = vmatpush.msra.mxu0 0.0
        %1499 = vmatpush.msra.mxu0 0.0
        %1500 = vmatpush.msra.mxu0 0.0
        %1501 = vmatpush.msra.mxu0 0.0
        %1502 = vmatpush.msra.mxu0 0.0
        %1503 = vmatpush.msra.mxu0 0.0
        %1504 = vmatpush.msra.mxu0 0.0
        %1505 = vmatpush.msra.mxu0 0.0
        %1506 = vmatpush.msra.mxu0 0.0
        %1507 = vmatpush.msra.mxu0 0.0
        %1508 = vmatpush.msra.mxu0 0.0
        %1509 = vmatpush.msra.mxu0 0.0
        %1510 = vmatpush.msra.mxu0 %v1490
        %1511 = vmatmul.f32.gmra.mxu0 %v1493
        %v1512 = vpop.f32.mrf.mxu0
        %v1513 = vadd.f32 0.0, %v1512
        %1514 = vdwg.mxu0
        %v1515 = vadd.f32 %v1488, %v1513
        %1516 = vst.msk [vmem:[%s1481] sm:$0xff] %vm587, %v1515
        %s1517 = scalar_lea.vmem [#allocation6], 56
        %v1518 = vld [vmem:[%s1517] sm:$0xff]
        %s1519 = scalar_lea.vmem [#allocation17], 56
        %v1520 = vld [vmem:[%s1519] sm:$0xff]
        %v1522 = vsel %vm615, %v1520, 0
        %1524 = vmatpush.msra.mxu0 0.0
        %1525 = vmatpush.msra.mxu0 0.0
        %1526 = vmatpush.msra.mxu0 0.0
        %1527 = vmatpush.msra.mxu0 0.0
        %1528 = vmatpush.msra.mxu0 0.0
        %1529 = vmatpush.msra.mxu0 0.0
        %1530 = vmatpush.msra.mxu0 0.0
        %1531 = vmatpush.msra.mxu0 0.0
        %1532 = vmatpush.msra.mxu0 0.0
        %1533 = vmatpush.msra.mxu0 0.0
        %1534 = vmatpush.msra.mxu0 0.0
        %1535 = vmatpush.msra.mxu0 0.0
        %1536 = vmatpush.msra.mxu0 0.0
        %1537 = vmatpush.msra.mxu0 0.0
        %1538 = vmatpush.msra.mxu0 0.0
        %1539 = vmatpush.msra.mxu0 %v1490
        %1540 = vmatmul.f32.gmra.mxu0 %v1522
        %v1541 = vpop.f32.mrf.mxu0
        %v1542 = vadd.f32 0.0, %v1541
        %1543 = vdwg.mxu0
        %v1544 = vadd.f32 %v1518, %v1542
        %1545 = vst.msk [vmem:[%s1517] sm:$0xff] %vm587, %v1544
        %1546 = vst.msk [vmem:[%s1456] sm:$0xff] %vm637, %v1461
        // Predicated region
        $region81: #{tpu_custom_call.1} parent=51 // pred_check
          %p1547 = pneg %p465
        $region82: #{tpu_custom_call.1} parent=51 // pred_check_branch
          %1549 = sbr.rel (%p1547) target = $region84
        $region83: #{tpu_custom_call.1} parent=51 // pred_region
          %v1550 = vld [vmem:[#allocation4] sm:$0xff]
          %v1551 = vrcp.pop %v1550
          %v1552 = vmul.f32 %v1550, %v1551
          %v1553 = vsub.f32 1.0, %v1552
          %v1554 = vmul.f32 %v1551, %v1553
          %v1555 = vadd.f32 %v1551, %v1554
          %vm1556 = vweird.f32 %v1550
          %vm1557 = vweird.f32 %v1551
          %vm1558 = vmor %vm1556, %vm1557
          %v1559 = vsel %vm1558, %v1551, %v1555
          %v1560 = vand.u32 2147483647, %v1550
          %vm1561 = vcmp.eq.f32.partialorder %v1560, 8.507059e+37
          %v1562 = vand.u32 %v1550, 2147483648
          %v1563 = vor.u32 1.1754944e-38, %v1562
          %v1564 = vsel %vm1561, %v1563, %v1559
          %v1565 = vmul.f32 1.0, %v1564
          %v1566 = vld [vmem:[#allocation5] sm:$0xff]
          %1568 = vset.pattern.permute.xlu0 0
          %1569 = vperm.xlu0 %1568, %v1565
          %v1570 = vpop.permute.xlu0 %1569
          %v1572 = vmul.f32 %v1566, %v1570
          %v1573 = vld [vmem:[#allocation6] sm:$0xff]
          %v1574 = vadd.f32 %v1572, %v1573
          %1575 = vst.msk [vmem:[#allocation7] sm:$0xff] %vm587, %v1574
          %v1576 = vld [vmem:[%s746] sm:$0xff]
          %v1577 = vrcp.pop %v1576
          %v1578 = vmul.f32 %v1576, %v1577
          %v1579 = vsub.f32 1.0, %v1578
          %v1580 = vmul.f32 %v1577, %v1579
          %v1581 = vadd.f32 %v1577, %v1580
          %vm1582 = vweird.f32 %v1576
          %vm1583 = vweird.f32 %v1577
          %vm1584 = vmor %vm1582, %vm1583
          %v1585 = vsel %vm1584, %v1577, %v1581
          %v1586 = vand.u32 2147483647, %v1576
          %vm1587 = vcmp.eq.f32.partialorder %v1586, 8.507059e+37
          %v1588 = vand.u32 %v1576, 2147483648
          %v1589 = vor.u32 1.1754944e-38, %v1588
          %v1590 = vsel %vm1587, %v1589, %v1585
          %v1591 = vmul.f32 1.0, %v1590
          %v1592 = vld [vmem:[%s754] sm:$0xff]
          %1594 = vset.pattern.permute.xlu0 0
          %1595 = vperm.xlu0 %1594, %v1591
          %v1596 = vpop.permute.xlu0 %1595
          %v1598 = vmul.f32 %v1592, %v1596
          %v1599 = vld [vmem:[%s791] sm:$0xff]
          %v1600 = vadd.f32 %v1598, %v1599
          %1602 = vrot.lane.b32.xlu0 %v1600, 4
          %v1603 = vpop.permute.xlu0 %1602
          %vm1605 = vcmask 64544
          %1606 = vst.msk [vmem:[#allocation7] sm:$0xff] %vm1605, %v1603
          %v1607 = vld [vmem:[%s868] sm:$0xff]
          %v1608 = vrcp.pop %v1607
          %v1609 = vmul.f32 %v1607, %v1608
          %v1610 = vsub.f32 1.0, %v1609
          %v1611 = vmul.f32 %v1608, %v1610
          %v1612 = vadd.f32 %v1608, %v1611
          %vm1613 = vweird.f32 %v1607
          %vm1614 = vweird.f32 %v1608
          %vm1615 = vmor %vm1613, %vm1614
          %v1616 = vsel %vm1615, %v1608, %v1612
          %v1617 = vand.u32 2147483647, %v1607
          %vm1618 = vcmp.eq.f32.partialorder %v1617, 8.507059e+37
          %v1619 = vand.u32 %v1607, 2147483648
          %v1620 = vor.u32 1.1754944e-38, %v1619
          %v1621 = vsel %vm1618, %v1620, %v1616
          %v1622 = vmul.f32 1.0, %v1621
          %v1623 = vld [vmem:[%s876] sm:$0xff]
          %1625 = vset.pattern.permute.xlu0 0
          %1626 = vperm.xlu0 %1625, %v1622
          %v1627 = vpop.permute.xlu0 %1626
          %v1629 = vmul.f32 %v1623, %v1627
          %v1630 = vld [vmem:[%s912] sm:$0xff]
          %v1631 = vadd.f32 %v1629, %v1630
          %1633 = vrot.lane.b32.xlu0 %v1631, 8
          %v1634 = vpop.permute.xlu0 %1633
          %vm1636 = vcmask 97344
          %1637 = vst.msk [vmem:[#allocation7] sm:$0xff] %vm1636, %v1634
          %v1638 = vld [vmem:[%s989] sm:$0xff]
          %v1639 = vrcp.pop %v1638
          %v1640 = vmul.f32 %v1638, %v1639
          %v1641 = vsub.f32 1.0, %v1640
          %v1642 = vmul.f32 %v1639, %v1641
          %v1643 = vadd.f32 %v1639, %v1642
          %vm1644 = vweird.f32 %v1638
          %vm1645 = vweird.f32 %v1639
          %vm1646 = vmor %vm1644, %vm1645
          %v1647 = vsel %vm1646, %v1639, %v1643
          %v1648 = vand.u32 2147483647, %v1638
          %vm1649 = vcmp.eq.f32.partialorder %v1648, 8.507059e+37
          %v1650 = vand.u32 %v1638, 2147483648
          %v1651 = vor.u32 1.1754944e-38, %v1650
          %v1652 = vsel %vm1649, %v1651, %v1647
          %v1653 = vmul.f32 1.0, %v1652
          %v1654 = vld [vmem:[%s997] sm:$0xff]
          %1656 = vset.pattern.permute.xlu0 0
          %1657 = vperm.xlu0 %1656, %v1653
          %v1658 = vpop.permute.xlu0 %1657
          %v1660 = vmul.f32 %v1654, %v1658
          %v1661 = vld [vmem:[%s1033] sm:$0xff]
          %v1662 = vadd.f32 %v1660, %v1661
          %1664 = vrot.lane.b32.xlu0 %v1662, 12
          %v1665 = vpop.permute.xlu0 %1664
          %vm1667 = vcmask 130144
          %1668 = vst.msk [vmem:[#allocation7] sm:$0xff] %vm1667, %v1665
          %v1669 = vld [vmem:[%s1110] sm:$0xff]
          %v1670 = vrcp.pop %v1669
          %v1671 = vmul.f32 %v1669, %v1670
          %v1672 = vsub.f32 1.0, %v1671
          %v1673 = vmul.f32 %v1670, %v1672
          %v1674 = vadd.f32 %v1670, %v1673
          %vm1675 = vweird.f32 %v1669
          %vm1676 = vweird.f32 %v1670
          %vm1677 = vmor %vm1675, %vm1676
          %v1678 = vsel %vm1677, %v1670, %v1674
          %v1679 = vand.u32 2147483647, %v1669
          %vm1680 = vcmp.eq.f32.partialorder %v1679, 8.507059e+37
          %v1681 = vand.u32 %v1669, 2147483648
          %v1682 = vor.u32 1.1754944e-38, %v1681
          %v1683 = vsel %vm1680, %v1682, %v1678
          %v1684 = vmul.f32 1.0, %v1683
          %v1685 = vld [vmem:[%s1118] sm:$0xff]
          %1687 = vset.pattern.permute.xlu0 0
          %1688 = vperm.xlu0 %1687, %v1684
          %v1689 = vpop.permute.xlu0 %1688
          %v1691 = vmul.f32 %v1685, %v1689
          %v1692 = vld [vmem:[%s1154] sm:$0xff]
          %v1693 = vadd.f32 %v1691, %v1692
          %1695 = vrot.lane.b32.xlu0 %v1693, 16
          %v1696 = vpop.permute.xlu0 %1695
          %vm1698 = vcmask 162944
          %1699 = vst.msk [vmem:[#allocation7] sm:$0xff] %vm1698, %v1696
          %v1700 = vld [vmem:[%s1231] sm:$0xff]
          %v1701 = vrcp.pop %v1700
          %v1702 = vmul.f32 %v1700, %v1701
          %v1703 = vsub.f32 1.0, %v1702
          %v1704 = vmul.f32 %v1701, %v1703
          %v1705 = vadd.f32 %v1701, %v1704
          %vm1706 = vweird.f32 %v1700
          %vm1707 = vweird.f32 %v1701
          %vm1708 = vmor %vm1706, %vm1707
          %v1709 = vsel %vm1708, %v1701, %v1705
          %v1710 = vand.u32 2147483647, %v1700
          %vm1711 = vcmp.eq.f32.partialorder %v1710, 8.507059e+37
          %v1712 = vand.u32 %v1700, 2147483648
          %v1713 = vor.u32 1.1754944e-38, %v1712
          %v1714 = vsel %vm1711, %v1713, %v1709
          %v1715 = vmul.f32 1.0, %v1714
          %v1716 = vld [vmem:[%s1239] sm:$0xff]
          %1718 = vset.pattern.permute.xlu0 0
          %1719 = vperm.xlu0 %1718, %v1715
          %v1720 = vpop.permute.xlu0 %1719
          %v1722 = vmul.f32 %v1716, %v1720
          %v1723 = vld [vmem:[%s1275] sm:$0xff]
          %v1724 = vadd.f32 %v1722, %v1723
          %1726 = vrot.lane.b32.xlu0 %v1724, 20
          %v1727 = vpop.permute.xlu0 %1726
          %vm1729 = vcmask 195744
          %1730 = vst.msk [vmem:[#allocation7] sm:$0xff] %vm1729, %v1727
          %v1731 = vld [vmem:[%s1352] sm:$0xff]
          %v1732 = vrcp.pop %v1731
          %v1733 = vmul.f32 %v1731, %v1732
          %v1734 = vsub.f32 1.0, %v1733
          %v1735 = vmul.f32 %v1732, %v1734
          %v1736 = vadd.f32 %v1732, %v1735
          %vm1737 = vweird.f32 %v1731
          %vm1738 = vweird.f32 %v1732
          %vm1739 = vmor %vm1737, %vm1738
          %v1740 = vsel %vm1739, %v1732, %v1736
          %v1741 = vand.u32 2147483647, %v1731
          %vm1742 = vcmp.eq.f32.partialorder %v1741, 8.507059e+37
          %v1743 = vand.u32 %v1731, 2147483648
          %v1744 = vor.u32 1.1754944e-38, %v1743
          %v1745 = vsel %vm1742, %v1744, %v1740
          %v1746 = vmul.f32 1.0, %v1745
          %v1747 = vld [vmem:[%s1360] sm:$0xff]
          %1749 = vset.pattern.permute.xlu0 0
          %1750 = vperm.xlu0 %1749, %v1746
          %v1751 = vpop.permute.xlu0 %1750
          %v1753 = vmul.f32 %v1747, %v1751
          %v1754 = vld [vmem:[%s1396] sm:$0xff]
          %v1755 = vadd.f32 %v1753, %v1754
          %1757 = vrot.lane.b32.xlu0 %v1755, 24
          %v1758 = vpop.permute.xlu0 %1757
          %vm1760 = vcmask 228544
          %1761 = vst.msk [vmem:[#allocation7] sm:$0xff] %vm1760, %v1758
          %v1762 = vld [vmem:[%s1473] sm:$0xff]
          %v1763 = vrcp.pop %v1762
          %v1764 = vmul.f32 %v1762, %v1763
          %v1765 = vsub.f32 1.0, %v1764
          %v1766 = vmul.f32 %v1763, %v1765
          %v1767 = vadd.f32 %v1763, %v1766
          %vm1768 = vweird.f32 %v1762
          %vm1769 = vweird.f32 %v1763
          %vm1770 = vmor %vm1768, %vm1769
          %v1771 = vsel %vm1770, %v1763, %v1767
          %v1772 = vand.u32 2147483647, %v1762
          %vm1773 = vcmp.eq.f32.partialorder %v1772, 8.507059e+37
          %v1774 = vand.u32 %v1762, 2147483648
          %v1775 = vor.u32 1.1754944e-38, %v1774
          %v1776 = vsel %vm1773, %v1775, %v1771
          %v1777 = vmul.f32 1.0, %v1776
          %v1778 = vld [vmem:[%s1481] sm:$0xff]
          %1780 = vset.pattern.permute.xlu0 0
          %1781 = vperm.xlu0 %1780, %v1777
          %v1782 = vpop.permute.xlu0 %1781
          %v1784 = vmul.f32 %v1778, %v1782
          %v1785 = vld [vmem:[%s1517] sm:$0xff]
          %v1786 = vadd.f32 %v1784, %v1785
          %1788 = vrot.lane.b32.xlu0 %v1786, 28
          %v1789 = vpop.permute.xlu0 %1788
          %vm1791 = vcmask 261344
          %1792 = vst.msk [vmem:[#allocation7] sm:$0xff] %vm1791, %v1789
          %v1793 = vld [vmem:[#allocation7] sm:$0xff]
          %v1794 = vsel %vm538, %v1793, 0.0
          %1795 = vadd.xlane.f32.xlu0 %v1794
          %v1796 = vpop.xlane.xlu0 %1795
          %v1797 = vrcp.pop 32.0
          %v1798 = vmul.f32 32.0, %v1797
          %v1799 = vsub.f32 1.0, %v1798
          %v1800 = vmul.f32 %v1797, %v1799
          %v1801 = vadd.f32 %v1797, %v1800
          %vm1802 = vweird.f32 %v1797
          %v1803 = vsel %vm1802, %v1797, %v1801
          %v1804 = vmul.f32 %v1796, %v1803
          %v1805 = vsub.f32 %v1793, %v1804
          %v1806 = vmul.f32 %v1805, %v1805
          %v1807 = vsel %vm538, %v1806, 0.0
          %1808 = vadd.xlane.f32.xlu0 %v1807
          %v1809 = vpop.xlane.xlu0 %1808
          %v1810 = vmul.f32 %v1809, %v1803
          %v1811 = vadd.f32 %v1810, 1e-05
          %v1812 = vrsqrt.pop %v1811
          %v1813 = vmul.f32 %v1812, %v1811
          %v1814 = vmul.f32 %v1813, %v1812
          %v1815 = vmul.f32 0.5, %v1814
          %v1816 = vsub.f32 1.5, %v1815
          %v1817 = vmul.f32 %v1812, %v1816
          %vm1818 = vweird.f32 %v1811
          %vm1819 = vweird.f32 %v1812
          %vm1820 = vmor %vm1818, %vm1819
          %v1821 = vsel %vm1820, %v1812, %v1817
          %v1822 = vmul.f32 %v1805, %v1821
          %v1823 = vld [vmem:[%s6] sm:$0x1]
          %v1825 = vperm.slane %v1823, 0
          %v1827 = vmul.f32 %v1822, %v1825
          %v1828 = vld [vmem:[%s7] sm:$0x1]
          %v1830 = vperm.slane %v1828, 0
          %v1832 = vadd.f32 %v1827, %v1830
          %1833 = vst.msk [vmem:[%s464] sm:$0xff] %vm538, %v1832
        $region84: #{tpu_custom_call.1} parent=51 // pred_fallthru
          _
        %s1834 = sand.u32 %s248, 1
        %s1835 = scalar_lea.sflag [#allocation10], %s1834
        %s1836 = sand.u32 %s248, 1
        %s1837 = smul.addr %s1836, 8
        %s1838 = scalar_lea.vmem [#allocation19], %s1837
        // Predicated region
        $region85: #{tpu_custom_call.1} parent=51 // pred_check
          %p1839 = pneg %p258
        $region86: #{tpu_custom_call.1} parent=51 // pred_check_branch
          %1841 = sbr.rel (%p1839) target = $region88
        $region87: #{tpu_custom_call.1} parent=51 // pred_region
          %1843 = vsyncadd %s1835, 0
          %s1844 = sadd.s32 %s36, %s35
          %s1845 = smul.addr %s1844, 8
          %s1846 = scalar_lea.hbm %s8, %s1845
          %s1848 = sshll.u32 %s1838, 4
          %s1849 = int_to_ptr.vmem [resolvable:$true] %s1848
          %s1850 = sshll.u32 %s1846, 4
          %s1851 = int_to_ptr.hbm [resolvable:$true] %s1850
          %1853 = dma.vmem_to_hbm [thread:$0]  %s1849, 128, %s1851, %s1835
        $region88: #{tpu_custom_call.1} parent=51 // pred_fallthru
          _
      $region52: #{tpu_custom_call.1} parent=5 // pred_fallthru
        _
      %p1854 = scmp.le.s32.totalorder 2, %s25
      // Predicated region
      $region89: #{tpu_custom_call.1} parent=5 // pred_check
        %p1855 = pneg %p1854
      $region90: #{tpu_custom_call.1} parent=5 // pred_check_branch
        %1857 = sbr.rel (%p1855) target = $region92
      $region91: #{tpu_custom_call.1} parent=5 // pred_region
        %s1858 = ssub.s32 %s25, 2
        // Predicated region
        $region93: #{tpu_custom_call.1} parent=91 // pred_check
          %p1859 = pneg %p264
        $region94: #{tpu_custom_call.1} parent=91 // pred_check_branch
          %1861 = sbr.rel (%p1859) target = $region96
        $region95: #{tpu_custom_call.1} parent=91 // pred_region
          %s1862 = sand.u32 %s249, 1
          %s1863 = scalar_lea.sflag [#allocation10], %s1862
          %s1864 = sand.u32 %s249, 1
          %s1865 = smul.addr %s1864, 8
          %s1866 = scalar_lea.vmem [#allocation19], %s1865
          %1868 = dma.done %s1863, 128
        $region96: #{tpu_custom_call.1} parent=91 // pred_fallthru
          _
      $region92: #{tpu_custom_call.1} parent=5 // pred_fallthru
        _
    $region6: #{tpu_custom_call.1} parent=1 // loop_footer
      %s29 = sadd.s32 1, %s25
    $region7: #{tpu_custom_call.1} parent=1 // loop_footer_branch
      %24 = sbr.rel target = $region3
    $region8: #{tpu_custom_call.1} parent=1 // loop_exit
      _
    %1869 = vsyncpa [#allocation9], 1
    %s1870 = scalar_lea.sflag [#allocation9], 1
    %1871 = vsyncpa %s1870, 1
    %1872 = vsyncpa [#allocation12], 1
    %s1873 = scalar_lea.sflag [#allocation12], 1
    %1874 = vsyncpa %s1873, 1
    %1875 = vsyncpa [#allocation15], 1
    %1876 = vsyncpa [#allocation18], 1
    %1877 = vsyncpa [#allocation10], 1
    %s1878 = scalar_lea.sflag [#allocation10], 1
    %1879 = vsyncpa %s1878, 1

</llo_original>
